<compile_context>
chip_gen: v5e
topology: v5e:2x2
jax: 0.10.0
libtpu: 0.0.40
codegen_flags: <defaults>
</compile_context>

<pallas_src>
import numpy as np
import jax
import jax.numpy as jnp
from jax import lax
from jax.experimental import pallas as pl
from jax.experimental.pallas import tpu as pltpu

NIMG = 8              # images packed per grid step (lane-batched)
C1L = 16              # per-image lane block in the conv1 domain (9 ch/taps -> 16)
C2L = 32              # per-image lane block in the conv2/3 domain (18/27 ch -> 32)
S1 = 176              # conv1 pooled spatial rows per pool block (13*13=169 -> 176)
S2B = 32              # conv2 pooled spatial rows per pool block (5*5=25   -> 32)
P1_ROWS = 4 * S1      # 704 pool-split conv1 patch rows per image
L1 = NIMG * C1L       # 128
L2 = NIMG * C2L       # 256


# ------------------------------ Pallas kernel -------------------------------

def fixednet_kernel(p1_ref, w1_ref, b1_ref, g2_ref, w2_ref, b2_ref,
                    g3_ref, w3_ref, b3_ref, wl_ref, bl_ref, o_ref):
    f32 = jnp.float32
    bf16 = jnp.bfloat16

    # ---- conv1 (f32): one block-diagonal matmul, all NIMG images on lanes ----
    p1 = p1_ref[0]                                                 # (704, L1)
    y1 = jnp.dot(p1, w1_ref[...], preferred_element_type=f32) + b1_ref[...]
    y1 = jnp.where(jnp.abs(y1) < 0.5, 0.0, y1)                     # dead zone
    y1 = jnp.clip(y1, -6.0, 6.0)                                   # [-6, 6]
    # signed abs-max 2x2 pool; pool candidates are the four S1-row blocks in
    # window row-major (pi,pj) order, strict '>' keeps the first max (torch
    # tie-break).  Pad rows 169..175 stay zero because b1 == 0 (and are never
    # gathered by g2 anyway).
    best = y1[0:S1]
    best_abs = jnp.abs(best)
    for p in range(1, 4):
        cand = y1[p * S1:(p + 1) * S1]
        cand_abs = jnp.abs(cand)
        take = cand_abs > best_abs
        best = jnp.where(take, cand, best)
        best_abs = jnp.where(take, cand_abs, best_abs)
    h1 = best.astype(bf16)                                         # (176, L1)

    # ---- conv2: fused per-tap gather-dot + block-diag weight-dot ----
    # Bias + ReLU hoisted outside the pool max (relu(x+b) monotone in x).
    acc2 = None
    for s in range(9):
        a = jnp.dot(g2_ref[s], h1, preferred_element_type=f32).astype(bf16)   # (128, L1)
        t = jnp.dot(a, w2_ref[s], preferred_element_type=f32)                 # (128, L2)
        acc2 = t if acc2 is None else acc2 + t
    m2 = jnp.maximum(jnp.maximum(acc2[0:S2B], acc2[S2B:2 * S2B]),
                     jnp.maximum(acc2[2 * S2B:3 * S2B], acc2[3 * S2B:4 * S2B]))
    h2 = jnp.maximum(m2 + b2_ref[...], 0.0).astype(bf16)           # (32, L2)
    # (h2 pad rows 25..31 hold relu(b2) but are never gathered by g3.)

    # ---- conv3: same fused structure ----
    acc3 = None
    for s in range(9):
        a = jnp.dot(g3_ref[s], h2, preferred_element_type=f32).astype(bf16)   # (8, L2)
        t = jnp.dot(a, w3_ref[s], preferred_element_type=f32)                 # (8, L2)
        acc3 = t if acc3 is None else acc3 + t
    m3 = jnp.max(acc3, axis=0, keepdims=True)      # rows 4..7 duplicate row 0 -> safe
    h3 = jnp.maximum(m3 + b3_ref[...], 0.0).astype(bf16)           # (1, L2)

    # ---- classifier (block-diag over images, lane-dense (1, L1) store) ----
    o_ref[0] = jnp.dot(h3, wl_ref[...], preferred_element_type=f32) + bl_ref[...]


# ------------------------------- JAX wrapper ---------------------------------

def fixednet_forward(x_nchw, kparams):
    B = x_nchw.shape[0]
    grid = -(-B // NIMG)
    Bp = grid * NIMG

    x = x_nchw[:, 0].astype(jnp.float32).reshape(B, 28 * 28)
    if Bp > B:
        x = jnp.concatenate([x, jnp.zeros((Bp - B, 28 * 28), jnp.float32)], axis=0)
    xg = x.reshape(grid, NIMG * 28 * 28)

    # Single XLA gather -> lane-packed, pool-split conv1 patches:
    #   p1[g, p*176 + i*13 + j, n*16 + s] = x[g*NIMG+n, 2i+pi+kh, 2j+pj+kw]
    p1 = xg[:, kparams["p1_idx"]] * kparams["p1_msk"]              # (grid, 704, L1)

    def cspec(shape):
        zeros = (0,) * len(shape)
        return pl.BlockSpec(shape, lambda g, _z=zeros: _z)

    out = pl.pallas_call(
        fixednet_kernel,
        out_shape=jax.ShapeDtypeStruct((grid, 1, L1), jnp.float32),
        grid=(grid,),
        in_specs=[
            pl.BlockSpec((1, P1_ROWS, L1), lambda g: (g, 0, 0)),   # p1 (per step)
            cspec((L1, L1)),            # w1  block-diag conv1 weights (f32)
            cspec((1, L1)),             # b1  tiled (zeros)
            cspec((9, 4 * S2B, S1)),    # g2  one-hot gather, shared across images
            cspec((9, L1, L2)),         # w2  block-diag per tap
            cspec((1, L2)),             # b2  tiled
            cspec((9, 8, S2B)),         # g3  one-hot gather
            cspec((9, L2, L2)),         # w3  block-diag per tap
            cspec((1, L2)),             # b3  tiled
            cspec((L2, L1)),            # wl  block-diag classifier
            cspec((1, L1)),             # bl  tiled
        ],
        out_specs=pl.BlockSpec((1, 1, L1), lambda g: (g, 0, 0)),
        compiler_params=pltpu.CompilerParams(
            dimension_semantics=("parallel",)),
    )(p1, kparams["w1"], kparams["b1"], kparams["g2"], kparams["w2"],
      kparams["b2"], kparams["g3"], kparams["w3"], kparams["b3"],
      kparams["wl"], kparams["bl"])

    return out.reshape(grid * NIMG, C1L)[:B, :10]


# ---------------------------- parameter building -----------------------------

_FIXED_FILTERS = np.array([
    [[0.5, 0.5, 0.5], [0.5, 0.5, -1], [0.5, -1, -1]],
    [[0.5, 0.5, 0.5], [-1, 0.5, 0.5], [-1, -1, 0.5]],
    [[0.5, 0.5, 0.5], [0.5, 0.5, 0.5], [-1, -1, -1]],
    [[0.5, 0.5, -1], [0.5, 0.5, -1], [0.5, 0.5, -1]],
    [[0.25, -2, 0.25], [0.25, 0.25, 0.25], [0.25, 0.25, 0.25]],
    [[0.25, 0.25, 0.25], [0.25, 0.25, 0.25], [0.25, -2, 0.25]],
    [[0.25, 0.25, 0.25], [-2, 0.25, 0.25], [0.25, 0.25, 0.25]],
    [[0.25, 0.25, 0.25], [0.25, 0.25, -2], [0.25, 0.25, 0.25]],
    [[0.25, 0.25, 0.25], [0.25, -2, 0.25], [0.25, 0.25, 0.25]],
], dtype=np.float32)                                  # (9, 3, 3), Cin = 1


def make_params():
    """Raw (reference-layout) parameters."""
    params = {}
    params["w1"] = jnp.asarray(_FIXED_FILTERS.reshape(9, 9).T)   # (tap=9, cout=9)
    params["b1"] = jnp.zeros((1, 9), jnp.float32)

    key = jax.random.PRNGKey(0)
    k_w2, k_b2, k_w3, k_b3, k_wl, k_bl = jax.random.split(key, 6)

    def uni(k, shape, fan_in):
        bound = 1.0 / float(np.sqrt(fan_in))
        return jax.random.uniform(k, shape, jnp.float32, -bound, bound)

    w2 = uni(k_w2, (18, 9, 3, 3), 81)
    params["w2"] = w2.reshape(18, 81).T            # (81, 18), row = ci*9 + s
    params["b2"] = uni(k_b2, (1, 18), 81)

    w3 = uni(k_w3, (27, 18, 3, 3), 162)
    params["w3"] = w3.reshape(27, 162).T           # (162, 27), row = ci*9 + s
    params["b3"] = uni(k_b3, (1, 27), 162)

    wl = uni(k_wl, (10, 27), 27)
    params["wl"] = wl.T                            # (27, 10)
    params["bl"] = uni(k_bl, (1, 10), 27)
    return params


def pack_kernel_params(params, nimg=NIMG):
    """Kernel-layout parameters: lane-batched block-diag weights, one-hot
    gather matrices shared across images, tiled biases, im2col index/mask."""
    l1, l2 = nimg * C1L, nimg * C2L
    w1 = np.asarray(params["w1"], np.float32)      # (9, 9)  [tap, cout]
    w2 = np.asarray(params["w2"], np.float32)      # (81, 18)
    w3 = np.asarray(params["w3"], np.float32)      # (162, 27)
    wl = np.asarray(params["wl"], np.float32)      # (27, 10)
    b1 = np.asarray(params["b1"], np.float32).reshape(-1)
    b2 = np.asarray(params["b2"], np.float32).reshape(-1)
    b3 = np.asarray(params["b3"], np.float32).reshape(-1)
    bl = np.asarray(params["bl"], np.float32).reshape(-1)

    # conv1 block-diag (lane n*16+tap -> lane n*16+ch) and tiled bias.
    w1bd = np.zeros((l1, l1), np.float32)
    b1t = np.zeros((1, l1), np.float32)
    for n in range(nimg):
        w1bd[n * 16:n * 16 + 9, n * 16:n * 16 + 9] = w1
        b1t[0, n * 16:n * 16 + 9] = b1

    # conv2 one-hot gather (image-independent): g2[s, p*32 + i*5+j, r]
    g2 = np.zeros((9, 4 * S2B, S1), np.float32)
    for s in range(9):
        kh, kw = s // 3, s % 3
        for pi in range(2):
            for pj in range(2):
                p = pi * 2 + pj
                for i in range(5):
                    for j in range(5):
                        r = (2 * i + pi + kh) * 13 + (2 * j + pj + kw)
                        g2[s, p * S2B + i * 5 + j, r] = 1.0

    # conv2 block-diag weights per tap + tiled bias.
    w2r = w2.reshape(9, 9, 18)                     # [ci, s, co]
    w2bd = np.zeros((9, l1, l2), np.float32)
    b2t = np.zeros((1, l2), np.float32)
    for n in range(nimg):
        b2t[0, n * 32:n * 32 + 18] = b2
        for s in range(9):
            w2bd[s, n * 16:n * 16 + 9, n * 32:n * 32 + 18] = w2r[:, s, :]

    # conv3 one-hot gather + block-diag weights + tiled bias.
    g3 = np.zeros((9, 8, S2B), np.float32)
    for s in range(9):
        kh, kw = s // 3, s % 3
        for pi in range(2):
            for pj in range(2):
                g3[s, pi * 2 + pj, (pi + kh) * 5 + (pj + kw)] = 1.0
        g3[s, 4:8, :] = g3[s, 0:1, :]              # duplicate row 0 -> full 8-row max safe
    w3r = w3.reshape(18, 9, 27)                    # [ci, s, co]
    w3bd = np.zeros((9, l2, l2), np.float32)
    b3t = np.zeros((1, l2), np.float32)
    for n in range(nimg):
        b3t[0, n * 32:n * 32 + 27] = b3
        for s in range(9):
            w3bd[s, n * 32:n * 32 + 18, n * 32:n * 32 + 27] = w3r[:, s, :]

    # classifier block-diag + tiled bias.
    wlbd = np.zeros((l2, l1), np.float32)
    blt = np.zeros((1, l1), np.float32)
    for n in range(nimg):
        wlbd[n * 32:n * 32 + 27, n * 16:n * 16 + 10] = wl
        blt[0, n * 16:n * 16 + 10] = bl

    # im2col gather indices/mask for the lane-packed pool-split patch layout.
    idx = np.zeros((P1_ROWS, C1L), np.int32)
    msk = np.zeros((P1_ROWS, C1L), np.float32)
    for pi in range(2):
        for pj in range(2):
            p = pi * 2 + pj
            for i in range(13):
                for j in range(13):
                    r = p * S1 + i * 13 + j
                    for kh in range(3):
                        for kw in range(3):
                            idx[r, kh * 3 + kw] = (2 * i + pi + kh) * 28 + (2 * j + pj + kw)
                            msk[r, kh * 3 + kw] = 1.0
    idx2 = np.zeros((P1_ROWS, l1), np.int32)
    msk2 = np.zeros((P1_ROWS, l1), np.float32)
    for n in range(nimg):
        idx2[:, n * 16:(n + 1) * 16] = idx + n * 28 * 28
        msk2[:, n * 16:(n + 1) * 16] = msk

    return dict(
        w1=jnp.asarray(w1bd), b1=jnp.asarray(b1t),
        g2=jnp.asarray(g2, jnp.bfloat16), w2=jnp.asarray(w2bd, jnp.bfloat16),
        b2=jnp.asarray(b2t),
        g3=jnp.asarray(g3, jnp.bfloat16), w3=jnp.asarray(w3bd, jnp.bfloat16),
        b3=jnp.asarray(b3t),
        wl=jnp.asarray(wlbd, jnp.bfloat16), bl=jnp.asarray(blt),
        p1_idx=jnp.asarray(idx2), p1_msk=jnp.asarray(msk2),
    )


# ----------------------------- pure-JAX reference ----------------------------

def _reference_forward(x_nchw, params):
    x = jnp.transpose(x_nchw, (0, 2, 3, 1)).astype(jnp.float32)
    dn = ("NHWC", "HWIO", "NHWC")

    def conv(inp, wmat, cout):
        cin = inp.shape[-1]
        w = wmat.reshape(cin, 3, 3, cout).transpose(1, 2, 0, 3)   # HWIO
        return lax.conv_general_dilated(inp, w, (1, 1), "VALID",
                                        dimension_numbers=dn,
                                        precision=lax.Precision.HIGHEST)

    B = x.shape[0]
    # conv1 + bothway_relu6 + abs_maxpool_2d
    y = conv(x, params["w1"], 9) + params["b1"].reshape(1, 1, 1, 9)
    y = jnp.where(jnp.abs(y) < 0.5, 0.0, y)
    y = jnp.clip(y, -6.0, 6.0)
    yw = y.reshape(B, 13, 2, 13, 2, 9).transpose(0, 1, 3, 5, 2, 4).reshape(B, 13, 13, 9, 4)
    idx = jnp.argmax(jnp.abs(yw), axis=-1)
    h1 = jnp.take_along_axis(yw, idx[..., None], axis=-1)[..., 0]
    # conv2 + relu + maxpool
    y = jax.nn.relu(conv(h1, params["w2"], 18) + params["b2"].reshape(1, 1, 1, 18))
    h2 = y[:, :10, :10, :].reshape(B, 5, 2, 5, 2, 18).max(axis=(2, 4))
    # conv3 + relu + maxpool
    y = jax.nn.relu(conv(h2, params["w3"], 27) + params["b3"].reshape(1, 1, 1, 27))
    h3 = y[:, :2, :2, :].reshape(B, 1, 2, 1, 2, 27).max(axis=(2, 4)).reshape(B, 27)
    return jnp.dot(h3, params["wl"], precision=lax.Precision.HIGHEST) + params["bl"]


# ----------------------------------- main ------------------------------------

if __name__ == "__main__":
    params = make_params()
    kparams = pack_kernel_params(params)

    B = 13   # exercises 2 grid steps (both TCs on megacore parts) + padding
    x = jax.random.normal(jax.random.PRNGKey(0), (B, 1, 28, 28), jnp.float32)  # NCHW

    fwd = jax.jit(fixednet_forward)
    out = jax.block_until_ready(fwd(x, kparams))
    assert out.shape == (B, 10)

    ref = _reference_forward(x, params)
    np.testing.assert_allclose(np.asarray(out), np.asarray(ref), rtol=5e-2, atol=5e-2)

    print("KERNEL_OK")
</pallas_src>

<mosaic_0001>
module attributes {stable_mosaic.version = 11 : i64} {
  func.func @fixednet_kernel(%arg0: i32, %arg1: memref<1x704x128xf32, #tpu.memory_space<vmem>>, %arg2: memref<128x128xf32, #tpu.memory_space<vmem>>, %arg3: memref<1x128xf32, #tpu.memory_space<vmem>>, %arg4: memref<9x128x176xbf16, #tpu.memory_space<vmem>>, %arg5: memref<9x128x256xbf16, #tpu.memory_space<vmem>>, %arg6: memref<1x256xf32, #tpu.memory_space<vmem>>, %arg7: memref<9x8x32xbf16, #tpu.memory_space<vmem>>, %arg8: memref<9x256x256xbf16, #tpu.memory_space<vmem>>, %arg9: memref<1x256xf32, #tpu.memory_space<vmem>>, %arg10: memref<256x128xbf16, #tpu.memory_space<vmem>>, %arg11: memref<1x128xf32, #tpu.memory_space<vmem>>, %arg12: memref<1x1x128xf32, #tpu.memory_space<vmem>>) attributes {dimension_semantics = [#tpu.dimension_semantics<parallel>], iteration_bounds = array<i64: 2>, scalar_prefetch = 0 : i64, scratch_operands = 0 : i64, tpu.core_type = #tpu.core_type<tc>, window_params = [{transform_indices = @transform_0, window_bounds = array<i64: 1, 704, 128>}, {pipeline_mode = #tpu.pipeline_mode<synchronous>, transform_indices = @transform_1, window_bounds = array<i64: 128, 128>}, {pipeline_mode = #tpu.pipeline_mode<synchronous>, transform_indices = @transform_2, window_bounds = array<i64: 1, 128>}, {pipeline_mode = #tpu.pipeline_mode<synchronous>, transform_indices = @transform_3, window_bounds = array<i64: 9, 128, 176>}, {pipeline_mode = #tpu.pipeline_mode<synchronous>, transform_indices = @transform_4, window_bounds = array<i64: 9, 128, 256>}, {pipeline_mode = #tpu.pipeline_mode<synchronous>, transform_indices = @transform_5, window_bounds = array<i64: 1, 256>}, {pipeline_mode = #tpu.pipeline_mode<synchronous>, transform_indices = @transform_6, window_bounds = array<i64: 9, 8, 32>}, {pipeline_mode = #tpu.pipeline_mode<synchronous>, transform_indices = @transform_7, window_bounds = array<i64: 9, 256, 256>}, {pipeline_mode = #tpu.pipeline_mode<synchronous>, transform_indices = @transform_8, window_bounds = array<i64: 1, 256>}, {pipeline_mode = #tpu.pipeline_mode<synchronous>, transform_indices = @transform_9, window_bounds = array<i64: 256, 128>}, {pipeline_mode = #tpu.pipeline_mode<synchronous>, transform_indices = @transform_10, window_bounds = array<i64: 1, 128>}, {transform_indices = @transform_11, window_bounds = array<i64: 1, 1, 128>}]} {
    %c0 = arith.constant 0 : index
    %c0_0 = arith.constant 0 : index
    %c0_1 = arith.constant 0 : index
    %0 = vector.load %arg1[%c0, %c0_0, %c0_1] : memref<1x704x128xf32, #tpu.memory_space<vmem>>, vector<1x704x128xf32>
    %1 = vector.shape_cast %0 : vector<1x704x128xf32> to vector<704x128xf32>
    %c0_2 = arith.constant 0 : index
    %c0_3 = arith.constant 0 : index
    %2 = vector.load %arg2[%c0_2, %c0_3] : memref<128x128xf32, #tpu.memory_space<vmem>>, vector<128x128xf32>
    %cst = arith.constant dense<0.000000e+00> : vector<704x128xf32>
    %3 = tpu.matmul %1, %2, %cst {dimension_numbers = #tpu.dot_dimension_numbers<[1], [0], [0], [1], [0, 0, 1, 1], [], []>} : vector<704x128xf32>, vector<128x128xf32>, vector<704x128xf32> -> vector<704x128xf32>
    %c0_4 = arith.constant 0 : index
    %c0_5 = arith.constant 0 : index
    %4 = vector.load %arg3[%c0_4, %c0_5] : memref<1x128xf32, #tpu.memory_space<vmem>>, vector<1x128xf32>
    %5 = vector.broadcast %4 : vector<1x128xf32> to vector<704x128xf32>
    %6 = arith.addf %3, %5 : vector<704x128xf32>
    %7 = math.absf %6 : vector<704x128xf32>
    %cst_6 = arith.constant 5.000000e-01 : f32
    %8 = vector.broadcast %cst_6 : f32 to vector<704x128xf32>
    %9 = arith.cmpf olt, %7, %8 : vector<704x128xf32>
    %cst_7 = arith.constant 0.000000e+00 : f32
    %10 = vector.broadcast %cst_7 : f32 to vector<704x128xf32>
    %11 = arith.select %9, %10, %6 : vector<704x128xi1>, vector<704x128xf32>
    %cst_8 = arith.constant -6.000000e+00 : f32
    %cst_9 = arith.constant 6.000000e+00 : f32
    %12 = vector.broadcast %cst_8 : f32 to vector<704x128xf32>
    %13 = arith.maximumf %12, %11 : vector<704x128xf32>
    %14 = vector.broadcast %cst_9 : f32 to vector<704x128xf32>
    %15 = arith.minimumf %14, %13 : vector<704x128xf32>
    %16 = vector.extract_strided_slice %15 {offsets = [0, 0], sizes = [176, 128], strides = [1, 1]} : vector<704x128xf32> to vector<176x128xf32>
    %17 = math.absf %16 : vector<176x128xf32>
    %18 = vector.extract_strided_slice %15 {offsets = [176, 0], sizes = [176, 128], strides = [1, 1]} : vector<704x128xf32> to vector<176x128xf32>
    %19 = math.absf %18 : vector<176x128xf32>
    %20 = arith.cmpf ogt, %19, %17 : vector<176x128xf32>
    %21 = arith.select %20, %18, %16 : vector<176x128xi1>, vector<176x128xf32>
    %22 = arith.select %20, %19, %17 : vector<176x128xi1>, vector<176x128xf32>
    %23 = vector.extract_strided_slice %15 {offsets = [352, 0], sizes = [176, 128], strides = [1, 1]} : vector<704x128xf32> to vector<176x128xf32>
    %24 = math.absf %23 : vector<176x128xf32>
    %25 = arith.cmpf ogt, %24, %22 : vector<176x128xf32>
    %26 = arith.select %25, %23, %21 : vector<176x128xi1>, vector<176x128xf32>
    %27 = arith.select %25, %24, %22 : vector<176x128xi1>, vector<176x128xf32>
    %28 = vector.extract_strided_slice %15 {offsets = [528, 0], sizes = [176, 128], strides = [1, 1]} : vector<704x128xf32> to vector<176x128xf32>
    %29 = math.absf %28 : vector<176x128xf32>
    %30 = arith.cmpf ogt, %29, %27 : vector<176x128xf32>
    %31 = arith.select %30, %28, %26 : vector<176x128xi1>, vector<176x128xf32>
    %32 = arith.truncf %31 : vector<176x128xf32> to vector<176x128xbf16>
    %c0_10 = arith.constant 0 : index
    %c0_11 = arith.constant 0 : index
    %c0_12 = arith.constant 0 : index
    %33 = vector.load %arg4[%c0_10, %c0_11, %c0_12] : memref<9x128x176xbf16, #tpu.memory_space<vmem>>, vector<1x128x176xbf16>
    %34 = vector.shape_cast %33 : vector<1x128x176xbf16> to vector<128x176xbf16>
    %cst_13 = arith.constant dense<0.000000e+00> : vector<128x128xf32>
    %35 = tpu.matmul %34, %32, %cst_13 {dimension_numbers = #tpu.dot_dimension_numbers<[1], [0], [0], [1], [0, 0, 1, 1], [], []>} : vector<128x176xbf16>, vector<176x128xbf16>, vector<128x128xf32> -> vector<128x128xf32>
    %36 = arith.truncf %35 : vector<128x128xf32> to vector<128x128xbf16>
    %c0_14 = arith.constant 0 : index
    %c0_15 = arith.constant 0 : index
    %c0_16 = arith.constant 0 : index
    %37 = vector.load %arg5[%c0_14, %c0_15, %c0_16] : memref<9x128x256xbf16, #tpu.memory_space<vmem>>, vector<1x128x256xbf16>
    %38 = vector.shape_cast %37 : vector<1x128x256xbf16> to vector<128x256xbf16>
    %cst_17 = arith.constant dense<0.000000e+00> : vector<128x256xf32>
    %39 = tpu.matmul %36, %38, %cst_17 {dimension_numbers = #tpu.dot_dimension_numbers<[1], [0], [0], [1], [0, 0, 1, 1], [], []>} : vector<128x128xbf16>, vector<128x256xbf16>, vector<128x256xf32> -> vector<128x256xf32>
    %c1 = arith.constant 1 : index
    %c0_18 = arith.constant 0 : index
    %c0_19 = arith.constant 0 : index
    %40 = vector.load %arg4[%c1, %c0_18, %c0_19] : memref<9x128x176xbf16, #tpu.memory_space<vmem>>, vector<1x128x176xbf16>
    %41 = vector.shape_cast %40 : vector<1x128x176xbf16> to vector<128x176xbf16>
    %cst_20 = arith.constant dense<0.000000e+00> : vector<128x128xf32>
    %42 = tpu.matmul %41, %32, %cst_20 {dimension_numbers = #tpu.dot_dimension_numbers<[1], [0], [0], [1], [0, 0, 1, 1], [], []>} : vector<128x176xbf16>, vector<176x128xbf16>, vector<128x128xf32> -> vector<128x128xf32>
    %43 = arith.truncf %42 : vector<128x128xf32> to vector<128x128xbf16>
    %c1_21 = arith.constant 1 : index
    %c0_22 = arith.constant 0 : index
    %c0_23 = arith.constant 0 : index
    %44 = vector.load %arg5[%c1_21, %c0_22, %c0_23] : memref<9x128x256xbf16, #tpu.memory_space<vmem>>, vector<1x128x256xbf16>
    %45 = vector.shape_cast %44 : vector<1x128x256xbf16> to vector<128x256xbf16>
    %cst_24 = arith.constant dense<0.000000e+00> : vector<128x256xf32>
    %46 = tpu.matmul %43, %45, %cst_24 {dimension_numbers = #tpu.dot_dimension_numbers<[1], [0], [0], [1], [0, 0, 1, 1], [], []>} : vector<128x128xbf16>, vector<128x256xbf16>, vector<128x256xf32> -> vector<128x256xf32>
    %47 = arith.addf %39, %46 : vector<128x256xf32>
    %c2 = arith.constant 2 : index
    %c0_25 = arith.constant 0 : index
    %c0_26 = arith.constant 0 : index
    %48 = vector.load %arg4[%c2, %c0_25, %c0_26] : memref<9x128x176xbf16, #tpu.memory_space<vmem>>, vector<1x128x176xbf16>
    %49 = vector.shape_cast %48 : vector<1x128x176xbf16> to vector<128x176xbf16>
    %cst_27 = arith.constant dense<0.000000e+00> : vector<128x128xf32>
    %50 = tpu.matmul %49, %32, %cst_27 {dimension_numbers = #tpu.dot_dimension_numbers<[1], [0], [0], [1], [0, 0, 1, 1], [], []>} : vector<128x176xbf16>, vector<176x128xbf16>, vector<128x128xf32> -> vector<128x128xf32>
    %51 = arith.truncf %50 : vector<128x128xf32> to vector<128x128xbf16>
    %c2_28 = arith.constant 2 : index
    %c0_29 = arith.constant 0 : index
    %c0_30 = arith.constant 0 : index
    %52 = vector.load %arg5[%c2_28, %c0_29, %c0_30] : memref<9x128x256xbf16, #tpu.memory_space<vmem>>, vector<1x128x256xbf16>
    %53 = vector.shape_cast %52 : vector<1x128x256xbf16> to vector<128x256xbf16>
    %cst_31 = arith.constant dense<0.000000e+00> : vector<128x256xf32>
    %54 = tpu.matmul %51, %53, %cst_31 {dimension_numbers = #tpu.dot_dimension_numbers<[1], [0], [0], [1], [0, 0, 1, 1], [], []>} : vector<128x128xbf16>, vector<128x256xbf16>, vector<128x256xf32> -> vector<128x256xf32>
    %55 = arith.addf %47, %54 : vector<128x256xf32>
    %c3 = arith.constant 3 : index
    %c0_32 = arith.constant 0 : index
    %c0_33 = arith.constant 0 : index
    %56 = vector.load %arg4[%c3, %c0_32, %c0_33] : memref<9x128x176xbf16, #tpu.memory_space<vmem>>, vector<1x128x176xbf16>
    %57 = vector.shape_cast %56 : vector<1x128x176xbf16> to vector<128x176xbf16>
    %cst_34 = arith.constant dense<0.000000e+00> : vector<128x128xf32>
    %58 = tpu.matmul %57, %32, %cst_34 {dimension_numbers = #tpu.dot_dimension_numbers<[1], [0], [0], [1], [0, 0, 1, 1], [], []>} : vector<128x176xbf16>, vector<176x128xbf16>, vector<128x128xf32> -> vector<128x128xf32>
    %59 = arith.truncf %58 : vector<128x128xf32> to vector<128x128xbf16>
    %c3_35 = arith.constant 3 : index
    %c0_36 = arith.constant 0 : index
    %c0_37 = arith.constant 0 : index
    %60 = vector.load %arg5[%c3_35, %c0_36, %c0_37] : memref<9x128x256xbf16, #tpu.memory_space<vmem>>, vector<1x128x256xbf16>
    %61 = vector.shape_cast %60 : vector<1x128x256xbf16> to vector<128x256xbf16>
    %cst_38 = arith.constant dense<0.000000e+00> : vector<128x256xf32>
    %62 = tpu.matmul %59, %61, %cst_38 {dimension_numbers = #tpu.dot_dimension_numbers<[1], [0], [0], [1], [0, 0, 1, 1], [], []>} : vector<128x128xbf16>, vector<128x256xbf16>, vector<128x256xf32> -> vector<128x256xf32>
    %63 = arith.addf %55, %62 : vector<128x256xf32>
    %c4 = arith.constant 4 : index
    %c0_39 = arith.constant 0 : index
    %c0_40 = arith.constant 0 : index
    %64 = vector.load %arg4[%c4, %c0_39, %c0_40] : memref<9x128x176xbf16, #tpu.memory_space<vmem>>, vector<1x128x176xbf16>
    %65 = vector.shape_cast %64 : vector<1x128x176xbf16> to vector<128x176xbf16>
    %cst_41 = arith.constant dense<0.000000e+00> : vector<128x128xf32>
    %66 = tpu.matmul %65, %32, %cst_41 {dimension_numbers = #tpu.dot_dimension_numbers<[1], [0], [0], [1], [0, 0, 1, 1], [], []>} : vector<128x176xbf16>, vector<176x128xbf16>, vector<128x128xf32> -> vector<128x128xf32>
    %67 = arith.truncf %66 : vector<128x128xf32> to vector<128x128xbf16>
    %c4_42 = arith.constant 4 : index
    %c0_43 = arith.constant 0 : index
    %c0_44 = arith.constant 0 : index
    %68 = vector.load %arg5[%c4_42, %c0_43, %c0_44] : memref<9x128x256xbf16, #tpu.memory_space<vmem>>, vector<1x128x256xbf16>
    %69 = vector.shape_cast %68 : vector<1x128x256xbf16> to vector<128x256xbf16>
    %cst_45 = arith.constant dense<0.000000e+00> : vector<128x256xf32>
    %70 = tpu.matmul %67, %69, %cst_45 {dimension_numbers = #tpu.dot_dimension_numbers<[1], [0], [0], [1], [0, 0, 1, 1], [], []>} : vector<128x128xbf16>, vector<128x256xbf16>, vector<128x256xf32> -> vector<128x256xf32>
    %71 = arith.addf %63, %70 : vector<128x256xf32>
    %c5 = arith.constant 5 : index
    %c0_46 = arith.constant 0 : index
    %c0_47 = arith.constant 0 : index
    %72 = vector.load %arg4[%c5, %c0_46, %c0_47] : memref<9x128x176xbf16, #tpu.memory_space<vmem>>, vector<1x128x176xbf16>
    %73 = vector.shape_cast %72 : vector<1x128x176xbf16> to vector<128x176xbf16>
    %cst_48 = arith.constant dense<0.000000e+00> : vector<128x128xf32>
    %74 = tpu.matmul %73, %32, %cst_48 {dimension_numbers = #tpu.dot_dimension_numbers<[1], [0], [0], [1], [0, 0, 1, 1], [], []>} : vector<128x176xbf16>, vector<176x128xbf16>, vector<128x128xf32> -> vector<128x128xf32>
    %75 = arith.truncf %74 : vector<128x128xf32> to vector<128x128xbf16>
    %c5_49 = arith.constant 5 : index
    %c0_50 = arith.constant 0 : index
    %c0_51 = arith.constant 0 : index
    %76 = vector.load %arg5[%c5_49, %c0_50, %c0_51] : memref<9x128x256xbf16, #tpu.memory_space<vmem>>, vector<1x128x256xbf16>
    %77 = vector.shape_cast %76 : vector<1x128x256xbf16> to vector<128x256xbf16>
    %cst_52 = arith.constant dense<0.000000e+00> : vector<128x256xf32>
    %78 = tpu.matmul %75, %77, %cst_52 {dimension_numbers = #tpu.dot_dimension_numbers<[1], [0], [0], [1], [0, 0, 1, 1], [], []>} : vector<128x128xbf16>, vector<128x256xbf16>, vector<128x256xf32> -> vector<128x256xf32>
    %79 = arith.addf %71, %78 : vector<128x256xf32>
    %c6 = arith.constant 6 : index
    %c0_53 = arith.constant 0 : index
    %c0_54 = arith.constant 0 : index
    %80 = vector.load %arg4[%c6, %c0_53, %c0_54] : memref<9x128x176xbf16, #tpu.memory_space<vmem>>, vector<1x128x176xbf16>
    %81 = vector.shape_cast %80 : vector<1x128x176xbf16> to vector<128x176xbf16>
    %cst_55 = arith.constant dense<0.000000e+00> : vector<128x128xf32>
    %82 = tpu.matmul %81, %32, %cst_55 {dimension_numbers = #tpu.dot_dimension_numbers<[1], [0], [0], [1], [0, 0, 1, 1], [], []>} : vector<128x176xbf16>, vector<176x128xbf16>, vector<128x128xf32> -> vector<128x128xf32>
    %83 = arith.truncf %82 : vector<128x128xf32> to vector<128x128xbf16>
    %c6_56 = arith.constant 6 : index
    %c0_57 = arith.constant 0 : index
    %c0_58 = arith.constant 0 : index
    %84 = vector.load %arg5[%c6_56, %c0_57, %c0_58] : memref<9x128x256xbf16, #tpu.memory_space<vmem>>, vector<1x128x256xbf16>
    %85 = vector.shape_cast %84 : vector<1x128x256xbf16> to vector<128x256xbf16>
    %cst_59 = arith.constant dense<0.000000e+00> : vector<128x256xf32>
    %86 = tpu.matmul %83, %85, %cst_59 {dimension_numbers = #tpu.dot_dimension_numbers<[1], [0], [0], [1], [0, 0, 1, 1], [], []>} : vector<128x128xbf16>, vector<128x256xbf16>, vector<128x256xf32> -> vector<128x256xf32>
    %87 = arith.addf %79, %86 : vector<128x256xf32>
    %c7 = arith.constant 7 : index
    %c0_60 = arith.constant 0 : index
    %c0_61 = arith.constant 0 : index
    %88 = vector.load %arg4[%c7, %c0_60, %c0_61] : memref<9x128x176xbf16, #tpu.memory_space<vmem>>, vector<1x128x176xbf16>
    %89 = vector.shape_cast %88 : vector<1x128x176xbf16> to vector<128x176xbf16>
    %cst_62 = arith.constant dense<0.000000e+00> : vector<128x128xf32>
    %90 = tpu.matmul %89, %32, %cst_62 {dimension_numbers = #tpu.dot_dimension_numbers<[1], [0], [0], [1], [0, 0, 1, 1], [], []>} : vector<128x176xbf16>, vector<176x128xbf16>, vector<128x128xf32> -> vector<128x128xf32>
    %91 = arith.truncf %90 : vector<128x128xf32> to vector<128x128xbf16>
    %c7_63 = arith.constant 7 : index
    %c0_64 = arith.constant 0 : index
    %c0_65 = arith.constant 0 : index
    %92 = vector.load %arg5[%c7_63, %c0_64, %c0_65] : memref<9x128x256xbf16, #tpu.memory_space<vmem>>, vector<1x128x256xbf16>
    %93 = vector.shape_cast %92 : vector<1x128x256xbf16> to vector<128x256xbf16>
    %cst_66 = arith.constant dense<0.000000e+00> : vector<128x256xf32>
    %94 = tpu.matmul %91, %93, %cst_66 {dimension_numbers = #tpu.dot_dimension_numbers<[1], [0], [0], [1], [0, 0, 1, 1], [], []>} : vector<128x128xbf16>, vector<128x256xbf16>, vector<128x256xf32> -> vector<128x256xf32>
    %95 = arith.addf %87, %94 : vector<128x256xf32>
    %c8 = arith.constant 8 : index
    %c0_67 = arith.constant 0 : index
    %c0_68 = arith.constant 0 : index
    %96 = vector.load %arg4[%c8, %c0_67, %c0_68] : memref<9x128x176xbf16, #tpu.memory_space<vmem>>, vector<1x128x176xbf16>
    %97 = vector.shape_cast %96 : vector<1x128x176xbf16> to vector<128x176xbf16>
    %cst_69 = arith.constant dense<0.000000e+00> : vector<128x128xf32>
    %98 = tpu.matmul %97, %32, %cst_69 {dimension_numbers = #tpu.dot_dimension_numbers<[1], [0], [0], [1], [0, 0, 1, 1], [], []>} : vector<128x176xbf16>, vector<176x128xbf16>, vector<128x128xf32> -> vector<128x128xf32>
    %99 = arith.truncf %98 : vector<128x128xf32> to vector<128x128xbf16>
    %c8_70 = arith.constant 8 : index
    %c0_71 = arith.constant 0 : index
    %c0_72 = arith.constant 0 : index
    %100 = vector.load %arg5[%c8_70, %c0_71, %c0_72] : memref<9x128x256xbf16, #tpu.memory_space<vmem>>, vector<1x128x256xbf16>
    %101 = vector.shape_cast %100 : vector<1x128x256xbf16> to vector<128x256xbf16>
    %cst_73 = arith.constant dense<0.000000e+00> : vector<128x256xf32>
    %102 = tpu.matmul %99, %101, %cst_73 {dimension_numbers = #tpu.dot_dimension_numbers<[1], [0], [0], [1], [0, 0, 1, 1], [], []>} : vector<128x128xbf16>, vector<128x256xbf16>, vector<128x256xf32> -> vector<128x256xf32>
    %103 = arith.addf %95, %102 : vector<128x256xf32>
    %104 = vector.extract_strided_slice %103 {offsets = [0, 0], sizes = [32, 256], strides = [1, 1]} : vector<128x256xf32> to vector<32x256xf32>
    %105 = vector.extract_strided_slice %103 {offsets = [32, 0], sizes = [32, 256], strides = [1, 1]} : vector<128x256xf32> to vector<32x256xf32>
    %106 = arith.maximumf %104, %105 : vector<32x256xf32>
    %107 = vector.extract_strided_slice %103 {offsets = [64, 0], sizes = [32, 256], strides = [1, 1]} : vector<128x256xf32> to vector<32x256xf32>
    %108 = vector.extract_strided_slice %103 {offsets = [96, 0], sizes = [32, 256], strides = [1, 1]} : vector<128x256xf32> to vector<32x256xf32>
    %109 = arith.maximumf %107, %108 : vector<32x256xf32>
    %110 = arith.maximumf %106, %109 : vector<32x256xf32>
    %c0_74 = arith.constant 0 : index
    %c0_75 = arith.constant 0 : index
    %111 = vector.load %arg6[%c0_74, %c0_75] : memref<1x256xf32, #tpu.memory_space<vmem>>, vector<1x256xf32>
    %112 = vector.broadcast %111 : vector<1x256xf32> to vector<32x256xf32>
    %113 = arith.addf %110, %112 : vector<32x256xf32>
    %cst_76 = arith.constant 0.000000e+00 : f32
    %114 = vector.broadcast %cst_76 : f32 to vector<32x256xf32>
    %115 = arith.maximumf %113, %114 : vector<32x256xf32>
    %116 = arith.truncf %115 : vector<32x256xf32> to vector<32x256xbf16>
    %c0_77 = arith.constant 0 : index
    %c0_78 = arith.constant 0 : index
    %c0_79 = arith.constant 0 : index
    %117 = vector.load %arg7[%c0_77, %c0_78, %c0_79] : memref<9x8x32xbf16, #tpu.memory_space<vmem>>, vector<1x8x32xbf16>
    %118 = vector.shape_cast %117 : vector<1x8x32xbf16> to vector<8x32xbf16>
    %cst_80 = arith.constant dense<0.000000e+00> : vector<8x256xf32>
    %119 = tpu.matmul %118, %116, %cst_80 {dimension_numbers = #tpu.dot_dimension_numbers<[1], [0], [0], [1], [0, 0, 1, 1], [], []>} : vector<8x32xbf16>, vector<32x256xbf16>, vector<8x256xf32> -> vector<8x256xf32>
    %120 = arith.truncf %119 : vector<8x256xf32> to vector<8x256xbf16>
    %c0_81 = arith.constant 0 : index
    %c0_82 = arith.constant 0 : index
    %c0_83 = arith.constant 0 : index
    %121 = vector.load %arg8[%c0_81, %c0_82, %c0_83] : memref<9x256x256xbf16, #tpu.memory_space<vmem>>, vector<1x256x256xbf16>
    %122 = vector.shape_cast %121 : vector<1x256x256xbf16> to vector<256x256xbf16>
    %cst_84 = arith.constant dense<0.000000e+00> : vector<8x256xf32>
    %123 = tpu.matmul %120, %122, %cst_84 {dimension_numbers = #tpu.dot_dimension_numbers<[1], [0], [0], [1], [0, 0, 1, 1], [], []>} : vector<8x256xbf16>, vector<256x256xbf16>, vector<8x256xf32> -> vector<8x256xf32>
    %c1_85 = arith.constant 1 : index
    %c0_86 = arith.constant 0 : index
    %c0_87 = arith.constant 0 : index
    %124 = vector.load %arg7[%c1_85, %c0_86, %c0_87] : memref<9x8x32xbf16, #tpu.memory_space<vmem>>, vector<1x8x32xbf16>
    %125 = vector.shape_cast %124 : vector<1x8x32xbf16> to vector<8x32xbf16>
    %cst_88 = arith.constant dense<0.000000e+00> : vector<8x256xf32>
    %126 = tpu.matmul %125, %116, %cst_88 {dimension_numbers = #tpu.dot_dimension_numbers<[1], [0], [0], [1], [0, 0, 1, 1], [], []>} : vector<8x32xbf16>, vector<32x256xbf16>, vector<8x256xf32> -> vector<8x256xf32>
    %127 = arith.truncf %126 : vector<8x256xf32> to vector<8x256xbf16>
    %c1_89 = arith.constant 1 : index
    %c0_90 = arith.constant 0 : index
    %c0_91 = arith.constant 0 : index
    %128 = vector.load %arg8[%c1_89, %c0_90, %c0_91] : memref<9x256x256xbf16, #tpu.memory_space<vmem>>, vector<1x256x256xbf16>
    %129 = vector.shape_cast %128 : vector<1x256x256xbf16> to vector<256x256xbf16>
    %cst_92 = arith.constant dense<0.000000e+00> : vector<8x256xf32>
    %130 = tpu.matmul %127, %129, %cst_92 {dimension_numbers = #tpu.dot_dimension_numbers<[1], [0], [0], [1], [0, 0, 1, 1], [], []>} : vector<8x256xbf16>, vector<256x256xbf16>, vector<8x256xf32> -> vector<8x256xf32>
    %131 = arith.addf %123, %130 : vector<8x256xf32>
    %c2_93 = arith.constant 2 : index
    %c0_94 = arith.constant 0 : index
    %c0_95 = arith.constant 0 : index
    %132 = vector.load %arg7[%c2_93, %c0_94, %c0_95] : memref<9x8x32xbf16, #tpu.memory_space<vmem>>, vector<1x8x32xbf16>
    %133 = vector.shape_cast %132 : vector<1x8x32xbf16> to vector<8x32xbf16>
    %cst_96 = arith.constant dense<0.000000e+00> : vector<8x256xf32>
    %134 = tpu.matmul %133, %116, %cst_96 {dimension_numbers = #tpu.dot_dimension_numbers<[1], [0], [0], [1], [0, 0, 1, 1], [], []>} : vector<8x32xbf16>, vector<32x256xbf16>, vector<8x256xf32> -> vector<8x256xf32>
    %135 = arith.truncf %134 : vector<8x256xf32> to vector<8x256xbf16>
    %c2_97 = arith.constant 2 : index
    %c0_98 = arith.constant 0 : index
    %c0_99 = arith.constant 0 : index
    %136 = vector.load %arg8[%c2_97, %c0_98, %c0_99] : memref<9x256x256xbf16, #tpu.memory_space<vmem>>, vector<1x256x256xbf16>
    %137 = vector.shape_cast %136 : vector<1x256x256xbf16> to vector<256x256xbf16>
    %cst_100 = arith.constant dense<0.000000e+00> : vector<8x256xf32>
    %138 = tpu.matmul %135, %137, %cst_100 {dimension_numbers = #tpu.dot_dimension_numbers<[1], [0], [0], [1], [0, 0, 1, 1], [], []>} : vector<8x256xbf16>, vector<256x256xbf16>, vector<8x256xf32> -> vector<8x256xf32>
    %139 = arith.addf %131, %138 : vector<8x256xf32>
    %c3_101 = arith.constant 3 : index
    %c0_102 = arith.constant 0 : index
    %c0_103 = arith.constant 0 : index
    %140 = vector.load %arg7[%c3_101, %c0_102, %c0_103] : memref<9x8x32xbf16, #tpu.memory_space<vmem>>, vector<1x8x32xbf16>
    %141 = vector.shape_cast %140 : vector<1x8x32xbf16> to vector<8x32xbf16>
    %cst_104 = arith.constant dense<0.000000e+00> : vector<8x256xf32>
    %142 = tpu.matmul %141, %116, %cst_104 {dimension_numbers = #tpu.dot_dimension_numbers<[1], [0], [0], [1], [0, 0, 1, 1], [], []>} : vector<8x32xbf16>, vector<32x256xbf16>, vector<8x256xf32> -> vector<8x256xf32>
    %143 = arith.truncf %142 : vector<8x256xf32> to vector<8x256xbf16>
    %c3_105 = arith.constant 3 : index
    %c0_106 = arith.constant 0 : index
    %c0_107 = arith.constant 0 : index
    %144 = vector.load %arg8[%c3_105, %c0_106, %c0_107] : memref<9x256x256xbf16, #tpu.memory_space<vmem>>, vector<1x256x256xbf16>
    %145 = vector.shape_cast %144 : vector<1x256x256xbf16> to vector<256x256xbf16>
    %cst_108 = arith.constant dense<0.000000e+00> : vector<8x256xf32>
    %146 = tpu.matmul %143, %145, %cst_108 {dimension_numbers = #tpu.dot_dimension_numbers<[1], [0], [0], [1], [0, 0, 1, 1], [], []>} : vector<8x256xbf16>, vector<256x256xbf16>, vector<8x256xf32> -> vector<8x256xf32>
    %147 = arith.addf %139, %146 : vector<8x256xf32>
    %c4_109 = arith.constant 4 : index
    %c0_110 = arith.constant 0 : index
    %c0_111 = arith.constant 0 : index
    %148 = vector.load %arg7[%c4_109, %c0_110, %c0_111] : memref<9x8x32xbf16, #tpu.memory_space<vmem>>, vector<1x8x32xbf16>
    %149 = vector.shape_cast %148 : vector<1x8x32xbf16> to vector<8x32xbf16>
    %cst_112 = arith.constant dense<0.000000e+00> : vector<8x256xf32>
    %150 = tpu.matmul %149, %116, %cst_112 {dimension_numbers = #tpu.dot_dimension_numbers<[1], [0], [0], [1], [0, 0, 1, 1], [], []>} : vector<8x32xbf16>, vector<32x256xbf16>, vector<8x256xf32> -> vector<8x256xf32>
    %151 = arith.truncf %150 : vector<8x256xf32> to vector<8x256xbf16>
    %c4_113 = arith.constant 4 : index
    %c0_114 = arith.constant 0 : index
    %c0_115 = arith.constant 0 : index
    %152 = vector.load %arg8[%c4_113, %c0_114, %c0_115] : memref<9x256x256xbf16, #tpu.memory_space<vmem>>, vector<1x256x256xbf16>
    %153 = vector.shape_cast %152 : vector<1x256x256xbf16> to vector<256x256xbf16>
    %cst_116 = arith.constant dense<0.000000e+00> : vector<8x256xf32>
    %154 = tpu.matmul %151, %153, %cst_116 {dimension_numbers = #tpu.dot_dimension_numbers<[1], [0], [0], [1], [0, 0, 1, 1], [], []>} : vector<8x256xbf16>, vector<256x256xbf16>, vector<8x256xf32> -> vector<8x256xf32>
    %155 = arith.addf %147, %154 : vector<8x256xf32>
    %c5_117 = arith.constant 5 : index
    %c0_118 = arith.constant 0 : index
    %c0_119 = arith.constant 0 : index
    %156 = vector.load %arg7[%c5_117, %c0_118, %c0_119] : memref<9x8x32xbf16, #tpu.memory_space<vmem>>, vector<1x8x32xbf16>
    %157 = vector.shape_cast %156 : vector<1x8x32xbf16> to vector<8x32xbf16>
    %cst_120 = arith.constant dense<0.000000e+00> : vector<8x256xf32>
    %158 = tpu.matmul %157, %116, %cst_120 {dimension_numbers = #tpu.dot_dimension_numbers<[1], [0], [0], [1], [0, 0, 1, 1], [], []>} : vector<8x32xbf16>, vector<32x256xbf16>, vector<8x256xf32> -> vector<8x256xf32>
    %159 = arith.truncf %158 : vector<8x256xf32> to vector<8x256xbf16>
    %c5_121 = arith.constant 5 : index
    %c0_122 = arith.constant 0 : index
    %c0_123 = arith.constant 0 : index
    %160 = vector.load %arg8[%c5_121, %c0_122, %c0_123] : memref<9x256x256xbf16, #tpu.memory_space<vmem>>, vector<1x256x256xbf16>
    %161 = vector.shape_cast %160 : vector<1x256x256xbf16> to vector<256x256xbf16>
    %cst_124 = arith.constant dense<0.000000e+00> : vector<8x256xf32>
    %162 = tpu.matmul %159, %161, %cst_124 {dimension_numbers = #tpu.dot_dimension_numbers<[1], [0], [0], [1], [0, 0, 1, 1], [], []>} : vector<8x256xbf16>, vector<256x256xbf16>, vector<8x256xf32> -> vector<8x256xf32>
    %163 = arith.addf %155, %162 : vector<8x256xf32>
    %c6_125 = arith.constant 6 : index
    %c0_126 = arith.constant 0 : index
    %c0_127 = arith.constant 0 : index
    %164 = vector.load %arg7[%c6_125, %c0_126, %c0_127] : memref<9x8x32xbf16, #tpu.memory_space<vmem>>, vector<1x8x32xbf16>
    %165 = vector.shape_cast %164 : vector<1x8x32xbf16> to vector<8x32xbf16>
    %cst_128 = arith.constant dense<0.000000e+00> : vector<8x256xf32>
    %166 = tpu.matmul %165, %116, %cst_128 {dimension_numbers = #tpu.dot_dimension_numbers<[1], [0], [0], [1], [0, 0, 1, 1], [], []>} : vector<8x32xbf16>, vector<32x256xbf16>, vector<8x256xf32> -> vector<8x256xf32>
    %167 = arith.truncf %166 : vector<8x256xf32> to vector<8x256xbf16>
    %c6_129 = arith.constant 6 : index
    %c0_130 = arith.constant 0 : index
    %c0_131 = arith.constant 0 : index
    %168 = vector.load %arg8[%c6_129, %c0_130, %c0_131] : memref<9x256x256xbf16, #tpu.memory_space<vmem>>, vector<1x256x256xbf16>
    %169 = vector.shape_cast %168 : vector<1x256x256xbf16> to vector<256x256xbf16>
    %cst_132 = arith.constant dense<0.000000e+00> : vector<8x256xf32>
    %170 = tpu.matmul %167, %169, %cst_132 {dimension_numbers = #tpu.dot_dimension_numbers<[1], [0], [0], [1], [0, 0, 1, 1], [], []>} : vector<8x256xbf16>, vector<256x256xbf16>, vector<8x256xf32> -> vector<8x256xf32>
    %171 = arith.addf %163, %170 : vector<8x256xf32>
    %c7_133 = arith.constant 7 : index
    %c0_134 = arith.constant 0 : index
    %c0_135 = arith.constant 0 : index
    %172 = vector.load %arg7[%c7_133, %c0_134, %c0_135] : memref<9x8x32xbf16, #tpu.memory_space<vmem>>, vector<1x8x32xbf16>
    %173 = vector.shape_cast %172 : vector<1x8x32xbf16> to vector<8x32xbf16>
    %cst_136 = arith.constant dense<0.000000e+00> : vector<8x256xf32>
    %174 = tpu.matmul %173, %116, %cst_136 {dimension_numbers = #tpu.dot_dimension_numbers<[1], [0], [0], [1], [0, 0, 1, 1], [], []>} : vector<8x32xbf16>, vector<32x256xbf16>, vector<8x256xf32> -> vector<8x256xf32>
    %175 = arith.truncf %174 : vector<8x256xf32> to vector<8x256xbf16>
    %c7_137 = arith.constant 7 : index
    %c0_138 = arith.constant 0 : index
    %c0_139 = arith.constant 0 : index
    %176 = vector.load %arg8[%c7_137, %c0_138, %c0_139] : memref<9x256x256xbf16, #tpu.memory_space<vmem>>, vector<1x256x256xbf16>
    %177 = vector.shape_cast %176 : vector<1x256x256xbf16> to vector<256x256xbf16>
    %cst_140 = arith.constant dense<0.000000e+00> : vector<8x256xf32>
    %178 = tpu.matmul %175, %177, %cst_140 {dimension_numbers = #tpu.dot_dimension_numbers<[1], [0], [0], [1], [0, 0, 1, 1], [], []>} : vector<8x256xbf16>, vector<256x256xbf16>, vector<8x256xf32> -> vector<8x256xf32>
    %179 = arith.addf %171, %178 : vector<8x256xf32>
    %c8_141 = arith.constant 8 : index
    %c0_142 = arith.constant 0 : index
    %c0_143 = arith.constant 0 : index
    %180 = vector.load %arg7[%c8_141, %c0_142, %c0_143] : memref<9x8x32xbf16, #tpu.memory_space<vmem>>, vector<1x8x32xbf16>
    %181 = vector.shape_cast %180 : vector<1x8x32xbf16> to vector<8x32xbf16>
    %cst_144 = arith.constant dense<0.000000e+00> : vector<8x256xf32>
    %182 = tpu.matmul %181, %116, %cst_144 {dimension_numbers = #tpu.dot_dimension_numbers<[1], [0], [0], [1], [0, 0, 1, 1], [], []>} : vector<8x32xbf16>, vector<32x256xbf16>, vector<8x256xf32> -> vector<8x256xf32>
    %183 = arith.truncf %182 : vector<8x256xf32> to vector<8x256xbf16>
    %c8_145 = arith.constant 8 : index
    %c0_146 = arith.constant 0 : index
    %c0_147 = arith.constant 0 : index
    %184 = vector.load %arg8[%c8_145, %c0_146, %c0_147] : memref<9x256x256xbf16, #tpu.memory_space<vmem>>, vector<1x256x256xbf16>
    %185 = vector.shape_cast %184 : vector<1x256x256xbf16> to vector<256x256xbf16>
    %cst_148 = arith.constant dense<0.000000e+00> : vector<8x256xf32>
    %186 = tpu.matmul %183, %185, %cst_148 {dimension_numbers = #tpu.dot_dimension_numbers<[1], [0], [0], [1], [0, 0, 1, 1], [], []>} : vector<8x256xbf16>, vector<256x256xbf16>, vector<8x256xf32> -> vector<8x256xf32>
    %187 = arith.addf %179, %186 : vector<8x256xf32>
    %cst_149 = arith.constant dense<0xFF800000> : vector<256xf32>
    %188 = vector.multi_reduction <maximumf>, %187, %cst_149 [0] : vector<8x256xf32> to vector<256xf32>
    %189 = vector.shape_cast %188 : vector<256xf32> to vector<1x256xf32>
    %c0_150 = arith.constant 0 : index
    %c0_151 = arith.constant 0 : index
    %190 = vector.load %arg9[%c0_150, %c0_151] : memref<1x256xf32, #tpu.memory_space<vmem>>, vector<1x256xf32>
    %191 = arith.addf %189, %190 : vector<1x256xf32>
    %cst_152 = arith.constant 0.000000e+00 : f32
    %192 = vector.broadcast %cst_152 : f32 to vector<1x256xf32>
    %193 = arith.maximumf %191, %192 : vector<1x256xf32>
    %194 = arith.truncf %193 : vector<1x256xf32> to vector<1x256xbf16>
    %c0_153 = arith.constant 0 : index
    %c0_154 = arith.constant 0 : index
    %195 = vector.load %arg10[%c0_153, %c0_154] : memref<256x128xbf16, #tpu.memory_space<vmem>>, vector<256x128xbf16>
    %cst_155 = arith.constant dense<0.000000e+00> : vector<1x128xf32>
    %196 = tpu.matmul %194, %195, %cst_155 {dimension_numbers = #tpu.dot_dimension_numbers<[1], [0], [0], [1], [0, 0, 1, 1], [], []>} : vector<1x256xbf16>, vector<256x128xbf16>, vector<1x128xf32> -> vector<1x128xf32>
    %c0_156 = arith.constant 0 : index
    %c0_157 = arith.constant 0 : index
    %197 = vector.load %arg11[%c0_156, %c0_157] : memref<1x128xf32, #tpu.memory_space<vmem>>, vector<1x128xf32>
    %198 = arith.addf %196, %197 : vector<1x128xf32>
    %c0_158 = arith.constant 0 : index
    %c0_159 = arith.constant 0 : index
    %c0_160 = arith.constant 0 : index
    %199 = vector.load %arg12[%c0_158, %c0_159, %c0_160] : memref<1x1x128xf32, #tpu.memory_space<vmem>>, vector<1x1x128xf32>
    %200 = vector.shape_cast %199 : vector<1x1x128xf32> to vector<1x128xf32>
    %201 = vector.shape_cast %198 : vector<1x128xf32> to vector<1x1x128xf32>
    tpu.vector_store %arg12[%c0_158, %c0_159, %c0_160], %201 {strides = array<i32>} : memref<1x1x128xf32, #tpu.memory_space<vmem>>, vector<1x1x128xf32>,
    return
  }
  func.func @transform_0(%arg0: i32) -> (i32, i32, i32) {
    %c0_i32 = arith.constant 0 : i32
    %c0_i32_0 = arith.constant 0 : i32
    %c0_i32_1 = arith.constant 0 : i32
    return %arg0, %c0_i32, %c0_i32_0 : i32, i32, i32
  }
  func.func @transform_1(%arg0: i32) -> (i32, i32) {
    %c0_i32 = arith.constant 0 : i32
    %c0_i32_0 = arith.constant 0 : i32
    %c0_i32_1 = arith.constant 0 : i32
    return %c0_i32, %c0_i32_0 : i32, i32
  }
  func.func @transform_2(%arg0: i32) -> (i32, i32) {
    %c0_i32 = arith.constant 0 : i32
    %c0_i32_0 = arith.constant 0 : i32
    %c0_i32_1 = arith.constant 0 : i32
    return %c0_i32, %c0_i32_0 : i32, i32
  }
  func.func @transform_3(%arg0: i32) -> (i32, i32, i32) {
    %c0_i32 = arith.constant 0 : i32
    %c0_i32_0 = arith.constant 0 : i32
    %c0_i32_1 = arith.constant 0 : i32
    %c0_i32_2 = arith.constant 0 : i32
    return %c0_i32, %c0_i32_0, %c0_i32_1 : i32, i32, i32
  }
  func.func @transform_4(%arg0: i32) -> (i32, i32, i32) {
    %c0_i32 = arith.constant 0 : i32
    %c0_i32_0 = arith.constant 0 : i32
    %c0_i32_1 = arith.constant 0 : i32
    %c0_i32_2 = arith.constant 0 : i32
    return %c0_i32, %c0_i32_0, %c0_i32_1 : i32, i32, i32
  }
  func.func @transform_5(%arg0: i32) -> (i32, i32) {
    %c0_i32 = arith.constant 0 : i32
    %c0_i32_0 = arith.constant 0 : i32
    %c0_i32_1 = arith.constant 0 : i32
    return %c0_i32, %c0_i32_0 : i32, i32
  }
  func.func @transform_6(%arg0: i32) -> (i32, i32, i32) {
    %c0_i32 = arith.constant 0 : i32
    %c0_i32_0 = arith.constant 0 : i32
    %c0_i32_1 = arith.constant 0 : i32
    %c0_i32_2 = arith.constant 0 : i32
    return %c0_i32, %c0_i32_0, %c0_i32_1 : i32, i32, i32
  }
  func.func @transform_7(%arg0: i32) -> (i32, i32, i32) {
    %c0_i32 = arith.constant 0 : i32
    %c0_i32_0 = arith.constant 0 : i32
    %c0_i32_1 = arith.constant 0 : i32
    %c0_i32_2 = arith.constant 0 : i32
    return %c0_i32, %c0_i32_0, %c0_i32_1 : i32, i32, i32
  }
  func.func @transform_8(%arg0: i32) -> (i32, i32) {
    %c0_i32 = arith.constant 0 : i32
    %c0_i32_0 = arith.constant 0 : i32
    %c0_i32_1 = arith.constant 0 : i32
    return %c0_i32, %c0_i32_0 : i32, i32
  }
  func.func @transform_9(%arg0: i32) -> (i32, i32) {
    %c0_i32 = arith.constant 0 : i32
    %c0_i32_0 = arith.constant 0 : i32
    %c0_i32_1 = arith.constant 0 : i32
    return %c0_i32, %c0_i32_0 : i32, i32
  }
  func.func @transform_10(%arg0: i32) -> (i32, i32) {
    %c0_i32 = arith.constant 0 : i32
    %c0_i32_0 = arith.constant 0 : i32
    %c0_i32_1 = arith.constant 0 : i32
    return %c0_i32, %c0_i32_0 : i32, i32
  }
  func.func @transform_11(%arg0: i32) -> (i32, i32, i32) {
    %c0_i32 = arith.constant 0 : i32
    %c0_i32_0 = arith.constant 0 : i32
    %c0_i32_1 = arith.constant 0 : i32
    return %arg0, %c0_i32, %c0_i32_0 : i32, i32, i32
  }
}

</mosaic_0001>

<llo_original>
// kernel: squeeze.1
$region0: #{squeeze.1}
  %s0 = inlined_call_operand.vmem [shape: f32[13,28,28], index: 0, kind: input, shape index: {}]
  %s1 = inlined_call_operand.vmem [shape: f32[13,784], index: 1, kind: output, shape index: {}]
  %v2 = vld [vmem:[%s0] sm:$0x1]
  %s3 = scalar_lea.vmem %s0, 31
  %v4 = vld [vmem:[%s3] sm:$0x2]
  %vm5 = vcmask 1041409
  %v6 = vsel %vm5, %v4, %v2
  %s7 = scalar_lea.vmem %s0, 62
  %v8 = vld [vmem:[%s7] sm:$0x4]
  %vm9 = vcmask 1042434
  %v10 = vsel %vm9, %v8, %v6
  %s11 = scalar_lea.vmem %s0, 93
  %v12 = vld [vmem:[%s11] sm:$0x8]
  %vm13 = vcmask 1043459
  %v14 = vsel %vm13, %v12, %v10
  %s15 = scalar_lea.vmem %s0, 124
  %v16 = vld [vmem:[%s15] sm:$0x10]
  %vm17 = vcmask 1044484
  %v18 = vsel %vm17, %v16, %v14
  %s19 = scalar_lea.vmem %s0, 155
  %v20 = vld [vmem:[%s19] sm:$0x20]
  %vm21 = vcmask 1045509
  %v22 = vsel %vm21, %v20, %v18
  %s23 = scalar_lea.vmem %s0, 186
  %v24 = vld [vmem:[%s23] sm:$0x40]
  %vm25 = vcmask 1046534
  %v26 = vsel %vm25, %v24, %v22
  %s27 = scalar_lea.vmem %s0, 217
  %v28 = vld [vmem:[%s27] sm:$0x80]
  %vm29 = vcmask 1047559
  %v30 = vsel %vm29, %v28, %v26
  %vm31 = vcmask 228352
  %32 = vst.msk [vmem:[%s1] sm:$0xff] %vm31, %v30
  %s33 = scalar_lea.vmem %s0, 256
  %v34 = vld [vmem:[%s33] sm:$0x1]
  %s35 = scalar_lea.vmem %s0, 287
  %v36 = vld [vmem:[%s35] sm:$0x2]
  %vm37 = vcmask 1041409
  %v38 = vsel %vm37, %v36, %v34
  %s39 = scalar_lea.vmem %s0, 318
  %v40 = vld [vmem:[%s39] sm:$0x4]
  %vm41 = vcmask 1042434
  %v42 = vsel %vm41, %v40, %v38
  %s43 = scalar_lea.vmem %s0, 349
  %v44 = vld [vmem:[%s43] sm:$0x8]
  %vm45 = vcmask 1043459
  %v46 = vsel %vm45, %v44, %v42
  %s47 = scalar_lea.vmem %s0, 380
  %v48 = vld [vmem:[%s47] sm:$0x10]
  %vm49 = vcmask 1044484
  %v50 = vsel %vm49, %v48, %v46
  %vm51 = vcmask 228352
  %s52 = scalar_lea.vmem %s1, 56
  %53 = vst.msk [vmem:[%s52] sm:$0x1f] %vm51, %v50
  %s54 = scalar_lea.vmem %s0, 265
  %v55 = vld [vmem:[%s54] sm:$0x1]
  %s56 = scalar_lea.vmem %s0, 296
  %v57 = vld [vmem:[%s56] sm:$0x2]
  %vm58 = vcmask 1041409
  %v59 = vsel %vm58, %v57, %v55
  %s60 = scalar_lea.vmem %s0, 327
  %v61 = vld [vmem:[%s60] sm:$0x4]
  %vm62 = vcmask 1042434
  %v63 = vsel %vm62, %v61, %v59
  %s64 = scalar_lea.vmem %s0, 358
  %v65 = vld [vmem:[%s64] sm:$0x8]
  %vm66 = vcmask 1043459
  %v67 = vsel %vm66, %v65, %v63
  %s68 = scalar_lea.vmem %s0, 389
  %v69 = vld [vmem:[%s68] sm:$0x10]
  %vm70 = vcmask 1044484
  %v71 = vsel %vm70, %v69, %v67
  %s72 = scalar_lea.vmem %s0, 4
  %v73 = vld [vmem:[%s72] sm:$0x20]
  %vm74 = vcmask 1045509
  %v75 = vsel %vm74, %v73, %v71
  %s76 = scalar_lea.vmem %s0, 35
  %v77 = vld [vmem:[%s76] sm:$0x40]
  %vm78 = vcmask 1046534
  %v79 = vsel %vm78, %v77, %v75
  %s80 = scalar_lea.vmem %s0, 66
  %v81 = vld [vmem:[%s80] sm:$0x80]
  %vm82 = vcmask 1047559
  %v83 = vsel %vm82, %v81, %v79
  %84 = vrot.lane.b32.xlu0 %v83, 124
  %v85 = vpop.permute.xlu0 %84
  %vm86 = vcmask 195584
  %s87 = scalar_lea.vmem %s1, 72
  %88 = vst.msk [vmem:[%s87] sm:$0x1f] %vm86, %v85
  %s89 = scalar_lea.vmem %s1, 11
  %90 = vst.msk [vmem:[%s89] sm:$0xe0] %vm86, %v85
  %s91 = scalar_lea.vmem %s0, 265
  %v92 = vld [vmem:[%s91] sm:$0x1]
  %s93 = scalar_lea.vmem %s0, 296
  %v94 = vld [vmem:[%s93] sm:$0x2]
  %vm95 = vcmask 1041409
  %v96 = vsel %vm95, %v94, %v92
  %s97 = scalar_lea.vmem %s0, 327
  %v98 = vld [vmem:[%s97] sm:$0x4]
  %vm99 = vcmask 1042434
  %v100 = vsel %vm99, %v98, %v96
  %s101 = scalar_lea.vmem %s0, 358
  %v102 = vld [vmem:[%s101] sm:$0x8]
  %vm103 = vcmask 1043459
  %v104 = vsel %vm103, %v102, %v100
  %s105 = scalar_lea.vmem %s0, 389
  %v106 = vld [vmem:[%s105] sm:$0x10]
  %vm107 = vcmask 1044484
  %v108 = vsel %vm107, %v106, %v104
  %s109 = scalar_lea.vmem %s0, 4
  %v110 = vld [vmem:[%s109] sm:$0x20]
  %vm111 = vcmask 1045509
  %v112 = vsel %vm111, %v110, %v108
  %s113 = scalar_lea.vmem %s0, 35
  %v114 = vld [vmem:[%s113] sm:$0x40]
  %vm115 = vcmask 1046534
  %v116 = vsel %vm115, %v114, %v112
  %s117 = scalar_lea.vmem %s0, 66
  %v118 = vld [vmem:[%s117] sm:$0x80]
  %vm119 = vcmask 1047559
  %v120 = vsel %vm119, %v118, %v116
  %121 = vrot.lane.b32.xlu0 %v120, 124
  %v122 = vpop.permute.xlu0 %121
  %vm123 = vcmask 1048544
  %s124 = scalar_lea.vmem %s1, 64
  %125 = vst.msk [vmem:[%s124] sm:$0x1f] %vm123, %v122
  %s126 = scalar_lea.vmem %s1, 3
  %127 = vst.msk [vmem:[%s126] sm:$0xe0] %vm123, %v122
  %s128 = scalar_lea.vmem %s0, 105
  %v129 = vld [vmem:[%s128] sm:$0x1]
  %s130 = scalar_lea.vmem %s0, 136
  %v131 = vld [vmem:[%s130] sm:$0x2]
  %vm132 = vcmask 1041409
  %v133 = vsel %vm132, %v131, %v129
  %s134 = scalar_lea.vmem %s0, 167
  %v135 = vld [vmem:[%s134] sm:$0x4]
  %vm136 = vcmask 1042434
  %v137 = vsel %vm136, %v135, %v133
  %s138 = scalar_lea.vmem %s0, 198
  %v139 = vld [vmem:[%s138] sm:$0x8]
  %vm140 = vcmask 1043459
  %v141 = vsel %vm140, %v139, %v137
  %s142 = scalar_lea.vmem %s0, 229
  %v143 = vld [vmem:[%s142] sm:$0x10]
  %vm144 = vcmask 1044484
  %v145 = vsel %vm144, %v143, %v141
  %s146 = scalar_lea.vmem %s0, 105
  %v147 = vld [vmem:[%s146] sm:$0x1]
  %s148 = scalar_lea.vmem %s0, 136
  %v149 = vld [vmem:[%s148] sm:$0x2]
  %vm150 = vcmask 1041409
  %v151 = vsel %vm150, %v149, %v147
  %s152 = scalar_lea.vmem %s0, 167
  %v153 = vld [vmem:[%s152] sm:$0x4]
  %vm154 = vcmask 1042434
  %v155 = vsel %vm154, %v153, %v151
  %s156 = scalar_lea.vmem %s0, 198
  %v157 = vld [vmem:[%s156] sm:$0x8]
  %vm158 = vcmask 1043459
  %v159 = vsel %vm158, %v157, %v155
  %s160 = scalar_lea.vmem %s0, 229
  %v161 = vld [vmem:[%s160] sm:$0x10]
  %vm162 = vcmask 1044484
  %v163 = vsel %vm162, %v161, %v159
  %vm164 = vcmask 31744
  %v165 = vsel %vm164, %v163, %v145
  %166 = vrot.lane.b32.xlu0 %v165, 124
  %v167 = vpop.permute.xlu0 %166
  %vm168 = vcmask 195584
  %s169 = scalar_lea.vmem %s1, 19
  %170 = vst.msk [vmem:[%s169] sm:$0x1f] %vm168, %v167
  %vm171 = vcmask 1048544
  %s172 = scalar_lea.vmem %s1, 11
  %173 = vst.msk [vmem:[%s172] sm:$0x1f] %vm171, %v167
  %s174 = scalar_lea.vmem %s0, 18
  %v175 = vld [vmem:[%s174] sm:$0x1]
  %s176 = scalar_lea.vmem %s0, 49
  %v177 = vld [vmem:[%s176] sm:$0x2]
  %vm178 = vcmask 1041409
  %v179 = vsel %vm178, %v177, %v175
  %s180 = scalar_lea.vmem %s0, 80
  %v181 = vld [vmem:[%s180] sm:$0x4]
  %vm182 = vcmask 1042434
  %v183 = vsel %vm182, %v181, %v179
  %s184 = scalar_lea.vmem %s0, 111
  %v185 = vld [vmem:[%s184] sm:$0x8]
  %vm186 = vcmask 1043459
  %v187 = vsel %vm186, %v185, %v183
  %s188 = scalar_lea.vmem %s0, 142
  %v189 = vld [vmem:[%s188] sm:$0x10]
  %vm190 = vcmask 1044484
  %v191 = vsel %vm190, %v189, %v187
  %s192 = scalar_lea.vmem %s0, 173
  %v193 = vld [vmem:[%s192] sm:$0x20]
  %vm194 = vcmask 1045509
  %v195 = vsel %vm194, %v193, %v191
  %s196 = scalar_lea.vmem %s0, 204
  %v197 = vld [vmem:[%s196] sm:$0x40]
  %vm198 = vcmask 1046534
  %v199 = vsel %vm198, %v197, %v195
  %s200 = scalar_lea.vmem %s0, 235
  %v201 = vld [vmem:[%s200] sm:$0x80]
  %vm202 = vcmask 1047559
  %v203 = vsel %vm202, %v201, %v199
  %204 = vrot.lane.b32.xlu0 %v203, 120
  %v205 = vpop.permute.xlu0 %204
  %vm206 = vcmask 162816
  %s207 = scalar_lea.vmem %s1, 32
  %208 = vst.msk [vmem:[%s207] sm:$0xff] %vm206, %v205
  %s209 = scalar_lea.vmem %s0, 274
  %v210 = vld [vmem:[%s209] sm:$0x1]
  %s211 = scalar_lea.vmem %s0, 305
  %v212 = vld [vmem:[%s211] sm:$0x2]
  %vm213 = vcmask 1041409
  %v214 = vsel %vm213, %v212, %v210
  %s215 = scalar_lea.vmem %s0, 336
  %v216 = vld [vmem:[%s215] sm:$0x4]
  %vm217 = vcmask 1042434
  %v218 = vsel %vm217, %v216, %v214
  %s219 = scalar_lea.vmem %s0, 367
  %v220 = vld [vmem:[%s219] sm:$0x8]
  %vm221 = vcmask 1043459
  %v222 = vsel %vm221, %v220, %v218
  %s223 = scalar_lea.vmem %s0, 398
  %v224 = vld [vmem:[%s223] sm:$0x10]
  %vm225 = vcmask 1044484
  %v226 = vsel %vm225, %v224, %v222
  %s227 = scalar_lea.vmem %s0, 13
  %v228 = vld [vmem:[%s227] sm:$0x20]
  %vm229 = vcmask 1045509
  %v230 = vsel %vm229, %v228, %v226
  %s231 = scalar_lea.vmem %s0, 44
  %v232 = vld [vmem:[%s231] sm:$0x40]
  %vm233 = vcmask 1046534
  %v234 = vsel %vm233, %v232, %v230
  %s235 = scalar_lea.vmem %s0, 75
  %v236 = vld [vmem:[%s235] sm:$0x80]
  %vm237 = vcmask 1047559
  %v238 = vsel %vm237, %v236, %v234
  %239 = vrot.lane.b32.xlu0 %v238, 120
  %v240 = vpop.permute.xlu0 %239
  %vm241 = vcmask 1048512
  %s242 = scalar_lea.vmem %s1, 80
  %243 = vst.msk [vmem:[%s242] sm:$0x1f] %vm241, %v240
  %s244 = scalar_lea.vmem %s1, 19
  %245 = vst.msk [vmem:[%s244] sm:$0xe0] %vm241, %v240
  %s246 = scalar_lea.vmem %s0, 274
  %v247 = vld [vmem:[%s246] sm:$0x1]
  %s248 = scalar_lea.vmem %s0, 305
  %v249 = vld [vmem:[%s248] sm:$0x2]
  %vm250 = vcmask 1041409
  %v251 = vsel %vm250, %v249, %v247
  %s252 = scalar_lea.vmem %s0, 336
  %v253 = vld [vmem:[%s252] sm:$0x4]
  %vm254 = vcmask 1042434
  %v255 = vsel %vm254, %v253, %v251
  %s256 = scalar_lea.vmem %s0, 367
  %v257 = vld [vmem:[%s256] sm:$0x8]
  %vm258 = vcmask 1043459
  %v259 = vsel %vm258, %v257, %v255
  %s260 = scalar_lea.vmem %s0, 398
  %v261 = vld [vmem:[%s260] sm:$0x10]
  %vm262 = vcmask 1044484
  %v263 = vsel %vm262, %v261, %v259
  %s264 = scalar_lea.vmem %s0, 114
  %v265 = vld [vmem:[%s264] sm:$0x1]
  %s266 = scalar_lea.vmem %s0, 145
  %v267 = vld [vmem:[%s266] sm:$0x2]
  %vm268 = vcmask 1041409
  %v269 = vsel %vm268, %v267, %v265
  %s270 = scalar_lea.vmem %s0, 176
  %v271 = vld [vmem:[%s270] sm:$0x4]
  %vm272 = vcmask 1042434
  %v273 = vsel %vm272, %v271, %v269
  %s274 = scalar_lea.vmem %s0, 207
  %v275 = vld [vmem:[%s274] sm:$0x8]
  %vm276 = vcmask 1043459
  %v277 = vsel %vm276, %v275, %v273
  %s278 = scalar_lea.vmem %s0, 238
  %v279 = vld [vmem:[%s278] sm:$0x10]
  %vm280 = vcmask 1044484
  %v281 = vsel %vm280, %v279, %v277
  %vm282 = vcmask 64512
  %v283 = vsel %vm282, %v281, %v263
  %284 = vrot.lane.b32.xlu0 %v283, 120
  %v285 = vpop.permute.xlu0 %284
  %vm286 = vcmask 162816
  %s287 = scalar_lea.vmem %s1, 88
  %288 = vst.msk [vmem:[%s287] sm:$0x1f] %vm286, %v285
  %vm289 = vcmask 1048512
  %s290 = scalar_lea.vmem %s1, 27
  %291 = vst.msk [vmem:[%s290] sm:$0x1f] %vm289, %v285
  %s292 = scalar_lea.vmem %s0, 283
  %v293 = vld [vmem:[%s292] sm:$0x1]
  %s294 = scalar_lea.vmem %s0, 314
  %v295 = vld [vmem:[%s294] sm:$0x2]
  %vm296 = vcmask 1041409
  %v297 = vsel %vm296, %v295, %v293
  %s298 = scalar_lea.vmem %s0, 345
  %v299 = vld [vmem:[%s298] sm:$0x4]
  %vm300 = vcmask 1042434
  %v301 = vsel %vm300, %v299, %v297
  %s302 = scalar_lea.vmem %s0, 376
  %v303 = vld [vmem:[%s302] sm:$0x8]
  %vm304 = vcmask 1043459
  %v305 = vsel %vm304, %v303, %v301
  %s306 = scalar_lea.vmem %s0, 407
  %v307 = vld [vmem:[%s306] sm:$0x10]
  %vm308 = vcmask 1044484
  %v309 = vsel %vm308, %v307, %v305
  %s310 = scalar_lea.vmem %s0, 22
  %v311 = vld [vmem:[%s310] sm:$0x20]
  %vm312 = vcmask 1045509
  %v313 = vsel %vm312, %v311, %v309
  %s314 = scalar_lea.vmem %s0, 53
  %v315 = vld [vmem:[%s314] sm:$0x40]
  %vm316 = vcmask 1046534
  %v317 = vsel %vm316, %v315, %v313
  %s318 = scalar_lea.vmem %s0, 84
  %v319 = vld [vmem:[%s318] sm:$0x80]
  %vm320 = vcmask 1047559
  %v321 = vsel %vm320, %v319, %v317
  %322 = vrot.lane.b32.xlu0 %v321, 116
  %v323 = vpop.permute.xlu0 %322
  %vm324 = vcmask 130048
  %s325 = scalar_lea.vmem %s1, 104
  %326 = vst.msk [vmem:[%s325] sm:$0x1f] %vm324, %v323
  %s327 = scalar_lea.vmem %s1, 43
  %328 = vst.msk [vmem:[%s327] sm:$0xe0] %vm324, %v323
  %s329 = scalar_lea.vmem %s0, 283
  %v330 = vld [vmem:[%s329] sm:$0x1]
  %s331 = scalar_lea.vmem %s0, 314
  %v332 = vld [vmem:[%s331] sm:$0x2]
  %vm333 = vcmask 1041409
  %v334 = vsel %vm333, %v332, %v330
  %s335 = scalar_lea.vmem %s0, 345
  %v336 = vld [vmem:[%s335] sm:$0x4]
  %vm337 = vcmask 1042434
  %v338 = vsel %vm337, %v336, %v334
  %s339 = scalar_lea.vmem %s0, 376
  %v340 = vld [vmem:[%s339] sm:$0x8]
  %vm341 = vcmask 1043459
  %v342 = vsel %vm341, %v340, %v338
  %s343 = scalar_lea.vmem %s0, 407
  %v344 = vld [vmem:[%s343] sm:$0x10]
  %vm345 = vcmask 1044484
  %v346 = vsel %vm345, %v344, %v342
  %s347 = scalar_lea.vmem %s0, 22
  %v348 = vld [vmem:[%s347] sm:$0x20]
  %vm349 = vcmask 1045509
  %v350 = vsel %vm349, %v348, %v346
  %s351 = scalar_lea.vmem %s0, 53
  %v352 = vld [vmem:[%s351] sm:$0x40]
  %vm353 = vcmask 1046534
  %v354 = vsel %vm353, %v352, %v350
  %s355 = scalar_lea.vmem %s0, 84
  %v356 = vld [vmem:[%s355] sm:$0x80]
  %vm357 = vcmask 1047559
  %v358 = vsel %vm357, %v356, %v354
  %359 = vrot.lane.b32.xlu0 %v358, 116
  %v360 = vpop.permute.xlu0 %359
  %vm361 = vcmask 1048480
  %s362 = scalar_lea.vmem %s1, 96
  %363 = vst.msk [vmem:[%s362] sm:$0x1f] %vm361, %v360
  %s364 = scalar_lea.vmem %s1, 35
  %365 = vst.msk [vmem:[%s364] sm:$0xe0] %vm361, %v360
  %s366 = scalar_lea.vmem %s0, 123
  %v367 = vld [vmem:[%s366] sm:$0x1]
  %s368 = scalar_lea.vmem %s0, 154
  %v369 = vld [vmem:[%s368] sm:$0x2]
  %vm370 = vcmask 1041409
  %v371 = vsel %vm370, %v369, %v367
  %s372 = scalar_lea.vmem %s0, 185
  %v373 = vld [vmem:[%s372] sm:$0x4]
  %vm374 = vcmask 1042434
  %v375 = vsel %vm374, %v373, %v371
  %s376 = scalar_lea.vmem %s0, 216
  %v377 = vld [vmem:[%s376] sm:$0x8]
  %vm378 = vcmask 1043459
  %v379 = vsel %vm378, %v377, %v375
  %s380 = scalar_lea.vmem %s0, 247
  %v381 = vld [vmem:[%s380] sm:$0x10]
  %vm382 = vcmask 1044484
  %v383 = vsel %vm382, %v381, %v379
  %s384 = scalar_lea.vmem %s0, 123
  %v385 = vld [vmem:[%s384] sm:$0x1]
  %s386 = scalar_lea.vmem %s0, 154
  %v387 = vld [vmem:[%s386] sm:$0x2]
  %vm388 = vcmask 1041409
  %v389 = vsel %vm388, %v387, %v385
  %s390 = scalar_lea.vmem %s0, 185
  %v391 = vld [vmem:[%s390] sm:$0x4]
  %vm392 = vcmask 1042434
  %v393 = vsel %vm392, %v391, %v389
  %s394 = scalar_lea.vmem %s0, 216
  %v395 = vld [vmem:[%s394] sm:$0x8]
  %vm396 = vcmask 1043459
  %v397 = vsel %vm396, %v395, %v393
  %s398 = scalar_lea.vmem %s0, 247
  %v399 = vld [vmem:[%s398] sm:$0x10]
  %vm400 = vcmask 1044484
  %v401 = vsel %vm400, %v399, %v397
  %vm402 = vcmask 97280
  %v403 = vsel %vm402, %v401, %v383
  %404 = vrot.lane.b32.xlu0 %v403, 116
  %v405 = vpop.permute.xlu0 %404
  %vm406 = vcmask 130048
  %s407 = scalar_lea.vmem %s1, 51
  %408 = vst.msk [vmem:[%s407] sm:$0x1f] %vm406, %v405
  %vm409 = vcmask 1048480
  %s410 = scalar_lea.vmem %s1, 43
  %411 = vst.msk [vmem:[%s410] sm:$0x1f] %vm409, %v405
  %s412 = scalar_lea.vmem %s0, 260
  %v413 = vld [vmem:[%s412] sm:$0x1]
  %s414 = scalar_lea.vmem %s0, 291
  %v415 = vld [vmem:[%s414] sm:$0x2]
  %vm416 = vcmask 1041409
  %v417 = vsel %vm416, %v415, %v413
  %s418 = scalar_lea.vmem %s0, 322
  %v419 = vld [vmem:[%s418] sm:$0x4]
  %vm420 = vcmask 1042434
  %v421 = vsel %vm420, %v419, %v417
  %s422 = scalar_lea.vmem %s0, 353
  %v423 = vld [vmem:[%s422] sm:$0x8]
  %vm424 = vcmask 1043459
  %v425 = vsel %vm424, %v423, %v421
  %s426 = scalar_lea.vmem %s0, 384
  %v427 = vld [vmem:[%s426] sm:$0x10]
  %vm428 = vcmask 1044484
  %v429 = vsel %vm428, %v427, %v425
  %s430 = scalar_lea.vmem %s0, 4294967295
  %v431 = vld [vmem:[%s430] sm:$0x20]
  %vm432 = vcmask 1045509
  %v433 = vsel %vm432, %v431, %v429
  %s434 = scalar_lea.vmem %s0, 30
  %v435 = vld [vmem:[%s434] sm:$0x40]
  %vm436 = vcmask 1046534
  %v437 = vsel %vm436, %v435, %v433
  %s438 = scalar_lea.vmem %s0, 61
  %v439 = vld [vmem:[%s438] sm:$0x80]
  %vm440 = vcmask 1047559
  %v441 = vsel %vm440, %v439, %v437
  %442 = vrot.lane.b32.xlu0 %v441, 112
  %v443 = vpop.permute.xlu0 %442
  %vm444 = vcmask 97280
  %s445 = scalar_lea.vmem %s1, 64
  %446 = vst.msk [vmem:[%s445] sm:$0x1f] %vm444, %v443
  %s447 = scalar_lea.vmem %s1, 3
  %448 = vst.msk [vmem:[%s447] sm:$0xe0] %vm444, %v443
  %s449 = scalar_lea.vmem %s0, 4
  %v450 = vld [vmem:[%s449] sm:$0x1]
  %s451 = scalar_lea.vmem %s0, 35
  %v452 = vld [vmem:[%s451] sm:$0x2]
  %vm453 = vcmask 1041409
  %v454 = vsel %vm453, %v452, %v450
  %s455 = scalar_lea.vmem %s0, 66
  %v456 = vld [vmem:[%s455] sm:$0x4]
  %vm457 = vcmask 1042434
  %v458 = vsel %vm457, %v456, %v454
  %s459 = scalar_lea.vmem %s0, 97
  %v460 = vld [vmem:[%s459] sm:$0x8]
  %vm461 = vcmask 1043459
  %v462 = vsel %vm461, %v460, %v458
  %s463 = scalar_lea.vmem %s0, 128
  %v464 = vld [vmem:[%s463] sm:$0x10]
  %vm465 = vcmask 1044484
  %v466 = vsel %vm465, %v464, %v462
  %s467 = scalar_lea.vmem %s0, 159
  %v468 = vld [vmem:[%s467] sm:$0x20]
  %vm469 = vcmask 1045509
  %v470 = vsel %vm469, %v468, %v466
  %s471 = scalar_lea.vmem %s0, 190
  %v472 = vld [vmem:[%s471] sm:$0x40]
  %vm473 = vcmask 1046534
  %v474 = vsel %vm473, %v472, %v470
  %s475 = scalar_lea.vmem %s0, 221
  %v476 = vld [vmem:[%s475] sm:$0x80]
  %vm477 = vcmask 1047559
  %v478 = vsel %vm477, %v476, %v474
  %479 = vrot.lane.b32.xlu0 %v478, 112
  %v480 = vpop.permute.xlu0 %479
  %vm481 = vcmask 1048448
  %482 = vst.msk [vmem:[%s1] sm:$0xff] %vm481, %v480
  %s483 = scalar_lea.vmem %s0, 100
  %v484 = vld [vmem:[%s483] sm:$0x1]
  %s485 = scalar_lea.vmem %s0, 131
  %v486 = vld [vmem:[%s485] sm:$0x2]
  %vm487 = vcmask 1041409
  %v488 = vsel %vm487, %v486, %v484
  %s489 = scalar_lea.vmem %s0, 162
  %v490 = vld [vmem:[%s489] sm:$0x4]
  %vm491 = vcmask 1042434
  %v492 = vsel %vm491, %v490, %v488
  %s493 = scalar_lea.vmem %s0, 193
  %v494 = vld [vmem:[%s493] sm:$0x8]
  %vm495 = vcmask 1043459
  %v496 = vsel %vm495, %v494, %v492
  %s497 = scalar_lea.vmem %s0, 224
  %v498 = vld [vmem:[%s497] sm:$0x10]
  %vm499 = vcmask 1044484
  %v500 = vsel %vm499, %v498, %v496
  %s501 = scalar_lea.vmem %s0, 260
  %v502 = vld [vmem:[%s501] sm:$0x1]
  %s503 = scalar_lea.vmem %s0, 291
  %v504 = vld [vmem:[%s503] sm:$0x2]
  %vm505 = vcmask 1041409
  %v506 = vsel %vm505, %v504, %v502
  %s507 = scalar_lea.vmem %s0, 322
  %v508 = vld [vmem:[%s507] sm:$0x4]
  %vm509 = vcmask 1042434
  %v510 = vsel %vm509, %v508, %v506
  %s511 = scalar_lea.vmem %s0, 353
  %v512 = vld [vmem:[%s511] sm:$0x8]
  %vm513 = vcmask 1043459
  %v514 = vsel %vm513, %v512, %v510
  %s515 = scalar_lea.vmem %s0, 384
  %v516 = vld [vmem:[%s515] sm:$0x10]
  %vm517 = vcmask 1044484
  %v518 = vsel %vm517, %v516, %v514
  %vm519 = vcmask 130048
  %v520 = vsel %vm519, %v518, %v500
  %521 = vrot.lane.b32.xlu0 %v520, 112
  %v522 = vpop.permute.xlu0 %521
  %vm523 = vcmask 97280
  %s524 = scalar_lea.vmem %s1, 11
  %525 = vst.msk [vmem:[%s524] sm:$0x1f] %vm523, %v522
  %vm526 = vcmask 1048448
  %s527 = scalar_lea.vmem %s1, 56
  %528 = vst.msk [vmem:[%s527] sm:$0x1f] %vm526, %v522
  %s529 = scalar_lea.vmem %s0, 269
  %v530 = vld [vmem:[%s529] sm:$0x1]
  %s531 = scalar_lea.vmem %s0, 300
  %v532 = vld [vmem:[%s531] sm:$0x2]
  %vm533 = vcmask 1041409
  %v534 = vsel %vm533, %v532, %v530
  %s535 = scalar_lea.vmem %s0, 331
  %v536 = vld [vmem:[%s535] sm:$0x4]
  %vm537 = vcmask 1042434
  %v538 = vsel %vm537, %v536, %v534
  %s539 = scalar_lea.vmem %s0, 362
  %v540 = vld [vmem:[%s539] sm:$0x8]
  %vm541 = vcmask 1043459
  %v542 = vsel %vm541, %v540, %v538
  %s543 = scalar_lea.vmem %s0, 393
  %v544 = vld [vmem:[%s543] sm:$0x10]
  %vm545 = vcmask 1044484
  %v546 = vsel %vm545, %v544, %v542
  %s547 = scalar_lea.vmem %s0, 8
  %v548 = vld [vmem:[%s547] sm:$0x20]
  %vm549 = vcmask 1045509
  %v550 = vsel %vm549, %v548, %v546
  %s551 = scalar_lea.vmem %s0, 39
  %v552 = vld [vmem:[%s551] sm:$0x40]
  %vm553 = vcmask 1046534
  %v554 = vsel %vm553, %v552, %v550
  %s555 = scalar_lea.vmem %s0, 70
  %v556 = vld [vmem:[%s555] sm:$0x80]
  %vm557 = vcmask 1047559
  %v558 = vsel %vm557, %v556, %v554
  %559 = vrot.lane.b32.xlu0 %v558, 108
  %v560 = vpop.permute.xlu0 %559
  %vm561 = vcmask 64512
  %s562 = scalar_lea.vmem %s1, 80
  %563 = vst.msk [vmem:[%s562] sm:$0x1f] %vm561, %v560
  %s564 = scalar_lea.vmem %s1, 19
  %565 = vst.msk [vmem:[%s564] sm:$0xe0] %vm561, %v560
  %s566 = scalar_lea.vmem %s0, 269
  %v567 = vld [vmem:[%s566] sm:$0x1]
  %s568 = scalar_lea.vmem %s0, 300
  %v569 = vld [vmem:[%s568] sm:$0x2]
  %vm570 = vcmask 1041409
  %v571 = vsel %vm570, %v569, %v567
  %s572 = scalar_lea.vmem %s0, 331
  %v573 = vld [vmem:[%s572] sm:$0x4]
  %vm574 = vcmask 1042434
  %v575 = vsel %vm574, %v573, %v571
  %s576 = scalar_lea.vmem %s0, 362
  %v577 = vld [vmem:[%s576] sm:$0x8]
  %vm578 = vcmask 1043459
  %v579 = vsel %vm578, %v577, %v575
  %s580 = scalar_lea.vmem %s0, 393
  %v581 = vld [vmem:[%s580] sm:$0x10]
  %vm582 = vcmask 1044484
  %v583 = vsel %vm582, %v581, %v579
  %s584 = scalar_lea.vmem %s0, 8
  %v585 = vld [vmem:[%s584] sm:$0x20]
  %vm586 = vcmask 1045509
  %v587 = vsel %vm586, %v585, %v583
  %s588 = scalar_lea.vmem %s0, 39
  %v589 = vld [vmem:[%s588] sm:$0x40]
  %vm590 = vcmask 1046534
  %v591 = vsel %vm590, %v589, %v587
  %s592 = scalar_lea.vmem %s0, 70
  %v593 = vld [vmem:[%s592] sm:$0x80]
  %vm594 = vcmask 1047559
  %v595 = vsel %vm594, %v593, %v591
  %596 = vrot.lane.b32.xlu0 %v595, 108
  %v597 = vpop.permute.xlu0 %596
  %vm598 = vcmask 1048416
  %s599 = scalar_lea.vmem %s1, 72
  %600 = vst.msk [vmem:[%s599] sm:$0x1f] %vm598, %v597
  %s601 = scalar_lea.vmem %s1, 11
  %602 = vst.msk [vmem:[%s601] sm:$0xe0] %vm598, %v597
  %s603 = scalar_lea.vmem %s0, 109
  %v604 = vld [vmem:[%s603] sm:$0x1]
  %s605 = scalar_lea.vmem %s0, 140
  %v606 = vld [vmem:[%s605] sm:$0x2]
  %vm607 = vcmask 1041409
  %v608 = vsel %vm607, %v606, %v604
  %s609 = scalar_lea.vmem %s0, 171
  %v610 = vld [vmem:[%s609] sm:$0x4]
  %vm611 = vcmask 1042434
  %v612 = vsel %vm611, %v610, %v608
  %s613 = scalar_lea.vmem %s0, 202
  %v614 = vld [vmem:[%s613] sm:$0x8]
  %vm615 = vcmask 1043459
  %v616 = vsel %vm615, %v614, %v612
  %s617 = scalar_lea.vmem %s0, 233
  %v618 = vld [vmem:[%s617] sm:$0x10]
  %vm619 = vcmask 1044484
  %v620 = vsel %vm619, %v618, %v616
  %s621 = scalar_lea.vmem %s0, 109
  %v622 = vld [vmem:[%s621] sm:$0x1]
  %s623 = scalar_lea.vmem %s0, 140
  %v624 = vld [vmem:[%s623] sm:$0x2]
  %vm625 = vcmask 1041409
  %v626 = vsel %vm625, %v624, %v622
  %s627 = scalar_lea.vmem %s0, 171
  %v628 = vld [vmem:[%s627] sm:$0x4]
  %vm629 = vcmask 1042434
  %v630 = vsel %vm629, %v628, %v626
  %s631 = scalar_lea.vmem %s0, 202
  %v632 = vld [vmem:[%s631] sm:$0x8]
  %vm633 = vcmask 1043459
  %v634 = vsel %vm633, %v632, %v630
  %s635 = scalar_lea.vmem %s0, 233
  %v636 = vld [vmem:[%s635] sm:$0x10]
  %vm637 = vcmask 1044484
  %v638 = vsel %vm637, %v636, %v634
  %vm639 = vcmask 162816
  %v640 = vsel %vm639, %v638, %v620
  %641 = vrot.lane.b32.xlu0 %v640, 108
  %v642 = vpop.permute.xlu0 %641
  %vm643 = vcmask 64512
  %s644 = scalar_lea.vmem %s1, 27
  %645 = vst.msk [vmem:[%s644] sm:$0x1f] %vm643, %v642
  %vm646 = vcmask 1048416
  %s647 = scalar_lea.vmem %s1, 19
  %648 = vst.msk [vmem:[%s647] sm:$0x1f] %vm646, %v642
  %s649 = scalar_lea.vmem %s0, 278
  %v650 = vld [vmem:[%s649] sm:$0x1]
  %s651 = scalar_lea.vmem %s0, 309
  %v652 = vld [vmem:[%s651] sm:$0x2]
  %vm653 = vcmask 1041409
  %v654 = vsel %vm653, %v652, %v650
  %s655 = scalar_lea.vmem %s0, 340
  %v656 = vld [vmem:[%s655] sm:$0x4]
  %vm657 = vcmask 1042434
  %v658 = vsel %vm657, %v656, %v654
  %s659 = scalar_lea.vmem %s0, 371
  %v660 = vld [vmem:[%s659] sm:$0x8]
  %vm661 = vcmask 1043459
  %v662 = vsel %vm661, %v660, %v658
  %s663 = scalar_lea.vmem %s0, 402
  %v664 = vld [vmem:[%s663] sm:$0x10]
  %vm665 = vcmask 1044484
  %v666 = vsel %vm665, %v664, %v662
  %s667 = scalar_lea.vmem %s0, 17
  %v668 = vld [vmem:[%s667] sm:$0x20]
  %vm669 = vcmask 1045509
  %v670 = vsel %vm669, %v668, %v666
  %s671 = scalar_lea.vmem %s0, 48
  %v672 = vld [vmem:[%s671] sm:$0x40]
  %vm673 = vcmask 1046534
  %v674 = vsel %vm673, %v672, %v670
  %s675 = scalar_lea.vmem %s0, 79
  %v676 = vld [vmem:[%s675] sm:$0x80]
  %vm677 = vcmask 1047559
  %v678 = vsel %vm677, %v676, %v674
  %679 = vrot.lane.b32.xlu0 %v678, 104
  %v680 = vpop.permute.xlu0 %679
  %vm681 = vcmask 31744
  %s682 = scalar_lea.vmem %s1, 96
  %683 = vst.msk [vmem:[%s682] sm:$0x1f] %vm681, %v680
  %s684 = scalar_lea.vmem %s1, 35
  %685 = vst.msk [vmem:[%s684] sm:$0xe0] %vm681, %v680
  %s686 = scalar_lea.vmem %s0, 22
  %v687 = vld [vmem:[%s686] sm:$0x1]
  %s688 = scalar_lea.vmem %s0, 53
  %v689 = vld [vmem:[%s688] sm:$0x2]
  %vm690 = vcmask 1041409
  %v691 = vsel %vm690, %v689, %v687
  %s692 = scalar_lea.vmem %s0, 84
  %v693 = vld [vmem:[%s692] sm:$0x4]
  %vm694 = vcmask 1042434
  %v695 = vsel %vm694, %v693, %v691
  %s696 = scalar_lea.vmem %s0, 115
  %v697 = vld [vmem:[%s696] sm:$0x8]
  %vm698 = vcmask 1043459
  %v699 = vsel %vm698, %v697, %v695
  %s700 = scalar_lea.vmem %s0, 146
  %v701 = vld [vmem:[%s700] sm:$0x10]
  %vm702 = vcmask 1044484
  %v703 = vsel %vm702, %v701, %v699
  %s704 = scalar_lea.vmem %s0, 177
  %v705 = vld [vmem:[%s704] sm:$0x20]
  %vm706 = vcmask 1045509
  %v707 = vsel %vm706, %v705, %v703
  %s708 = scalar_lea.vmem %s0, 208
  %v709 = vld [vmem:[%s708] sm:$0x40]
  %vm710 = vcmask 1046534
  %v711 = vsel %vm710, %v709, %v707
  %s712 = scalar_lea.vmem %s0, 239
  %v713 = vld [vmem:[%s712] sm:$0x80]
  %vm714 = vcmask 1047559
  %v715 = vsel %vm714, %v713, %v711
  %716 = vrot.lane.b32.xlu0 %v715, 104
  %v717 = vpop.permute.xlu0 %716
  %vm718 = vcmask 1048384
  %s719 = scalar_lea.vmem %s1, 32
  %720 = vst.msk [vmem:[%s719] sm:$0xff] %vm718, %v717
  %s721 = scalar_lea.vmem %s0, 118
  %v722 = vld [vmem:[%s721] sm:$0x1]
  %s723 = scalar_lea.vmem %s0, 149
  %v724 = vld [vmem:[%s723] sm:$0x2]
  %vm725 = vcmask 1041409
  %v726 = vsel %vm725, %v724, %v722
  %s727 = scalar_lea.vmem %s0, 180
  %v728 = vld [vmem:[%s727] sm:$0x4]
  %vm729 = vcmask 1042434
  %v730 = vsel %vm729, %v728, %v726
  %s731 = scalar_lea.vmem %s0, 211
  %v732 = vld [vmem:[%s731] sm:$0x8]
  %vm733 = vcmask 1043459
  %v734 = vsel %vm733, %v732, %v730
  %s735 = scalar_lea.vmem %s0, 242
  %v736 = vld [vmem:[%s735] sm:$0x10]
  %vm737 = vcmask 1044484
  %v738 = vsel %vm737, %v736, %v734
  %s739 = scalar_lea.vmem %s0, 278
  %v740 = vld [vmem:[%s739] sm:$0x1]
  %s741 = scalar_lea.vmem %s0, 309
  %v742 = vld [vmem:[%s741] sm:$0x2]
  %vm743 = vcmask 1041409
  %v744 = vsel %vm743, %v742, %v740
  %s745 = scalar_lea.vmem %s0, 340
  %v746 = vld [vmem:[%s745] sm:$0x4]
  %vm747 = vcmask 1042434
  %v748 = vsel %vm747, %v746, %v744
  %s749 = scalar_lea.vmem %s0, 371
  %v750 = vld [vmem:[%s749] sm:$0x8]
  %vm751 = vcmask 1043459
  %v752 = vsel %vm751, %v750, %v748
  %s753 = scalar_lea.vmem %s0, 402
  %v754 = vld [vmem:[%s753] sm:$0x10]
  %vm755 = vcmask 1044484
  %v756 = vsel %vm755, %v754, %v752
  %vm757 = vcmask 195584
  %v758 = vsel %vm757, %v756, %v738
  %759 = vrot.lane.b32.xlu0 %v758, 104
  %v760 = vpop.permute.xlu0 %759
  %vm761 = vcmask 31744
  %s762 = scalar_lea.vmem %s1, 43
  %763 = vst.msk [vmem:[%s762] sm:$0x1f] %vm761, %v760
  %vm764 = vcmask 1048384
  %s765 = scalar_lea.vmem %s1, 88
  %766 = vst.msk [vmem:[%s765] sm:$0x1f] %vm764, %v760
  %s767 = scalar_lea.vmem %s0, 264
  %v768 = vld [vmem:[%s767] sm:$0x1]
  %s769 = scalar_lea.vmem %s0, 295
  %v770 = vld [vmem:[%s769] sm:$0x2]
  %vm771 = vcmask 1041409
  %v772 = vsel %vm771, %v770, %v768
  %s773 = scalar_lea.vmem %s0, 326
  %v774 = vld [vmem:[%s773] sm:$0x4]
  %vm775 = vcmask 1042434
  %v776 = vsel %vm775, %v774, %v772
  %s777 = scalar_lea.vmem %s0, 357
  %v778 = vld [vmem:[%s777] sm:$0x8]
  %vm779 = vcmask 1043459
  %v780 = vsel %vm779, %v778, %v776
  %s781 = scalar_lea.vmem %s0, 388
  %v782 = vld [vmem:[%s781] sm:$0x10]
  %vm783 = vcmask 1044484
  %v784 = vsel %vm783, %v782, %v780
  %s785 = scalar_lea.vmem %s0, 3
  %v786 = vld [vmem:[%s785] sm:$0x20]
  %vm787 = vcmask 1045509
  %v788 = vsel %vm787, %v786, %v784
  %s789 = scalar_lea.vmem %s0, 34
  %v790 = vld [vmem:[%s789] sm:$0x40]
  %vm791 = vcmask 1046534
  %v792 = vsel %vm791, %v790, %v788
  %s793 = scalar_lea.vmem %s0, 65
  %v794 = vld [vmem:[%s793] sm:$0x80]
  %vm795 = vcmask 1047559
  %v796 = vsel %vm795, %v794, %v792
  %797 = vrot.lane.b32.xlu0 %v796, 96
  %v798 = vpop.permute.xlu0 %797
  %vm799 = vcmask 1015552
  %s800 = scalar_lea.vmem %s1, 64
  %801 = vst.msk [vmem:[%s800] sm:$0x1f] %vm799, %v798
  %s802 = scalar_lea.vmem %s1, 3
  %803 = vst.msk [vmem:[%s802] sm:$0xe0] %vm799, %v798
  %s804 = scalar_lea.vmem %s0, 104
  %v805 = vld [vmem:[%s804] sm:$0x1]
  %s806 = scalar_lea.vmem %s0, 135
  %v807 = vld [vmem:[%s806] sm:$0x2]
  %vm808 = vcmask 1041409
  %v809 = vsel %vm808, %v807, %v805
  %s810 = scalar_lea.vmem %s0, 166
  %v811 = vld [vmem:[%s810] sm:$0x4]
  %vm812 = vcmask 1042434
  %v813 = vsel %vm812, %v811, %v809
  %s814 = scalar_lea.vmem %s0, 197
  %v815 = vld [vmem:[%s814] sm:$0x8]
  %vm816 = vcmask 1043459
  %v817 = vsel %vm816, %v815, %v813
  %s818 = scalar_lea.vmem %s0, 228
  %v819 = vld [vmem:[%s818] sm:$0x10]
  %vm820 = vcmask 1044484
  %v821 = vsel %vm820, %v819, %v817
  %822 = vrot.lane.b32.xlu0 %v821, 96
  %v823 = vpop.permute.xlu0 %822
  %vm824 = vcmask 1015552
  %s825 = scalar_lea.vmem %s1, 11
  %826 = vst.msk [vmem:[%s825] sm:$0x1f] %vm824, %v823
  %s827 = scalar_lea.vmem %s0, 273
  %v828 = vld [vmem:[%s827] sm:$0x1]
  %s829 = scalar_lea.vmem %s0, 304
  %v830 = vld [vmem:[%s829] sm:$0x2]
  %vm831 = vcmask 1041409
  %v832 = vsel %vm831, %v830, %v828
  %s833 = scalar_lea.vmem %s0, 335
  %v834 = vld [vmem:[%s833] sm:$0x4]
  %vm835 = vcmask 1042434
  %v836 = vsel %vm835, %v834, %v832
  %s837 = scalar_lea.vmem %s0, 366
  %v838 = vld [vmem:[%s837] sm:$0x8]
  %vm839 = vcmask 1043459
  %v840 = vsel %vm839, %v838, %v836
  %s841 = scalar_lea.vmem %s0, 397
  %v842 = vld [vmem:[%s841] sm:$0x10]
  %vm843 = vcmask 1044484
  %v844 = vsel %vm843, %v842, %v840
  %s845 = scalar_lea.vmem %s0, 12
  %v846 = vld [vmem:[%s845] sm:$0x20]
  %vm847 = vcmask 1045509
  %v848 = vsel %vm847, %v846, %v844
  %s849 = scalar_lea.vmem %s0, 43
  %v850 = vld [vmem:[%s849] sm:$0x40]
  %vm851 = vcmask 1046534
  %v852 = vsel %vm851, %v850, %v848
  %s853 = scalar_lea.vmem %s0, 74
  %v854 = vld [vmem:[%s853] sm:$0x80]
  %vm855 = vcmask 1047559
  %v856 = vsel %vm855, %v854, %v852
  %857 = vrot.lane.b32.xlu0 %v856, 92
  %v858 = vpop.permute.xlu0 %857
  %vm859 = vcmask 982752
  %s860 = scalar_lea.vmem %s1, 80
  %861 = vst.msk [vmem:[%s860] sm:$0x1f] %vm859, %v858
  %s862 = scalar_lea.vmem %s1, 19
  %863 = vst.msk [vmem:[%s862] sm:$0xe0] %vm859, %v858
  %s864 = scalar_lea.vmem %s0, 113
  %v865 = vld [vmem:[%s864] sm:$0x1]
  %s866 = scalar_lea.vmem %s0, 144
  %v867 = vld [vmem:[%s866] sm:$0x2]
  %vm868 = vcmask 1041409
  %v869 = vsel %vm868, %v867, %v865
  %s870 = scalar_lea.vmem %s0, 175
  %v871 = vld [vmem:[%s870] sm:$0x4]
  %vm872 = vcmask 1042434
  %v873 = vsel %vm872, %v871, %v869
  %s874 = scalar_lea.vmem %s0, 206
  %v875 = vld [vmem:[%s874] sm:$0x8]
  %vm876 = vcmask 1043459
  %v877 = vsel %vm876, %v875, %v873
  %s878 = scalar_lea.vmem %s0, 237
  %v879 = vld [vmem:[%s878] sm:$0x10]
  %vm880 = vcmask 1044484
  %v881 = vsel %vm880, %v879, %v877
  %882 = vrot.lane.b32.xlu0 %v881, 92
  %v883 = vpop.permute.xlu0 %882
  %vm884 = vcmask 982752
  %s885 = scalar_lea.vmem %s1, 27
  %886 = vst.msk [vmem:[%s885] sm:$0x1f] %vm884, %v883
  %s887 = scalar_lea.vmem %s0, 282
  %v888 = vld [vmem:[%s887] sm:$0x1]
  %s889 = scalar_lea.vmem %s0, 313
  %v890 = vld [vmem:[%s889] sm:$0x2]
  %vm891 = vcmask 1041409
  %v892 = vsel %vm891, %v890, %v888
  %s893 = scalar_lea.vmem %s0, 344
  %v894 = vld [vmem:[%s893] sm:$0x4]
  %vm895 = vcmask 1042434
  %v896 = vsel %vm895, %v894, %v892
  %s897 = scalar_lea.vmem %s0, 375
  %v898 = vld [vmem:[%s897] sm:$0x8]
  %vm899 = vcmask 1043459
  %v900 = vsel %vm899, %v898, %v896
  %s901 = scalar_lea.vmem %s0, 406
  %v902 = vld [vmem:[%s901] sm:$0x10]
  %vm903 = vcmask 1044484
  %v904 = vsel %vm903, %v902, %v900
  %s905 = scalar_lea.vmem %s0, 21
  %v906 = vld [vmem:[%s905] sm:$0x20]
  %vm907 = vcmask 1045509
  %v908 = vsel %vm907, %v906, %v904
  %s909 = scalar_lea.vmem %s0, 52
  %v910 = vld [vmem:[%s909] sm:$0x40]
  %vm911 = vcmask 1046534
  %v912 = vsel %vm911, %v910, %v908
  %s913 = scalar_lea.vmem %s0, 83
  %v914 = vld [vmem:[%s913] sm:$0x80]
  %vm915 = vcmask 1047559
  %v916 = vsel %vm915, %v914, %v912
  %917 = vrot.lane.b32.xlu0 %v916, 88
  %v918 = vpop.permute.xlu0 %917
  %vm919 = vcmask 949952
  %s920 = scalar_lea.vmem %s1, 96
  %921 = vst.msk [vmem:[%s920] sm:$0x1f] %vm919, %v918
  %s922 = scalar_lea.vmem %s1, 35
  %923 = vst.msk [vmem:[%s922] sm:$0xe0] %vm919, %v918
  %s924 = scalar_lea.vmem %s0, 122
  %v925 = vld [vmem:[%s924] sm:$0x1]
  %s926 = scalar_lea.vmem %s0, 153
  %v927 = vld [vmem:[%s926] sm:$0x2]
  %vm928 = vcmask 1041409
  %v929 = vsel %vm928, %v927, %v925
  %s930 = scalar_lea.vmem %s0, 184
  %v931 = vld [vmem:[%s930] sm:$0x4]
  %vm932 = vcmask 1042434
  %v933 = vsel %vm932, %v931, %v929
  %s934 = scalar_lea.vmem %s0, 215
  %v935 = vld [vmem:[%s934] sm:$0x8]
  %vm936 = vcmask 1043459
  %v937 = vsel %vm936, %v935, %v933
  %s938 = scalar_lea.vmem %s0, 246
  %v939 = vld [vmem:[%s938] sm:$0x10]
  %vm940 = vcmask 1044484
  %v941 = vsel %vm940, %v939, %v937
  %942 = vrot.lane.b32.xlu0 %v941, 88
  %v943 = vpop.permute.xlu0 %942
  %vm944 = vcmask 949952
  %s945 = scalar_lea.vmem %s1, 43
  %946 = vst.msk [vmem:[%s945] sm:$0x1f] %vm944, %v943
  %s947 = scalar_lea.vmem %s0, 3
  %v948 = vld [vmem:[%s947] sm:$0x1]
  %s949 = scalar_lea.vmem %s0, 34
  %v950 = vld [vmem:[%s949] sm:$0x2]
  %vm951 = vcmask 1041409
  %v952 = vsel %vm951, %v950, %v948
  %s953 = scalar_lea.vmem %s0, 65
  %v954 = vld [vmem:[%s953] sm:$0x4]
  %vm955 = vcmask 1042434
  %v956 = vsel %vm955, %v954, %v952
  %s957 = scalar_lea.vmem %s0, 96
  %v958 = vld [vmem:[%s957] sm:$0x8]
  %vm959 = vcmask 1043459
  %v960 = vsel %vm959, %v958, %v956
  %s961 = scalar_lea.vmem %s0, 127
  %v962 = vld [vmem:[%s961] sm:$0x10]
  %vm963 = vcmask 1044484
  %v964 = vsel %vm963, %v962, %v960
  %s965 = scalar_lea.vmem %s0, 158
  %v966 = vld [vmem:[%s965] sm:$0x20]
  %vm967 = vcmask 1045509
  %v968 = vsel %vm967, %v966, %v964
  %s969 = scalar_lea.vmem %s0, 189
  %v970 = vld [vmem:[%s969] sm:$0x40]
  %vm971 = vcmask 1046534
  %v972 = vsel %vm971, %v970, %v968
  %s973 = scalar_lea.vmem %s0, 220
  %v974 = vld [vmem:[%s973] sm:$0x80]
  %vm975 = vcmask 1047559
  %v976 = vsel %vm975, %v974, %v972
  %977 = vrot.lane.b32.xlu0 %v976, 84
  %v978 = vpop.permute.xlu0 %977
  %vm979 = vcmask 917152
  %980 = vst.msk [vmem:[%s1] sm:$0xff] %vm979, %v978
  %s981 = scalar_lea.vmem %s0, 259
  %v982 = vld [vmem:[%s981] sm:$0x1]
  %s983 = scalar_lea.vmem %s0, 290
  %v984 = vld [vmem:[%s983] sm:$0x2]
  %vm985 = vcmask 1041409
  %v986 = vsel %vm985, %v984, %v982
  %s987 = scalar_lea.vmem %s0, 321
  %v988 = vld [vmem:[%s987] sm:$0x4]
  %vm989 = vcmask 1042434
  %v990 = vsel %vm989, %v988, %v986
  %s991 = scalar_lea.vmem %s0, 352
  %v992 = vld [vmem:[%s991] sm:$0x8]
  %vm993 = vcmask 1043459
  %v994 = vsel %vm993, %v992, %v990
  %s995 = scalar_lea.vmem %s0, 383
  %v996 = vld [vmem:[%s995] sm:$0x10]
  %vm997 = vcmask 1044484
  %v998 = vsel %vm997, %v996, %v994
  %999 = vrot.lane.b32.xlu0 %v998, 84
  %v1000 = vpop.permute.xlu0 %999
  %vm1001 = vcmask 917152
  %s1002 = scalar_lea.vmem %s1, 56
  %1003 = vst.msk [vmem:[%s1002] sm:$0x1f] %vm1001, %v1000
  %s1004 = scalar_lea.vmem %s0, 268
  %v1005 = vld [vmem:[%s1004] sm:$0x1]
  %s1006 = scalar_lea.vmem %s0, 299
  %v1007 = vld [vmem:[%s1006] sm:$0x2]
  %vm1008 = vcmask 1041409
  %v1009 = vsel %vm1008, %v1007, %v1005
  %s1010 = scalar_lea.vmem %s0, 330
  %v1011 = vld [vmem:[%s1010] sm:$0x4]
  %vm1012 = vcmask 1042434
  %v1013 = vsel %vm1012, %v1011, %v1009
  %s1014 = scalar_lea.vmem %s0, 361
  %v1015 = vld [vmem:[%s1014] sm:$0x8]
  %vm1016 = vcmask 1043459
  %v1017 = vsel %vm1016, %v1015, %v1013
  %s1018 = scalar_lea.vmem %s0, 392
  %v1019 = vld [vmem:[%s1018] sm:$0x10]
  %vm1020 = vcmask 1044484
  %v1021 = vsel %vm1020, %v1019, %v1017
  %s1022 = scalar_lea.vmem %s0, 7
  %v1023 = vld [vmem:[%s1022] sm:$0x20]
  %vm1024 = vcmask 1045509
  %v1025 = vsel %vm1024, %v1023, %v1021
  %s1026 = scalar_lea.vmem %s0, 38
  %v1027 = vld [vmem:[%s1026] sm:$0x40]
  %vm1028 = vcmask 1046534
  %v1029 = vsel %vm1028, %v1027, %v1025
  %s1030 = scalar_lea.vmem %s0, 69
  %v1031 = vld [vmem:[%s1030] sm:$0x80]
  %vm1032 = vcmask 1047559
  %v1033 = vsel %vm1032, %v1031, %v1029
  %1034 = vrot.lane.b32.xlu0 %v1033, 80
  %v1035 = vpop.permute.xlu0 %1034
  %vm1036 = vcmask 884352
  %s1037 = scalar_lea.vmem %s1, 72
  %1038 = vst.msk [vmem:[%s1037] sm:$0x1f] %vm1036, %v1035
  %s1039 = scalar_lea.vmem %s1, 11
  %1040 = vst.msk [vmem:[%s1039] sm:$0xe0] %vm1036, %v1035
  %s1041 = scalar_lea.vmem %s0, 108
  %v1042 = vld [vmem:[%s1041] sm:$0x1]
  %s1043 = scalar_lea.vmem %s0, 139
  %v1044 = vld [vmem:[%s1043] sm:$0x2]
  %vm1045 = vcmask 1041409
  %v1046 = vsel %vm1045, %v1044, %v1042
  %s1047 = scalar_lea.vmem %s0, 170
  %v1048 = vld [vmem:[%s1047] sm:$0x4]
  %vm1049 = vcmask 1042434
  %v1050 = vsel %vm1049, %v1048, %v1046
  %s1051 = scalar_lea.vmem %s0, 201
  %v1052 = vld [vmem:[%s1051] sm:$0x8]
  %vm1053 = vcmask 1043459
  %v1054 = vsel %vm1053, %v1052, %v1050
  %s1055 = scalar_lea.vmem %s0, 232
  %v1056 = vld [vmem:[%s1055] sm:$0x10]
  %vm1057 = vcmask 1044484
  %v1058 = vsel %vm1057, %v1056, %v1054
  %1059 = vrot.lane.b32.xlu0 %v1058, 80
  %v1060 = vpop.permute.xlu0 %1059
  %vm1061 = vcmask 884352
  %s1062 = scalar_lea.vmem %s1, 19
  %1063 = vst.msk [vmem:[%s1062] sm:$0x1f] %vm1061, %v1060
  %s1064 = scalar_lea.vmem %s0, 21
  %v1065 = vld [vmem:[%s1064] sm:$0x1]
  %s1066 = scalar_lea.vmem %s0, 52
  %v1067 = vld [vmem:[%s1066] sm:$0x2]
  %vm1068 = vcmask 1041409
  %v1069 = vsel %vm1068, %v1067, %v1065
  %s1070 = scalar_lea.vmem %s0, 83
  %v1071 = vld [vmem:[%s1070] sm:$0x4]
  %vm1072 = vcmask 1042434
  %v1073 = vsel %vm1072, %v1071, %v1069
  %s1074 = scalar_lea.vmem %s0, 114
  %v1075 = vld [vmem:[%s1074] sm:$0x8]
  %vm1076 = vcmask 1043459
  %v1077 = vsel %vm1076, %v1075, %v1073
  %s1078 = scalar_lea.vmem %s0, 145
  %v1079 = vld [vmem:[%s1078] sm:$0x10]
  %vm1080 = vcmask 1044484
  %v1081 = vsel %vm1080, %v1079, %v1077
  %s1082 = scalar_lea.vmem %s0, 176
  %v1083 = vld [vmem:[%s1082] sm:$0x20]
  %vm1084 = vcmask 1045509
  %v1085 = vsel %vm1084, %v1083, %v1081
  %s1086 = scalar_lea.vmem %s0, 207
  %v1087 = vld [vmem:[%s1086] sm:$0x40]
  %vm1088 = vcmask 1046534
  %v1089 = vsel %vm1088, %v1087, %v1085
  %s1090 = scalar_lea.vmem %s0, 238
  %v1091 = vld [vmem:[%s1090] sm:$0x80]
  %vm1092 = vcmask 1047559
  %v1093 = vsel %vm1092, %v1091, %v1089
  %1094 = vrot.lane.b32.xlu0 %v1093, 76
  %v1095 = vpop.permute.xlu0 %1094
  %vm1096 = vcmask 851552
  %s1097 = scalar_lea.vmem %s1, 32
  %1098 = vst.msk [vmem:[%s1097] sm:$0xff] %vm1096, %v1095
  %s1099 = scalar_lea.vmem %s0, 277
  %v1100 = vld [vmem:[%s1099] sm:$0x1]
  %s1101 = scalar_lea.vmem %s0, 308
  %v1102 = vld [vmem:[%s1101] sm:$0x2]
  %vm1103 = vcmask 1041409
  %v1104 = vsel %vm1103, %v1102, %v1100
  %s1105 = scalar_lea.vmem %s0, 339
  %v1106 = vld [vmem:[%s1105] sm:$0x4]
  %vm1107 = vcmask 1042434
  %v1108 = vsel %vm1107, %v1106, %v1104
  %s1109 = scalar_lea.vmem %s0, 370
  %v1110 = vld [vmem:[%s1109] sm:$0x8]
  %vm1111 = vcmask 1043459
  %v1112 = vsel %vm1111, %v1110, %v1108
  %s1113 = scalar_lea.vmem %s0, 401
  %v1114 = vld [vmem:[%s1113] sm:$0x10]
  %vm1115 = vcmask 1044484
  %v1116 = vsel %vm1115, %v1114, %v1112
  %1117 = vrot.lane.b32.xlu0 %v1116, 76
  %v1118 = vpop.permute.xlu0 %1117
  %vm1119 = vcmask 851552
  %s1120 = scalar_lea.vmem %s1, 88
  %1121 = vst.msk [vmem:[%s1120] sm:$0x1f] %vm1119, %v1118
  %s1122 = scalar_lea.vmem %s0, 263
  %v1123 = vld [vmem:[%s1122] sm:$0x1]
  %s1124 = scalar_lea.vmem %s0, 294
  %v1125 = vld [vmem:[%s1124] sm:$0x2]
  %vm1126 = vcmask 1041409
  %v1127 = vsel %vm1126, %v1125, %v1123
  %s1128 = scalar_lea.vmem %s0, 325
  %v1129 = vld [vmem:[%s1128] sm:$0x4]
  %vm1130 = vcmask 1042434
  %v1131 = vsel %vm1130, %v1129, %v1127
  %s1132 = scalar_lea.vmem %s0, 356
  %v1133 = vld [vmem:[%s1132] sm:$0x8]
  %vm1134 = vcmask 1043459
  %v1135 = vsel %vm1134, %v1133, %v1131
  %s1136 = scalar_lea.vmem %s0, 387
  %v1137 = vld [vmem:[%s1136] sm:$0x10]
  %vm1138 = vcmask 1044484
  %v1139 = vsel %vm1138, %v1137, %v1135
  %s1140 = scalar_lea.vmem %s0, 2
  %v1141 = vld [vmem:[%s1140] sm:$0x20]
  %vm1142 = vcmask 1045509
  %v1143 = vsel %vm1142, %v1141, %v1139
  %s1144 = scalar_lea.vmem %s0, 33
  %v1145 = vld [vmem:[%s1144] sm:$0x40]
  %vm1146 = vcmask 1046534
  %v1147 = vsel %vm1146, %v1145, %v1143
  %s1148 = scalar_lea.vmem %s0, 64
  %v1149 = vld [vmem:[%s1148] sm:$0x80]
  %vm1150 = vcmask 1047559
  %v1151 = vsel %vm1150, %v1149, %v1147
  %1152 = vrot.lane.b32.xlu0 %v1151, 68
  %v1153 = vpop.permute.xlu0 %1152
  %vm1154 = vcmask 785952
  %s1155 = scalar_lea.vmem %s1, 64
  %1156 = vst.msk [vmem:[%s1155] sm:$0x1f] %vm1154, %v1153
  %s1157 = scalar_lea.vmem %s1, 3
  %1158 = vst.msk [vmem:[%s1157] sm:$0xe0] %vm1154, %v1153
  %s1159 = scalar_lea.vmem %s0, 103
  %v1160 = vld [vmem:[%s1159] sm:$0x1]
  %s1161 = scalar_lea.vmem %s0, 134
  %v1162 = vld [vmem:[%s1161] sm:$0x2]
  %vm1163 = vcmask 1041409
  %v1164 = vsel %vm1163, %v1162, %v1160
  %s1165 = scalar_lea.vmem %s0, 165
  %v1166 = vld [vmem:[%s1165] sm:$0x4]
  %vm1167 = vcmask 1042434
  %v1168 = vsel %vm1167, %v1166, %v1164
  %s1169 = scalar_lea.vmem %s0, 196
  %v1170 = vld [vmem:[%s1169] sm:$0x8]
  %vm1171 = vcmask 1043459
  %v1172 = vsel %vm1171, %v1170, %v1168
  %s1173 = scalar_lea.vmem %s0, 227
  %v1174 = vld [vmem:[%s1173] sm:$0x10]
  %vm1175 = vcmask 1044484
  %v1176 = vsel %vm1175, %v1174, %v1172
  %1177 = vrot.lane.b32.xlu0 %v1176, 68
  %v1178 = vpop.permute.xlu0 %1177
  %vm1179 = vcmask 785952
  %s1180 = scalar_lea.vmem %s1, 11
  %1181 = vst.msk [vmem:[%s1180] sm:$0x1f] %vm1179, %v1178
  %s1182 = scalar_lea.vmem %s0, 272
  %v1183 = vld [vmem:[%s1182] sm:$0x1]
  %s1184 = scalar_lea.vmem %s0, 303
  %v1185 = vld [vmem:[%s1184] sm:$0x2]
  %vm1186 = vcmask 1041409
  %v1187 = vsel %vm1186, %v1185, %v1183
  %s1188 = scalar_lea.vmem %s0, 334
  %v1189 = vld [vmem:[%s1188] sm:$0x4]
  %vm1190 = vcmask 1042434
  %v1191 = vsel %vm1190, %v1189, %v1187
  %s1192 = scalar_lea.vmem %s0, 365
  %v1193 = vld [vmem:[%s1192] sm:$0x8]
  %vm1194 = vcmask 1043459
  %v1195 = vsel %vm1194, %v1193, %v1191
  %s1196 = scalar_lea.vmem %s0, 396
  %v1197 = vld [vmem:[%s1196] sm:$0x10]
  %vm1198 = vcmask 1044484
  %v1199 = vsel %vm1198, %v1197, %v1195
  %s1200 = scalar_lea.vmem %s0, 11
  %v1201 = vld [vmem:[%s1200] sm:$0x20]
  %vm1202 = vcmask 1045509
  %v1203 = vsel %vm1202, %v1201, %v1199
  %s1204 = scalar_lea.vmem %s0, 42
  %v1205 = vld [vmem:[%s1204] sm:$0x40]
  %vm1206 = vcmask 1046534
  %v1207 = vsel %vm1206, %v1205, %v1203
  %s1208 = scalar_lea.vmem %s0, 73
  %v1209 = vld [vmem:[%s1208] sm:$0x80]
  %vm1210 = vcmask 1047559
  %v1211 = vsel %vm1210, %v1209, %v1207
  %1212 = vrot.lane.b32.xlu0 %v1211, 64
  %v1213 = vpop.permute.xlu0 %1212
  %vm1214 = vcmask 753152
  %s1215 = scalar_lea.vmem %s1, 80
  %1216 = vst.msk [vmem:[%s1215] sm:$0x1f] %vm1214, %v1213
  %s1217 = scalar_lea.vmem %s1, 19
  %1218 = vst.msk [vmem:[%s1217] sm:$0xe0] %vm1214, %v1213
  %s1219 = scalar_lea.vmem %s0, 112
  %v1220 = vld [vmem:[%s1219] sm:$0x1]
  %s1221 = scalar_lea.vmem %s0, 143
  %v1222 = vld [vmem:[%s1221] sm:$0x2]
  %vm1223 = vcmask 1041409
  %v1224 = vsel %vm1223, %v1222, %v1220
  %s1225 = scalar_lea.vmem %s0, 174
  %v1226 = vld [vmem:[%s1225] sm:$0x4]
  %vm1227 = vcmask 1042434
  %v1228 = vsel %vm1227, %v1226, %v1224
  %s1229 = scalar_lea.vmem %s0, 205
  %v1230 = vld [vmem:[%s1229] sm:$0x8]
  %vm1231 = vcmask 1043459
  %v1232 = vsel %vm1231, %v1230, %v1228
  %s1233 = scalar_lea.vmem %s0, 236
  %v1234 = vld [vmem:[%s1233] sm:$0x10]
  %vm1235 = vcmask 1044484
  %v1236 = vsel %vm1235, %v1234, %v1232
  %1237 = vrot.lane.b32.xlu0 %v1236, 64
  %v1238 = vpop.permute.xlu0 %1237
  %vm1239 = vcmask 753152
  %s1240 = scalar_lea.vmem %s1, 27
  %1241 = vst.msk [vmem:[%s1240] sm:$0x1f] %vm1239, %v1238
  %s1242 = scalar_lea.vmem %s0, 281
  %v1243 = vld [vmem:[%s1242] sm:$0x1]
  %s1244 = scalar_lea.vmem %s0, 312
  %v1245 = vld [vmem:[%s1244] sm:$0x2]
  %vm1246 = vcmask 1041409
  %v1247 = vsel %vm1246, %v1245, %v1243
  %s1248 = scalar_lea.vmem %s0, 343
  %v1249 = vld [vmem:[%s1248] sm:$0x4]
  %vm1250 = vcmask 1042434
  %v1251 = vsel %vm1250, %v1249, %v1247
  %s1252 = scalar_lea.vmem %s0, 374
  %v1253 = vld [vmem:[%s1252] sm:$0x8]
  %vm1254 = vcmask 1043459
  %v1255 = vsel %vm1254, %v1253, %v1251
  %s1256 = scalar_lea.vmem %s0, 405
  %v1257 = vld [vmem:[%s1256] sm:$0x10]
  %vm1258 = vcmask 1044484
  %v1259 = vsel %vm1258, %v1257, %v1255
  %s1260 = scalar_lea.vmem %s0, 20
  %v1261 = vld [vmem:[%s1260] sm:$0x20]
  %vm1262 = vcmask 1045509
  %v1263 = vsel %vm1262, %v1261, %v1259
  %s1264 = scalar_lea.vmem %s0, 51
  %v1265 = vld [vmem:[%s1264] sm:$0x40]
  %vm1266 = vcmask 1046534
  %v1267 = vsel %vm1266, %v1265, %v1263
  %s1268 = scalar_lea.vmem %s0, 82
  %v1269 = vld [vmem:[%s1268] sm:$0x80]
  %vm1270 = vcmask 1047559
  %v1271 = vsel %vm1270, %v1269, %v1267
  %1272 = vrot.lane.b32.xlu0 %v1271, 60
  %v1273 = vpop.permute.xlu0 %1272
  %vm1274 = vcmask 720352
  %s1275 = scalar_lea.vmem %s1, 96
  %1276 = vst.msk [vmem:[%s1275] sm:$0x1f] %vm1274, %v1273
  %s1277 = scalar_lea.vmem %s1, 35
  %1278 = vst.msk [vmem:[%s1277] sm:$0xe0] %vm1274, %v1273
  %s1279 = scalar_lea.vmem %s0, 121
  %v1280 = vld [vmem:[%s1279] sm:$0x1]
  %s1281 = scalar_lea.vmem %s0, 152
  %v1282 = vld [vmem:[%s1281] sm:$0x2]
  %vm1283 = vcmask 1041409
  %v1284 = vsel %vm1283, %v1282, %v1280
  %s1285 = scalar_lea.vmem %s0, 183
  %v1286 = vld [vmem:[%s1285] sm:$0x4]
  %vm1287 = vcmask 1042434
  %v1288 = vsel %vm1287, %v1286, %v1284
  %s1289 = scalar_lea.vmem %s0, 214
  %v1290 = vld [vmem:[%s1289] sm:$0x8]
  %vm1291 = vcmask 1043459
  %v1292 = vsel %vm1291, %v1290, %v1288
  %s1293 = scalar_lea.vmem %s0, 245
  %v1294 = vld [vmem:[%s1293] sm:$0x10]
  %vm1295 = vcmask 1044484
  %v1296 = vsel %vm1295, %v1294, %v1292
  %1297 = vrot.lane.b32.xlu0 %v1296, 60
  %v1298 = vpop.permute.xlu0 %1297
  %vm1299 = vcmask 720352
  %s1300 = scalar_lea.vmem %s1, 43
  %1301 = vst.msk [vmem:[%s1300] sm:$0x1f] %vm1299, %v1298
  %s1302 = scalar_lea.vmem %s0, 2
  %v1303 = vld [vmem:[%s1302] sm:$0x1]
  %s1304 = scalar_lea.vmem %s0, 33
  %v1305 = vld [vmem:[%s1304] sm:$0x2]
  %vm1306 = vcmask 1041409
  %v1307 = vsel %vm1306, %v1305, %v1303
  %s1308 = scalar_lea.vmem %s0, 64
  %v1309 = vld [vmem:[%s1308] sm:$0x4]
  %vm1310 = vcmask 1042434
  %v1311 = vsel %vm1310, %v1309, %v1307
  %s1312 = scalar_lea.vmem %s0, 95
  %v1313 = vld [vmem:[%s1312] sm:$0x8]
  %vm1314 = vcmask 1043459
  %v1315 = vsel %vm1314, %v1313, %v1311
  %s1316 = scalar_lea.vmem %s0, 126
  %v1317 = vld [vmem:[%s1316] sm:$0x10]
  %vm1318 = vcmask 1044484
  %v1319 = vsel %vm1318, %v1317, %v1315
  %s1320 = scalar_lea.vmem %s0, 157
  %v1321 = vld [vmem:[%s1320] sm:$0x20]
  %vm1322 = vcmask 1045509
  %v1323 = vsel %vm1322, %v1321, %v1319
  %s1324 = scalar_lea.vmem %s0, 188
  %v1325 = vld [vmem:[%s1324] sm:$0x40]
  %vm1326 = vcmask 1046534
  %v1327 = vsel %vm1326, %v1325, %v1323
  %s1328 = scalar_lea.vmem %s0, 219
  %v1329 = vld [vmem:[%s1328] sm:$0x80]
  %vm1330 = vcmask 1047559
  %v1331 = vsel %vm1330, %v1329, %v1327
  %1332 = vrot.lane.b32.xlu0 %v1331, 56
  %v1333 = vpop.permute.xlu0 %1332
  %vm1334 = vcmask 687552
  %1335 = vst.msk [vmem:[%s1] sm:$0xff] %vm1334, %v1333
  %s1336 = scalar_lea.vmem %s0, 258
  %v1337 = vld [vmem:[%s1336] sm:$0x1]
  %s1338 = scalar_lea.vmem %s0, 289
  %v1339 = vld [vmem:[%s1338] sm:$0x2]
  %vm1340 = vcmask 1041409
  %v1341 = vsel %vm1340, %v1339, %v1337
  %s1342 = scalar_lea.vmem %s0, 320
  %v1343 = vld [vmem:[%s1342] sm:$0x4]
  %vm1344 = vcmask 1042434
  %v1345 = vsel %vm1344, %v1343, %v1341
  %s1346 = scalar_lea.vmem %s0, 351
  %v1347 = vld [vmem:[%s1346] sm:$0x8]
  %vm1348 = vcmask 1043459
  %v1349 = vsel %vm1348, %v1347, %v1345
  %s1350 = scalar_lea.vmem %s0, 382
  %v1351 = vld [vmem:[%s1350] sm:$0x10]
  %vm1352 = vcmask 1044484
  %v1353 = vsel %vm1352, %v1351, %v1349
  %1354 = vrot.lane.b32.xlu0 %v1353, 56
  %v1355 = vpop.permute.xlu0 %1354
  %vm1356 = vcmask 687552
  %s1357 = scalar_lea.vmem %s1, 56
  %1358 = vst.msk [vmem:[%s1357] sm:$0x1f] %vm1356, %v1355
  %s1359 = scalar_lea.vmem %s0, 267
  %v1360 = vld [vmem:[%s1359] sm:$0x1]
  %s1361 = scalar_lea.vmem %s0, 298
  %v1362 = vld [vmem:[%s1361] sm:$0x2]
  %vm1363 = vcmask 1041409
  %v1364 = vsel %vm1363, %v1362, %v1360
  %s1365 = scalar_lea.vmem %s0, 329
  %v1366 = vld [vmem:[%s1365] sm:$0x4]
  %vm1367 = vcmask 1042434
  %v1368 = vsel %vm1367, %v1366, %v1364
  %s1369 = scalar_lea.vmem %s0, 360
  %v1370 = vld [vmem:[%s1369] sm:$0x8]
  %vm1371 = vcmask 1043459
  %v1372 = vsel %vm1371, %v1370, %v1368
  %s1373 = scalar_lea.vmem %s0, 391
  %v1374 = vld [vmem:[%s1373] sm:$0x10]
  %vm1375 = vcmask 1044484
  %v1376 = vsel %vm1375, %v1374, %v1372
  %s1377 = scalar_lea.vmem %s0, 6
  %v1378 = vld [vmem:[%s1377] sm:$0x20]
  %vm1379 = vcmask 1045509
  %v1380 = vsel %vm1379, %v1378, %v1376
  %s1381 = scalar_lea.vmem %s0, 37
  %v1382 = vld [vmem:[%s1381] sm:$0x40]
  %vm1383 = vcmask 1046534
  %v1384 = vsel %vm1383, %v1382, %v1380
  %s1385 = scalar_lea.vmem %s0, 68
  %v1386 = vld [vmem:[%s1385] sm:$0x80]
  %vm1387 = vcmask 1047559
  %v1388 = vsel %vm1387, %v1386, %v1384
  %1389 = vrot.lane.b32.xlu0 %v1388, 52
  %v1390 = vpop.permute.xlu0 %1389
  %vm1391 = vcmask 654752
  %s1392 = scalar_lea.vmem %s1, 72
  %1393 = vst.msk [vmem:[%s1392] sm:$0x1f] %vm1391, %v1390
  %s1394 = scalar_lea.vmem %s1, 11
  %1395 = vst.msk [vmem:[%s1394] sm:$0xe0] %vm1391, %v1390
  %s1396 = scalar_lea.vmem %s0, 107
  %v1397 = vld [vmem:[%s1396] sm:$0x1]
  %s1398 = scalar_lea.vmem %s0, 138
  %v1399 = vld [vmem:[%s1398] sm:$0x2]
  %vm1400 = vcmask 1041409
  %v1401 = vsel %vm1400, %v1399, %v1397
  %s1402 = scalar_lea.vmem %s0, 169
  %v1403 = vld [vmem:[%s1402] sm:$0x4]
  %vm1404 = vcmask 1042434
  %v1405 = vsel %vm1404, %v1403, %v1401
  %s1406 = scalar_lea.vmem %s0, 200
  %v1407 = vld [vmem:[%s1406] sm:$0x8]
  %vm1408 = vcmask 1043459
  %v1409 = vsel %vm1408, %v1407, %v1405
  %s1410 = scalar_lea.vmem %s0, 231
  %v1411 = vld [vmem:[%s1410] sm:$0x10]
  %vm1412 = vcmask 1044484
  %v1413 = vsel %vm1412, %v1411, %v1409
  %1414 = vrot.lane.b32.xlu0 %v1413, 52
  %v1415 = vpop.permute.xlu0 %1414
  %vm1416 = vcmask 654752
  %s1417 = scalar_lea.vmem %s1, 19
  %1418 = vst.msk [vmem:[%s1417] sm:$0x1f] %vm1416, %v1415
  %s1419 = scalar_lea.vmem %s0, 20
  %v1420 = vld [vmem:[%s1419] sm:$0x1]
  %s1421 = scalar_lea.vmem %s0, 51
  %v1422 = vld [vmem:[%s1421] sm:$0x2]
  %vm1423 = vcmask 1041409
  %v1424 = vsel %vm1423, %v1422, %v1420
  %s1425 = scalar_lea.vmem %s0, 82
  %v1426 = vld [vmem:[%s1425] sm:$0x4]
  %vm1427 = vcmask 1042434
  %v1428 = vsel %vm1427, %v1426, %v1424
  %s1429 = scalar_lea.vmem %s0, 113
  %v1430 = vld [vmem:[%s1429] sm:$0x8]
  %vm1431 = vcmask 1043459
  %v1432 = vsel %vm1431, %v1430, %v1428
  %s1433 = scalar_lea.vmem %s0, 144
  %v1434 = vld [vmem:[%s1433] sm:$0x10]
  %vm1435 = vcmask 1044484
  %v1436 = vsel %vm1435, %v1434, %v1432
  %s1437 = scalar_lea.vmem %s0, 175
  %v1438 = vld [vmem:[%s1437] sm:$0x20]
  %vm1439 = vcmask 1045509
  %v1440 = vsel %vm1439, %v1438, %v1436
  %s1441 = scalar_lea.vmem %s0, 206
  %v1442 = vld [vmem:[%s1441] sm:$0x40]
  %vm1443 = vcmask 1046534
  %v1444 = vsel %vm1443, %v1442, %v1440
  %s1445 = scalar_lea.vmem %s0, 237
  %v1446 = vld [vmem:[%s1445] sm:$0x80]
  %vm1447 = vcmask 1047559
  %v1448 = vsel %vm1447, %v1446, %v1444
  %1449 = vrot.lane.b32.xlu0 %v1448, 48
  %v1450 = vpop.permute.xlu0 %1449
  %vm1451 = vcmask 621952
  %s1452 = scalar_lea.vmem %s1, 32
  %1453 = vst.msk [vmem:[%s1452] sm:$0xff] %vm1451, %v1450
  %s1454 = scalar_lea.vmem %s0, 276
  %v1455 = vld [vmem:[%s1454] sm:$0x1]
  %s1456 = scalar_lea.vmem %s0, 307
  %v1457 = vld [vmem:[%s1456] sm:$0x2]
  %vm1458 = vcmask 1041409
  %v1459 = vsel %vm1458, %v1457, %v1455
  %s1460 = scalar_lea.vmem %s0, 338
  %v1461 = vld [vmem:[%s1460] sm:$0x4]
  %vm1462 = vcmask 1042434
  %v1463 = vsel %vm1462, %v1461, %v1459
  %s1464 = scalar_lea.vmem %s0, 369
  %v1465 = vld [vmem:[%s1464] sm:$0x8]
  %vm1466 = vcmask 1043459
  %v1467 = vsel %vm1466, %v1465, %v1463
  %s1468 = scalar_lea.vmem %s0, 400
  %v1469 = vld [vmem:[%s1468] sm:$0x10]
  %vm1470 = vcmask 1044484
  %v1471 = vsel %vm1470, %v1469, %v1467
  %1472 = vrot.lane.b32.xlu0 %v1471, 48
  %v1473 = vpop.permute.xlu0 %1472
  %vm1474 = vcmask 621952
  %s1475 = scalar_lea.vmem %s1, 88
  %1476 = vst.msk [vmem:[%s1475] sm:$0x1f] %vm1474, %v1473
  %s1477 = scalar_lea.vmem %s0, 262
  %v1478 = vld [vmem:[%s1477] sm:$0x1]
  %s1479 = scalar_lea.vmem %s0, 293
  %v1480 = vld [vmem:[%s1479] sm:$0x2]
  %vm1481 = vcmask 1041409
  %v1482 = vsel %vm1481, %v1480, %v1478
  %s1483 = scalar_lea.vmem %s0, 324
  %v1484 = vld [vmem:[%s1483] sm:$0x4]
  %vm1485 = vcmask 1042434
  %v1486 = vsel %vm1485, %v1484, %v1482
  %s1487 = scalar_lea.vmem %s0, 355
  %v1488 = vld [vmem:[%s1487] sm:$0x8]
  %vm1489 = vcmask 1043459
  %v1490 = vsel %vm1489, %v1488, %v1486
  %s1491 = scalar_lea.vmem %s0, 386
  %v1492 = vld [vmem:[%s1491] sm:$0x10]
  %vm1493 = vcmask 1044484
  %v1494 = vsel %vm1493, %v1492, %v1490
  %s1495 = scalar_lea.vmem %s0, 1
  %v1496 = vld [vmem:[%s1495] sm:$0x20]
  %vm1497 = vcmask 1045509
  %v1498 = vsel %vm1497, %v1496, %v1494
  %s1499 = scalar_lea.vmem %s0, 32
  %v1500 = vld [vmem:[%s1499] sm:$0x40]
  %vm1501 = vcmask 1046534
  %v1502 = vsel %vm1501, %v1500, %v1498
  %s1503 = scalar_lea.vmem %s0, 63
  %v1504 = vld [vmem:[%s1503] sm:$0x80]
  %vm1505 = vcmask 1047559
  %v1506 = vsel %vm1505, %v1504, %v1502
  %1507 = vrot.lane.b32.xlu0 %v1506, 40
  %v1508 = vpop.permute.xlu0 %1507
  %vm1509 = vcmask 556352
  %s1510 = scalar_lea.vmem %s1, 64
  %1511 = vst.msk [vmem:[%s1510] sm:$0x1f] %vm1509, %v1508
  %s1512 = scalar_lea.vmem %s1, 3
  %1513 = vst.msk [vmem:[%s1512] sm:$0xe0] %vm1509, %v1508
  %s1514 = scalar_lea.vmem %s0, 102
  %v1515 = vld [vmem:[%s1514] sm:$0x1]
  %s1516 = scalar_lea.vmem %s0, 133
  %v1517 = vld [vmem:[%s1516] sm:$0x2]
  %vm1518 = vcmask 1041409
  %v1519 = vsel %vm1518, %v1517, %v1515
  %s1520 = scalar_lea.vmem %s0, 164
  %v1521 = vld [vmem:[%s1520] sm:$0x4]
  %vm1522 = vcmask 1042434
  %v1523 = vsel %vm1522, %v1521, %v1519
  %s1524 = scalar_lea.vmem %s0, 195
  %v1525 = vld [vmem:[%s1524] sm:$0x8]
  %vm1526 = vcmask 1043459
  %v1527 = vsel %vm1526, %v1525, %v1523
  %s1528 = scalar_lea.vmem %s0, 226
  %v1529 = vld [vmem:[%s1528] sm:$0x10]
  %vm1530 = vcmask 1044484
  %v1531 = vsel %vm1530, %v1529, %v1527
  %1532 = vrot.lane.b32.xlu0 %v1531, 40
  %v1533 = vpop.permute.xlu0 %1532
  %vm1534 = vcmask 556352
  %s1535 = scalar_lea.vmem %s1, 11
  %1536 = vst.msk [vmem:[%s1535] sm:$0x1f] %vm1534, %v1533
  %s1537 = scalar_lea.vmem %s0, 271
  %v1538 = vld [vmem:[%s1537] sm:$0x1]
  %s1539 = scalar_lea.vmem %s0, 302
  %v1540 = vld [vmem:[%s1539] sm:$0x2]
  %vm1541 = vcmask 1041409
  %v1542 = vsel %vm1541, %v1540, %v1538
  %s1543 = scalar_lea.vmem %s0, 333
  %v1544 = vld [vmem:[%s1543] sm:$0x4]
  %vm1545 = vcmask 1042434
  %v1546 = vsel %vm1545, %v1544, %v1542
  %s1547 = scalar_lea.vmem %s0, 364
  %v1548 = vld [vmem:[%s1547] sm:$0x8]
  %vm1549 = vcmask 1043459
  %v1550 = vsel %vm1549, %v1548, %v1546
  %s1551 = scalar_lea.vmem %s0, 395
  %v1552 = vld [vmem:[%s1551] sm:$0x10]
  %vm1553 = vcmask 1044484
  %v1554 = vsel %vm1553, %v1552, %v1550
  %s1555 = scalar_lea.vmem %s0, 10
  %v1556 = vld [vmem:[%s1555] sm:$0x20]
  %vm1557 = vcmask 1045509
  %v1558 = vsel %vm1557, %v1556, %v1554
  %s1559 = scalar_lea.vmem %s0, 41
  %v1560 = vld [vmem:[%s1559] sm:$0x40]
  %vm1561 = vcmask 1046534
  %v1562 = vsel %vm1561, %v1560, %v1558
  %s1563 = scalar_lea.vmem %s0, 72
  %v1564 = vld [vmem:[%s1563] sm:$0x80]
  %vm1565 = vcmask 1047559
  %v1566 = vsel %vm1565, %v1564, %v1562
  %1567 = vrot.lane.b32.xlu0 %v1566, 36
  %v1568 = vpop.permute.xlu0 %1567
  %vm1569 = vcmask 523552
  %s1570 = scalar_lea.vmem %s1, 80
  %1571 = vst.msk [vmem:[%s1570] sm:$0x1f] %vm1569, %v1568
  %s1572 = scalar_lea.vmem %s1, 19
  %1573 = vst.msk [vmem:[%s1572] sm:$0xe0] %vm1569, %v1568
  %s1574 = scalar_lea.vmem %s0, 111
  %v1575 = vld [vmem:[%s1574] sm:$0x1]
  %s1576 = scalar_lea.vmem %s0, 142
  %v1577 = vld [vmem:[%s1576] sm:$0x2]
  %vm1578 = vcmask 1041409
  %v1579 = vsel %vm1578, %v1577, %v1575
  %s1580 = scalar_lea.vmem %s0, 173
  %v1581 = vld [vmem:[%s1580] sm:$0x4]
  %vm1582 = vcmask 1042434
  %v1583 = vsel %vm1582, %v1581, %v1579
  %s1584 = scalar_lea.vmem %s0, 204
  %v1585 = vld [vmem:[%s1584] sm:$0x8]
  %vm1586 = vcmask 1043459
  %v1587 = vsel %vm1586, %v1585, %v1583
  %s1588 = scalar_lea.vmem %s0, 235
  %v1589 = vld [vmem:[%s1588] sm:$0x10]
  %vm1590 = vcmask 1044484
  %v1591 = vsel %vm1590, %v1589, %v1587
  %1592 = vrot.lane.b32.xlu0 %v1591, 36
  %v1593 = vpop.permute.xlu0 %1592
  %vm1594 = vcmask 523552
  %s1595 = scalar_lea.vmem %s1, 27
  %1596 = vst.msk [vmem:[%s1595] sm:$0x1f] %vm1594, %v1593
  %s1597 = scalar_lea.vmem %s0, 280
  %v1598 = vld [vmem:[%s1597] sm:$0x1]
  %s1599 = scalar_lea.vmem %s0, 311
  %v1600 = vld [vmem:[%s1599] sm:$0x2]
  %vm1601 = vcmask 1041409
  %v1602 = vsel %vm1601, %v1600, %v1598
  %s1603 = scalar_lea.vmem %s0, 342
  %v1604 = vld [vmem:[%s1603] sm:$0x4]
  %vm1605 = vcmask 1042434
  %v1606 = vsel %vm1605, %v1604, %v1602
  %s1607 = scalar_lea.vmem %s0, 373
  %v1608 = vld [vmem:[%s1607] sm:$0x8]
  %vm1609 = vcmask 1043459
  %v1610 = vsel %vm1609, %v1608, %v1606
  %s1611 = scalar_lea.vmem %s0, 404
  %v1612 = vld [vmem:[%s1611] sm:$0x10]
  %vm1613 = vcmask 1044484
  %v1614 = vsel %vm1613, %v1612, %v1610
  %s1615 = scalar_lea.vmem %s0, 19
  %v1616 = vld [vmem:[%s1615] sm:$0x20]
  %vm1617 = vcmask 1045509
  %v1618 = vsel %vm1617, %v1616, %v1614
  %s1619 = scalar_lea.vmem %s0, 50
  %v1620 = vld [vmem:[%s1619] sm:$0x40]
  %vm1621 = vcmask 1046534
  %v1622 = vsel %vm1621, %v1620, %v1618
  %s1623 = scalar_lea.vmem %s0, 81
  %v1624 = vld [vmem:[%s1623] sm:$0x80]
  %vm1625 = vcmask 1047559
  %v1626 = vsel %vm1625, %v1624, %v1622
  %1627 = vrot.lane.b32.xlu0 %v1626, 32
  %v1628 = vpop.permute.xlu0 %1627
  %vm1629 = vcmask 490752
  %s1630 = scalar_lea.vmem %s1, 96
  %1631 = vst.msk [vmem:[%s1630] sm:$0x1f] %vm1629, %v1628
  %s1632 = scalar_lea.vmem %s1, 35
  %1633 = vst.msk [vmem:[%s1632] sm:$0xe0] %vm1629, %v1628
  %s1634 = scalar_lea.vmem %s0, 120
  %v1635 = vld [vmem:[%s1634] sm:$0x1]
  %s1636 = scalar_lea.vmem %s0, 151
  %v1637 = vld [vmem:[%s1636] sm:$0x2]
  %vm1638 = vcmask 1041409
  %v1639 = vsel %vm1638, %v1637, %v1635
  %s1640 = scalar_lea.vmem %s0, 182
  %v1641 = vld [vmem:[%s1640] sm:$0x4]
  %vm1642 = vcmask 1042434
  %v1643 = vsel %vm1642, %v1641, %v1639
  %s1644 = scalar_lea.vmem %s0, 213
  %v1645 = vld [vmem:[%s1644] sm:$0x8]
  %vm1646 = vcmask 1043459
  %v1647 = vsel %vm1646, %v1645, %v1643
  %s1648 = scalar_lea.vmem %s0, 244
  %v1649 = vld [vmem:[%s1648] sm:$0x10]
  %vm1650 = vcmask 1044484
  %v1651 = vsel %vm1650, %v1649, %v1647
  %1652 = vrot.lane.b32.xlu0 %v1651, 32
  %v1653 = vpop.permute.xlu0 %1652
  %vm1654 = vcmask 490752
  %s1655 = scalar_lea.vmem %s1, 43
  %1656 = vst.msk [vmem:[%s1655] sm:$0x1f] %vm1654, %v1653
  %s1657 = scalar_lea.vmem %s0, 1
  %v1658 = vld [vmem:[%s1657] sm:$0x1]
  %s1659 = scalar_lea.vmem %s0, 32
  %v1660 = vld [vmem:[%s1659] sm:$0x2]
  %vm1661 = vcmask 1041409
  %v1662 = vsel %vm1661, %v1660, %v1658
  %s1663 = scalar_lea.vmem %s0, 63
  %v1664 = vld [vmem:[%s1663] sm:$0x4]
  %vm1665 = vcmask 1042434
  %v1666 = vsel %vm1665, %v1664, %v1662
  %s1667 = scalar_lea.vmem %s0, 94
  %v1668 = vld [vmem:[%s1667] sm:$0x8]
  %vm1669 = vcmask 1043459
  %v1670 = vsel %vm1669, %v1668, %v1666
  %s1671 = scalar_lea.vmem %s0, 125
  %v1672 = vld [vmem:[%s1671] sm:$0x10]
  %vm1673 = vcmask 1044484
  %v1674 = vsel %vm1673, %v1672, %v1670
  %s1675 = scalar_lea.vmem %s0, 156
  %v1676 = vld [vmem:[%s1675] sm:$0x20]
  %vm1677 = vcmask 1045509
  %v1678 = vsel %vm1677, %v1676, %v1674
  %s1679 = scalar_lea.vmem %s0, 187
  %v1680 = vld [vmem:[%s1679] sm:$0x40]
  %vm1681 = vcmask 1046534
  %v1682 = vsel %vm1681, %v1680, %v1678
  %s1683 = scalar_lea.vmem %s0, 218
  %v1684 = vld [vmem:[%s1683] sm:$0x80]
  %vm1685 = vcmask 1047559
  %v1686 = vsel %vm1685, %v1684, %v1682
  %1687 = vrot.lane.b32.xlu0 %v1686, 28
  %v1688 = vpop.permute.xlu0 %1687
  %vm1689 = vcmask 457952
  %1690 = vst.msk [vmem:[%s1] sm:$0xff] %vm1689, %v1688
  %s1691 = scalar_lea.vmem %s0, 257
  %v1692 = vld [vmem:[%s1691] sm:$0x1]
  %s1693 = scalar_lea.vmem %s0, 288
  %v1694 = vld [vmem:[%s1693] sm:$0x2]
  %vm1695 = vcmask 1041409
  %v1696 = vsel %vm1695, %v1694, %v1692
  %s1697 = scalar_lea.vmem %s0, 319
  %v1698 = vld [vmem:[%s1697] sm:$0x4]
  %vm1699 = vcmask 1042434
  %v1700 = vsel %vm1699, %v1698, %v1696
  %s1701 = scalar_lea.vmem %s0, 350
  %v1702 = vld [vmem:[%s1701] sm:$0x8]
  %vm1703 = vcmask 1043459
  %v1704 = vsel %vm1703, %v1702, %v1700
  %s1705 = scalar_lea.vmem %s0, 381
  %v1706 = vld [vmem:[%s1705] sm:$0x10]
  %vm1707 = vcmask 1044484
  %v1708 = vsel %vm1707, %v1706, %v1704
  %1709 = vrot.lane.b32.xlu0 %v1708, 28
  %v1710 = vpop.permute.xlu0 %1709
  %vm1711 = vcmask 457952
  %s1712 = scalar_lea.vmem %s1, 56
  %1713 = vst.msk [vmem:[%s1712] sm:$0x1f] %vm1711, %v1710
  %s1714 = scalar_lea.vmem %s0, 266
  %v1715 = vld [vmem:[%s1714] sm:$0x1]
  %s1716 = scalar_lea.vmem %s0, 297
  %v1717 = vld [vmem:[%s1716] sm:$0x2]
  %vm1718 = vcmask 1041409
  %v1719 = vsel %vm1718, %v1717, %v1715
  %s1720 = scalar_lea.vmem %s0, 328
  %v1721 = vld [vmem:[%s1720] sm:$0x4]
  %vm1722 = vcmask 1042434
  %v1723 = vsel %vm1722, %v1721, %v1719
  %s1724 = scalar_lea.vmem %s0, 359
  %v1725 = vld [vmem:[%s1724] sm:$0x8]
  %vm1726 = vcmask 1043459
  %v1727 = vsel %vm1726, %v1725, %v1723
  %s1728 = scalar_lea.vmem %s0, 390
  %v1729 = vld [vmem:[%s1728] sm:$0x10]
  %vm1730 = vcmask 1044484
  %v1731 = vsel %vm1730, %v1729, %v1727
  %s1732 = scalar_lea.vmem %s0, 5
  %v1733 = vld [vmem:[%s1732] sm:$0x20]
  %vm1734 = vcmask 1045509
  %v1735 = vsel %vm1734, %v1733, %v1731
  %s1736 = scalar_lea.vmem %s0, 36
  %v1737 = vld [vmem:[%s1736] sm:$0x40]
  %vm1738 = vcmask 1046534
  %v1739 = vsel %vm1738, %v1737, %v1735
  %s1740 = scalar_lea.vmem %s0, 67
  %v1741 = vld [vmem:[%s1740] sm:$0x80]
  %vm1742 = vcmask 1047559
  %v1743 = vsel %vm1742, %v1741, %v1739
  %1744 = vrot.lane.b32.xlu0 %v1743, 24
  %v1745 = vpop.permute.xlu0 %1744
  %vm1746 = vcmask 425152
  %s1747 = scalar_lea.vmem %s1, 72
  %1748 = vst.msk [vmem:[%s1747] sm:$0x1f] %vm1746, %v1745
  %s1749 = scalar_lea.vmem %s1, 11
  %1750 = vst.msk [vmem:[%s1749] sm:$0xe0] %vm1746, %v1745
  %s1751 = scalar_lea.vmem %s0, 106
  %v1752 = vld [vmem:[%s1751] sm:$0x1]
  %s1753 = scalar_lea.vmem %s0, 137
  %v1754 = vld [vmem:[%s1753] sm:$0x2]
  %vm1755 = vcmask 1041409
  %v1756 = vsel %vm1755, %v1754, %v1752
  %s1757 = scalar_lea.vmem %s0, 168
  %v1758 = vld [vmem:[%s1757] sm:$0x4]
  %vm1759 = vcmask 1042434
  %v1760 = vsel %vm1759, %v1758, %v1756
  %s1761 = scalar_lea.vmem %s0, 199
  %v1762 = vld [vmem:[%s1761] sm:$0x8]
  %vm1763 = vcmask 1043459
  %v1764 = vsel %vm1763, %v1762, %v1760
  %s1765 = scalar_lea.vmem %s0, 230
  %v1766 = vld [vmem:[%s1765] sm:$0x10]
  %vm1767 = vcmask 1044484
  %v1768 = vsel %vm1767, %v1766, %v1764
  %1769 = vrot.lane.b32.xlu0 %v1768, 24
  %v1770 = vpop.permute.xlu0 %1769
  %vm1771 = vcmask 425152
  %s1772 = scalar_lea.vmem %s1, 19
  %1773 = vst.msk [vmem:[%s1772] sm:$0x1f] %vm1771, %v1770
  %s1774 = scalar_lea.vmem %s0, 19
  %v1775 = vld [vmem:[%s1774] sm:$0x1]
  %s1776 = scalar_lea.vmem %s0, 50
  %v1777 = vld [vmem:[%s1776] sm:$0x2]
  %vm1778 = vcmask 1041409
  %v1779 = vsel %vm1778, %v1777, %v1775
  %s1780 = scalar_lea.vmem %s0, 81
  %v1781 = vld [vmem:[%s1780] sm:$0x4]
  %vm1782 = vcmask 1042434
  %v1783 = vsel %vm1782, %v1781, %v1779
  %s1784 = scalar_lea.vmem %s0, 112
  %v1785 = vld [vmem:[%s1784] sm:$0x8]
  %vm1786 = vcmask 1043459
  %v1787 = vsel %vm1786, %v1785, %v1783
  %s1788 = scalar_lea.vmem %s0, 143
  %v1789 = vld [vmem:[%s1788] sm:$0x10]
  %vm1790 = vcmask 1044484
  %v1791 = vsel %vm1790, %v1789, %v1787
  %s1792 = scalar_lea.vmem %s0, 174
  %v1793 = vld [vmem:[%s1792] sm:$0x20]
  %vm1794 = vcmask 1045509
  %v1795 = vsel %vm1794, %v1793, %v1791
  %s1796 = scalar_lea.vmem %s0, 205
  %v1797 = vld [vmem:[%s1796] sm:$0x40]
  %vm1798 = vcmask 1046534
  %v1799 = vsel %vm1798, %v1797, %v1795
  %s1800 = scalar_lea.vmem %s0, 236
  %v1801 = vld [vmem:[%s1800] sm:$0x80]
  %vm1802 = vcmask 1047559
  %v1803 = vsel %vm1802, %v1801, %v1799
  %1804 = vrot.lane.b32.xlu0 %v1803, 20
  %v1805 = vpop.permute.xlu0 %1804
  %vm1806 = vcmask 392352
  %s1807 = scalar_lea.vmem %s1, 32
  %1808 = vst.msk [vmem:[%s1807] sm:$0xff] %vm1806, %v1805
  %s1809 = scalar_lea.vmem %s0, 275
  %v1810 = vld [vmem:[%s1809] sm:$0x1]
  %s1811 = scalar_lea.vmem %s0, 306
  %v1812 = vld [vmem:[%s1811] sm:$0x2]
  %vm1813 = vcmask 1041409
  %v1814 = vsel %vm1813, %v1812, %v1810
  %s1815 = scalar_lea.vmem %s0, 337
  %v1816 = vld [vmem:[%s1815] sm:$0x4]
  %vm1817 = vcmask 1042434
  %v1818 = vsel %vm1817, %v1816, %v1814
  %s1819 = scalar_lea.vmem %s0, 368
  %v1820 = vld [vmem:[%s1819] sm:$0x8]
  %vm1821 = vcmask 1043459
  %v1822 = vsel %vm1821, %v1820, %v1818
  %s1823 = scalar_lea.vmem %s0, 399
  %v1824 = vld [vmem:[%s1823] sm:$0x10]
  %vm1825 = vcmask 1044484
  %v1826 = vsel %vm1825, %v1824, %v1822
  %1827 = vrot.lane.b32.xlu0 %v1826, 20
  %v1828 = vpop.permute.xlu0 %1827
  %vm1829 = vcmask 392352
  %s1830 = scalar_lea.vmem %s1, 88
  %1831 = vst.msk [vmem:[%s1830] sm:$0x1f] %vm1829, %v1828
  %s1832 = scalar_lea.vmem %s0, 261
  %v1833 = vld [vmem:[%s1832] sm:$0x1]
  %s1834 = scalar_lea.vmem %s0, 292
  %v1835 = vld [vmem:[%s1834] sm:$0x2]
  %vm1836 = vcmask 1041409
  %v1837 = vsel %vm1836, %v1835, %v1833
  %s1838 = scalar_lea.vmem %s0, 323
  %v1839 = vld [vmem:[%s1838] sm:$0x4]
  %vm1840 = vcmask 1042434
  %v1841 = vsel %vm1840, %v1839, %v1837
  %s1842 = scalar_lea.vmem %s0, 354
  %v1843 = vld [vmem:[%s1842] sm:$0x8]
  %vm1844 = vcmask 1043459
  %v1845 = vsel %vm1844, %v1843, %v1841
  %s1846 = scalar_lea.vmem %s0, 385
  %v1847 = vld [vmem:[%s1846] sm:$0x10]
  %vm1848 = vcmask 1044484
  %v1849 = vsel %vm1848, %v1847, %v1845
  %v1850 = vld [vmem:[%s0] sm:$0x20]
  %vm1851 = vcmask 1045509
  %v1852 = vsel %vm1851, %v1850, %v1849
  %s1853 = scalar_lea.vmem %s0, 31
  %v1854 = vld [vmem:[%s1853] sm:$0x40]
  %vm1855 = vcmask 1046534
  %v1856 = vsel %vm1855, %v1854, %v1852
  %s1857 = scalar_lea.vmem %s0, 62
  %v1858 = vld [vmem:[%s1857] sm:$0x80]
  %vm1859 = vcmask 1047559
  %v1860 = vsel %vm1859, %v1858, %v1856
  %1861 = vrot.lane.b32.xlu0 %v1860, 12
  %v1862 = vpop.permute.xlu0 %1861
  %vm1863 = vcmask 326752
  %s1864 = scalar_lea.vmem %s1, 64
  %1865 = vst.msk [vmem:[%s1864] sm:$0x1f] %vm1863, %v1862
  %s1866 = scalar_lea.vmem %s1, 3
  %1867 = vst.msk [vmem:[%s1866] sm:$0xe0] %vm1863, %v1862
  %s1868 = scalar_lea.vmem %s0, 101
  %v1869 = vld [vmem:[%s1868] sm:$0x1]
  %s1870 = scalar_lea.vmem %s0, 132
  %v1871 = vld [vmem:[%s1870] sm:$0x2]
  %vm1872 = vcmask 1041409
  %v1873 = vsel %vm1872, %v1871, %v1869
  %s1874 = scalar_lea.vmem %s0, 163
  %v1875 = vld [vmem:[%s1874] sm:$0x4]
  %vm1876 = vcmask 1042434
  %v1877 = vsel %vm1876, %v1875, %v1873
  %s1878 = scalar_lea.vmem %s0, 194
  %v1879 = vld [vmem:[%s1878] sm:$0x8]
  %vm1880 = vcmask 1043459
  %v1881 = vsel %vm1880, %v1879, %v1877
  %s1882 = scalar_lea.vmem %s0, 225
  %v1883 = vld [vmem:[%s1882] sm:$0x10]
  %vm1884 = vcmask 1044484
  %v1885 = vsel %vm1884, %v1883, %v1881
  %1886 = vrot.lane.b32.xlu0 %v1885, 12
  %v1887 = vpop.permute.xlu0 %1886
  %vm1888 = vcmask 326752
  %s1889 = scalar_lea.vmem %s1, 11
  %1890 = vst.msk [vmem:[%s1889] sm:$0x1f] %vm1888, %v1887
  %s1891 = scalar_lea.vmem %s0, 270
  %v1892 = vld [vmem:[%s1891] sm:$0x1]
  %s1893 = scalar_lea.vmem %s0, 301
  %v1894 = vld [vmem:[%s1893] sm:$0x2]
  %vm1895 = vcmask 1041409
  %v1896 = vsel %vm1895, %v1894, %v1892
  %s1897 = scalar_lea.vmem %s0, 332
  %v1898 = vld [vmem:[%s1897] sm:$0x4]
  %vm1899 = vcmask 1042434
  %v1900 = vsel %vm1899, %v1898, %v1896
  %s1901 = scalar_lea.vmem %s0, 363
  %v1902 = vld [vmem:[%s1901] sm:$0x8]
  %vm1903 = vcmask 1043459
  %v1904 = vsel %vm1903, %v1902, %v1900
  %s1905 = scalar_lea.vmem %s0, 394
  %v1906 = vld [vmem:[%s1905] sm:$0x10]
  %vm1907 = vcmask 1044484
  %v1908 = vsel %vm1907, %v1906, %v1904
  %s1909 = scalar_lea.vmem %s0, 9
  %v1910 = vld [vmem:[%s1909] sm:$0x20]
  %vm1911 = vcmask 1045509
  %v1912 = vsel %vm1911, %v1910, %v1908
  %s1913 = scalar_lea.vmem %s0, 40
  %v1914 = vld [vmem:[%s1913] sm:$0x40]
  %vm1915 = vcmask 1046534
  %v1916 = vsel %vm1915, %v1914, %v1912
  %s1917 = scalar_lea.vmem %s0, 71
  %v1918 = vld [vmem:[%s1917] sm:$0x80]
  %vm1919 = vcmask 1047559
  %v1920 = vsel %vm1919, %v1918, %v1916
  %1921 = vrot.lane.b32.xlu0 %v1920, 8
  %v1922 = vpop.permute.xlu0 %1921
  %vm1923 = vcmask 293952
  %s1924 = scalar_lea.vmem %s1, 80
  %1925 = vst.msk [vmem:[%s1924] sm:$0x1f] %vm1923, %v1922
  %s1926 = scalar_lea.vmem %s1, 19
  %1927 = vst.msk [vmem:[%s1926] sm:$0xe0] %vm1923, %v1922
  %s1928 = scalar_lea.vmem %s0, 110
  %v1929 = vld [vmem:[%s1928] sm:$0x1]
  %s1930 = scalar_lea.vmem %s0, 141
  %v1931 = vld [vmem:[%s1930] sm:$0x2]
  %vm1932 = vcmask 1041409
  %v1933 = vsel %vm1932, %v1931, %v1929
  %s1934 = scalar_lea.vmem %s0, 172
  %v1935 = vld [vmem:[%s1934] sm:$0x4]
  %vm1936 = vcmask 1042434
  %v1937 = vsel %vm1936, %v1935, %v1933
  %s1938 = scalar_lea.vmem %s0, 203
  %v1939 = vld [vmem:[%s1938] sm:$0x8]
  %vm1940 = vcmask 1043459
  %v1941 = vsel %vm1940, %v1939, %v1937
  %s1942 = scalar_lea.vmem %s0, 234
  %v1943 = vld [vmem:[%s1942] sm:$0x10]
  %vm1944 = vcmask 1044484
  %v1945 = vsel %vm1944, %v1943, %v1941
  %1946 = vrot.lane.b32.xlu0 %v1945, 8
  %v1947 = vpop.permute.xlu0 %1946
  %vm1948 = vcmask 293952
  %s1949 = scalar_lea.vmem %s1, 27
  %1950 = vst.msk [vmem:[%s1949] sm:$0x1f] %vm1948, %v1947
  %s1951 = scalar_lea.vmem %s0, 279
  %v1952 = vld [vmem:[%s1951] sm:$0x1]
  %s1953 = scalar_lea.vmem %s0, 310
  %v1954 = vld [vmem:[%s1953] sm:$0x2]
  %vm1955 = vcmask 1041409
  %v1956 = vsel %vm1955, %v1954, %v1952
  %s1957 = scalar_lea.vmem %s0, 341
  %v1958 = vld [vmem:[%s1957] sm:$0x4]
  %vm1959 = vcmask 1042434
  %v1960 = vsel %vm1959, %v1958, %v1956
  %s1961 = scalar_lea.vmem %s0, 372
  %v1962 = vld [vmem:[%s1961] sm:$0x8]
  %vm1963 = vcmask 1043459
  %v1964 = vsel %vm1963, %v1962, %v1960
  %s1965 = scalar_lea.vmem %s0, 403
  %v1966 = vld [vmem:[%s1965] sm:$0x10]
  %vm1967 = vcmask 1044484
  %v1968 = vsel %vm1967, %v1966, %v1964
  %s1969 = scalar_lea.vmem %s0, 18
  %v1970 = vld [vmem:[%s1969] sm:$0x20]
  %vm1971 = vcmask 1045509
  %v1972 = vsel %vm1971, %v1970, %v1968
  %s1973 = scalar_lea.vmem %s0, 49
  %v1974 = vld [vmem:[%s1973] sm:$0x40]
  %vm1975 = vcmask 1046534
  %v1976 = vsel %vm1975, %v1974, %v1972
  %s1977 = scalar_lea.vmem %s0, 80
  %v1978 = vld [vmem:[%s1977] sm:$0x80]
  %vm1979 = vcmask 1047559
  %v1980 = vsel %vm1979, %v1978, %v1976
  %1981 = vrot.lane.b32.xlu0 %v1980, 4
  %v1982 = vpop.permute.xlu0 %1981
  %vm1983 = vcmask 261152
  %s1984 = scalar_lea.vmem %s1, 96
  %1985 = vst.msk [vmem:[%s1984] sm:$0x1f] %vm1983, %v1982
  %s1986 = scalar_lea.vmem %s1, 35
  %1987 = vst.msk [vmem:[%s1986] sm:$0xe0] %vm1983, %v1982
  %s1988 = scalar_lea.vmem %s0, 119
  %v1989 = vld [vmem:[%s1988] sm:$0x1]
  %s1990 = scalar_lea.vmem %s0, 150
  %v1991 = vld [vmem:[%s1990] sm:$0x2]
  %vm1992 = vcmask 1041409
  %v1993 = vsel %vm1992, %v1991, %v1989
  %s1994 = scalar_lea.vmem %s0, 181
  %v1995 = vld [vmem:[%s1994] sm:$0x4]
  %vm1996 = vcmask 1042434
  %v1997 = vsel %vm1996, %v1995, %v1993
  %s1998 = scalar_lea.vmem %s0, 212
  %v1999 = vld [vmem:[%s1998] sm:$0x8]
  %vm2000 = vcmask 1043459
  %v2001 = vsel %vm2000, %v1999, %v1997
  %s2002 = scalar_lea.vmem %s0, 243
  %v2003 = vld [vmem:[%s2002] sm:$0x10]
  %vm2004 = vcmask 1044484
  %v2005 = vsel %vm2004, %v2003, %v2001
  %2006 = vrot.lane.b32.xlu0 %v2005, 4
  %v2007 = vpop.permute.xlu0 %2006
  %vm2008 = vcmask 261152
  %s2009 = scalar_lea.vmem %s1, 43
  %2010 = vst.msk [vmem:[%s2009] sm:$0x1f] %vm2008, %v2007

// kernel: fixednet_forward.1
$region0: #{fixednet_forward.1}
  #allocation0 [shape = 'u32[]', space=smem, size = 0x4, offset = 0x4, fixed_abs, tag = 'smem constant byte address 0x4 - core index']
  #allocation1 [shape = 'u32[72,128]{1,0:T(1,128)}', space=vmem, size = 0x9000, scoped, tag = 'internal scratch']
  %s0 = inlined_call_operand.vmem [shape: f32[2,704,128], index: 0, kind: input, shape index: {}]
  %s1 = inlined_call_operand.vmem [shape: f32[128,128], index: 1, kind: input, shape index: {}]
  %s2 = inlined_call_operand.vmem [shape: f32[1,128], index: 2, kind: input, shape index: {}]
  %s3 = inlined_call_operand.vmem [shape: bf16[9,128,176], index: 3, kind: input, shape index: {}]
  %s4 = inlined_call_operand.vmem [shape: bf16[9,128,256], index: 4, kind: input, shape index: {}]
  %s5 = inlined_call_operand.vmem [shape: f32[1,256], index: 5, kind: input, shape index: {}]
  %s6 = inlined_call_operand.vmem [shape: bf16[9,8,32], index: 6, kind: input, shape index: {}]
  %s7 = inlined_call_operand.vmem [shape: bf16[9,256,256], index: 7, kind: input, shape index: {}]
  %s8 = inlined_call_operand.vmem [shape: f32[1,256], index: 8, kind: input, shape index: {}]
  %s9 = inlined_call_operand.vmem [shape: bf16[256,128], index: 9, kind: input, shape index: {}]
  %s10 = inlined_call_operand.vmem [shape: f32[1,128], index: 10, kind: input, shape index: {}]
  %s11 = inlined_call_operand.vmem [shape: f32[2,1,128], index: 11, kind: output, shape index: {}]
  %s12 = sld [smem:[#allocation0]]
  $region77: #{fixednet_forward.1} parent=0
    _
  %s14 = ssub.s32 1, %s12
  %s15 = scalar_select 0, %s14, %s12
  loop: start=0, step=1, limit=4
  $region2: #{fixednet_forward.1} parent=0 // loop_pre_header
    _
  $region3: #{fixednet_forward.1} parent=0 // loop_header
    %s17 = sphi 0, %s21
    %p18 = scmp.ge.s32.totalorder %s17, 4
    %s27 = sphi 0, %s29
    %s30 = sphi 0, %s27
    %s31 = sphi 0, %s30
    %s47 = sphi 0, %s31
    %s51 = sphi 0, %s51
    %s53 = sphi 0, %s51
    %s54 = sphi 0, %s53
    %s68 = sphi 0, %s54
    %s72 = sphi 0, %s72
    %s74 = sphi 0, %s72
    %s75 = sphi 0, %s74
    %s89 = sphi 0, %s75
    %s93 = sphi 0, %s93
    %s95 = sphi 0, %s93
    %s96 = sphi 0, %s95
    %s110 = sphi 0, %s96
    %s114 = sphi 0, %s114
    %s116 = sphi 0, %s114
    %s117 = sphi 0, %s116
    %s131 = sphi 0, %s117
    %s135 = sphi 0, %s135
    %s137 = sphi 0, %s135
    %s138 = sphi 0, %s137
    %s152 = sphi 0, %s138
    %s156 = sphi 0, %s156
    %s158 = sphi 0, %s156
    %s159 = sphi 0, %s158
    %s173 = sphi 0, %s159
    %s177 = sphi 0, %s177
    %s179 = sphi 0, %s177
    %s180 = sphi 0, %s179
    %s194 = sphi 0, %s180
    %s198 = sphi 0, %s198
    %s200 = sphi 0, %s198
    %s201 = sphi 0, %s200
    %s215 = sphi 0, %s201
    %s219 = sphi 0, %s219
    %s221 = sphi 0, %s219
    %s222 = sphi 0, %s221
    %s236 = sphi 0, %s222
    %s240 = sphi 0, %s240
    %s242 = sphi 0, %s240
    %s243 = sphi 0, %s242
    %s257 = sphi 0, %s243
    %s263 = sphi 0, %s265
    %s266 = sphi 0, %s263
    %s267 = sphi 0, %s266
    %s283 = sphi 0, %s267
  $region4: #{fixednet_forward.1} parent=0 // loop_header_branch
    %20 = sbr.rel (%p18) target = $region8
  $region5: #{fixednet_forward.1} parent=0 // loop_body
    %s22 = ssub.s32 %s17, 1
    %s23 = ssub.s32 %s17, 2
    %s24 = sadd.s32 %s17, 1
    %s25 = ssub.s32 %s17, %s24
    %p26 = scmp.eq.s32.totalorder %s25, 0
    %s28 = sadd.s32 %s27, 1
    %s29 = scalar_select %p26, %s27, %s28
    %p32 = pneg %p26
    %p33 = scmp.eq.s32.totalorder %s17, 1
    %p34 = por %p32, %p33
    %p35 = scmp.ne.s32.totalorder %s27, %s30
    %p36 = scmp.eq.s32.totalorder %s17, 0
    %p37 = por %p35, %p36
    %p38 = scmp.ne.s32.totalorder %s27, %s30
    %p39 = scmp.eq.s32.totalorder %s22, 1
    %p40 = por %p38, %p39
    %p41 = scmp.ne.s32.totalorder %s30, %s31
    %p42 = scmp.eq.s32.totalorder %s22, 0
    %p43 = por %p41, %p42
    %p44 = scmp.ne.s32.totalorder %s30, %s31
    %p45 = scmp.eq.s32.totalorder %s23, 1
    %p46 = por %p44, %p45
    %p48 = scmp.ne.s32.totalorder %s31, %s47
    %p49 = scmp.eq.s32.totalorder %s23, 0
    %p50 = por %p48, %p49
    %s52 = sadd.s32 %s51, 1
    %p55 = scmp.eq.s32.totalorder %s17, 1
    %p56 = scmp.ne.s32.totalorder %s51, %s53
    %p57 = scmp.eq.s32.totalorder %s17, 0
    %p58 = por %p56, %p57
    %p59 = scmp.ne.s32.totalorder %s51, %s53
    %p60 = scmp.eq.s32.totalorder %s22, 1
    %p61 = por %p59, %p60
    %p62 = scmp.ne.s32.totalorder %s53, %s54
    %p63 = scmp.eq.s32.totalorder %s22, 0
    %p64 = por %p62, %p63
    %p65 = scmp.ne.s32.totalorder %s53, %s54
    %p66 = scmp.eq.s32.totalorder %s23, 1
    %p67 = por %p65, %p66
    %p69 = scmp.ne.s32.totalorder %s54, %s68
    %p70 = scmp.eq.s32.totalorder %s23, 0
    %p71 = por %p69, %p70
    %s73 = sadd.s32 %s72, 1
    %p76 = scmp.eq.s32.totalorder %s17, 1
    %p77 = scmp.ne.s32.totalorder %s72, %s74
    %p78 = scmp.eq.s32.totalorder %s17, 0
    %p79 = por %p77, %p78
    %p80 = scmp.ne.s32.totalorder %s72, %s74
    %p81 = scmp.eq.s32.totalorder %s22, 1
    %p82 = por %p80, %p81
    %p83 = scmp.ne.s32.totalorder %s74, %s75
    %p84 = scmp.eq.s32.totalorder %s22, 0
    %p85 = por %p83, %p84
    %p86 = scmp.ne.s32.totalorder %s74, %s75
    %p87 = scmp.eq.s32.totalorder %s23, 1
    %p88 = por %p86, %p87
    %p90 = scmp.ne.s32.totalorder %s75, %s89
    %p91 = scmp.eq.s32.totalorder %s23, 0
    %p92 = por %p90, %p91
    %s94 = sadd.s32 %s93, 1
    %p97 = scmp.eq.s32.totalorder %s17, 1
    %p98 = scmp.ne.s32.totalorder %s93, %s95
    %p99 = scmp.eq.s32.totalorder %s17, 0
    %p100 = por %p98, %p99
    %p101 = scmp.ne.s32.totalorder %s93, %s95
    %p102 = scmp.eq.s32.totalorder %s22, 1
    %p103 = por %p101, %p102
    %p104 = scmp.ne.s32.totalorder %s95, %s96
    %p105 = scmp.eq.s32.totalorder %s22, 0
    %p106 = por %p104, %p105
    %p107 = scmp.ne.s32.totalorder %s95, %s96
    %p108 = scmp.eq.s32.totalorder %s23, 1
    %p109 = por %p107, %p108
    %p111 = scmp.ne.s32.totalorder %s96, %s110
    %p112 = scmp.eq.s32.totalorder %s23, 0
    %p113 = por %p111, %p112
    %s115 = sadd.s32 %s114, 1
    %p118 = scmp.eq.s32.totalorder %s17, 1
    %p119 = scmp.ne.s32.totalorder %s114, %s116
    %p120 = scmp.eq.s32.totalorder %s17, 0
    %p121 = por %p119, %p120
    %p122 = scmp.ne.s32.totalorder %s114, %s116
    %p123 = scmp.eq.s32.totalorder %s22, 1
    %p124 = por %p122, %p123
    %p125 = scmp.ne.s32.totalorder %s116, %s117
    %p126 = scmp.eq.s32.totalorder %s22, 0
    %p127 = por %p125, %p126
    %p128 = scmp.ne.s32.totalorder %s116, %s117
    %p129 = scmp.eq.s32.totalorder %s23, 1
    %p130 = por %p128, %p129
    %p132 = scmp.ne.s32.totalorder %s117, %s131
    %p133 = scmp.eq.s32.totalorder %s23, 0
    %p134 = por %p132, %p133
    %s136 = sadd.s32 %s135, 1
    %p139 = scmp.eq.s32.totalorder %s17, 1
    %p140 = scmp.ne.s32.totalorder %s135, %s137
    %p141 = scmp.eq.s32.totalorder %s17, 0
    %p142 = por %p140, %p141
    %p143 = scmp.ne.s32.totalorder %s135, %s137
    %p144 = scmp.eq.s32.totalorder %s22, 1
    %p145 = por %p143, %p144
    %p146 = scmp.ne.s32.totalorder %s137, %s138
    %p147 = scmp.eq.s32.totalorder %s22, 0
    %p148 = por %p146, %p147
    %p149 = scmp.ne.s32.totalorder %s137, %s138
    %p150 = scmp.eq.s32.totalorder %s23, 1
    %p151 = por %p149, %p150
    %p153 = scmp.ne.s32.totalorder %s138, %s152
    %p154 = scmp.eq.s32.totalorder %s23, 0
    %p155 = por %p153, %p154
    %s157 = sadd.s32 %s156, 1
    %p160 = scmp.eq.s32.totalorder %s17, 1
    %p161 = scmp.ne.s32.totalorder %s156, %s158
    %p162 = scmp.eq.s32.totalorder %s17, 0
    %p163 = por %p161, %p162
    %p164 = scmp.ne.s32.totalorder %s156, %s158
    %p165 = scmp.eq.s32.totalorder %s22, 1
    %p166 = por %p164, %p165
    %p167 = scmp.ne.s32.totalorder %s158, %s159
    %p168 = scmp.eq.s32.totalorder %s22, 0
    %p169 = por %p167, %p168
    %p170 = scmp.ne.s32.totalorder %s158, %s159
    %p171 = scmp.eq.s32.totalorder %s23, 1
    %p172 = por %p170, %p171
    %p174 = scmp.ne.s32.totalorder %s159, %s173
    %p175 = scmp.eq.s32.totalorder %s23, 0
    %p176 = por %p174, %p175
    %s178 = sadd.s32 %s177, 1
    %p181 = scmp.eq.s32.totalorder %s17, 1
    %p182 = scmp.ne.s32.totalorder %s177, %s179
    %p183 = scmp.eq.s32.totalorder %s17, 0
    %p184 = por %p182, %p183
    %p185 = scmp.ne.s32.totalorder %s177, %s179
    %p186 = scmp.eq.s32.totalorder %s22, 1
    %p187 = por %p185, %p186
    %p188 = scmp.ne.s32.totalorder %s179, %s180
    %p189 = scmp.eq.s32.totalorder %s22, 0
    %p190 = por %p188, %p189
    %p191 = scmp.ne.s32.totalorder %s179, %s180
    %p192 = scmp.eq.s32.totalorder %s23, 1
    %p193 = por %p191, %p192
    %p195 = scmp.ne.s32.totalorder %s180, %s194
    %p196 = scmp.eq.s32.totalorder %s23, 0
    %p197 = por %p195, %p196
    %s199 = sadd.s32 %s198, 1
    %p202 = scmp.eq.s32.totalorder %s17, 1
    %p203 = scmp.ne.s32.totalorder %s198, %s200
    %p204 = scmp.eq.s32.totalorder %s17, 0
    %p205 = por %p203, %p204
    %p206 = scmp.ne.s32.totalorder %s198, %s200
    %p207 = scmp.eq.s32.totalorder %s22, 1
    %p208 = por %p206, %p207
    %p209 = scmp.ne.s32.totalorder %s200, %s201
    %p210 = scmp.eq.s32.totalorder %s22, 0
    %p211 = por %p209, %p210
    %p212 = scmp.ne.s32.totalorder %s200, %s201
    %p213 = scmp.eq.s32.totalorder %s23, 1
    %p214 = por %p212, %p213
    %p216 = scmp.ne.s32.totalorder %s201, %s215
    %p217 = scmp.eq.s32.totalorder %s23, 0
    %p218 = por %p216, %p217
    %s220 = sadd.s32 %s219, 1
    %p223 = scmp.eq.s32.totalorder %s17, 1
    %p224 = scmp.ne.s32.totalorder %s219, %s221
    %p225 = scmp.eq.s32.totalorder %s17, 0
    %p226 = por %p224, %p225
    %p227 = scmp.ne.s32.totalorder %s219, %s221
    %p228 = scmp.eq.s32.totalorder %s22, 1
    %p229 = por %p227, %p228
    %p230 = scmp.ne.s32.totalorder %s221, %s222
    %p231 = scmp.eq.s32.totalorder %s22, 0
    %p232 = por %p230, %p231
    %p233 = scmp.ne.s32.totalorder %s221, %s222
    %p234 = scmp.eq.s32.totalorder %s23, 1
    %p235 = por %p233, %p234
    %p237 = scmp.ne.s32.totalorder %s222, %s236
    %p238 = scmp.eq.s32.totalorder %s23, 0
    %p239 = por %p237, %p238
    %s241 = sadd.s32 %s240, 1
    %p244 = scmp.eq.s32.totalorder %s17, 1
    %p245 = scmp.ne.s32.totalorder %s240, %s242
    %p246 = scmp.eq.s32.totalorder %s17, 0
    %p247 = por %p245, %p246
    %p248 = scmp.ne.s32.totalorder %s240, %s242
    %p249 = scmp.eq.s32.totalorder %s22, 1
    %p250 = por %p248, %p249
    %p251 = scmp.ne.s32.totalorder %s242, %s243
    %p252 = scmp.eq.s32.totalorder %s22, 0
    %p253 = por %p251, %p252
    %p254 = scmp.ne.s32.totalorder %s242, %s243
    %p255 = scmp.eq.s32.totalorder %s23, 1
    %p256 = por %p254, %p255
    %p258 = scmp.ne.s32.totalorder %s243, %s257
    %p259 = scmp.eq.s32.totalorder %s23, 0
    %p260 = por %p258, %p259
    %s261 = ssub.s32 %s17, %s24
    %p262 = scmp.eq.s32.totalorder %s261, 0
    %s264 = sadd.s32 %s263, 1
    %s265 = scalar_select %p262, %s263, %s264
    %p268 = pneg %p262
    %p269 = scmp.eq.s32.totalorder %s17, 1
    %p270 = por %p268, %p269
    %p271 = scmp.ne.s32.totalorder %s263, %s266
    %p272 = scmp.eq.s32.totalorder %s17, 0
    %p273 = por %p271, %p272
    %p274 = scmp.ne.s32.totalorder %s263, %s266
    %p275 = scmp.eq.s32.totalorder %s22, 1
    %p276 = por %p274, %p275
    %p277 = scmp.ne.s32.totalorder %s266, %s267
    %p278 = scmp.eq.s32.totalorder %s22, 0
    %p279 = por %p277, %p278
    %p280 = scmp.ne.s32.totalorder %s266, %s267
    %p281 = scmp.eq.s32.totalorder %s23, 1
    %p282 = por %p280, %p281
    %p284 = scmp.ne.s32.totalorder %s267, %s283
    %p285 = scmp.eq.s32.totalorder %s23, 0
    %p286 = por %p284, %p285
    %p287 = scmp.le.s32.totalorder 1, %s17
    %p288 = scmp.lt.s32.totalorder %s17, 3
    %p289 = pnand %p287, %p288
    %p290 = pneg %p289
    // Predicated region
    $region9: #{fixednet_forward.1} parent=5 // pred_check
      _
    $region10: #{fixednet_forward.1} parent=5 // pred_check_branch
      %292 = sbr.rel (%p289) target = $region12
    $region11: #{fixednet_forward.1} parent=5 // pred_region
      %s293 = ssub.s32 %s17, 1
      // Predicated region
      $region13: #{fixednet_forward.1} parent=11 // pred_check
        %p294 = pneg %p64
      $region14: #{fixednet_forward.1} parent=11 // pred_check_branch
        %296 = sbr.rel (%p294) target = $region16
      $region15: #{fixednet_forward.1} parent=11 // pred_region
        _
      $region16: #{fixednet_forward.1} parent=11 // pred_fallthru
        _
      // Predicated region
      $region17: #{fixednet_forward.1} parent=11 // pred_check
        %p297 = pneg %p85
      $region18: #{fixednet_forward.1} parent=11 // pred_check_branch
        %299 = sbr.rel (%p297) target = $region20
      $region19: #{fixednet_forward.1} parent=11 // pred_region
        _
      $region20: #{fixednet_forward.1} parent=11 // pred_fallthru
        _
      // Predicated region
      $region21: #{fixednet_forward.1} parent=11 // pred_check
        %p300 = pneg %p106
      $region22: #{fixednet_forward.1} parent=11 // pred_check_branch
        %302 = sbr.rel (%p300) target = $region24
      $region23: #{fixednet_forward.1} parent=11 // pred_region
        _
      $region24: #{fixednet_forward.1} parent=11 // pred_fallthru
        _
      // Predicated region
      $region25: #{fixednet_forward.1} parent=11 // pred_check
        %p303 = pneg %p127
      $region26: #{fixednet_forward.1} parent=11 // pred_check_branch
        %305 = sbr.rel (%p303) target = $region28
      $region27: #{fixednet_forward.1} parent=11 // pred_region
        _
      $region28: #{fixednet_forward.1} parent=11 // pred_fallthru
        _
      // Predicated region
      $region29: #{fixednet_forward.1} parent=11 // pred_check
        %p306 = pneg %p148
      $region30: #{fixednet_forward.1} parent=11 // pred_check_branch
        %308 = sbr.rel (%p306) target = $region32
      $region31: #{fixednet_forward.1} parent=11 // pred_region
        _
      $region32: #{fixednet_forward.1} parent=11 // pred_fallthru
        _
      // Predicated region
      $region33: #{fixednet_forward.1} parent=11 // pred_check
        %p309 = pneg %p169
      $region34: #{fixednet_forward.1} parent=11 // pred_check_branch
        %311 = sbr.rel (%p309) target = $region36
      $region35: #{fixednet_forward.1} parent=11 // pred_region
        _
      $region36: #{fixednet_forward.1} parent=11 // pred_fallthru
        _
      // Predicated region
      $region37: #{fixednet_forward.1} parent=11 // pred_check
        %p312 = pneg %p190
      $region38: #{fixednet_forward.1} parent=11 // pred_check_branch
        %314 = sbr.rel (%p312) target = $region40
      $region39: #{fixednet_forward.1} parent=11 // pred_region
        _
      $region40: #{fixednet_forward.1} parent=11 // pred_fallthru
        _
      // Predicated region
      $region41: #{fixednet_forward.1} parent=11 // pred_check
        %p315 = pneg %p211
      $region42: #{fixednet_forward.1} parent=11 // pred_check_branch
        %317 = sbr.rel (%p315) target = $region44
      $region43: #{fixednet_forward.1} parent=11 // pred_region
        _
      $region44: #{fixednet_forward.1} parent=11 // pred_fallthru
        _
      // Predicated region
      $region45: #{fixednet_forward.1} parent=11 // pred_check
        %p318 = pneg %p232
      $region46: #{fixednet_forward.1} parent=11 // pred_check_branch
        %320 = sbr.rel (%p318) target = $region48
      $region47: #{fixednet_forward.1} parent=11 // pred_region
        _
      $region48: #{fixednet_forward.1} parent=11 // pred_fallthru
        _
      // Predicated region
      $region49: #{fixednet_forward.1} parent=11 // pred_check
        %p321 = pneg %p253
      $region50: #{fixednet_forward.1} parent=11 // pred_check_branch
        %323 = sbr.rel (%p321) target = $region52
      $region51: #{fixednet_forward.1} parent=11 // pred_region
        _
      $region52: #{fixednet_forward.1} parent=11 // pred_fallthru
        _
    $region12: #{fixednet_forward.1} parent=5 // pred_fallthru
      _
    %p324 = scmp.lt.s32.totalorder %s17, 2
    // Predicated region
    $region53: #{fixednet_forward.1} parent=5 // pred_check
      %p325 = pneg %p324
    $region54: #{fixednet_forward.1} parent=5 // pred_check_branch
      %327 = sbr.rel (%p325) target = $region56
    $region55: #{fixednet_forward.1} parent=5 // pred_region
      // Predicated region
      $region57: #{fixednet_forward.1} parent=55 // pred_check
        %p328 = pneg %p37
      $region58: #{fixednet_forward.1} parent=55 // pred_check_branch
        %330 = sbr.rel (%p328) target = $region60
      $region59: #{fixednet_forward.1} parent=55 // pred_region
        %p331 = scmp.lt.s32.totalorder %s17, 1
        %s332 = scalar_select %p331, %s17, 1
        %s333 = smul.addr %s332, 88
        %s334 = smul.addr %s333, 8
        %s335 = scalar_lea.vmem %s0, %s334
      $region60: #{fixednet_forward.1} parent=55 // pred_fallthru
        _
    $region56: #{fixednet_forward.1} parent=5 // pred_fallthru
      _
    %p336 = scmp.le.s32.totalorder 1, %s17
    %p337 = scmp.lt.s32.totalorder %s17, 3
    %p338 = pnand %p336, %p337
    %p339 = pneg %p338
    // Predicated region
    $region61: #{fixednet_forward.1} parent=5 // pred_check
      _
    $region62: #{fixednet_forward.1} parent=5 // pred_check_branch
      %341 = sbr.rel (%p338) target = $region64
    $region63: #{fixednet_forward.1} parent=5 // pred_region
      %s342 = ssub.s32 %s17, 1
      %p343 = scmp.lt.s32.totalorder %s22, 1
      %s344 = scalar_select %p343, %s22, 1
      %s345 = smul.addr %s344, 88
      %s346 = smul.addr %s345, 8
      %s347 = scalar_lea.vmem %s0, %s346
      %p348 = pneg %p43
      %p349 = pneg %p40
      %p350 = pneg %p64
      %p351 = pneg %p61
      %p352 = pneg %p85
      %p353 = pneg %p82
      %p354 = pneg %p106
      %p355 = pneg %p103
      %p356 = pneg %p127
      %p357 = pneg %p124
      %p358 = pneg %p148
      %p359 = pneg %p145
      %p360 = pneg %p169
      %p361 = pneg %p166
      %p362 = pneg %p190
      %p363 = pneg %p187
      %p364 = pneg %p211
      %p365 = pneg %p208
      %p366 = pneg %p232
      %p367 = pneg %p229
      %p368 = pneg %p253
      %p369 = pneg %p250
      %p370 = pneg %p279
      %p371 = pneg %p276
      %p372 = scmp.lt.s32.totalorder %s22, 1
      %s373 = scalar_select %p372, %s22, 1
      %s374 = scalar_lea.vmem %s11, %s373
      %p375 = scmp.lt.s32.totalorder %s22, 1
      %s376 = scalar_select %p375, %s22, 1
      %s377 = smul.addr %s376, 88
      %s378 = smul.addr %s377, 8
      %s379 = scalar_lea.vmem %s0, %s378
      %p380 = scmp.lt.s32.totalorder %s22, 1
      %s381 = scalar_select %p380, %s22, 1
      %s382 = scalar_lea.vmem %s11, %s381
      %v384 = vld [vmem:[%s379] sm:$0xff]
      %v385 = vld [vmem:[%s379 + $0x8] sm:$0xff]
      %v386 = vld [vmem:[%s379 + $0x10] sm:$0xff]
      %v387 = vld [vmem:[%s379 + $0x18] sm:$0xff]
      %v388 = vld [vmem:[%s379 + $0x20] sm:$0xff]
      %v389 = vld [vmem:[%s379 + $0x28] sm:$0xff]
      %v390 = vld [vmem:[%s379 + $0x30] sm:$0xff]
      %v391 = vld [vmem:[%s379 + $0x38] sm:$0xff]
      %v392 = vld [vmem:[%s379 + $0x40] sm:$0xff]
      %v393 = vld [vmem:[%s379 + $0x48] sm:$0xff]
      %v394 = vld [vmem:[%s379 + $0x50] sm:$0xff]
      %v395 = vld [vmem:[%s379 + $0x58] sm:$0xff]
      %v396 = vld [vmem:[%s379 + $0x60] sm:$0xff]
      %v397 = vld [vmem:[%s379 + $0x68] sm:$0xff]
      %v398 = vld [vmem:[%s379 + $0x70] sm:$0xff]
      %v399 = vld [vmem:[%s379 + $0x78] sm:$0xff]
      %v400 = vld [vmem:[%s379 + $0x80] sm:$0xff]
      %v401 = vld [vmem:[%s379 + $0x88] sm:$0xff]
      %v402 = vld [vmem:[%s379 + $0x90] sm:$0xff]
      %v403 = vld [vmem:[%s379 + $0x98] sm:$0xff]
      %v404 = vld [vmem:[%s379 + $0xa0] sm:$0xff]
      %v405 = vld [vmem:[%s379 + $0xa8] sm:$0xff]
      %v406 = vld [vmem:[%s379 + $0xb0] sm:$0xff]
      %v407 = vld [vmem:[%s379 + $0xb8] sm:$0xff]
      %v408 = vld [vmem:[%s379 + $0xc0] sm:$0xff]
      %v409 = vld [vmem:[%s379 + $0xc8] sm:$0xff]
      %v410 = vld [vmem:[%s379 + $0xd0] sm:$0xff]
      %v411 = vld [vmem:[%s379 + $0xd8] sm:$0xff]
      %v412 = vld [vmem:[%s379 + $0xe0] sm:$0xff]
      %v413 = vld [vmem:[%s379 + $0xe8] sm:$0xff]
      %v414 = vld [vmem:[%s379 + $0xf0] sm:$0xff]
      %v415 = vld [vmem:[%s379 + $0xf8] sm:$0xff]
      %v416 = vld [vmem:[%s379 + $0x100] sm:$0xff]
      %v417 = vld [vmem:[%s379 + $0x108] sm:$0xff]
      %v418 = vld [vmem:[%s379 + $0x110] sm:$0xff]
      %v419 = vld [vmem:[%s379 + $0x118] sm:$0xff]
      %v420 = vld [vmem:[%s379 + $0x120] sm:$0xff]
      %v421 = vld [vmem:[%s379 + $0x128] sm:$0xff]
      %v422 = vld [vmem:[%s379 + $0x130] sm:$0xff]
      %v423 = vld [vmem:[%s379 + $0x138] sm:$0xff]
      %v424 = vld [vmem:[%s379 + $0x140] sm:$0xff]
      %v425 = vld [vmem:[%s379 + $0x148] sm:$0xff]
      %v426 = vld [vmem:[%s379 + $0x150] sm:$0xff]
      %v427 = vld [vmem:[%s379 + $0x158] sm:$0xff]
      %v428 = vld [vmem:[%s379 + $0x160] sm:$0xff]
      %v429 = vld [vmem:[%s379 + $0x168] sm:$0xff]
      %v430 = vld [vmem:[%s379 + $0x170] sm:$0xff]
      %v431 = vld [vmem:[%s379 + $0x178] sm:$0xff]
      %v432 = vld [vmem:[%s379 + $0x180] sm:$0xff]
      %v433 = vld [vmem:[%s379 + $0x188] sm:$0xff]
      %v434 = vld [vmem:[%s379 + $0x190] sm:$0xff]
      %v435 = vld [vmem:[%s379 + $0x198] sm:$0xff]
      %v436 = vld [vmem:[%s379 + $0x1a0] sm:$0xff]
      %v437 = vld [vmem:[%s379 + $0x1a8] sm:$0xff]
      %v438 = vld [vmem:[%s379 + $0x1b0] sm:$0xff]
      %v439 = vld [vmem:[%s379 + $0x1b8] sm:$0xff]
      %v440 = vld [vmem:[%s379 + $0x1c0] sm:$0xff]
      %v441 = vld [vmem:[%s379 + $0x1c8] sm:$0xff]
      %v442 = vld [vmem:[%s379 + $0x1d0] sm:$0xff]
      %v443 = vld [vmem:[%s379 + $0x1d8] sm:$0xff]
      %v444 = vld [vmem:[%s379 + $0x1e0] sm:$0xff]
      %v445 = vld [vmem:[%s379 + $0x1e8] sm:$0xff]
      %v446 = vld [vmem:[%s379 + $0x1f0] sm:$0xff]
      %v447 = vld [vmem:[%s379 + $0x1f8] sm:$0xff]
      %v448 = vld [vmem:[%s379 + $0x200] sm:$0xff]
      %v449 = vld [vmem:[%s379 + $0x208] sm:$0xff]
      %v450 = vld [vmem:[%s379 + $0x210] sm:$0xff]
      %v451 = vld [vmem:[%s379 + $0x218] sm:$0xff]
      %v452 = vld [vmem:[%s379 + $0x220] sm:$0xff]
      %v453 = vld [vmem:[%s379 + $0x228] sm:$0xff]
      %v454 = vld [vmem:[%s379 + $0x230] sm:$0xff]
      %v455 = vld [vmem:[%s379 + $0x238] sm:$0xff]
      %v456 = vld [vmem:[%s379 + $0x240] sm:$0xff]
      %v457 = vld [vmem:[%s379 + $0x248] sm:$0xff]
      %v458 = vld [vmem:[%s379 + $0x250] sm:$0xff]
      %v459 = vld [vmem:[%s379 + $0x258] sm:$0xff]
      %v460 = vld [vmem:[%s379 + $0x260] sm:$0xff]
      %v461 = vld [vmem:[%s379 + $0x268] sm:$0xff]
      %v462 = vld [vmem:[%s379 + $0x270] sm:$0xff]
      %v463 = vld [vmem:[%s379 + $0x278] sm:$0xff]
      %v464 = vld [vmem:[%s379 + $0x280] sm:$0xff]
      %v465 = vld [vmem:[%s379 + $0x288] sm:$0xff]
      %v466 = vld [vmem:[%s379 + $0x290] sm:$0xff]
      %v467 = vld [vmem:[%s379 + $0x298] sm:$0xff]
      %v468 = vld [vmem:[%s379 + $0x2a0] sm:$0xff]
      %v469 = vld [vmem:[%s379 + $0x2a8] sm:$0xff]
      %v470 = vld [vmem:[%s379 + $0x2b0] sm:$0xff]
      %v471 = vld [vmem:[%s379 + $0x2b8] sm:$0xff]
      %v472 = vld [vmem:[%s1] sm:$0xff]
      %v473 = vld [vmem:[%s1 + $0x8] sm:$0xff]
      %v474 = vld [vmem:[%s1 + $0x10] sm:$0xff]
      %v475 = vld [vmem:[%s1 + $0x18] sm:$0xff]
      %v476 = vld [vmem:[%s1 + $0x20] sm:$0xff]
      %v477 = vld [vmem:[%s1 + $0x28] sm:$0xff]
      %v478 = vld [vmem:[%s1 + $0x30] sm:$0xff]
      %v479 = vld [vmem:[%s1 + $0x38] sm:$0xff]
      %v480 = vld [vmem:[%s1 + $0x40] sm:$0xff]
      %v481 = vld [vmem:[%s1 + $0x48] sm:$0xff]
      %v482 = vld [vmem:[%s1 + $0x50] sm:$0xff]
      %v483 = vld [vmem:[%s1 + $0x58] sm:$0xff]
      %v484 = vld [vmem:[%s1 + $0x60] sm:$0xff]
      %v485 = vld [vmem:[%s1 + $0x68] sm:$0xff]
      %v486 = vld [vmem:[%s1 + $0x70] sm:$0xff]
      %v487 = vld [vmem:[%s1 + $0x78] sm:$0xff]
      %v488 = vld [vmem:[%s2] sm:$0x1]
      %v490 = vperm.slane %v488, 0
      %492 = vmatpush.msra.mxu0 %v487
      %493 = vmatpush.msra.mxu0 %v486
      %494 = vmatpush.msra.mxu0 %v485
      %495 = vmatpush.msra.mxu0 %v484
      %496 = vmatpush.msra.mxu0 %v483
      %497 = vmatpush.msra.mxu0 %v482
      %498 = vmatpush.msra.mxu0 %v481
      %499 = vmatpush.msra.mxu0 %v480
      %500 = vmatpush.msra.mxu0 %v479
      %501 = vmatpush.msra.mxu0 %v478
      %502 = vmatpush.msra.mxu0 %v477
      %503 = vmatpush.msra.mxu0 %v476
      %504 = vmatpush.msra.mxu0 %v475
      %505 = vmatpush.msra.mxu0 %v474
      %506 = vmatpush.msra.mxu0 %v473
      %507 = vmatpush.msra.mxu0 %v472
      %508 = vmatmul.f32.gmra.mxu0 %v384
      %v509 = vpop.f32.mrf.mxu0
      %v510 = vadd.f32 %v490, %v509
      %511 = vmatmul.f32.gmra.mxu0 %v385
      %v512 = vpop.f32.mrf.mxu0
      %v513 = vadd.f32 %v490, %v512
      %514 = vmatmul.f32.gmra.mxu0 %v386
      %v515 = vpop.f32.mrf.mxu0
      %v516 = vadd.f32 %v490, %v515
      %517 = vmatmul.f32.gmra.mxu0 %v387
      %v518 = vpop.f32.mrf.mxu0
      %v519 = vadd.f32 %v490, %v518
      %520 = vmatmul.f32.gmra.mxu0 %v388
      %v521 = vpop.f32.mrf.mxu0
      %v522 = vadd.f32 %v490, %v521
      %523 = vmatmul.f32.gmra.mxu0 %v389
      %v524 = vpop.f32.mrf.mxu0
      %v525 = vadd.f32 %v490, %v524
      %526 = vmatmul.f32.gmra.mxu0 %v390
      %v527 = vpop.f32.mrf.mxu0
      %v528 = vadd.f32 %v490, %v527
      %529 = vmatmul.f32.gmra.mxu0 %v391
      %v530 = vpop.f32.mrf.mxu0
      %v531 = vadd.f32 %v490, %v530
      %532 = vmatmul.f32.gmra.mxu0 %v392
      %v533 = vpop.f32.mrf.mxu0
      %v534 = vadd.f32 %v490, %v533
      %535 = vmatmul.f32.gmra.mxu0 %v393
      %v536 = vpop.f32.mrf.mxu0
      %v537 = vadd.f32 %v490, %v536
      %538 = vmatmul.f32.gmra.mxu0 %v394
      %v539 = vpop.f32.mrf.mxu0
      %v540 = vadd.f32 %v490, %v539
      %541 = vmatmul.f32.gmra.mxu0 %v395
      %v542 = vpop.f32.mrf.mxu0
      %v543 = vadd.f32 %v490, %v542
      %544 = vmatmul.f32.gmra.mxu0 %v396
      %v545 = vpop.f32.mrf.mxu0
      %v546 = vadd.f32 %v490, %v545
      %547 = vmatmul.f32.gmra.mxu0 %v397
      %v548 = vpop.f32.mrf.mxu0
      %v549 = vadd.f32 %v490, %v548
      %550 = vmatmul.f32.gmra.mxu0 %v398
      %v551 = vpop.f32.mrf.mxu0
      %v552 = vadd.f32 %v490, %v551
      %553 = vmatmul.f32.gmra.mxu0 %v399
      %v554 = vpop.f32.mrf.mxu0
      %v555 = vadd.f32 %v490, %v554
      %556 = vmatmul.f32.gmra.mxu0 %v400
      %v557 = vpop.f32.mrf.mxu0
      %v558 = vadd.f32 %v490, %v557
      %559 = vmatmul.f32.gmra.mxu0 %v401
      %v560 = vpop.f32.mrf.mxu0
      %v561 = vadd.f32 %v490, %v560
      %562 = vmatmul.f32.gmra.mxu0 %v402
      %v563 = vpop.f32.mrf.mxu0
      %v564 = vadd.f32 %v490, %v563
      %565 = vmatmul.f32.gmra.mxu0 %v403
      %v566 = vpop.f32.mrf.mxu0
      %v567 = vadd.f32 %v490, %v566
      %568 = vmatmul.f32.gmra.mxu0 %v404
      %v569 = vpop.f32.mrf.mxu0
      %v570 = vadd.f32 %v490, %v569
      %571 = vmatmul.f32.gmra.mxu0 %v405
      %v572 = vpop.f32.mrf.mxu0
      %v573 = vadd.f32 %v490, %v572
      %574 = vmatmul.f32.gmra.mxu0 %v406
      %v575 = vpop.f32.mrf.mxu0
      %v576 = vadd.f32 %v490, %v575
      %577 = vmatmul.f32.gmra.mxu0 %v407
      %v578 = vpop.f32.mrf.mxu0
      %v579 = vadd.f32 %v490, %v578
      %580 = vmatmul.f32.gmra.mxu0 %v408
      %v581 = vpop.f32.mrf.mxu0
      %v582 = vadd.f32 %v490, %v581
      %583 = vmatmul.f32.gmra.mxu0 %v409
      %v584 = vpop.f32.mrf.mxu0
      %v585 = vadd.f32 %v490, %v584
      %586 = vmatmul.f32.gmra.mxu0 %v410
      %v587 = vpop.f32.mrf.mxu0
      %v588 = vadd.f32 %v490, %v587
      %589 = vmatmul.f32.gmra.mxu0 %v411
      %v590 = vpop.f32.mrf.mxu0
      %v591 = vadd.f32 %v490, %v590
      %592 = vmatmul.f32.gmra.mxu0 %v412
      %v593 = vpop.f32.mrf.mxu0
      %v594 = vadd.f32 %v490, %v593
      %595 = vmatmul.f32.gmra.mxu0 %v413
      %v596 = vpop.f32.mrf.mxu0
      %v597 = vadd.f32 %v490, %v596
      %598 = vmatmul.f32.gmra.mxu0 %v414
      %v599 = vpop.f32.mrf.mxu0
      %v600 = vadd.f32 %v490, %v599
      %601 = vmatmul.f32.gmra.mxu0 %v415
      %v602 = vpop.f32.mrf.mxu0
      %v603 = vadd.f32 %v490, %v602
      %604 = vmatmul.f32.gmra.mxu0 %v416
      %v605 = vpop.f32.mrf.mxu0
      %v606 = vadd.f32 %v490, %v605
      %607 = vmatmul.f32.gmra.mxu0 %v417
      %v608 = vpop.f32.mrf.mxu0
      %v609 = vadd.f32 %v490, %v608
      %610 = vmatmul.f32.gmra.mxu0 %v418
      %v611 = vpop.f32.mrf.mxu0
      %v612 = vadd.f32 %v490, %v611
      %613 = vmatmul.f32.gmra.mxu0 %v419
      %v614 = vpop.f32.mrf.mxu0
      %v615 = vadd.f32 %v490, %v614
      %616 = vmatmul.f32.gmra.mxu0 %v420
      %v617 = vpop.f32.mrf.mxu0
      %v618 = vadd.f32 %v490, %v617
      %619 = vmatmul.f32.gmra.mxu0 %v421
      %v620 = vpop.f32.mrf.mxu0
      %v621 = vadd.f32 %v490, %v620
      %622 = vmatmul.f32.gmra.mxu0 %v422
      %v623 = vpop.f32.mrf.mxu0
      %v624 = vadd.f32 %v490, %v623
      %625 = vmatmul.f32.gmra.mxu0 %v423
      %v626 = vpop.f32.mrf.mxu0
      %v627 = vadd.f32 %v490, %v626
      %628 = vmatmul.f32.gmra.mxu0 %v424
      %v629 = vpop.f32.mrf.mxu0
      %v630 = vadd.f32 %v490, %v629
      %631 = vmatmul.f32.gmra.mxu0 %v425
      %v632 = vpop.f32.mrf.mxu0
      %v633 = vadd.f32 %v490, %v632
      %634 = vmatmul.f32.gmra.mxu0 %v426
      %v635 = vpop.f32.mrf.mxu0
      %v636 = vadd.f32 %v490, %v635
      %637 = vmatmul.f32.gmra.mxu0 %v427
      %v638 = vpop.f32.mrf.mxu0
      %v639 = vadd.f32 %v490, %v638
      %640 = vmatmul.f32.gmra.mxu0 %v428
      %v641 = vpop.f32.mrf.mxu0
      %v642 = vadd.f32 %v490, %v641
      %643 = vmatmul.f32.gmra.mxu0 %v429
      %v644 = vpop.f32.mrf.mxu0
      %v645 = vadd.f32 %v490, %v644
      %646 = vmatmul.f32.gmra.mxu0 %v430
      %v647 = vpop.f32.mrf.mxu0
      %v648 = vadd.f32 %v490, %v647
      %649 = vmatmul.f32.gmra.mxu0 %v431
      %v650 = vpop.f32.mrf.mxu0
      %v651 = vadd.f32 %v490, %v650
      %652 = vmatmul.f32.gmra.mxu0 %v432
      %v653 = vpop.f32.mrf.mxu0
      %v654 = vadd.f32 %v490, %v653
      %655 = vmatmul.f32.gmra.mxu0 %v433
      %v656 = vpop.f32.mrf.mxu0
      %v657 = vadd.f32 %v490, %v656
      %658 = vmatmul.f32.gmra.mxu0 %v434
      %v659 = vpop.f32.mrf.mxu0
      %v660 = vadd.f32 %v490, %v659
      %661 = vmatmul.f32.gmra.mxu0 %v435
      %v662 = vpop.f32.mrf.mxu0
      %v663 = vadd.f32 %v490, %v662
      %664 = vmatmul.f32.gmra.mxu0 %v436
      %v665 = vpop.f32.mrf.mxu0
      %v666 = vadd.f32 %v490, %v665
      %667 = vmatmul.f32.gmra.mxu0 %v437
      %v668 = vpop.f32.mrf.mxu0
      %v669 = vadd.f32 %v490, %v668
      %670 = vmatmul.f32.gmra.mxu0 %v438
      %v671 = vpop.f32.mrf.mxu0
      %v672 = vadd.f32 %v490, %v671
      %673 = vmatmul.f32.gmra.mxu0 %v439
      %v674 = vpop.f32.mrf.mxu0
      %v675 = vadd.f32 %v490, %v674
      %676 = vmatmul.f32.gmra.mxu0 %v440
      %v677 = vpop.f32.mrf.mxu0
      %v678 = vadd.f32 %v490, %v677
      %679 = vmatmul.f32.gmra.mxu0 %v441
      %v680 = vpop.f32.mrf.mxu0
      %v681 = vadd.f32 %v490, %v680
      %682 = vmatmul.f32.gmra.mxu0 %v442
      %v683 = vpop.f32.mrf.mxu0
      %v684 = vadd.f32 %v490, %v683
      %685 = vmatmul.f32.gmra.mxu0 %v443
      %v686 = vpop.f32.mrf.mxu0
      %v687 = vadd.f32 %v490, %v686
      %688 = vmatmul.f32.gmra.mxu0 %v444
      %v689 = vpop.f32.mrf.mxu0
      %v690 = vadd.f32 %v490, %v689
      %691 = vmatmul.f32.gmra.mxu0 %v445
      %v692 = vpop.f32.mrf.mxu0
      %v693 = vadd.f32 %v490, %v692
      %694 = vmatmul.f32.gmra.mxu0 %v446
      %v695 = vpop.f32.mrf.mxu0
      %v696 = vadd.f32 %v490, %v695
      %697 = vmatmul.f32.gmra.mxu0 %v447
      %v698 = vpop.f32.mrf.mxu0
      %v699 = vadd.f32 %v490, %v698
      %700 = vmatmul.f32.gmra.mxu0 %v448
      %v701 = vpop.f32.mrf.mxu0
      %v702 = vadd.f32 %v490, %v701
      %703 = vmatmul.f32.gmra.mxu0 %v449
      %v704 = vpop.f32.mrf.mxu0
      %v705 = vadd.f32 %v490, %v704
      %706 = vmatmul.f32.gmra.mxu0 %v450
      %v707 = vpop.f32.mrf.mxu0
      %v708 = vadd.f32 %v490, %v707
      %709 = vmatmul.f32.gmra.mxu0 %v451
      %v710 = vpop.f32.mrf.mxu0
      %v711 = vadd.f32 %v490, %v710
      %712 = vmatmul.f32.gmra.mxu0 %v452
      %v713 = vpop.f32.mrf.mxu0
      %v714 = vadd.f32 %v490, %v713
      %715 = vmatmul.f32.gmra.mxu0 %v453
      %v716 = vpop.f32.mrf.mxu0
      %v717 = vadd.f32 %v490, %v716
      %718 = vmatmul.f32.gmra.mxu0 %v454
      %v719 = vpop.f32.mrf.mxu0
      %v720 = vadd.f32 %v490, %v719
      %721 = vmatmul.f32.gmra.mxu0 %v455
      %v722 = vpop.f32.mrf.mxu0
      %v723 = vadd.f32 %v490, %v722
      %724 = vmatmul.f32.gmra.mxu0 %v456
      %v725 = vpop.f32.mrf.mxu0
      %v726 = vadd.f32 %v490, %v725
      %727 = vmatmul.f32.gmra.mxu0 %v457
      %v728 = vpop.f32.mrf.mxu0
      %v729 = vadd.f32 %v490, %v728
      %730 = vmatmul.f32.gmra.mxu0 %v458
      %v731 = vpop.f32.mrf.mxu0
      %v732 = vadd.f32 %v490, %v731
      %733 = vmatmul.f32.gmra.mxu0 %v459
      %v734 = vpop.f32.mrf.mxu0
      %v735 = vadd.f32 %v490, %v734
      %736 = vmatmul.f32.gmra.mxu0 %v460
      %v737 = vpop.f32.mrf.mxu0
      %v738 = vadd.f32 %v490, %v737
      %739 = vmatmul.f32.gmra.mxu0 %v461
      %v740 = vpop.f32.mrf.mxu0
      %v741 = vadd.f32 %v490, %v740
      %742 = vmatmul.f32.gmra.mxu0 %v462
      %v743 = vpop.f32.mrf.mxu0
      %v744 = vadd.f32 %v490, %v743
      %745 = vmatmul.f32.gmra.mxu0 %v463
      %v746 = vpop.f32.mrf.mxu0
      %v747 = vadd.f32 %v490, %v746
      %748 = vmatmul.f32.gmra.mxu0 %v464
      %v749 = vpop.f32.mrf.mxu0
      %v750 = vadd.f32 %v490, %v749
      %751 = vmatmul.f32.gmra.mxu0 %v465
      %v752 = vpop.f32.mrf.mxu0
      %v753 = vadd.f32 %v490, %v752
      %754 = vmatmul.f32.gmra.mxu0 %v466
      %v755 = vpop.f32.mrf.mxu0
      %v756 = vadd.f32 %v490, %v755
      %757 = vmatmul.f32.gmra.mxu0 %v467
      %v758 = vpop.f32.mrf.mxu0
      %v759 = vadd.f32 %v490, %v758
      %760 = vmatmul.f32.gmra.mxu0 %v468
      %v761 = vpop.f32.mrf.mxu0
      %v762 = vadd.f32 %v490, %v761
      %763 = vmatmul.f32.gmra.mxu0 %v469
      %v764 = vpop.f32.mrf.mxu0
      %v765 = vadd.f32 %v490, %v764
      %766 = vmatmul.f32.gmra.mxu0 %v470
      %v767 = vpop.f32.mrf.mxu0
      %v768 = vadd.f32 %v490, %v767
      %769 = vmatmul.f32.gmra.mxu0 %v471
      %v770 = vpop.f32.mrf.mxu0
      %v771 = vadd.f32 %v490, %v770
      %772 = vdwg.mxu0
      %v773 = vand.u32 2147483647, %v510
      %v774 = vand.u32 2147483647, %v513
      %v775 = vand.u32 2147483647, %v516
      %v776 = vand.u32 2147483647, %v519
      %v777 = vand.u32 2147483647, %v522
      %v778 = vand.u32 2147483647, %v525
      %v779 = vand.u32 2147483647, %v528
      %v780 = vand.u32 2147483647, %v531
      %v781 = vand.u32 2147483647, %v534
      %v782 = vand.u32 2147483647, %v537
      %v783 = vand.u32 2147483647, %v540
      %v784 = vand.u32 2147483647, %v543
      %v785 = vand.u32 2147483647, %v546
      %v786 = vand.u32 2147483647, %v549
      %v787 = vand.u32 2147483647, %v552
      %v788 = vand.u32 2147483647, %v555
      %v789 = vand.u32 2147483647, %v558
      %v790 = vand.u32 2147483647, %v561
      %v791 = vand.u32 2147483647, %v564
      %v792 = vand.u32 2147483647, %v567
      %v793 = vand.u32 2147483647, %v570
      %v794 = vand.u32 2147483647, %v573
      %v795 = vand.u32 2147483647, %v576
      %v796 = vand.u32 2147483647, %v579
      %v797 = vand.u32 2147483647, %v582
      %v798 = vand.u32 2147483647, %v585
      %v799 = vand.u32 2147483647, %v588
      %v800 = vand.u32 2147483647, %v591
      %v801 = vand.u32 2147483647, %v594
      %v802 = vand.u32 2147483647, %v597
      %v803 = vand.u32 2147483647, %v600
      %v804 = vand.u32 2147483647, %v603
      %v805 = vand.u32 2147483647, %v606
      %v806 = vand.u32 2147483647, %v609
      %v807 = vand.u32 2147483647, %v612
      %v808 = vand.u32 2147483647, %v615
      %v809 = vand.u32 2147483647, %v618
      %v810 = vand.u32 2147483647, %v621
      %v811 = vand.u32 2147483647, %v624
      %v812 = vand.u32 2147483647, %v627
      %v813 = vand.u32 2147483647, %v630
      %v814 = vand.u32 2147483647, %v633
      %v815 = vand.u32 2147483647, %v636
      %v816 = vand.u32 2147483647, %v639
      %v817 = vand.u32 2147483647, %v642
      %v818 = vand.u32 2147483647, %v645
      %v819 = vand.u32 2147483647, %v648
      %v820 = vand.u32 2147483647, %v651
      %v821 = vand.u32 2147483647, %v654
      %v822 = vand.u32 2147483647, %v657
      %v823 = vand.u32 2147483647, %v660
      %v824 = vand.u32 2147483647, %v663
      %v825 = vand.u32 2147483647, %v666
      %v826 = vand.u32 2147483647, %v669
      %v827 = vand.u32 2147483647, %v672
      %v828 = vand.u32 2147483647, %v675
      %v829 = vand.u32 2147483647, %v678
      %v830 = vand.u32 2147483647, %v681
      %v831 = vand.u32 2147483647, %v684
      %v832 = vand.u32 2147483647, %v687
      %v833 = vand.u32 2147483647, %v690
      %v834 = vand.u32 2147483647, %v693
      %v835 = vand.u32 2147483647, %v696
      %v836 = vand.u32 2147483647, %v699
      %v837 = vand.u32 2147483647, %v702
      %v838 = vand.u32 2147483647, %v705
      %v839 = vand.u32 2147483647, %v708
      %v840 = vand.u32 2147483647, %v711
      %v841 = vand.u32 2147483647, %v714
      %v842 = vand.u32 2147483647, %v717
      %v843 = vand.u32 2147483647, %v720
      %v844 = vand.u32 2147483647, %v723
      %v845 = vand.u32 2147483647, %v726
      %v846 = vand.u32 2147483647, %v729
      %v847 = vand.u32 2147483647, %v732
      %v848 = vand.u32 2147483647, %v735
      %v849 = vand.u32 2147483647, %v738
      %v850 = vand.u32 2147483647, %v741
      %v851 = vand.u32 2147483647, %v744
      %v852 = vand.u32 2147483647, %v747
      %v853 = vand.u32 2147483647, %v750
      %v854 = vand.u32 2147483647, %v753
      %v855 = vand.u32 2147483647, %v756
      %v856 = vand.u32 2147483647, %v759
      %v857 = vand.u32 2147483647, %v762
      %v858 = vand.u32 2147483647, %v765
      %v859 = vand.u32 2147483647, %v768
      %v860 = vand.u32 2147483647, %v771
      %vm861 = vcmp.lt.f32.partialorder %v773, 0.5
      %vm862 = vcmp.lt.f32.partialorder %v774, 0.5
      %vm863 = vcmp.lt.f32.partialorder %v775, 0.5
      %vm864 = vcmp.lt.f32.partialorder %v776, 0.5
      %vm865 = vcmp.lt.f32.partialorder %v777, 0.5
      %vm866 = vcmp.lt.f32.partialorder %v778, 0.5
      %vm867 = vcmp.lt.f32.partialorder %v779, 0.5
      %vm868 = vcmp.lt.f32.partialorder %v780, 0.5
      %vm869 = vcmp.lt.f32.partialorder %v781, 0.5
      %vm870 = vcmp.lt.f32.partialorder %v782, 0.5
      %vm871 = vcmp.lt.f32.partialorder %v783, 0.5
      %vm872 = vcmp.lt.f32.partialorder %v784, 0.5
      %vm873 = vcmp.lt.f32.partialorder %v785, 0.5
      %vm874 = vcmp.lt.f32.partialorder %v786, 0.5
      %vm875 = vcmp.lt.f32.partialorder %v787, 0.5
      %vm876 = vcmp.lt.f32.partialorder %v788, 0.5
      %vm877 = vcmp.lt.f32.partialorder %v789, 0.5
      %vm878 = vcmp.lt.f32.partialorder %v790, 0.5
      %vm879 = vcmp.lt.f32.partialorder %v791, 0.5
      %vm880 = vcmp.lt.f32.partialorder %v792, 0.5
      %vm881 = vcmp.lt.f32.partialorder %v793, 0.5
      %vm882 = vcmp.lt.f32.partialorder %v794, 0.5
      %vm883 = vcmp.lt.f32.partialorder %v795, 0.5
      %vm884 = vcmp.lt.f32.partialorder %v796, 0.5
      %vm885 = vcmp.lt.f32.partialorder %v797, 0.5
      %vm886 = vcmp.lt.f32.partialorder %v798, 0.5
      %vm887 = vcmp.lt.f32.partialorder %v799, 0.5
      %vm888 = vcmp.lt.f32.partialorder %v800, 0.5
      %vm889 = vcmp.lt.f32.partialorder %v801, 0.5
      %vm890 = vcmp.lt.f32.partialorder %v802, 0.5
      %vm891 = vcmp.lt.f32.partialorder %v803, 0.5
      %vm892 = vcmp.lt.f32.partialorder %v804, 0.5
      %vm893 = vcmp.lt.f32.partialorder %v805, 0.5
      %vm894 = vcmp.lt.f32.partialorder %v806, 0.5
      %vm895 = vcmp.lt.f32.partialorder %v807, 0.5
      %vm896 = vcmp.lt.f32.partialorder %v808, 0.5
      %vm897 = vcmp.lt.f32.partialorder %v809, 0.5
      %vm898 = vcmp.lt.f32.partialorder %v810, 0.5
      %vm899 = vcmp.lt.f32.partialorder %v811, 0.5
      %vm900 = vcmp.lt.f32.partialorder %v812, 0.5
      %vm901 = vcmp.lt.f32.partialorder %v813, 0.5
      %vm902 = vcmp.lt.f32.partialorder %v814, 0.5
      %vm903 = vcmp.lt.f32.partialorder %v815, 0.5
      %vm904 = vcmp.lt.f32.partialorder %v816, 0.5
      %vm905 = vcmp.lt.f32.partialorder %v817, 0.5
      %vm906 = vcmp.lt.f32.partialorder %v818, 0.5
      %vm907 = vcmp.lt.f32.partialorder %v819, 0.5
      %vm908 = vcmp.lt.f32.partialorder %v820, 0.5
      %vm909 = vcmp.lt.f32.partialorder %v821, 0.5
      %vm910 = vcmp.lt.f32.partialorder %v822, 0.5
      %vm911 = vcmp.lt.f32.partialorder %v823, 0.5
      %vm912 = vcmp.lt.f32.partialorder %v824, 0.5
      %vm913 = vcmp.lt.f32.partialorder %v825, 0.5
      %vm914 = vcmp.lt.f32.partialorder %v826, 0.5
      %vm915 = vcmp.lt.f32.partialorder %v827, 0.5
      %vm916 = vcmp.lt.f32.partialorder %v828, 0.5
      %vm917 = vcmp.lt.f32.partialorder %v829, 0.5
      %vm918 = vcmp.lt.f32.partialorder %v830, 0.5
      %vm919 = vcmp.lt.f32.partialorder %v831, 0.5
      %vm920 = vcmp.lt.f32.partialorder %v832, 0.5
      %vm921 = vcmp.lt.f32.partialorder %v833, 0.5
      %vm922 = vcmp.lt.f32.partialorder %v834, 0.5
      %vm923 = vcmp.lt.f32.partialorder %v835, 0.5
      %vm924 = vcmp.lt.f32.partialorder %v836, 0.5
      %vm925 = vcmp.lt.f32.partialorder %v837, 0.5
      %vm926 = vcmp.lt.f32.partialorder %v838, 0.5
      %vm927 = vcmp.lt.f32.partialorder %v839, 0.5
      %vm928 = vcmp.lt.f32.partialorder %v840, 0.5
      %vm929 = vcmp.lt.f32.partialorder %v841, 0.5
      %vm930 = vcmp.lt.f32.partialorder %v842, 0.5
      %vm931 = vcmp.lt.f32.partialorder %v843, 0.5
      %vm932 = vcmp.lt.f32.partialorder %v844, 0.5
      %vm933 = vcmp.lt.f32.partialorder %v845, 0.5
      %vm934 = vcmp.lt.f32.partialorder %v846, 0.5
      %vm935 = vcmp.lt.f32.partialorder %v847, 0.5
      %vm936 = vcmp.lt.f32.partialorder %v848, 0.5
      %vm937 = vcmp.lt.f32.partialorder %v849, 0.5
      %vm938 = vcmp.lt.f32.partialorder %v850, 0.5
      %vm939 = vcmp.lt.f32.partialorder %v851, 0.5
      %vm940 = vcmp.lt.f32.partialorder %v852, 0.5
      %vm941 = vcmp.lt.f32.partialorder %v853, 0.5
      %vm942 = vcmp.lt.f32.partialorder %v854, 0.5
      %vm943 = vcmp.lt.f32.partialorder %v855, 0.5
      %vm944 = vcmp.lt.f32.partialorder %v856, 0.5
      %vm945 = vcmp.lt.f32.partialorder %v857, 0.5
      %vm946 = vcmp.lt.f32.partialorder %v858, 0.5
      %vm947 = vcmp.lt.f32.partialorder %v859, 0.5
      %vm948 = vcmp.lt.f32.partialorder %v860, 0.5
      %v949 = vsel %vm861, 0.0, %v510
      %v950 = vsel %vm862, 0.0, %v513
      %v951 = vsel %vm863, 0.0, %v516
      %v952 = vsel %vm864, 0.0, %v519
      %v953 = vsel %vm865, 0.0, %v522
      %v954 = vsel %vm866, 0.0, %v525
      %v955 = vsel %vm867, 0.0, %v528
      %v956 = vsel %vm868, 0.0, %v531
      %v957 = vsel %vm869, 0.0, %v534
      %v958 = vsel %vm870, 0.0, %v537
      %v959 = vsel %vm871, 0.0, %v540
      %v960 = vsel %vm872, 0.0, %v543
      %v961 = vsel %vm873, 0.0, %v546
      %v962 = vsel %vm874, 0.0, %v549
      %v963 = vsel %vm875, 0.0, %v552
      %v964 = vsel %vm876, 0.0, %v555
      %v965 = vsel %vm877, 0.0, %v558
      %v966 = vsel %vm878, 0.0, %v561
      %v967 = vsel %vm879, 0.0, %v564
      %v968 = vsel %vm880, 0.0, %v567
      %v969 = vsel %vm881, 0.0, %v570
      %v970 = vsel %vm882, 0.0, %v573
      %v971 = vsel %vm883, 0.0, %v576
      %v972 = vsel %vm884, 0.0, %v579
      %v973 = vsel %vm885, 0.0, %v582
      %v974 = vsel %vm886, 0.0, %v585
      %v975 = vsel %vm887, 0.0, %v588
      %v976 = vsel %vm888, 0.0, %v591
      %v977 = vsel %vm889, 0.0, %v594
      %v978 = vsel %vm890, 0.0, %v597
      %v979 = vsel %vm891, 0.0, %v600
      %v980 = vsel %vm892, 0.0, %v603
      %v981 = vsel %vm893, 0.0, %v606
      %v982 = vsel %vm894, 0.0, %v609
      %v983 = vsel %vm895, 0.0, %v612
      %v984 = vsel %vm896, 0.0, %v615
      %v985 = vsel %vm897, 0.0, %v618
      %v986 = vsel %vm898, 0.0, %v621
      %v987 = vsel %vm899, 0.0, %v624
      %v988 = vsel %vm900, 0.0, %v627
      %v989 = vsel %vm901, 0.0, %v630
      %v990 = vsel %vm902, 0.0, %v633
      %v991 = vsel %vm903, 0.0, %v636
      %v992 = vsel %vm904, 0.0, %v639
      %v993 = vsel %vm905, 0.0, %v642
      %v994 = vsel %vm906, 0.0, %v645
      %v995 = vsel %vm907, 0.0, %v648
      %v996 = vsel %vm908, 0.0, %v651
      %v997 = vsel %vm909, 0.0, %v654
      %v998 = vsel %vm910, 0.0, %v657
      %v999 = vsel %vm911, 0.0, %v660
      %v1000 = vsel %vm912, 0.0, %v663
      %v1001 = vsel %vm913, 0.0, %v666
      %v1002 = vsel %vm914, 0.0, %v669
      %v1003 = vsel %vm915, 0.0, %v672
      %v1004 = vsel %vm916, 0.0, %v675
      %v1005 = vsel %vm917, 0.0, %v678
      %v1006 = vsel %vm918, 0.0, %v681
      %v1007 = vsel %vm919, 0.0, %v684
      %v1008 = vsel %vm920, 0.0, %v687
      %v1009 = vsel %vm921, 0.0, %v690
      %v1010 = vsel %vm922, 0.0, %v693
      %v1011 = vsel %vm923, 0.0, %v696
      %v1012 = vsel %vm924, 0.0, %v699
      %v1013 = vsel %vm925, 0.0, %v702
      %v1014 = vsel %vm926, 0.0, %v705
      %v1015 = vsel %vm927, 0.0, %v708
      %v1016 = vsel %vm928, 0.0, %v711
      %v1017 = vsel %vm929, 0.0, %v714
      %v1018 = vsel %vm930, 0.0, %v717
      %v1019 = vsel %vm931, 0.0, %v720
      %v1020 = vsel %vm932, 0.0, %v723
      %v1021 = vsel %vm933, 0.0, %v726
      %v1022 = vsel %vm934, 0.0, %v729
      %v1023 = vsel %vm935, 0.0, %v732
      %v1024 = vsel %vm936, 0.0, %v735
      %v1025 = vsel %vm937, 0.0, %v738
      %v1026 = vsel %vm938, 0.0, %v741
      %v1027 = vsel %vm939, 0.0, %v744
      %v1028 = vsel %vm940, 0.0, %v747
      %v1029 = vsel %vm941, 0.0, %v750
      %v1030 = vsel %vm942, 0.0, %v753
      %v1031 = vsel %vm943, 0.0, %v756
      %v1032 = vsel %vm944, 0.0, %v759
      %v1033 = vsel %vm945, 0.0, %v762
      %v1034 = vsel %vm946, 0.0, %v765
      %v1035 = vsel %vm947, 0.0, %v768
      %v1036 = vsel %vm948, 0.0, %v771
      %v1037 = vmax.f32 %v949, -6.0
      %v1038 = vmax.f32 %v950, -6.0
      %v1039 = vmax.f32 %v951, -6.0
      %v1040 = vmax.f32 %v952, -6.0
      %v1041 = vmax.f32 %v953, -6.0
      %v1042 = vmax.f32 %v954, -6.0
      %v1043 = vmax.f32 %v955, -6.0
      %v1044 = vmax.f32 %v956, -6.0
      %v1045 = vmax.f32 %v957, -6.0
      %v1046 = vmax.f32 %v958, -6.0
      %v1047 = vmax.f32 %v959, -6.0
      %v1048 = vmax.f32 %v960, -6.0
      %v1049 = vmax.f32 %v961, -6.0
      %v1050 = vmax.f32 %v962, -6.0
      %v1051 = vmax.f32 %v963, -6.0
      %v1052 = vmax.f32 %v964, -6.0
      %v1053 = vmax.f32 %v965, -6.0
      %v1054 = vmax.f32 %v966, -6.0
      %v1055 = vmax.f32 %v967, -6.0
      %v1056 = vmax.f32 %v968, -6.0
      %v1057 = vmax.f32 %v969, -6.0
      %v1058 = vmax.f32 %v970, -6.0
      %v1059 = vmax.f32 %v971, -6.0
      %v1060 = vmax.f32 %v972, -6.0
      %v1061 = vmax.f32 %v973, -6.0
      %v1062 = vmax.f32 %v974, -6.0
      %v1063 = vmax.f32 %v975, -6.0
      %v1064 = vmax.f32 %v976, -6.0
      %v1065 = vmax.f32 %v977, -6.0
      %v1066 = vmax.f32 %v978, -6.0
      %v1067 = vmax.f32 %v979, -6.0
      %v1068 = vmax.f32 %v980, -6.0
      %v1069 = vmax.f32 %v981, -6.0
      %v1070 = vmax.f32 %v982, -6.0
      %v1071 = vmax.f32 %v983, -6.0
      %v1072 = vmax.f32 %v984, -6.0
      %v1073 = vmax.f32 %v985, -6.0
      %v1074 = vmax.f32 %v986, -6.0
      %v1075 = vmax.f32 %v987, -6.0
      %v1076 = vmax.f32 %v988, -6.0
      %v1077 = vmax.f32 %v989, -6.0
      %v1078 = vmax.f32 %v990, -6.0
      %v1079 = vmax.f32 %v991, -6.0
      %v1080 = vmax.f32 %v992, -6.0
      %v1081 = vmax.f32 %v993, -6.0
      %v1082 = vmax.f32 %v994, -6.0
      %v1083 = vmax.f32 %v995, -6.0
      %v1084 = vmax.f32 %v996, -6.0
      %v1085 = vmax.f32 %v997, -6.0
      %v1086 = vmax.f32 %v998, -6.0
      %v1087 = vmax.f32 %v999, -6.0
      %v1088 = vmax.f32 %v1000, -6.0
      %v1089 = vmax.f32 %v1001, -6.0
      %v1090 = vmax.f32 %v1002, -6.0
      %v1091 = vmax.f32 %v1003, -6.0
      %v1092 = vmax.f32 %v1004, -6.0
      %v1093 = vmax.f32 %v1005, -6.0
      %v1094 = vmax.f32 %v1006, -6.0
      %v1095 = vmax.f32 %v1007, -6.0
      %v1096 = vmax.f32 %v1008, -6.0
      %v1097 = vmax.f32 %v1009, -6.0
      %v1098 = vmax.f32 %v1010, -6.0
      %v1099 = vmax.f32 %v1011, -6.0
      %v1100 = vmax.f32 %v1012, -6.0
      %v1101 = vmax.f32 %v1013, -6.0
      %v1102 = vmax.f32 %v1014, -6.0
      %v1103 = vmax.f32 %v1015, -6.0
      %v1104 = vmax.f32 %v1016, -6.0
      %v1105 = vmax.f32 %v1017, -6.0
      %v1106 = vmax.f32 %v1018, -6.0
      %v1107 = vmax.f32 %v1019, -6.0
      %v1108 = vmax.f32 %v1020, -6.0
      %v1109 = vmax.f32 %v1021, -6.0
      %v1110 = vmax.f32 %v1022, -6.0
      %v1111 = vmax.f32 %v1023, -6.0
      %v1112 = vmax.f32 %v1024, -6.0
      %v1113 = vmax.f32 %v1025, -6.0
      %v1114 = vmax.f32 %v1026, -6.0
      %v1115 = vmax.f32 %v1027, -6.0
      %v1116 = vmax.f32 %v1028, -6.0
      %v1117 = vmax.f32 %v1029, -6.0
      %v1118 = vmax.f32 %v1030, -6.0
      %v1119 = vmax.f32 %v1031, -6.0
      %v1120 = vmax.f32 %v1032, -6.0
      %v1121 = vmax.f32 %v1033, -6.0
      %v1122 = vmax.f32 %v1034, -6.0
      %v1123 = vmax.f32 %v1035, -6.0
      %v1124 = vmax.f32 %v1036, -6.0
      %v1125 = vmin.f32 %v1037, 6.0
      %v1126 = vmin.f32 %v1038, 6.0
      %v1127 = vmin.f32 %v1039, 6.0
      %v1128 = vmin.f32 %v1040, 6.0
      %v1129 = vmin.f32 %v1041, 6.0
      %v1130 = vmin.f32 %v1042, 6.0
      %v1131 = vmin.f32 %v1043, 6.0
      %v1132 = vmin.f32 %v1044, 6.0
      %v1133 = vmin.f32 %v1045, 6.0
      %v1134 = vmin.f32 %v1046, 6.0
      %v1135 = vmin.f32 %v1047, 6.0
      %v1136 = vmin.f32 %v1048, 6.0
      %v1137 = vmin.f32 %v1049, 6.0
      %v1138 = vmin.f32 %v1050, 6.0
      %v1139 = vmin.f32 %v1051, 6.0
      %v1140 = vmin.f32 %v1052, 6.0
      %v1141 = vmin.f32 %v1053, 6.0
      %v1142 = vmin.f32 %v1054, 6.0
      %v1143 = vmin.f32 %v1055, 6.0
      %v1144 = vmin.f32 %v1056, 6.0
      %v1145 = vmin.f32 %v1057, 6.0
      %v1146 = vmin.f32 %v1058, 6.0
      %v1147 = vmin.f32 %v1059, 6.0
      %v1148 = vmin.f32 %v1060, 6.0
      %v1149 = vmin.f32 %v1061, 6.0
      %v1150 = vmin.f32 %v1062, 6.0
      %v1151 = vmin.f32 %v1063, 6.0
      %v1152 = vmin.f32 %v1064, 6.0
      %v1153 = vmin.f32 %v1065, 6.0
      %v1154 = vmin.f32 %v1066, 6.0
      %v1155 = vmin.f32 %v1067, 6.0
      %v1156 = vmin.f32 %v1068, 6.0
      %v1157 = vmin.f32 %v1069, 6.0
      %v1158 = vmin.f32 %v1070, 6.0
      %v1159 = vmin.f32 %v1071, 6.0
      %v1160 = vmin.f32 %v1072, 6.0
      %v1161 = vmin.f32 %v1073, 6.0
      %v1162 = vmin.f32 %v1074, 6.0
      %v1163 = vmin.f32 %v1075, 6.0
      %v1164 = vmin.f32 %v1076, 6.0
      %v1165 = vmin.f32 %v1077, 6.0
      %v1166 = vmin.f32 %v1078, 6.0
      %v1167 = vmin.f32 %v1079, 6.0
      %v1168 = vmin.f32 %v1080, 6.0
      %v1169 = vmin.f32 %v1081, 6.0
      %v1170 = vmin.f32 %v1082, 6.0
      %v1171 = vmin.f32 %v1083, 6.0
      %v1172 = vmin.f32 %v1084, 6.0
      %v1173 = vmin.f32 %v1085, 6.0
      %v1174 = vmin.f32 %v1086, 6.0
      %v1175 = vmin.f32 %v1087, 6.0
      %v1176 = vmin.f32 %v1088, 6.0
      %v1177 = vmin.f32 %v1089, 6.0
      %v1178 = vmin.f32 %v1090, 6.0
      %v1179 = vmin.f32 %v1091, 6.0
      %v1180 = vmin.f32 %v1092, 6.0
      %v1181 = vmin.f32 %v1093, 6.0
      %v1182 = vmin.f32 %v1094, 6.0
      %v1183 = vmin.f32 %v1095, 6.0
      %v1184 = vmin.f32 %v1096, 6.0
      %v1185 = vmin.f32 %v1097, 6.0
      %v1186 = vmin.f32 %v1098, 6.0
      %v1187 = vmin.f32 %v1099, 6.0
      %v1188 = vmin.f32 %v1100, 6.0
      %v1189 = vmin.f32 %v1101, 6.0
      %v1190 = vmin.f32 %v1102, 6.0
      %v1191 = vmin.f32 %v1103, 6.0
      %v1192 = vmin.f32 %v1104, 6.0
      %v1193 = vmin.f32 %v1105, 6.0
      %v1194 = vmin.f32 %v1106, 6.0
      %v1195 = vmin.f32 %v1107, 6.0
      %v1196 = vmin.f32 %v1108, 6.0
      %v1197 = vmin.f32 %v1109, 6.0
      %v1198 = vmin.f32 %v1110, 6.0
      %v1199 = vmin.f32 %v1111, 6.0
      %v1200 = vmin.f32 %v1112, 6.0
      %v1201 = vmin.f32 %v1113, 6.0
      %v1202 = vmin.f32 %v1114, 6.0
      %v1203 = vmin.f32 %v1115, 6.0
      %v1204 = vmin.f32 %v1116, 6.0
      %v1205 = vmin.f32 %v1117, 6.0
      %v1206 = vmin.f32 %v1118, 6.0
      %v1207 = vmin.f32 %v1119, 6.0
      %v1208 = vmin.f32 %v1120, 6.0
      %v1209 = vmin.f32 %v1121, 6.0
      %v1210 = vmin.f32 %v1122, 6.0
      %v1211 = vmin.f32 %v1123, 6.0
      %v1212 = vmin.f32 %v1124, 6.0
      %v1213 = vand.u32 2147483647, %v1125
      %v1214 = vand.u32 2147483647, %v1126
      %v1215 = vand.u32 2147483647, %v1127
      %v1216 = vand.u32 2147483647, %v1128
      %v1217 = vand.u32 2147483647, %v1129
      %v1218 = vand.u32 2147483647, %v1130
      %v1219 = vand.u32 2147483647, %v1131
      %v1220 = vand.u32 2147483647, %v1132
      %v1221 = vand.u32 2147483647, %v1133
      %v1222 = vand.u32 2147483647, %v1134
      %v1223 = vand.u32 2147483647, %v1135
      %v1224 = vand.u32 2147483647, %v1136
      %v1225 = vand.u32 2147483647, %v1137
      %v1226 = vand.u32 2147483647, %v1138
      %v1227 = vand.u32 2147483647, %v1139
      %v1228 = vand.u32 2147483647, %v1140
      %v1229 = vand.u32 2147483647, %v1141
      %v1230 = vand.u32 2147483647, %v1142
      %v1231 = vand.u32 2147483647, %v1143
      %v1232 = vand.u32 2147483647, %v1144
      %v1233 = vand.u32 2147483647, %v1145
      %v1234 = vand.u32 2147483647, %v1146
      %v1235 = vand.u32 2147483647, %v1147
      %v1236 = vand.u32 2147483647, %v1148
      %v1237 = vand.u32 2147483647, %v1149
      %v1238 = vand.u32 2147483647, %v1150
      %v1239 = vand.u32 2147483647, %v1151
      %v1240 = vand.u32 2147483647, %v1152
      %v1241 = vand.u32 2147483647, %v1153
      %v1242 = vand.u32 2147483647, %v1154
      %v1243 = vand.u32 2147483647, %v1155
      %v1244 = vand.u32 2147483647, %v1156
      %v1245 = vand.u32 2147483647, %v1157
      %v1246 = vand.u32 2147483647, %v1158
      %v1247 = vand.u32 2147483647, %v1159
      %v1248 = vand.u32 2147483647, %v1160
      %v1249 = vand.u32 2147483647, %v1161
      %v1250 = vand.u32 2147483647, %v1162
      %v1251 = vand.u32 2147483647, %v1163
      %v1252 = vand.u32 2147483647, %v1164
      %v1253 = vand.u32 2147483647, %v1165
      %v1254 = vand.u32 2147483647, %v1166
      %v1255 = vand.u32 2147483647, %v1167
      %v1256 = vand.u32 2147483647, %v1168
      %vm1257 = vcmp.gt.f32.partialorder %v1235, %v1213
      %vm1258 = vcmp.gt.f32.partialorder %v1236, %v1214
      %vm1259 = vcmp.gt.f32.partialorder %v1237, %v1215
      %vm1260 = vcmp.gt.f32.partialorder %v1238, %v1216
      %vm1261 = vcmp.gt.f32.partialorder %v1239, %v1217
      %vm1262 = vcmp.gt.f32.partialorder %v1240, %v1218
      %vm1263 = vcmp.gt.f32.partialorder %v1241, %v1219
      %vm1264 = vcmp.gt.f32.partialorder %v1242, %v1220
      %vm1265 = vcmp.gt.f32.partialorder %v1243, %v1221
      %vm1266 = vcmp.gt.f32.partialorder %v1244, %v1222
      %vm1267 = vcmp.gt.f32.partialorder %v1245, %v1223
      %vm1268 = vcmp.gt.f32.partialorder %v1246, %v1224
      %vm1269 = vcmp.gt.f32.partialorder %v1247, %v1225
      %vm1270 = vcmp.gt.f32.partialorder %v1248, %v1226
      %vm1271 = vcmp.gt.f32.partialorder %v1249, %v1227
      %vm1272 = vcmp.gt.f32.partialorder %v1250, %v1228
      %vm1273 = vcmp.gt.f32.partialorder %v1251, %v1229
      %vm1274 = vcmp.gt.f32.partialorder %v1252, %v1230
      %vm1275 = vcmp.gt.f32.partialorder %v1253, %v1231
      %vm1276 = vcmp.gt.f32.partialorder %v1254, %v1232
      %vm1277 = vcmp.gt.f32.partialorder %v1255, %v1233
      %vm1278 = vcmp.gt.f32.partialorder %v1256, %v1234
      %v1279 = vsel %vm1257, %v1147, %v1125
      %v1280 = vsel %vm1258, %v1148, %v1126
      %v1281 = vsel %vm1259, %v1149, %v1127
      %v1282 = vsel %vm1260, %v1150, %v1128
      %v1283 = vsel %vm1261, %v1151, %v1129
      %v1284 = vsel %vm1262, %v1152, %v1130
      %v1285 = vsel %vm1263, %v1153, %v1131
      %v1286 = vsel %vm1264, %v1154, %v1132
      %v1287 = vsel %vm1265, %v1155, %v1133
      %v1288 = vsel %vm1266, %v1156, %v1134
      %v1289 = vsel %vm1267, %v1157, %v1135
      %v1290 = vsel %vm1268, %v1158, %v1136
      %v1291 = vsel %vm1269, %v1159, %v1137
      %v1292 = vsel %vm1270, %v1160, %v1138
      %v1293 = vsel %vm1271, %v1161, %v1139
      %v1294 = vsel %vm1272, %v1162, %v1140
      %v1295 = vsel %vm1273, %v1163, %v1141
      %v1296 = vsel %vm1274, %v1164, %v1142
      %v1297 = vsel %vm1275, %v1165, %v1143
      %v1298 = vsel %vm1276, %v1166, %v1144
      %v1299 = vsel %vm1277, %v1167, %v1145
      %v1300 = vsel %vm1278, %v1168, %v1146
      %v1301 = vsel %vm1257, %v1235, %v1213
      %v1302 = vsel %vm1258, %v1236, %v1214
      %v1303 = vsel %vm1259, %v1237, %v1215
      %v1304 = vsel %vm1260, %v1238, %v1216
      %v1305 = vsel %vm1261, %v1239, %v1217
      %v1306 = vsel %vm1262, %v1240, %v1218
      %v1307 = vsel %vm1263, %v1241, %v1219
      %v1308 = vsel %vm1264, %v1242, %v1220
      %v1309 = vsel %vm1265, %v1243, %v1221
      %v1310 = vsel %vm1266, %v1244, %v1222
      %v1311 = vsel %vm1267, %v1245, %v1223
      %v1312 = vsel %vm1268, %v1246, %v1224
      %v1313 = vsel %vm1269, %v1247, %v1225
      %v1314 = vsel %vm1270, %v1248, %v1226
      %v1315 = vsel %vm1271, %v1249, %v1227
      %v1316 = vsel %vm1272, %v1250, %v1228
      %v1317 = vsel %vm1273, %v1251, %v1229
      %v1318 = vsel %vm1274, %v1252, %v1230
      %v1319 = vsel %vm1275, %v1253, %v1231
      %v1320 = vsel %vm1276, %v1254, %v1232
      %v1321 = vsel %vm1277, %v1255, %v1233
      %v1322 = vsel %vm1278, %v1256, %v1234
      %v1323 = vand.u32 2147483647, %v1169
      %v1324 = vand.u32 2147483647, %v1170
      %v1325 = vand.u32 2147483647, %v1171
      %v1326 = vand.u32 2147483647, %v1172
      %v1327 = vand.u32 2147483647, %v1173
      %v1328 = vand.u32 2147483647, %v1174
      %v1329 = vand.u32 2147483647, %v1175
      %v1330 = vand.u32 2147483647, %v1176
      %v1331 = vand.u32 2147483647, %v1177
      %v1332 = vand.u32 2147483647, %v1178
      %v1333 = vand.u32 2147483647, %v1179
      %v1334 = vand.u32 2147483647, %v1180
      %v1335 = vand.u32 2147483647, %v1181
      %v1336 = vand.u32 2147483647, %v1182
      %v1337 = vand.u32 2147483647, %v1183
      %v1338 = vand.u32 2147483647, %v1184
      %v1339 = vand.u32 2147483647, %v1185
      %v1340 = vand.u32 2147483647, %v1186
      %v1341 = vand.u32 2147483647, %v1187
      %v1342 = vand.u32 2147483647, %v1188
      %v1343 = vand.u32 2147483647, %v1189
      %v1344 = vand.u32 2147483647, %v1190
      %vm1345 = vcmp.gt.f32.partialorder %v1323, %v1301
      %vm1346 = vcmp.gt.f32.partialorder %v1324, %v1302
      %vm1347 = vcmp.gt.f32.partialorder %v1325, %v1303
      %vm1348 = vcmp.gt.f32.partialorder %v1326, %v1304
      %vm1349 = vcmp.gt.f32.partialorder %v1327, %v1305
      %vm1350 = vcmp.gt.f32.partialorder %v1328, %v1306
      %vm1351 = vcmp.gt.f32.partialorder %v1329, %v1307
      %vm1352 = vcmp.gt.f32.partialorder %v1330, %v1308
      %vm1353 = vcmp.gt.f32.partialorder %v1331, %v1309
      %vm1354 = vcmp.gt.f32.partialorder %v1332, %v1310
      %vm1355 = vcmp.gt.f32.partialorder %v1333, %v1311
      %vm1356 = vcmp.gt.f32.partialorder %v1334, %v1312
      %vm1357 = vcmp.gt.f32.partialorder %v1335, %v1313
      %vm1358 = vcmp.gt.f32.partialorder %v1336, %v1314
      %vm1359 = vcmp.gt.f32.partialorder %v1337, %v1315
      %vm1360 = vcmp.gt.f32.partialorder %v1338, %v1316
      %vm1361 = vcmp.gt.f32.partialorder %v1339, %v1317
      %vm1362 = vcmp.gt.f32.partialorder %v1340, %v1318
      %vm1363 = vcmp.gt.f32.partialorder %v1341, %v1319
      %vm1364 = vcmp.gt.f32.partialorder %v1342, %v1320
      %vm1365 = vcmp.gt.f32.partialorder %v1343, %v1321
      %vm1366 = vcmp.gt.f32.partialorder %v1344, %v1322
      %v1367 = vsel %vm1345, %v1169, %v1279
      %v1368 = vsel %vm1346, %v1170, %v1280
      %v1369 = vsel %vm1347, %v1171, %v1281
      %v1370 = vsel %vm1348, %v1172, %v1282
      %v1371 = vsel %vm1349, %v1173, %v1283
      %v1372 = vsel %vm1350, %v1174, %v1284
      %v1373 = vsel %vm1351, %v1175, %v1285
      %v1374 = vsel %vm1352, %v1176, %v1286
      %v1375 = vsel %vm1353, %v1177, %v1287
      %v1376 = vsel %vm1354, %v1178, %v1288
      %v1377 = vsel %vm1355, %v1179, %v1289
      %v1378 = vsel %vm1356, %v1180, %v1290
      %v1379 = vsel %vm1357, %v1181, %v1291
      %v1380 = vsel %vm1358, %v1182, %v1292
      %v1381 = vsel %vm1359, %v1183, %v1293
      %v1382 = vsel %vm1360, %v1184, %v1294
      %v1383 = vsel %vm1361, %v1185, %v1295
      %v1384 = vsel %vm1362, %v1186, %v1296
      %v1385 = vsel %vm1363, %v1187, %v1297
      %v1386 = vsel %vm1364, %v1188, %v1298
      %v1387 = vsel %vm1365, %v1189, %v1299
      %v1388 = vsel %vm1366, %v1190, %v1300
      %v1389 = vsel %vm1345, %v1323, %v1301
      %v1390 = vsel %vm1346, %v1324, %v1302
      %v1391 = vsel %vm1347, %v1325, %v1303
      %v1392 = vsel %vm1348, %v1326, %v1304
      %v1393 = vsel %vm1349, %v1327, %v1305
      %v1394 = vsel %vm1350, %v1328, %v1306
      %v1395 = vsel %vm1351, %v1329, %v1307
      %v1396 = vsel %vm1352, %v1330, %v1308
      %v1397 = vsel %vm1353, %v1331, %v1309
      %v1398 = vsel %vm1354, %v1332, %v1310
      %v1399 = vsel %vm1355, %v1333, %v1311
      %v1400 = vsel %vm1356, %v1334, %v1312
      %v1401 = vsel %vm1357, %v1335, %v1313
      %v1402 = vsel %vm1358, %v1336, %v1314
      %v1403 = vsel %vm1359, %v1337, %v1315
      %v1404 = vsel %vm1360, %v1338, %v1316
      %v1405 = vsel %vm1361, %v1339, %v1317
      %v1406 = vsel %vm1362, %v1340, %v1318
      %v1407 = vsel %vm1363, %v1341, %v1319
      %v1408 = vsel %vm1364, %v1342, %v1320
      %v1409 = vsel %vm1365, %v1343, %v1321
      %v1410 = vsel %vm1366, %v1344, %v1322
      %v1411 = vand.u32 2147483647, %v1191
      %v1412 = vand.u32 2147483647, %v1192
      %v1413 = vand.u32 2147483647, %v1193
      %v1414 = vand.u32 2147483647, %v1194
      %v1415 = vand.u32 2147483647, %v1195
      %v1416 = vand.u32 2147483647, %v1196
      %v1417 = vand.u32 2147483647, %v1197
      %v1418 = vand.u32 2147483647, %v1198
      %v1419 = vand.u32 2147483647, %v1199
      %v1420 = vand.u32 2147483647, %v1200
      %v1421 = vand.u32 2147483647, %v1201
      %v1422 = vand.u32 2147483647, %v1202
      %v1423 = vand.u32 2147483647, %v1203
      %v1424 = vand.u32 2147483647, %v1204
      %v1425 = vand.u32 2147483647, %v1205
      %v1426 = vand.u32 2147483647, %v1206
      %v1427 = vand.u32 2147483647, %v1207
      %v1428 = vand.u32 2147483647, %v1208
      %v1429 = vand.u32 2147483647, %v1209
      %v1430 = vand.u32 2147483647, %v1210
      %v1431 = vand.u32 2147483647, %v1211
      %v1432 = vand.u32 2147483647, %v1212
      %vm1433 = vcmp.gt.f32.partialorder %v1411, %v1389
      %vm1434 = vcmp.gt.f32.partialorder %v1412, %v1390
      %vm1435 = vcmp.gt.f32.partialorder %v1413, %v1391
      %vm1436 = vcmp.gt.f32.partialorder %v1414, %v1392
      %vm1437 = vcmp.gt.f32.partialorder %v1415, %v1393
      %vm1438 = vcmp.gt.f32.partialorder %v1416, %v1394
      %vm1439 = vcmp.gt.f32.partialorder %v1417, %v1395
      %vm1440 = vcmp.gt.f32.partialorder %v1418, %v1396
      %vm1441 = vcmp.gt.f32.partialorder %v1419, %v1397
      %vm1442 = vcmp.gt.f32.partialorder %v1420, %v1398
      %vm1443 = vcmp.gt.f32.partialorder %v1421, %v1399
      %vm1444 = vcmp.gt.f32.partialorder %v1422, %v1400
      %vm1445 = vcmp.gt.f32.partialorder %v1423, %v1401
      %vm1446 = vcmp.gt.f32.partialorder %v1424, %v1402
      %vm1447 = vcmp.gt.f32.partialorder %v1425, %v1403
      %vm1448 = vcmp.gt.f32.partialorder %v1426, %v1404
      %vm1449 = vcmp.gt.f32.partialorder %v1427, %v1405
      %vm1450 = vcmp.gt.f32.partialorder %v1428, %v1406
      %vm1451 = vcmp.gt.f32.partialorder %v1429, %v1407
      %vm1452 = vcmp.gt.f32.partialorder %v1430, %v1408
      %vm1453 = vcmp.gt.f32.partialorder %v1431, %v1409
      %vm1454 = vcmp.gt.f32.partialorder %v1432, %v1410
      %v1455 = vsel %vm1433, %v1191, %v1367
      %v1456 = vsel %vm1434, %v1192, %v1368
      %v1457 = vsel %vm1435, %v1193, %v1369
      %v1458 = vsel %vm1436, %v1194, %v1370
      %v1459 = vsel %vm1437, %v1195, %v1371
      %v1460 = vsel %vm1438, %v1196, %v1372
      %v1461 = vsel %vm1439, %v1197, %v1373
      %v1462 = vsel %vm1440, %v1198, %v1374
      %v1463 = vsel %vm1441, %v1199, %v1375
      %v1464 = vsel %vm1442, %v1200, %v1376
      %v1465 = vsel %vm1443, %v1201, %v1377
      %v1466 = vsel %vm1444, %v1202, %v1378
      %v1467 = vsel %vm1445, %v1203, %v1379
      %v1468 = vsel %vm1446, %v1204, %v1380
      %v1469 = vsel %vm1447, %v1205, %v1381
      %v1470 = vsel %vm1448, %v1206, %v1382
      %v1471 = vsel %vm1449, %v1207, %v1383
      %v1472 = vsel %vm1450, %v1208, %v1384
      %v1473 = vsel %vm1451, %v1209, %v1385
      %v1474 = vsel %vm1452, %v1210, %v1386
      %v1475 = vsel %vm1453, %v1211, %v1387
      %v1476 = vsel %vm1454, %v1212, %v1388
      %v1477 = vpack.c.bf16 %v1456, %v1455
      %v1478 = vpack.c.bf16 %v1458, %v1457
      %v1479 = vpack.c.bf16 %v1460, %v1459
      %v1480 = vpack.c.bf16 %v1462, %v1461
      %v1481 = vpack.c.bf16 %v1464, %v1463
      %v1482 = vpack.c.bf16 %v1466, %v1465
      %v1483 = vpack.c.bf16 %v1468, %v1467
      %v1484 = vpack.c.bf16 %v1470, %v1469
      %v1485 = vpack.c.bf16 %v1472, %v1471
      %v1486 = vpack.c.bf16 %v1474, %v1473
      %v1487 = vpack.c.bf16 %v1476, %v1475
      %v1488 = vld [vmem:[%s3] sm:$0xff]
      %v1489 = vld [vmem:[%s3 + $0x8] sm:$0xff]
      %v1490 = vld [vmem:[%s3 + $0x10] sm:$0xff]
      %v1491 = vld [vmem:[%s3 + $0x18] sm:$0xff]
      %v1492 = vld [vmem:[%s3 + $0x20] sm:$0xff]
      %v1493 = vld [vmem:[%s3 + $0x28] sm:$0xff]
      %v1494 = vld [vmem:[%s3 + $0x30] sm:$0xff]
      %v1495 = vld [vmem:[%s3 + $0x38] sm:$0xff]
      %v1496 = vld [vmem:[%s3 + $0x40] sm:$0xff]
      %v1497 = vld [vmem:[%s3 + $0x48] sm:$0xff]
      %v1498 = vld [vmem:[%s3 + $0x50] sm:$0xff]
      %v1499 = vld [vmem:[%s3 + $0x58] sm:$0xff]
      %v1500 = vld [vmem:[%s3 + $0x60] sm:$0xff]
      %v1501 = vld [vmem:[%s3 + $0x68] sm:$0xff]
      %v1502 = vld [vmem:[%s3 + $0x70] sm:$0xff]
      %v1503 = vld [vmem:[%s3 + $0x78] sm:$0xff]
      %v1520 = vunpack.c.l.b16 %v1488
      %v1521 = vunpack.c.h.b16 %v1488
      %v1522 = vunpack.c.l.b16 %v1489
      %v1523 = vunpack.c.h.b16 %v1489
      %v1524 = vunpack.c.l.b16 %v1490
      %v1525 = vunpack.c.h.b16 %v1490
      %v1526 = vunpack.c.l.b16 %v1491
      %v1527 = vunpack.c.h.b16 %v1491
      %v1528 = vunpack.c.l.b16 %v1492
      %v1529 = vunpack.c.h.b16 %v1492
      %v1530 = vunpack.c.l.b16 %v1493
      %v1531 = vunpack.c.h.b16 %v1493
      %v1532 = vunpack.c.l.b16 %v1494
      %v1533 = vunpack.c.h.b16 %v1494
      %v1534 = vunpack.c.l.b16 %v1495
      %v1535 = vunpack.c.h.b16 %v1495
      %v1536 = vunpack.c.l.b16 %v1496
      %v1537 = vunpack.c.h.b16 %v1496
      %v1538 = vunpack.c.l.b16 %v1497
      %v1539 = vunpack.c.h.b16 %v1497
      %v1540 = vunpack.c.l.b16 %v1498
      %v1541 = vunpack.c.h.b16 %v1498
      %v1542 = vunpack.c.l.b16 %v1499
      %v1543 = vunpack.c.h.b16 %v1499
      %v1544 = vunpack.c.l.b16 %v1500
      %v1545 = vunpack.c.h.b16 %v1500
      %v1546 = vunpack.c.l.b16 %v1501
      %v1547 = vunpack.c.h.b16 %v1501
      %v1548 = vunpack.c.l.b16 %v1502
      %v1549 = vunpack.c.h.b16 %v1502
      %v1550 = vunpack.c.l.b16 %v1503
      %v1551 = vunpack.c.h.b16 %v1503
      %v1552 = vpack.c.b16 %v1522, %v1520
      %v1553 = vpack.c.b16 %v1523, %v1521
      %v1554 = vpack.c.b16 %v1526, %v1524
      %v1555 = vpack.c.b16 %v1527, %v1525
      %v1556 = vpack.c.b16 %v1530, %v1528
      %v1557 = vpack.c.b16 %v1531, %v1529
      %v1558 = vpack.c.b16 %v1534, %v1532
      %v1559 = vpack.c.b16 %v1535, %v1533
      %v1560 = vpack.c.b16 %v1538, %v1536
      %v1561 = vpack.c.b16 %v1539, %v1537
      %v1562 = vpack.c.b16 %v1542, %v1540
      %v1563 = vpack.c.b16 %v1543, %v1541
      %v1564 = vpack.c.b16 %v1546, %v1544
      %v1565 = vpack.c.b16 %v1547, %v1545
      %v1566 = vpack.c.b16 %v1550, %v1548
      %v1567 = vpack.c.b16 %v1551, %v1549
      %vm1576 = vcmask 392192
      %v1578 = vsel %vm1576, %v1553, 0
      %v1581 = vsel %vm1576, %v1555, 0
      %v1584 = vsel %vm1576, %v1557, 0
      %v1587 = vsel %vm1576, %v1559, 0
      %v1590 = vsel %vm1576, %v1561, 0
      %v1593 = vsel %vm1576, %v1563, 0
      %v1596 = vsel %vm1576, %v1565, 0
      %v1599 = vsel %vm1576, %v1567, 0
      %1601 = vmatpush.bf16.msra.mxu0 %v1484
      %1602 = vmatpush.bf16.msra.mxu0 %v1483
      %1603 = vmatpush.bf16.msra.mxu0 %v1482
      %1604 = vmatpush.bf16.msra.mxu0 %v1481
      %1605 = vmatpush.bf16.msra.mxu0 %v1480
      %1606 = vmatpush.bf16.msra.mxu0 %v1479
      %1607 = vmatpush.bf16.msra.mxu0 %v1478
      %1608 = vmatpush.bf16.msra.mxu0 %v1477
      %1609 = vmatmul.bf16.gmra.mxu0 %v1552
      %v1610 = vpop.f32.mrf.mxu0
      %v1611 = vadd.f32 0.0, %v1610
      %v1612 = vpop.f32.mrf.mxu0
      %v1613 = vadd.f32 0.0, %v1612
      %1614 = vmatmul.bf16.gmra.mxu0 %v1554
      %v1615 = vpop.f32.mrf.mxu0
      %v1616 = vadd.f32 0.0, %v1615
      %v1617 = vpop.f32.mrf.mxu0
      %v1618 = vadd.f32 0.0, %v1617
      %1619 = vmatmul.bf16.gmra.mxu0 %v1556
      %v1620 = vpop.f32.mrf.mxu0
      %v1621 = vadd.f32 0.0, %v1620
      %v1622 = vpop.f32.mrf.mxu0
      %v1623 = vadd.f32 0.0, %v1622
      %1624 = vmatmul.bf16.gmra.mxu0 %v1558
      %v1625 = vpop.f32.mrf.mxu0
      %v1626 = vadd.f32 0.0, %v1625
      %v1627 = vpop.f32.mrf.mxu0
      %v1628 = vadd.f32 0.0, %v1627
      %1629 = vmatmul.bf16.gmra.mxu0 %v1560
      %v1630 = vpop.f32.mrf.mxu0
      %v1631 = vadd.f32 0.0, %v1630
      %v1632 = vpop.f32.mrf.mxu0
      %v1633 = vadd.f32 0.0, %v1632
      %1634 = vmatmul.bf16.gmra.mxu0 %v1562
      %v1635 = vpop.f32.mrf.mxu0
      %v1636 = vadd.f32 0.0, %v1635
      %v1637 = vpop.f32.mrf.mxu0
      %v1638 = vadd.f32 0.0, %v1637
      %1639 = vmatmul.bf16.gmra.mxu0 %v1564
      %v1640 = vpop.f32.mrf.mxu0
      %v1641 = vadd.f32 0.0, %v1640
      %v1642 = vpop.f32.mrf.mxu0
      %v1643 = vadd.f32 0.0, %v1642
      %1644 = vmatmul.bf16.gmra.mxu0 %v1566
      %v1645 = vpop.f32.mrf.mxu0
      %v1646 = vadd.f32 0.0, %v1645
      %v1647 = vpop.f32.mrf.mxu0
      %v1648 = vadd.f32 0.0, %v1647
      %1649 = vdwg.mxu0
      %1650 = vmatpush.bf16.msra.mxu0 0
      %1651 = vmatpush.bf16.msra.mxu0 0
      %1652 = vmatpush.bf16.msra.mxu0 0
      %1653 = vmatpush.bf16.msra.mxu0 0
      %1654 = vmatpush.bf16.msra.mxu0 0
      %1655 = vmatpush.bf16.msra.mxu0 %v1487
      %1656 = vmatpush.bf16.msra.mxu0 %v1486
      %1657 = vmatpush.bf16.msra.mxu0 %v1485
      %1658 = vmatmul.bf16.gmra.mxu0 %v1578
      %v1659 = vpop.f32.mrf.mxu0
      %v1660 = vadd.f32 %v1611, %v1659
      %v1661 = vpop.f32.mrf.mxu0
      %v1662 = vadd.f32 %v1613, %v1661
      %1663 = vmatmul.bf16.gmra.mxu0 %v1581
      %v1664 = vpop.f32.mrf.mxu0
      %v1665 = vadd.f32 %v1616, %v1664
      %v1666 = vpop.f32.mrf.mxu0
      %v1667 = vadd.f32 %v1618, %v1666
      %1668 = vmatmul.bf16.gmra.mxu0 %v1584
      %v1669 = vpop.f32.mrf.mxu0
      %v1670 = vadd.f32 %v1621, %v1669
      %v1671 = vpop.f32.mrf.mxu0
      %v1672 = vadd.f32 %v1623, %v1671
      %1673 = vmatmul.bf16.gmra.mxu0 %v1587
      %v1674 = vpop.f32.mrf.mxu0
      %v1675 = vadd.f32 %v1626, %v1674
      %v1676 = vpop.f32.mrf.mxu0
      %v1677 = vadd.f32 %v1628, %v1676
      %1678 = vmatmul.bf16.gmra.mxu0 %v1590
      %v1679 = vpop.f32.mrf.mxu0
      %v1680 = vadd.f32 %v1631, %v1679
      %v1681 = vpop.f32.mrf.mxu0
      %v1682 = vadd.f32 %v1633, %v1681
      %1683 = vmatmul.bf16.gmra.mxu0 %v1593
      %v1684 = vpop.f32.mrf.mxu0
      %v1685 = vadd.f32 %v1636, %v1684
      %v1686 = vpop.f32.mrf.mxu0
      %v1687 = vadd.f32 %v1638, %v1686
      %1688 = vmatmul.bf16.gmra.mxu0 %v1596
      %v1689 = vpop.f32.mrf.mxu0
      %v1690 = vadd.f32 %v1641, %v1689
      %v1691 = vpop.f32.mrf.mxu0
      %v1692 = vadd.f32 %v1643, %v1691
      %1693 = vmatmul.bf16.gmra.mxu0 %v1599
      %v1694 = vpop.f32.mrf.mxu0
      %v1695 = vadd.f32 %v1646, %v1694
      %v1696 = vpop.f32.mrf.mxu0
      %v1697 = vadd.f32 %v1648, %v1696
      %1698 = vdwg.mxu0
      %v1699 = vpack.c.bf16 %v1662, %v1660
      %v1700 = vpack.c.bf16 %v1667, %v1665
      %v1701 = vpack.c.bf16 %v1672, %v1670
      %v1702 = vpack.c.bf16 %v1677, %v1675
      %v1703 = vpack.c.bf16 %v1682, %v1680
      %v1704 = vpack.c.bf16 %v1687, %v1685
      %v1705 = vpack.c.bf16 %v1692, %v1690
      %v1706 = vpack.c.bf16 %v1697, %v1695
      %v1707 = vld [vmem:[%s4] sm:$0xff]
      %v1708 = vld [vmem:[%s4 + $0x8] sm:$0xff]
      %v1709 = vld [vmem:[%s4 + $0x10] sm:$0xff]
      %v1710 = vld [vmem:[%s4 + $0x18] sm:$0xff]
      %v1711 = vld [vmem:[%s4 + $0x20] sm:$0xff]
      %v1712 = vld [vmem:[%s4 + $0x28] sm:$0xff]
      %v1713 = vld [vmem:[%s4 + $0x30] sm:$0xff]
      %v1714 = vld [vmem:[%s4 + $0x38] sm:$0xff]
      %v1715 = vld [vmem:[%s4 + $0x40] sm:$0xff]
      %v1716 = vld [vmem:[%s4 + $0x48] sm:$0xff]
      %v1717 = vld [vmem:[%s4 + $0x50] sm:$0xff]
      %v1718 = vld [vmem:[%s4 + $0x58] sm:$0xff]
      %v1719 = vld [vmem:[%s4 + $0x60] sm:$0xff]
      %v1720 = vld [vmem:[%s4 + $0x68] sm:$0xff]
      %v1721 = vld [vmem:[%s4 + $0x70] sm:$0xff]
      %v1722 = vld [vmem:[%s4 + $0x78] sm:$0xff]
      %s1723 = scalar_lea.vmem %s3, 128
      %v1724 = vld [vmem:[%s1723] sm:$0xff]
      %v1725 = vld [vmem:[%s1723 + $0x8] sm:$0xff]
      %v1726 = vld [vmem:[%s1723 + $0x10] sm:$0xff]
      %v1727 = vld [vmem:[%s1723 + $0x18] sm:$0xff]
      %v1728 = vld [vmem:[%s1723 + $0x20] sm:$0xff]
      %v1729 = vld [vmem:[%s1723 + $0x28] sm:$0xff]
      %v1730 = vld [vmem:[%s1723 + $0x30] sm:$0xff]
      %v1731 = vld [vmem:[%s1723 + $0x38] sm:$0xff]
      %v1732 = vld [vmem:[%s1723 + $0x40] sm:$0xff]
      %v1733 = vld [vmem:[%s1723 + $0x48] sm:$0xff]
      %v1734 = vld [vmem:[%s1723 + $0x50] sm:$0xff]
      %v1735 = vld [vmem:[%s1723 + $0x58] sm:$0xff]
      %v1736 = vld [vmem:[%s1723 + $0x60] sm:$0xff]
      %v1737 = vld [vmem:[%s1723 + $0x68] sm:$0xff]
      %v1738 = vld [vmem:[%s1723 + $0x70] sm:$0xff]
      %v1739 = vld [vmem:[%s1723 + $0x78] sm:$0xff]
      %v1756 = vunpack.c.l.b16 %v1724
      %v1757 = vunpack.c.h.b16 %v1724
      %v1758 = vunpack.c.l.b16 %v1725
      %v1759 = vunpack.c.h.b16 %v1725
      %v1760 = vunpack.c.l.b16 %v1726
      %v1761 = vunpack.c.h.b16 %v1726
      %v1762 = vunpack.c.l.b16 %v1727
      %v1763 = vunpack.c.h.b16 %v1727
      %v1764 = vunpack.c.l.b16 %v1728
      %v1765 = vunpack.c.h.b16 %v1728
      %v1766 = vunpack.c.l.b16 %v1729
      %v1767 = vunpack.c.h.b16 %v1729
      %v1768 = vunpack.c.l.b16 %v1730
      %v1769 = vunpack.c.h.b16 %v1730
      %v1770 = vunpack.c.l.b16 %v1731
      %v1771 = vunpack.c.h.b16 %v1731
      %v1772 = vunpack.c.l.b16 %v1732
      %v1773 = vunpack.c.h.b16 %v1732
      %v1774 = vunpack.c.l.b16 %v1733
      %v1775 = vunpack.c.h.b16 %v1733
      %v1776 = vunpack.c.l.b16 %v1734
      %v1777 = vunpack.c.h.b16 %v1734
      %v1778 = vunpack.c.l.b16 %v1735
      %v1779 = vunpack.c.h.b16 %v1735
      %v1780 = vunpack.c.l.b16 %v1736
      %v1781 = vunpack.c.h.b16 %v1736
      %v1782 = vunpack.c.l.b16 %v1737
      %v1783 = vunpack.c.h.b16 %v1737
      %v1784 = vunpack.c.l.b16 %v1738
      %v1785 = vunpack.c.h.b16 %v1738
      %v1786 = vunpack.c.l.b16 %v1739
      %v1787 = vunpack.c.h.b16 %v1739
      %v1788 = vpack.c.b16 %v1758, %v1756
      %v1789 = vpack.c.b16 %v1759, %v1757
      %v1790 = vpack.c.b16 %v1762, %v1760
      %v1791 = vpack.c.b16 %v1763, %v1761
      %v1792 = vpack.c.b16 %v1766, %v1764
      %v1793 = vpack.c.b16 %v1767, %v1765
      %v1794 = vpack.c.b16 %v1770, %v1768
      %v1795 = vpack.c.b16 %v1771, %v1769
      %v1796 = vpack.c.b16 %v1774, %v1772
      %v1797 = vpack.c.b16 %v1775, %v1773
      %v1798 = vpack.c.b16 %v1778, %v1776
      %v1799 = vpack.c.b16 %v1779, %v1777
      %v1800 = vpack.c.b16 %v1782, %v1780
      %v1801 = vpack.c.b16 %v1783, %v1781
      %v1802 = vpack.c.b16 %v1786, %v1784
      %v1803 = vpack.c.b16 %v1787, %v1785
      %v1813 = vsel %vm1576, %v1789, 0
      %v1816 = vsel %vm1576, %v1791, 0
      %v1819 = vsel %vm1576, %v1793, 0
      %v1822 = vsel %vm1576, %v1795, 0
      %v1825 = vsel %vm1576, %v1797, 0
      %v1828 = vsel %vm1576, %v1799, 0
      %v1831 = vsel %vm1576, %v1801, 0
      %v1834 = vsel %vm1576, %v1803, 0
      %1836 = vmatpush.bf16.msra.mxu0 %v1484
      %1837 = vmatpush.bf16.msra.mxu0 %v1483
      %1838 = vmatpush.bf16.msra.mxu0 %v1482
      %1839 = vmatpush.bf16.msra.mxu0 %v1481
      %1840 = vmatpush.bf16.msra.mxu0 %v1480
      %1841 = vmatpush.bf16.msra.mxu0 %v1479
      %1842 = vmatpush.bf16.msra.mxu0 %v1478
      %1843 = vmatpush.bf16.msra.mxu0 %v1477
      %1844 = vmatmul.bf16.gmra.mxu0 %v1788
      %v1845 = vpop.f32.mrf.mxu0
      %v1846 = vadd.f32 0.0, %v1845
      %v1847 = vpop.f32.mrf.mxu0
      %v1848 = vadd.f32 0.0, %v1847
      %1849 = vmatmul.bf16.gmra.mxu0 %v1790
      %v1850 = vpop.f32.mrf.mxu0
      %v1851 = vadd.f32 0.0, %v1850
      %v1852 = vpop.f32.mrf.mxu0
      %v1853 = vadd.f32 0.0, %v1852
      %1854 = vmatmul.bf16.gmra.mxu0 %v1792
      %v1855 = vpop.f32.mrf.mxu0
      %v1856 = vadd.f32 0.0, %v1855
      %v1857 = vpop.f32.mrf.mxu0
      %v1858 = vadd.f32 0.0, %v1857
      %1859 = vmatmul.bf16.gmra.mxu0 %v1794
      %v1860 = vpop.f32.mrf.mxu0
      %v1861 = vadd.f32 0.0, %v1860
      %v1862 = vpop.f32.mrf.mxu0
      %v1863 = vadd.f32 0.0, %v1862
      %1864 = vmatmul.bf16.gmra.mxu0 %v1796
      %v1865 = vpop.f32.mrf.mxu0
      %v1866 = vadd.f32 0.0, %v1865
      %v1867 = vpop.f32.mrf.mxu0
      %v1868 = vadd.f32 0.0, %v1867
      %1869 = vmatmul.bf16.gmra.mxu0 %v1798
      %v1870 = vpop.f32.mrf.mxu0
      %v1871 = vadd.f32 0.0, %v1870
      %v1872 = vpop.f32.mrf.mxu0
      %v1873 = vadd.f32 0.0, %v1872
      %1874 = vmatmul.bf16.gmra.mxu0 %v1800
      %v1875 = vpop.f32.mrf.mxu0
      %v1876 = vadd.f32 0.0, %v1875
      %v1877 = vpop.f32.mrf.mxu0
      %v1878 = vadd.f32 0.0, %v1877
      %1879 = vmatmul.bf16.gmra.mxu0 %v1802
      %v1880 = vpop.f32.mrf.mxu0
      %v1881 = vadd.f32 0.0, %v1880
      %v1882 = vpop.f32.mrf.mxu0
      %v1883 = vadd.f32 0.0, %v1882
      %1884 = vdwg.mxu0
      %1885 = vmatpush.bf16.msra.mxu0 0
      %1886 = vmatpush.bf16.msra.mxu0 0
      %1887 = vmatpush.bf16.msra.mxu0 0
      %1888 = vmatpush.bf16.msra.mxu0 0
      %1889 = vmatpush.bf16.msra.mxu0 0
      %1890 = vmatpush.bf16.msra.mxu0 %v1487
      %1891 = vmatpush.bf16.msra.mxu0 %v1486
      %1892 = vmatpush.bf16.msra.mxu0 %v1485
      %1893 = vmatmul.bf16.gmra.mxu0 %v1813
      %v1894 = vpop.f32.mrf.mxu0
      %v1895 = vadd.f32 %v1846, %v1894
      %v1896 = vpop.f32.mrf.mxu0
      %v1897 = vadd.f32 %v1848, %v1896
      %1898 = vmatmul.bf16.gmra.mxu0 %v1816
      %v1899 = vpop.f32.mrf.mxu0
      %v1900 = vadd.f32 %v1851, %v1899
      %v1901 = vpop.f32.mrf.mxu0
      %v1902 = vadd.f32 %v1853, %v1901
      %1903 = vmatmul.bf16.gmra.mxu0 %v1819
      %v1904 = vpop.f32.mrf.mxu0
      %v1905 = vadd.f32 %v1856, %v1904
      %v1906 = vpop.f32.mrf.mxu0
      %v1907 = vadd.f32 %v1858, %v1906
      %1908 = vmatmul.bf16.gmra.mxu0 %v1822
      %v1909 = vpop.f32.mrf.mxu0
      %v1910 = vadd.f32 %v1861, %v1909
      %v1911 = vpop.f32.mrf.mxu0
      %v1912 = vadd.f32 %v1863, %v1911
      %1913 = vmatmul.bf16.gmra.mxu0 %v1825
      %v1914 = vpop.f32.mrf.mxu0
      %v1915 = vadd.f32 %v1866, %v1914
      %v1916 = vpop.f32.mrf.mxu0
      %v1917 = vadd.f32 %v1868, %v1916
      %1918 = vmatmul.bf16.gmra.mxu0 %v1828
      %v1919 = vpop.f32.mrf.mxu0
      %v1920 = vadd.f32 %v1871, %v1919
      %v1921 = vpop.f32.mrf.mxu0
      %v1922 = vadd.f32 %v1873, %v1921
      %1923 = vmatmul.bf16.gmra.mxu0 %v1831
      %v1924 = vpop.f32.mrf.mxu0
      %v1925 = vadd.f32 %v1876, %v1924
      %v1926 = vpop.f32.mrf.mxu0
      %v1927 = vadd.f32 %v1878, %v1926
      %1928 = vmatmul.bf16.gmra.mxu0 %v1834
      %v1929 = vpop.f32.mrf.mxu0
      %v1930 = vadd.f32 %v1881, %v1929
      %v1931 = vpop.f32.mrf.mxu0
      %v1932 = vadd.f32 %v1883, %v1931
      %1933 = vdwg.mxu0
      %v1934 = vpack.c.bf16 %v1897, %v1895
      %v1935 = vpack.c.bf16 %v1902, %v1900
      %v1936 = vpack.c.bf16 %v1907, %v1905
      %v1937 = vpack.c.bf16 %v1912, %v1910
      %v1938 = vpack.c.bf16 %v1917, %v1915
      %v1939 = vpack.c.bf16 %v1922, %v1920
      %v1940 = vpack.c.bf16 %v1927, %v1925
      %v1941 = vpack.c.bf16 %v1932, %v1930
      %s1942 = scalar_lea.vmem %s4, 128
      %v1943 = vld [vmem:[%s1942] sm:$0xff]
      %v1944 = vld [vmem:[%s1942 + $0x8] sm:$0xff]
      %v1945 = vld [vmem:[%s1942 + $0x10] sm:$0xff]
      %v1946 = vld [vmem:[%s1942 + $0x18] sm:$0xff]
      %v1947 = vld [vmem:[%s1942 + $0x20] sm:$0xff]
      %v1948 = vld [vmem:[%s1942 + $0x28] sm:$0xff]
      %v1949 = vld [vmem:[%s1942 + $0x30] sm:$0xff]
      %v1950 = vld [vmem:[%s1942 + $0x38] sm:$0xff]
      %v1951 = vld [vmem:[%s1942 + $0x40] sm:$0xff]
      %v1952 = vld [vmem:[%s1942 + $0x48] sm:$0xff]
      %v1953 = vld [vmem:[%s1942 + $0x50] sm:$0xff]
      %v1954 = vld [vmem:[%s1942 + $0x58] sm:$0xff]
      %v1955 = vld [vmem:[%s1942 + $0x60] sm:$0xff]
      %v1956 = vld [vmem:[%s1942 + $0x68] sm:$0xff]
      %v1957 = vld [vmem:[%s1942 + $0x70] sm:$0xff]
      %v1958 = vld [vmem:[%s1942 + $0x78] sm:$0xff]
      %v1975 = vunpack.c.l.b16 %v1943
      %v1976 = vunpack.c.h.b16 %v1943
      %v1977 = vunpack.c.l.b16 %v1944
      %v1978 = vunpack.c.h.b16 %v1944
      %v1979 = vunpack.c.l.b16 %v1945
      %v1980 = vunpack.c.h.b16 %v1945
      %v1981 = vunpack.c.l.b16 %v1946
      %v1982 = vunpack.c.h.b16 %v1946
      %v1983 = vunpack.c.l.b16 %v1947
      %v1984 = vunpack.c.h.b16 %v1947
      %v1985 = vunpack.c.l.b16 %v1948
      %v1986 = vunpack.c.h.b16 %v1948
      %v1987 = vunpack.c.l.b16 %v1949
      %v1988 = vunpack.c.h.b16 %v1949
      %v1989 = vunpack.c.l.b16 %v1950
      %v1990 = vunpack.c.h.b16 %v1950
      %v1991 = vunpack.c.l.b16 %v1951
      %v1992 = vunpack.c.h.b16 %v1951
      %v1993 = vunpack.c.l.b16 %v1952
      %v1994 = vunpack.c.h.b16 %v1952
      %v1995 = vunpack.c.l.b16 %v1953
      %v1996 = vunpack.c.h.b16 %v1953
      %v1997 = vunpack.c.l.b16 %v1954
      %v1998 = vunpack.c.h.b16 %v1954
      %v1999 = vunpack.c.l.b16 %v1955
      %v2000 = vunpack.c.h.b16 %v1955
      %v2001 = vunpack.c.l.b16 %v1956
      %v2002 = vunpack.c.h.b16 %v1956
      %v2003 = vunpack.c.l.b16 %v1957
      %v2004 = vunpack.c.h.b16 %v1957
      %v2005 = vunpack.c.l.b16 %v1958
      %v2006 = vunpack.c.h.b16 %v1958
      %v2007 = vpack.c.b16 %v1977, %v1975
      %v2008 = vpack.c.b16 %v1978, %v1976
      %v2009 = vpack.c.b16 %v1981, %v1979
      %v2010 = vpack.c.b16 %v1982, %v1980
      %v2011 = vpack.c.b16 %v1985, %v1983
      %v2012 = vpack.c.b16 %v1986, %v1984
      %v2013 = vpack.c.b16 %v1989, %v1987
      %v2014 = vpack.c.b16 %v1990, %v1988
      %v2015 = vpack.c.b16 %v1993, %v1991
      %v2016 = vpack.c.b16 %v1994, %v1992
      %v2017 = vpack.c.b16 %v1997, %v1995
      %v2018 = vpack.c.b16 %v1998, %v1996
      %v2019 = vpack.c.b16 %v2001, %v1999
      %v2020 = vpack.c.b16 %v2002, %v2000
      %v2021 = vpack.c.b16 %v2005, %v2003
      %v2022 = vpack.c.b16 %v2006, %v2004
      %2039 = vmatpush.bf16.msra.mxu0 %v2021
      %2040 = vmatpush.bf16.msra.mxu0 %v2019
      %2041 = vmatpush.bf16.msra.mxu0 %v2017
      %2042 = vmatpush.bf16.msra.mxu0 %v2015
      %2043 = vmatpush.bf16.msra.mxu0 %v2013
      %2044 = vmatpush.bf16.msra.mxu0 %v2011
      %2045 = vmatpush.bf16.msra.mxu0 %v2009
      %2046 = vmatpush.bf16.msra.mxu0 %v2007
      %2047 = vmatmul.bf16.gmra.mxu0 %v1934
      %v2048 = vpop.f32.mrf.mxu0
      %v2049 = vadd.f32 0.0, %v2048
      %v2050 = vpop.f32.mrf.mxu0
      %v2051 = vadd.f32 0.0, %v2050
      %2052 = vmatmul.bf16.gmra.mxu0 %v1935
      %v2053 = vpop.f32.mrf.mxu0
      %v2054 = vadd.f32 0.0, %v2053
      %v2055 = vpop.f32.mrf.mxu0
      %v2056 = vadd.f32 0.0, %v2055
      %2057 = vmatmul.bf16.gmra.mxu0 %v1936
      %v2058 = vpop.f32.mrf.mxu0
      %v2059 = vadd.f32 0.0, %v2058
      %v2060 = vpop.f32.mrf.mxu0
      %v2061 = vadd.f32 0.0, %v2060
      %2062 = vmatmul.bf16.gmra.mxu0 %v1937
      %v2063 = vpop.f32.mrf.mxu0
      %v2064 = vadd.f32 0.0, %v2063
      %v2065 = vpop.f32.mrf.mxu0
      %v2066 = vadd.f32 0.0, %v2065
      %2067 = vmatmul.bf16.gmra.mxu0 %v1938
      %v2068 = vpop.f32.mrf.mxu0
      %v2069 = vadd.f32 0.0, %v2068
      %v2070 = vpop.f32.mrf.mxu0
      %v2071 = vadd.f32 0.0, %v2070
      %2072 = vmatmul.bf16.gmra.mxu0 %v1939
      %v2073 = vpop.f32.mrf.mxu0
      %v2074 = vadd.f32 0.0, %v2073
      %v2075 = vpop.f32.mrf.mxu0
      %v2076 = vadd.f32 0.0, %v2075
      %2077 = vmatmul.bf16.gmra.mxu0 %v1940
      %v2078 = vpop.f32.mrf.mxu0
      %v2079 = vadd.f32 0.0, %v2078
      %v2080 = vpop.f32.mrf.mxu0
      %v2081 = vadd.f32 0.0, %v2080
      %2082 = vmatmul.bf16.gmra.mxu0 %v1941
      %v2083 = vpop.f32.mrf.mxu0
      %v2084 = vadd.f32 0.0, %v2083
      %v2085 = vpop.f32.mrf.mxu0
      %v2086 = vadd.f32 0.0, %v2085
      %2087 = vdwg.mxu0
      %2088 = vmatpush.bf16.msra.mxu0 %v2022
      %2089 = vmatpush.bf16.msra.mxu0 %v2020
      %2090 = vmatpush.bf16.msra.mxu0 %v2018
      %2091 = vmatpush.bf16.msra.mxu0 %v2016
      %2092 = vmatpush.bf16.msra.mxu0 %v2014
      %2093 = vmatpush.bf16.msra.mxu0 %v2012
      %2094 = vmatpush.bf16.msra.mxu0 %v2010
      %2095 = vmatpush.bf16.msra.mxu0 %v2008
      %2096 = vmatmul.bf16.gmra.mxu0 %v1934
      %v2097 = vpop.f32.mrf.mxu0
      %v2098 = vadd.f32 0.0, %v2097
      %v2099 = vpop.f32.mrf.mxu0
      %v2100 = vadd.f32 0.0, %v2099
      %2101 = vmatmul.bf16.gmra.mxu0 %v1935
      %v2102 = vpop.f32.mrf.mxu0
      %v2103 = vadd.f32 0.0, %v2102
      %v2104 = vpop.f32.mrf.mxu0
      %v2105 = vadd.f32 0.0, %v2104
      %2106 = vmatmul.bf16.gmra.mxu0 %v1936
      %v2107 = vpop.f32.mrf.mxu0
      %v2108 = vadd.f32 0.0, %v2107
      %v2109 = vpop.f32.mrf.mxu0
      %v2110 = vadd.f32 0.0, %v2109
      %2111 = vmatmul.bf16.gmra.mxu0 %v1937
      %v2112 = vpop.f32.mrf.mxu0
      %v2113 = vadd.f32 0.0, %v2112
      %v2114 = vpop.f32.mrf.mxu0
      %v2115 = vadd.f32 0.0, %v2114
      %2116 = vmatmul.bf16.gmra.mxu0 %v1938
      %v2117 = vpop.f32.mrf.mxu0
      %v2118 = vadd.f32 0.0, %v2117
      %v2119 = vpop.f32.mrf.mxu0
      %v2120 = vadd.f32 0.0, %v2119
      %2121 = vmatmul.bf16.gmra.mxu0 %v1939
      %v2122 = vpop.f32.mrf.mxu0
      %v2123 = vadd.f32 0.0, %v2122
      %v2124 = vpop.f32.mrf.mxu0
      %v2125 = vadd.f32 0.0, %v2124
      %2126 = vmatmul.bf16.gmra.mxu0 %v1940
      %v2127 = vpop.f32.mrf.mxu0
      %v2128 = vadd.f32 0.0, %v2127
      %v2129 = vpop.f32.mrf.mxu0
      %v2130 = vadd.f32 0.0, %v2129
      %2131 = vmatmul.bf16.gmra.mxu0 %v1941
      %v2132 = vpop.f32.mrf.mxu0
      %v2133 = vadd.f32 0.0, %v2132
      %v2134 = vpop.f32.mrf.mxu0
      %v2135 = vadd.f32 0.0, %v2134
      %2136 = vdwg.mxu0
      %v2153 = vunpack.c.l.b16 %v1707
      %v2154 = vunpack.c.h.b16 %v1707
      %v2155 = vunpack.c.l.b16 %v1708
      %v2156 = vunpack.c.h.b16 %v1708
      %v2157 = vunpack.c.l.b16 %v1709
      %v2158 = vunpack.c.h.b16 %v1709
      %v2159 = vunpack.c.l.b16 %v1710
      %v2160 = vunpack.c.h.b16 %v1710
      %v2161 = vunpack.c.l.b16 %v1711
      %v2162 = vunpack.c.h.b16 %v1711
      %v2163 = vunpack.c.l.b16 %v1712
      %v2164 = vunpack.c.h.b16 %v1712
      %v2165 = vunpack.c.l.b16 %v1713
      %v2166 = vunpack.c.h.b16 %v1713
      %v2167 = vunpack.c.l.b16 %v1714
      %v2168 = vunpack.c.h.b16 %v1714
      %v2169 = vunpack.c.l.b16 %v1715
      %v2170 = vunpack.c.h.b16 %v1715
      %v2171 = vunpack.c.l.b16 %v1716
      %v2172 = vunpack.c.h.b16 %v1716
      %v2173 = vunpack.c.l.b16 %v1717
      %v2174 = vunpack.c.h.b16 %v1717
      %v2175 = vunpack.c.l.b16 %v1718
      %v2176 = vunpack.c.h.b16 %v1718
      %v2177 = vunpack.c.l.b16 %v1719
      %v2178 = vunpack.c.h.b16 %v1719
      %v2179 = vunpack.c.l.b16 %v1720
      %v2180 = vunpack.c.h.b16 %v1720
      %v2181 = vunpack.c.l.b16 %v1721
      %v2182 = vunpack.c.h.b16 %v1721
      %v2183 = vunpack.c.l.b16 %v1722
      %v2184 = vunpack.c.h.b16 %v1722
      %v2185 = vpack.c.b16 %v2155, %v2153
      %v2186 = vpack.c.b16 %v2156, %v2154
      %v2187 = vpack.c.b16 %v2159, %v2157
      %v2188 = vpack.c.b16 %v2160, %v2158
      %v2189 = vpack.c.b16 %v2163, %v2161
      %v2190 = vpack.c.b16 %v2164, %v2162
      %v2191 = vpack.c.b16 %v2167, %v2165
      %v2192 = vpack.c.b16 %v2168, %v2166
      %v2193 = vpack.c.b16 %v2171, %v2169
      %v2194 = vpack.c.b16 %v2172, %v2170
      %v2195 = vpack.c.b16 %v2175, %v2173
      %v2196 = vpack.c.b16 %v2176, %v2174
      %v2197 = vpack.c.b16 %v2179, %v2177
      %v2198 = vpack.c.b16 %v2180, %v2178
      %v2199 = vpack.c.b16 %v2183, %v2181
      %v2200 = vpack.c.b16 %v2184, %v2182
      %2217 = vmatpush.bf16.msra.mxu0 %v2199
      %2218 = vmatpush.bf16.msra.mxu0 %v2197
      %2219 = vmatpush.bf16.msra.mxu0 %v2195
      %2220 = vmatpush.bf16.msra.mxu0 %v2193
      %2221 = vmatpush.bf16.msra.mxu0 %v2191
      %2222 = vmatpush.bf16.msra.mxu0 %v2189
      %2223 = vmatpush.bf16.msra.mxu0 %v2187
      %2224 = vmatpush.bf16.msra.mxu0 %v2185
      %2225 = vmatmul.bf16.gmra.mxu0 %v1699
      %v2226 = vpop.f32.mrf.mxu0
      %v2227 = vadd.f32 %v2049, %v2226
      %v2228 = vpop.f32.mrf.mxu0
      %v2229 = vadd.f32 %v2051, %v2228
      %2230 = vmatmul.bf16.gmra.mxu0 %v1700
      %v2231 = vpop.f32.mrf.mxu0
      %v2232 = vadd.f32 %v2054, %v2231
      %v2233 = vpop.f32.mrf.mxu0
      %v2234 = vadd.f32 %v2056, %v2233
      %2235 = vmatmul.bf16.gmra.mxu0 %v1701
      %v2236 = vpop.f32.mrf.mxu0
      %v2237 = vadd.f32 %v2059, %v2236
      %v2238 = vpop.f32.mrf.mxu0
      %v2239 = vadd.f32 %v2061, %v2238
      %2240 = vmatmul.bf16.gmra.mxu0 %v1702
      %v2241 = vpop.f32.mrf.mxu0
      %v2242 = vadd.f32 %v2064, %v2241
      %v2243 = vpop.f32.mrf.mxu0
      %v2244 = vadd.f32 %v2066, %v2243
      %2245 = vmatmul.bf16.gmra.mxu0 %v1703
      %v2246 = vpop.f32.mrf.mxu0
      %v2247 = vadd.f32 %v2069, %v2246
      %v2248 = vpop.f32.mrf.mxu0
      %v2249 = vadd.f32 %v2071, %v2248
      %2250 = vmatmul.bf16.gmra.mxu0 %v1704
      %v2251 = vpop.f32.mrf.mxu0
      %v2252 = vadd.f32 %v2074, %v2251
      %v2253 = vpop.f32.mrf.mxu0
      %v2254 = vadd.f32 %v2076, %v2253
      %2255 = vmatmul.bf16.gmra.mxu0 %v1705
      %v2256 = vpop.f32.mrf.mxu0
      %v2257 = vadd.f32 %v2079, %v2256
      %v2258 = vpop.f32.mrf.mxu0
      %v2259 = vadd.f32 %v2081, %v2258
      %2260 = vmatmul.bf16.gmra.mxu0 %v1706
      %v2261 = vpop.f32.mrf.mxu0
      %v2262 = vadd.f32 %v2084, %v2261
      %v2263 = vpop.f32.mrf.mxu0
      %v2264 = vadd.f32 %v2086, %v2263
      %2265 = vdwg.mxu0
      %2266 = vmatpush.bf16.msra.mxu0 %v2200
      %2267 = vmatpush.bf16.msra.mxu0 %v2198
      %2268 = vmatpush.bf16.msra.mxu0 %v2196
      %2269 = vmatpush.bf16.msra.mxu0 %v2194
      %2270 = vmatpush.bf16.msra.mxu0 %v2192
      %2271 = vmatpush.bf16.msra.mxu0 %v2190
      %2272 = vmatpush.bf16.msra.mxu0 %v2188
      %2273 = vmatpush.bf16.msra.mxu0 %v2186
      %2274 = vmatmul.bf16.gmra.mxu0 %v1699
      %v2275 = vpop.f32.mrf.mxu0
      %v2276 = vadd.f32 %v2098, %v2275
      %v2277 = vpop.f32.mrf.mxu0
      %v2278 = vadd.f32 %v2100, %v2277
      %2279 = vmatmul.bf16.gmra.mxu0 %v1700
      %v2280 = vpop.f32.mrf.mxu0
      %v2281 = vadd.f32 %v2103, %v2280
      %v2282 = vpop.f32.mrf.mxu0
      %v2283 = vadd.f32 %v2105, %v2282
      %2284 = vmatmul.bf16.gmra.mxu0 %v1701
      %v2285 = vpop.f32.mrf.mxu0
      %v2286 = vadd.f32 %v2108, %v2285
      %v2287 = vpop.f32.mrf.mxu0
      %v2288 = vadd.f32 %v2110, %v2287
      %2289 = vmatmul.bf16.gmra.mxu0 %v1702
      %v2290 = vpop.f32.mrf.mxu0
      %v2291 = vadd.f32 %v2113, %v2290
      %v2292 = vpop.f32.mrf.mxu0
      %v2293 = vadd.f32 %v2115, %v2292
      %2294 = vmatmul.bf16.gmra.mxu0 %v1703
      %v2295 = vpop.f32.mrf.mxu0
      %v2296 = vadd.f32 %v2118, %v2295
      %v2297 = vpop.f32.mrf.mxu0
      %v2298 = vadd.f32 %v2120, %v2297
      %2299 = vmatmul.bf16.gmra.mxu0 %v1704
      %v2300 = vpop.f32.mrf.mxu0
      %v2301 = vadd.f32 %v2123, %v2300
      %v2302 = vpop.f32.mrf.mxu0
      %v2303 = vadd.f32 %v2125, %v2302
      %2304 = vmatmul.bf16.gmra.mxu0 %v1705
      %v2305 = vpop.f32.mrf.mxu0
      %v2306 = vadd.f32 %v2128, %v2305
      %v2307 = vpop.f32.mrf.mxu0
      %v2308 = vadd.f32 %v2130, %v2307
      %2309 = vmatmul.bf16.gmra.mxu0 %v1706
      %v2310 = vpop.f32.mrf.mxu0
      %v2311 = vadd.f32 %v2133, %v2310
      %v2312 = vpop.f32.mrf.mxu0
      %v2313 = vadd.f32 %v2135, %v2312
      %2314 = vdwg.mxu0
      %s2315 = scalar_lea.vmem %s3, 256
      %v2316 = vld [vmem:[%s2315] sm:$0xff]
      %v2317 = vld [vmem:[%s2315 + $0x8] sm:$0xff]
      %v2318 = vld [vmem:[%s2315 + $0x10] sm:$0xff]
      %v2319 = vld [vmem:[%s2315 + $0x18] sm:$0xff]
      %v2320 = vld [vmem:[%s2315 + $0x20] sm:$0xff]
      %v2321 = vld [vmem:[%s2315 + $0x28] sm:$0xff]
      %v2322 = vld [vmem:[%s2315 + $0x30] sm:$0xff]
      %v2323 = vld [vmem:[%s2315 + $0x38] sm:$0xff]
      %v2324 = vld [vmem:[%s2315 + $0x40] sm:$0xff]
      %v2325 = vld [vmem:[%s2315 + $0x48] sm:$0xff]
      %v2326 = vld [vmem:[%s2315 + $0x50] sm:$0xff]
      %v2327 = vld [vmem:[%s2315 + $0x58] sm:$0xff]
      %v2328 = vld [vmem:[%s2315 + $0x60] sm:$0xff]
      %v2329 = vld [vmem:[%s2315 + $0x68] sm:$0xff]
      %v2330 = vld [vmem:[%s2315 + $0x70] sm:$0xff]
      %v2331 = vld [vmem:[%s2315 + $0x78] sm:$0xff]
      %v2348 = vunpack.c.l.b16 %v2316
      %v2349 = vunpack.c.h.b16 %v2316
      %v2350 = vunpack.c.l.b16 %v2317
      %v2351 = vunpack.c.h.b16 %v2317
      %v2352 = vunpack.c.l.b16 %v2318
      %v2353 = vunpack.c.h.b16 %v2318
      %v2354 = vunpack.c.l.b16 %v2319
      %v2355 = vunpack.c.h.b16 %v2319
      %v2356 = vunpack.c.l.b16 %v2320
      %v2357 = vunpack.c.h.b16 %v2320
      %v2358 = vunpack.c.l.b16 %v2321
      %v2359 = vunpack.c.h.b16 %v2321
      %v2360 = vunpack.c.l.b16 %v2322
      %v2361 = vunpack.c.h.b16 %v2322
      %v2362 = vunpack.c.l.b16 %v2323
      %v2363 = vunpack.c.h.b16 %v2323
      %v2364 = vunpack.c.l.b16 %v2324
      %v2365 = vunpack.c.h.b16 %v2324
      %v2366 = vunpack.c.l.b16 %v2325
      %v2367 = vunpack.c.h.b16 %v2325
      %v2368 = vunpack.c.l.b16 %v2326
      %v2369 = vunpack.c.h.b16 %v2326
      %v2370 = vunpack.c.l.b16 %v2327
      %v2371 = vunpack.c.h.b16 %v2327
      %v2372 = vunpack.c.l.b16 %v2328
      %v2373 = vunpack.c.h.b16 %v2328
      %v2374 = vunpack.c.l.b16 %v2329
      %v2375 = vunpack.c.h.b16 %v2329
      %v2376 = vunpack.c.l.b16 %v2330
      %v2377 = vunpack.c.h.b16 %v2330
      %v2378 = vunpack.c.l.b16 %v2331
      %v2379 = vunpack.c.h.b16 %v2331
      %v2380 = vpack.c.b16 %v2350, %v2348
      %v2381 = vpack.c.b16 %v2351, %v2349
      %v2382 = vpack.c.b16 %v2354, %v2352
      %v2383 = vpack.c.b16 %v2355, %v2353
      %v2384 = vpack.c.b16 %v2358, %v2356
      %v2385 = vpack.c.b16 %v2359, %v2357
      %v2386 = vpack.c.b16 %v2362, %v2360
      %v2387 = vpack.c.b16 %v2363, %v2361
      %v2388 = vpack.c.b16 %v2366, %v2364
      %v2389 = vpack.c.b16 %v2367, %v2365
      %v2390 = vpack.c.b16 %v2370, %v2368
      %v2391 = vpack.c.b16 %v2371, %v2369
      %v2392 = vpack.c.b16 %v2374, %v2372
      %v2393 = vpack.c.b16 %v2375, %v2373
      %v2394 = vpack.c.b16 %v2378, %v2376
      %v2395 = vpack.c.b16 %v2379, %v2377
      %v2405 = vsel %vm1576, %v2381, 0
      %v2408 = vsel %vm1576, %v2383, 0
      %v2411 = vsel %vm1576, %v2385, 0
      %v2414 = vsel %vm1576, %v2387, 0
      %v2417 = vsel %vm1576, %v2389, 0
      %v2420 = vsel %vm1576, %v2391, 0
      %v2423 = vsel %vm1576, %v2393, 0
      %v2426 = vsel %vm1576, %v2395, 0
      %2428 = vmatpush.bf16.msra.mxu0 %v1484
      %2429 = vmatpush.bf16.msra.mxu0 %v1483
      %2430 = vmatpush.bf16.msra.mxu0 %v1482
      %2431 = vmatpush.bf16.msra.mxu0 %v1481
      %2432 = vmatpush.bf16.msra.mxu0 %v1480
      %2433 = vmatpush.bf16.msra.mxu0 %v1479
      %2434 = vmatpush.bf16.msra.mxu0 %v1478
      %2435 = vmatpush.bf16.msra.mxu0 %v1477
      %2436 = vmatmul.bf16.gmra.mxu0 %v2380
      %v2437 = vpop.f32.mrf.mxu0
      %v2438 = vadd.f32 0.0, %v2437
      %v2439 = vpop.f32.mrf.mxu0
      %v2440 = vadd.f32 0.0, %v2439
      %2441 = vmatmul.bf16.gmra.mxu0 %v2382
      %v2442 = vpop.f32.mrf.mxu0
      %v2443 = vadd.f32 0.0, %v2442
      %v2444 = vpop.f32.mrf.mxu0
      %v2445 = vadd.f32 0.0, %v2444
      %2446 = vmatmul.bf16.gmra.mxu0 %v2384
      %v2447 = vpop.f32.mrf.mxu0
      %v2448 = vadd.f32 0.0, %v2447
      %v2449 = vpop.f32.mrf.mxu0
      %v2450 = vadd.f32 0.0, %v2449
      %2451 = vmatmul.bf16.gmra.mxu0 %v2386
      %v2452 = vpop.f32.mrf.mxu0
      %v2453 = vadd.f32 0.0, %v2452
      %v2454 = vpop.f32.mrf.mxu0
      %v2455 = vadd.f32 0.0, %v2454
      %2456 = vmatmul.bf16.gmra.mxu0 %v2388
      %v2457 = vpop.f32.mrf.mxu0
      %v2458 = vadd.f32 0.0, %v2457
      %v2459 = vpop.f32.mrf.mxu0
      %v2460 = vadd.f32 0.0, %v2459
      %2461 = vmatmul.bf16.gmra.mxu0 %v2390
      %v2462 = vpop.f32.mrf.mxu0
      %v2463 = vadd.f32 0.0, %v2462
      %v2464 = vpop.f32.mrf.mxu0
      %v2465 = vadd.f32 0.0, %v2464
      %2466 = vmatmul.bf16.gmra.mxu0 %v2392
      %v2467 = vpop.f32.mrf.mxu0
      %v2468 = vadd.f32 0.0, %v2467
      %v2469 = vpop.f32.mrf.mxu0
      %v2470 = vadd.f32 0.0, %v2469
      %2471 = vmatmul.bf16.gmra.mxu0 %v2394
      %v2472 = vpop.f32.mrf.mxu0
      %v2473 = vadd.f32 0.0, %v2472
      %v2474 = vpop.f32.mrf.mxu0
      %v2475 = vadd.f32 0.0, %v2474
      %2476 = vdwg.mxu0
      %2477 = vmatpush.bf16.msra.mxu0 0
      %2478 = vmatpush.bf16.msra.mxu0 0
      %2479 = vmatpush.bf16.msra.mxu0 0
      %2480 = vmatpush.bf16.msra.mxu0 0
      %2481 = vmatpush.bf16.msra.mxu0 0
      %2482 = vmatpush.bf16.msra.mxu0 %v1487
      %2483 = vmatpush.bf16.msra.mxu0 %v1486
      %2484 = vmatpush.bf16.msra.mxu0 %v1485
      %2485 = vmatmul.bf16.gmra.mxu0 %v2405
      %v2486 = vpop.f32.mrf.mxu0
      %v2487 = vadd.f32 %v2438, %v2486
      %v2488 = vpop.f32.mrf.mxu0
      %v2489 = vadd.f32 %v2440, %v2488
      %2490 = vmatmul.bf16.gmra.mxu0 %v2408
      %v2491 = vpop.f32.mrf.mxu0
      %v2492 = vadd.f32 %v2443, %v2491
      %v2493 = vpop.f32.mrf.mxu0
      %v2494 = vadd.f32 %v2445, %v2493
      %2495 = vmatmul.bf16.gmra.mxu0 %v2411
      %v2496 = vpop.f32.mrf.mxu0
      %v2497 = vadd.f32 %v2448, %v2496
      %v2498 = vpop.f32.mrf.mxu0
      %v2499 = vadd.f32 %v2450, %v2498
      %2500 = vmatmul.bf16.gmra.mxu0 %v2414
      %v2501 = vpop.f32.mrf.mxu0
      %v2502 = vadd.f32 %v2453, %v2501
      %v2503 = vpop.f32.mrf.mxu0
      %v2504 = vadd.f32 %v2455, %v2503
      %2505 = vmatmul.bf16.gmra.mxu0 %v2417
      %v2506 = vpop.f32.mrf.mxu0
      %v2507 = vadd.f32 %v2458, %v2506
      %v2508 = vpop.f32.mrf.mxu0
      %v2509 = vadd.f32 %v2460, %v2508
      %2510 = vmatmul.bf16.gmra.mxu0 %v2420
      %v2511 = vpop.f32.mrf.mxu0
      %v2512 = vadd.f32 %v2463, %v2511
      %v2513 = vpop.f32.mrf.mxu0
      %v2514 = vadd.f32 %v2465, %v2513
      %2515 = vmatmul.bf16.gmra.mxu0 %v2423
      %v2516 = vpop.f32.mrf.mxu0
      %v2517 = vadd.f32 %v2468, %v2516
      %v2518 = vpop.f32.mrf.mxu0
      %v2519 = vadd.f32 %v2470, %v2518
      %2520 = vmatmul.bf16.gmra.mxu0 %v2426
      %v2521 = vpop.f32.mrf.mxu0
      %v2522 = vadd.f32 %v2473, %v2521
      %v2523 = vpop.f32.mrf.mxu0
      %v2524 = vadd.f32 %v2475, %v2523
      %2525 = vdwg.mxu0
      %v2526 = vpack.c.bf16 %v2489, %v2487
      %v2527 = vpack.c.bf16 %v2494, %v2492
      %v2528 = vpack.c.bf16 %v2499, %v2497
      %v2529 = vpack.c.bf16 %v2504, %v2502
      %v2530 = vpack.c.bf16 %v2509, %v2507
      %v2531 = vpack.c.bf16 %v2514, %v2512
      %v2532 = vpack.c.bf16 %v2519, %v2517
      %v2533 = vpack.c.bf16 %v2524, %v2522
      %s2534 = scalar_lea.vmem %s4, 256
      %v2535 = vld [vmem:[%s2534] sm:$0xff]
      %v2536 = vld [vmem:[%s2534 + $0x8] sm:$0xff]
      %v2537 = vld [vmem:[%s2534 + $0x10] sm:$0xff]
      %v2538 = vld [vmem:[%s2534 + $0x18] sm:$0xff]
      %v2539 = vld [vmem:[%s2534 + $0x20] sm:$0xff]
      %v2540 = vld [vmem:[%s2534 + $0x28] sm:$0xff]
      %v2541 = vld [vmem:[%s2534 + $0x30] sm:$0xff]
      %v2542 = vld [vmem:[%s2534 + $0x38] sm:$0xff]
      %v2543 = vld [vmem:[%s2534 + $0x40] sm:$0xff]
      %v2544 = vld [vmem:[%s2534 + $0x48] sm:$0xff]
      %v2545 = vld [vmem:[%s2534 + $0x50] sm:$0xff]
      %v2546 = vld [vmem:[%s2534 + $0x58] sm:$0xff]
      %v2547 = vld [vmem:[%s2534 + $0x60] sm:$0xff]
      %v2548 = vld [vmem:[%s2534 + $0x68] sm:$0xff]
      %v2549 = vld [vmem:[%s2534 + $0x70] sm:$0xff]
      %v2550 = vld [vmem:[%s2534 + $0x78] sm:$0xff]
      %v2567 = vunpack.c.l.b16 %v2535
      %v2568 = vunpack.c.h.b16 %v2535
      %v2569 = vunpack.c.l.b16 %v2536
      %v2570 = vunpack.c.h.b16 %v2536
      %v2571 = vunpack.c.l.b16 %v2537
      %v2572 = vunpack.c.h.b16 %v2537
      %v2573 = vunpack.c.l.b16 %v2538
      %v2574 = vunpack.c.h.b16 %v2538
      %v2575 = vunpack.c.l.b16 %v2539
      %v2576 = vunpack.c.h.b16 %v2539
      %v2577 = vunpack.c.l.b16 %v2540
      %v2578 = vunpack.c.h.b16 %v2540
      %v2579 = vunpack.c.l.b16 %v2541
      %v2580 = vunpack.c.h.b16 %v2541
      %v2581 = vunpack.c.l.b16 %v2542
      %v2582 = vunpack.c.h.b16 %v2542
      %v2583 = vunpack.c.l.b16 %v2543
      %v2584 = vunpack.c.h.b16 %v2543
      %v2585 = vunpack.c.l.b16 %v2544
      %v2586 = vunpack.c.h.b16 %v2544
      %v2587 = vunpack.c.l.b16 %v2545
      %v2588 = vunpack.c.h.b16 %v2545
      %v2589 = vunpack.c.l.b16 %v2546
      %v2590 = vunpack.c.h.b16 %v2546
      %v2591 = vunpack.c.l.b16 %v2547
      %v2592 = vunpack.c.h.b16 %v2547
      %v2593 = vunpack.c.l.b16 %v2548
      %v2594 = vunpack.c.h.b16 %v2548
      %v2595 = vunpack.c.l.b16 %v2549
      %v2596 = vunpack.c.h.b16 %v2549
      %v2597 = vunpack.c.l.b16 %v2550
      %v2598 = vunpack.c.h.b16 %v2550
      %v2599 = vpack.c.b16 %v2569, %v2567
      %v2600 = vpack.c.b16 %v2570, %v2568
      %v2601 = vpack.c.b16 %v2573, %v2571
      %v2602 = vpack.c.b16 %v2574, %v2572
      %v2603 = vpack.c.b16 %v2577, %v2575
      %v2604 = vpack.c.b16 %v2578, %v2576
      %v2605 = vpack.c.b16 %v2581, %v2579
      %v2606 = vpack.c.b16 %v2582, %v2580
      %v2607 = vpack.c.b16 %v2585, %v2583
      %v2608 = vpack.c.b16 %v2586, %v2584
      %v2609 = vpack.c.b16 %v2589, %v2587
      %v2610 = vpack.c.b16 %v2590, %v2588
      %v2611 = vpack.c.b16 %v2593, %v2591
      %v2612 = vpack.c.b16 %v2594, %v2592
      %v2613 = vpack.c.b16 %v2597, %v2595
      %v2614 = vpack.c.b16 %v2598, %v2596
      %2631 = vmatpush.bf16.msra.mxu0 %v2613
      %2632 = vmatpush.bf16.msra.mxu0 %v2611
      %2633 = vmatpush.bf16.msra.mxu0 %v2609
      %2634 = vmatpush.bf16.msra.mxu0 %v2607
      %2635 = vmatpush.bf16.msra.mxu0 %v2605
      %2636 = vmatpush.bf16.msra.mxu0 %v2603
      %2637 = vmatpush.bf16.msra.mxu0 %v2601
      %2638 = vmatpush.bf16.msra.mxu0 %v2599
      %2639 = vmatmul.bf16.gmra.mxu0 %v2526
      %v2640 = vpop.f32.mrf.mxu0
      %v2641 = vadd.f32 0.0, %v2640
      %v2642 = vpop.f32.mrf.mxu0
      %v2643 = vadd.f32 0.0, %v2642
      %2644 = vmatmul.bf16.gmra.mxu0 %v2527
      %v2645 = vpop.f32.mrf.mxu0
      %v2646 = vadd.f32 0.0, %v2645
      %v2647 = vpop.f32.mrf.mxu0
      %v2648 = vadd.f32 0.0, %v2647
      %2649 = vmatmul.bf16.gmra.mxu0 %v2528
      %v2650 = vpop.f32.mrf.mxu0
      %v2651 = vadd.f32 0.0, %v2650
      %v2652 = vpop.f32.mrf.mxu0
      %v2653 = vadd.f32 0.0, %v2652
      %2654 = vmatmul.bf16.gmra.mxu0 %v2529
      %v2655 = vpop.f32.mrf.mxu0
      %v2656 = vadd.f32 0.0, %v2655
      %v2657 = vpop.f32.mrf.mxu0
      %v2658 = vadd.f32 0.0, %v2657
      %2659 = vmatmul.bf16.gmra.mxu0 %v2530
      %v2660 = vpop.f32.mrf.mxu0
      %v2661 = vadd.f32 0.0, %v2660
      %v2662 = vpop.f32.mrf.mxu0
      %v2663 = vadd.f32 0.0, %v2662
      %2664 = vmatmul.bf16.gmra.mxu0 %v2531
      %v2665 = vpop.f32.mrf.mxu0
      %v2666 = vadd.f32 0.0, %v2665
      %v2667 = vpop.f32.mrf.mxu0
      %v2668 = vadd.f32 0.0, %v2667
      %2669 = vmatmul.bf16.gmra.mxu0 %v2532
      %v2670 = vpop.f32.mrf.mxu0
      %v2671 = vadd.f32 0.0, %v2670
      %v2672 = vpop.f32.mrf.mxu0
      %v2673 = vadd.f32 0.0, %v2672
      %2674 = vmatmul.bf16.gmra.mxu0 %v2533
      %v2675 = vpop.f32.mrf.mxu0
      %v2676 = vadd.f32 0.0, %v2675
      %v2677 = vpop.f32.mrf.mxu0
      %v2678 = vadd.f32 0.0, %v2677
      %2679 = vdwg.mxu0
      %2680 = vmatpush.bf16.msra.mxu0 %v2614
      %2681 = vmatpush.bf16.msra.mxu0 %v2612
      %2682 = vmatpush.bf16.msra.mxu0 %v2610
      %2683 = vmatpush.bf16.msra.mxu0 %v2608
      %2684 = vmatpush.bf16.msra.mxu0 %v2606
      %2685 = vmatpush.bf16.msra.mxu0 %v2604
      %2686 = vmatpush.bf16.msra.mxu0 %v2602
      %2687 = vmatpush.bf16.msra.mxu0 %v2600
      %2688 = vmatmul.bf16.gmra.mxu0 %v2526
      %v2689 = vpop.f32.mrf.mxu0
      %v2690 = vadd.f32 0.0, %v2689
      %v2691 = vpop.f32.mrf.mxu0
      %v2692 = vadd.f32 0.0, %v2691
      %2693 = vmatmul.bf16.gmra.mxu0 %v2527
      %v2694 = vpop.f32.mrf.mxu0
      %v2695 = vadd.f32 0.0, %v2694
      %v2696 = vpop.f32.mrf.mxu0
      %v2697 = vadd.f32 0.0, %v2696
      %2698 = vmatmul.bf16.gmra.mxu0 %v2528
      %v2699 = vpop.f32.mrf.mxu0
      %v2700 = vadd.f32 0.0, %v2699
      %v2701 = vpop.f32.mrf.mxu0
      %v2702 = vadd.f32 0.0, %v2701
      %2703 = vmatmul.bf16.gmra.mxu0 %v2529
      %v2704 = vpop.f32.mrf.mxu0
      %v2705 = vadd.f32 0.0, %v2704
      %v2706 = vpop.f32.mrf.mxu0
      %v2707 = vadd.f32 0.0, %v2706
      %2708 = vmatmul.bf16.gmra.mxu0 %v2530
      %v2709 = vpop.f32.mrf.mxu0
      %v2710 = vadd.f32 0.0, %v2709
      %v2711 = vpop.f32.mrf.mxu0
      %v2712 = vadd.f32 0.0, %v2711
      %2713 = vmatmul.bf16.gmra.mxu0 %v2531
      %v2714 = vpop.f32.mrf.mxu0
      %v2715 = vadd.f32 0.0, %v2714
      %v2716 = vpop.f32.mrf.mxu0
      %v2717 = vadd.f32 0.0, %v2716
      %2718 = vmatmul.bf16.gmra.mxu0 %v2532
      %v2719 = vpop.f32.mrf.mxu0
      %v2720 = vadd.f32 0.0, %v2719
      %v2721 = vpop.f32.mrf.mxu0
      %v2722 = vadd.f32 0.0, %v2721
      %2723 = vmatmul.bf16.gmra.mxu0 %v2533
      %v2724 = vpop.f32.mrf.mxu0
      %v2725 = vadd.f32 0.0, %v2724
      %v2726 = vpop.f32.mrf.mxu0
      %v2727 = vadd.f32 0.0, %v2726
      %2728 = vdwg.mxu0
      %v2729 = vadd.f32 %v2227, %v2641
      %v2730 = vadd.f32 %v2276, %v2690
      %v2731 = vadd.f32 %v2229, %v2643
      %v2732 = vadd.f32 %v2278, %v2692
      %v2733 = vadd.f32 %v2232, %v2646
      %v2734 = vadd.f32 %v2281, %v2695
      %v2735 = vadd.f32 %v2234, %v2648
      %v2736 = vadd.f32 %v2283, %v2697
      %v2737 = vadd.f32 %v2237, %v2651
      %v2738 = vadd.f32 %v2286, %v2700
      %v2739 = vadd.f32 %v2239, %v2653
      %v2740 = vadd.f32 %v2288, %v2702
      %v2741 = vadd.f32 %v2242, %v2656
      %v2742 = vadd.f32 %v2291, %v2705
      %v2743 = vadd.f32 %v2244, %v2658
      %v2744 = vadd.f32 %v2293, %v2707
      %v2745 = vadd.f32 %v2247, %v2661
      %v2746 = vadd.f32 %v2296, %v2710
      %v2747 = vadd.f32 %v2249, %v2663
      %v2748 = vadd.f32 %v2298, %v2712
      %v2749 = vadd.f32 %v2252, %v2666
      %v2750 = vadd.f32 %v2301, %v2715
      %v2751 = vadd.f32 %v2254, %v2668
      %v2752 = vadd.f32 %v2303, %v2717
      %v2753 = vadd.f32 %v2257, %v2671
      %v2754 = vadd.f32 %v2306, %v2720
      %v2755 = vadd.f32 %v2259, %v2673
      %v2756 = vadd.f32 %v2308, %v2722
      %v2757 = vadd.f32 %v2262, %v2676
      %v2758 = vadd.f32 %v2311, %v2725
      %v2759 = vadd.f32 %v2264, %v2678
      %v2760 = vadd.f32 %v2313, %v2727
      %s2761 = scalar_lea.vmem %s3, 384
      %v2762 = vld [vmem:[%s2761] sm:$0xff]
      %v2763 = vld [vmem:[%s2761 + $0x8] sm:$0xff]
      %v2764 = vld [vmem:[%s2761 + $0x10] sm:$0xff]
      %v2765 = vld [vmem:[%s2761 + $0x18] sm:$0xff]
      %v2766 = vld [vmem:[%s2761 + $0x20] sm:$0xff]
      %v2767 = vld [vmem:[%s2761 + $0x28] sm:$0xff]
      %v2768 = vld [vmem:[%s2761 + $0x30] sm:$0xff]
      %v2769 = vld [vmem:[%s2761 + $0x38] sm:$0xff]
      %v2770 = vld [vmem:[%s2761 + $0x40] sm:$0xff]
      %v2771 = vld [vmem:[%s2761 + $0x48] sm:$0xff]
      %v2772 = vld [vmem:[%s2761 + $0x50] sm:$0xff]
      %v2773 = vld [vmem:[%s2761 + $0x58] sm:$0xff]
      %v2774 = vld [vmem:[%s2761 + $0x60] sm:$0xff]
      %v2775 = vld [vmem:[%s2761 + $0x68] sm:$0xff]
      %v2776 = vld [vmem:[%s2761 + $0x70] sm:$0xff]
      %v2777 = vld [vmem:[%s2761 + $0x78] sm:$0xff]
      %v2794 = vunpack.c.l.b16 %v2762
      %v2795 = vunpack.c.h.b16 %v2762
      %v2796 = vunpack.c.l.b16 %v2763
      %v2797 = vunpack.c.h.b16 %v2763
      %v2798 = vunpack.c.l.b16 %v2764
      %v2799 = vunpack.c.h.b16 %v2764
      %v2800 = vunpack.c.l.b16 %v2765
      %v2801 = vunpack.c.h.b16 %v2765
      %v2802 = vunpack.c.l.b16 %v2766
      %v2803 = vunpack.c.h.b16 %v2766
      %v2804 = vunpack.c.l.b16 %v2767
      %v2805 = vunpack.c.h.b16 %v2767
      %v2806 = vunpack.c.l.b16 %v2768
      %v2807 = vunpack.c.h.b16 %v2768
      %v2808 = vunpack.c.l.b16 %v2769
      %v2809 = vunpack.c.h.b16 %v2769
      %v2810 = vunpack.c.l.b16 %v2770
      %v2811 = vunpack.c.h.b16 %v2770
      %v2812 = vunpack.c.l.b16 %v2771
      %v2813 = vunpack.c.h.b16 %v2771
      %v2814 = vunpack.c.l.b16 %v2772
      %v2815 = vunpack.c.h.b16 %v2772
      %v2816 = vunpack.c.l.b16 %v2773
      %v2817 = vunpack.c.h.b16 %v2773
      %v2818 = vunpack.c.l.b16 %v2774
      %v2819 = vunpack.c.h.b16 %v2774
      %v2820 = vunpack.c.l.b16 %v2775
      %v2821 = vunpack.c.h.b16 %v2775
      %v2822 = vunpack.c.l.b16 %v2776
      %v2823 = vunpack.c.h.b16 %v2776
      %v2824 = vunpack.c.l.b16 %v2777
      %v2825 = vunpack.c.h.b16 %v2777
      %v2826 = vpack.c.b16 %v2796, %v2794
      %v2827 = vpack.c.b16 %v2797, %v2795
      %v2828 = vpack.c.b16 %v2800, %v2798
      %v2829 = vpack.c.b16 %v2801, %v2799
      %v2830 = vpack.c.b16 %v2804, %v2802
      %v2831 = vpack.c.b16 %v2805, %v2803
      %v2832 = vpack.c.b16 %v2808, %v2806
      %v2833 = vpack.c.b16 %v2809, %v2807
      %v2834 = vpack.c.b16 %v2812, %v2810
      %v2835 = vpack.c.b16 %v2813, %v2811
      %v2836 = vpack.c.b16 %v2816, %v2814
      %v2837 = vpack.c.b16 %v2817, %v2815
      %v2838 = vpack.c.b16 %v2820, %v2818
      %v2839 = vpack.c.b16 %v2821, %v2819
      %v2840 = vpack.c.b16 %v2824, %v2822
      %v2841 = vpack.c.b16 %v2825, %v2823
      %v2851 = vsel %vm1576, %v2827, 0
      %v2854 = vsel %vm1576, %v2829, 0
      %v2857 = vsel %vm1576, %v2831, 0
      %v2860 = vsel %vm1576, %v2833, 0
      %v2863 = vsel %vm1576, %v2835, 0
      %v2866 = vsel %vm1576, %v2837, 0
      %v2869 = vsel %vm1576, %v2839, 0
      %v2872 = vsel %vm1576, %v2841, 0
      %2874 = vmatpush.bf16.msra.mxu0 %v1484
      %2875 = vmatpush.bf16.msra.mxu0 %v1483
      %2876 = vmatpush.bf16.msra.mxu0 %v1482
      %2877 = vmatpush.bf16.msra.mxu0 %v1481
      %2878 = vmatpush.bf16.msra.mxu0 %v1480
      %2879 = vmatpush.bf16.msra.mxu0 %v1479
      %2880 = vmatpush.bf16.msra.mxu0 %v1478
      %2881 = vmatpush.bf16.msra.mxu0 %v1477
      %2882 = vmatmul.bf16.gmra.mxu0 %v2826
      %v2883 = vpop.f32.mrf.mxu0
      %v2884 = vadd.f32 0.0, %v2883
      %v2885 = vpop.f32.mrf.mxu0
      %v2886 = vadd.f32 0.0, %v2885
      %2887 = vmatmul.bf16.gmra.mxu0 %v2828
      %v2888 = vpop.f32.mrf.mxu0
      %v2889 = vadd.f32 0.0, %v2888
      %v2890 = vpop.f32.mrf.mxu0
      %v2891 = vadd.f32 0.0, %v2890
      %2892 = vmatmul.bf16.gmra.mxu0 %v2830
      %v2893 = vpop.f32.mrf.mxu0
      %v2894 = vadd.f32 0.0, %v2893
      %v2895 = vpop.f32.mrf.mxu0
      %v2896 = vadd.f32 0.0, %v2895
      %2897 = vmatmul.bf16.gmra.mxu0 %v2832
      %v2898 = vpop.f32.mrf.mxu0
      %v2899 = vadd.f32 0.0, %v2898
      %v2900 = vpop.f32.mrf.mxu0
      %v2901 = vadd.f32 0.0, %v2900
      %2902 = vmatmul.bf16.gmra.mxu0 %v2834
      %v2903 = vpop.f32.mrf.mxu0
      %v2904 = vadd.f32 0.0, %v2903
      %v2905 = vpop.f32.mrf.mxu0
      %v2906 = vadd.f32 0.0, %v2905
      %2907 = vmatmul.bf16.gmra.mxu0 %v2836
      %v2908 = vpop.f32.mrf.mxu0
      %v2909 = vadd.f32 0.0, %v2908
      %v2910 = vpop.f32.mrf.mxu0
      %v2911 = vadd.f32 0.0, %v2910
      %2912 = vmatmul.bf16.gmra.mxu0 %v2838
      %v2913 = vpop.f32.mrf.mxu0
      %v2914 = vadd.f32 0.0, %v2913
      %v2915 = vpop.f32.mrf.mxu0
      %v2916 = vadd.f32 0.0, %v2915
      %2917 = vmatmul.bf16.gmra.mxu0 %v2840
      %v2918 = vpop.f32.mrf.mxu0
      %v2919 = vadd.f32 0.0, %v2918
      %v2920 = vpop.f32.mrf.mxu0
      %v2921 = vadd.f32 0.0, %v2920
      %2922 = vdwg.mxu0
      %2923 = vmatpush.bf16.msra.mxu0 0
      %2924 = vmatpush.bf16.msra.mxu0 0
      %2925 = vmatpush.bf16.msra.mxu0 0
      %2926 = vmatpush.bf16.msra.mxu0 0
      %2927 = vmatpush.bf16.msra.mxu0 0
      %2928 = vmatpush.bf16.msra.mxu0 %v1487
      %2929 = vmatpush.bf16.msra.mxu0 %v1486
      %2930 = vmatpush.bf16.msra.mxu0 %v1485
      %2931 = vmatmul.bf16.gmra.mxu0 %v2851
      %v2932 = vpop.f32.mrf.mxu0
      %v2933 = vadd.f32 %v2884, %v2932
      %v2934 = vpop.f32.mrf.mxu0
      %v2935 = vadd.f32 %v2886, %v2934
      %2936 = vmatmul.bf16.gmra.mxu0 %v2854
      %v2937 = vpop.f32.mrf.mxu0
      %v2938 = vadd.f32 %v2889, %v2937
      %v2939 = vpop.f32.mrf.mxu0
      %v2940 = vadd.f32 %v2891, %v2939
      %2941 = vmatmul.bf16.gmra.mxu0 %v2857
      %v2942 = vpop.f32.mrf.mxu0
      %v2943 = vadd.f32 %v2894, %v2942
      %v2944 = vpop.f32.mrf.mxu0
      %v2945 = vadd.f32 %v2896, %v2944
      %2946 = vmatmul.bf16.gmra.mxu0 %v2860
      %v2947 = vpop.f32.mrf.mxu0
      %v2948 = vadd.f32 %v2899, %v2947
      %v2949 = vpop.f32.mrf.mxu0
      %v2950 = vadd.f32 %v2901, %v2949
      %2951 = vmatmul.bf16.gmra.mxu0 %v2863
      %v2952 = vpop.f32.mrf.mxu0
      %v2953 = vadd.f32 %v2904, %v2952
      %v2954 = vpop.f32.mrf.mxu0
      %v2955 = vadd.f32 %v2906, %v2954
      %2956 = vmatmul.bf16.gmra.mxu0 %v2866
      %v2957 = vpop.f32.mrf.mxu0
      %v2958 = vadd.f32 %v2909, %v2957
      %v2959 = vpop.f32.mrf.mxu0
      %v2960 = vadd.f32 %v2911, %v2959
      %2961 = vmatmul.bf16.gmra.mxu0 %v2869
      %v2962 = vpop.f32.mrf.mxu0
      %v2963 = vadd.f32 %v2914, %v2962
      %v2964 = vpop.f32.mrf.mxu0
      %v2965 = vadd.f32 %v2916, %v2964
      %2966 = vmatmul.bf16.gmra.mxu0 %v2872
      %v2967 = vpop.f32.mrf.mxu0
      %v2968 = vadd.f32 %v2919, %v2967
      %v2969 = vpop.f32.mrf.mxu0
      %v2970 = vadd.f32 %v2921, %v2969
      %2971 = vdwg.mxu0
      %v2972 = vpack.c.bf16 %v2935, %v2933
      %v2973 = vpack.c.bf16 %v2940, %v2938
      %v2974 = vpack.c.bf16 %v2945, %v2943
      %v2975 = vpack.c.bf16 %v2950, %v2948
      %v2976 = vpack.c.bf16 %v2955, %v2953
      %v2977 = vpack.c.bf16 %v2960, %v2958
      %v2978 = vpack.c.bf16 %v2965, %v2963
      %v2979 = vpack.c.bf16 %v2970, %v2968
      %s2980 = scalar_lea.vmem %s4, 384
      %v2981 = vld [vmem:[%s2980] sm:$0xff]
      %v2982 = vld [vmem:[%s2980 + $0x8] sm:$0xff]
      %v2983 = vld [vmem:[%s2980 + $0x10] sm:$0xff]
      %v2984 = vld [vmem:[%s2980 + $0x18] sm:$0xff]
      %v2985 = vld [vmem:[%s2980 + $0x20] sm:$0xff]
      %v2986 = vld [vmem:[%s2980 + $0x28] sm:$0xff]
      %v2987 = vld [vmem:[%s2980 + $0x30] sm:$0xff]
      %v2988 = vld [vmem:[%s2980 + $0x38] sm:$0xff]
      %v2989 = vld [vmem:[%s2980 + $0x40] sm:$0xff]
      %v2990 = vld [vmem:[%s2980 + $0x48] sm:$0xff]
      %v2991 = vld [vmem:[%s2980 + $0x50] sm:$0xff]
      %v2992 = vld [vmem:[%s2980 + $0x58] sm:$0xff]
      %v2993 = vld [vmem:[%s2980 + $0x60] sm:$0xff]
      %v2994 = vld [vmem:[%s2980 + $0x68] sm:$0xff]
      %v2995 = vld [vmem:[%s2980 + $0x70] sm:$0xff]
      %v2996 = vld [vmem:[%s2980 + $0x78] sm:$0xff]
      %v3013 = vunpack.c.l.b16 %v2981
      %v3014 = vunpack.c.h.b16 %v2981
      %v3015 = vunpack.c.l.b16 %v2982
      %v3016 = vunpack.c.h.b16 %v2982
      %v3017 = vunpack.c.l.b16 %v2983
      %v3018 = vunpack.c.h.b16 %v2983
      %v3019 = vunpack.c.l.b16 %v2984
      %v3020 = vunpack.c.h.b16 %v2984
      %v3021 = vunpack.c.l.b16 %v2985
      %v3022 = vunpack.c.h.b16 %v2985
      %v3023 = vunpack.c.l.b16 %v2986
      %v3024 = vunpack.c.h.b16 %v2986
      %v3025 = vunpack.c.l.b16 %v2987
      %v3026 = vunpack.c.h.b16 %v2987
      %v3027 = vunpack.c.l.b16 %v2988
      %v3028 = vunpack.c.h.b16 %v2988
      %v3029 = vunpack.c.l.b16 %v2989
      %v3030 = vunpack.c.h.b16 %v2989
      %v3031 = vunpack.c.l.b16 %v2990
      %v3032 = vunpack.c.h.b16 %v2990
      %v3033 = vunpack.c.l.b16 %v2991
      %v3034 = vunpack.c.h.b16 %v2991
      %v3035 = vunpack.c.l.b16 %v2992
      %v3036 = vunpack.c.h.b16 %v2992
      %v3037 = vunpack.c.l.b16 %v2993
      %v3038 = vunpack.c.h.b16 %v2993
      %v3039 = vunpack.c.l.b16 %v2994
      %v3040 = vunpack.c.h.b16 %v2994
      %v3041 = vunpack.c.l.b16 %v2995
      %v3042 = vunpack.c.h.b16 %v2995
      %v3043 = vunpack.c.l.b16 %v2996
      %v3044 = vunpack.c.h.b16 %v2996
      %v3045 = vpack.c.b16 %v3015, %v3013
      %v3046 = vpack.c.b16 %v3016, %v3014
      %v3047 = vpack.c.b16 %v3019, %v3017
      %v3048 = vpack.c.b16 %v3020, %v3018
      %v3049 = vpack.c.b16 %v3023, %v3021
      %v3050 = vpack.c.b16 %v3024, %v3022
      %v3051 = vpack.c.b16 %v3027, %v3025
      %v3052 = vpack.c.b16 %v3028, %v3026
      %v3053 = vpack.c.b16 %v3031, %v3029
      %v3054 = vpack.c.b16 %v3032, %v3030
      %v3055 = vpack.c.b16 %v3035, %v3033
      %v3056 = vpack.c.b16 %v3036, %v3034
      %v3057 = vpack.c.b16 %v3039, %v3037
      %v3058 = vpack.c.b16 %v3040, %v3038
      %v3059 = vpack.c.b16 %v3043, %v3041
      %v3060 = vpack.c.b16 %v3044, %v3042
      %3077 = vmatpush.bf16.msra.mxu0 %v3059
      %3078 = vmatpush.bf16.msra.mxu0 %v3057
      %3079 = vmatpush.bf16.msra.mxu0 %v3055
      %3080 = vmatpush.bf16.msra.mxu0 %v3053
      %3081 = vmatpush.bf16.msra.mxu0 %v3051
      %3082 = vmatpush.bf16.msra.mxu0 %v3049
      %3083 = vmatpush.bf16.msra.mxu0 %v3047
      %3084 = vmatpush.bf16.msra.mxu0 %v3045
      %3085 = vmatmul.bf16.gmra.mxu0 %v2972
      %v3086 = vpop.f32.mrf.mxu0
      %v3087 = vadd.f32 0.0, %v3086
      %v3088 = vpop.f32.mrf.mxu0
      %v3089 = vadd.f32 0.0, %v3088
      %3090 = vmatmul.bf16.gmra.mxu0 %v2973
      %v3091 = vpop.f32.mrf.mxu0
      %v3092 = vadd.f32 0.0, %v3091
      %v3093 = vpop.f32.mrf.mxu0
      %v3094 = vadd.f32 0.0, %v3093
      %3095 = vmatmul.bf16.gmra.mxu0 %v2974
      %v3096 = vpop.f32.mrf.mxu0
      %v3097 = vadd.f32 0.0, %v3096
      %v3098 = vpop.f32.mrf.mxu0
      %v3099 = vadd.f32 0.0, %v3098
      %3100 = vmatmul.bf16.gmra.mxu0 %v2975
      %v3101 = vpop.f32.mrf.mxu0
      %v3102 = vadd.f32 0.0, %v3101
      %v3103 = vpop.f32.mrf.mxu0
      %v3104 = vadd.f32 0.0, %v3103
      %3105 = vmatmul.bf16.gmra.mxu0 %v2976
      %v3106 = vpop.f32.mrf.mxu0
      %v3107 = vadd.f32 0.0, %v3106
      %v3108 = vpop.f32.mrf.mxu0
      %v3109 = vadd.f32 0.0, %v3108
      %3110 = vmatmul.bf16.gmra.mxu0 %v2977
      %v3111 = vpop.f32.mrf.mxu0
      %v3112 = vadd.f32 0.0, %v3111
      %v3113 = vpop.f32.mrf.mxu0
      %v3114 = vadd.f32 0.0, %v3113
      %3115 = vmatmul.bf16.gmra.mxu0 %v2978
      %v3116 = vpop.f32.mrf.mxu0
      %v3117 = vadd.f32 0.0, %v3116
      %v3118 = vpop.f32.mrf.mxu0
      %v3119 = vadd.f32 0.0, %v3118
      %3120 = vmatmul.bf16.gmra.mxu0 %v2979
      %v3121 = vpop.f32.mrf.mxu0
      %v3122 = vadd.f32 0.0, %v3121
      %v3123 = vpop.f32.mrf.mxu0
      %v3124 = vadd.f32 0.0, %v3123
      %3125 = vdwg.mxu0
      %3126 = vmatpush.bf16.msra.mxu0 %v3060
      %3127 = vmatpush.bf16.msra.mxu0 %v3058
      %3128 = vmatpush.bf16.msra.mxu0 %v3056
      %3129 = vmatpush.bf16.msra.mxu0 %v3054
      %3130 = vmatpush.bf16.msra.mxu0 %v3052
      %3131 = vmatpush.bf16.msra.mxu0 %v3050
      %3132 = vmatpush.bf16.msra.mxu0 %v3048
      %3133 = vmatpush.bf16.msra.mxu0 %v3046
      %3134 = vmatmul.bf16.gmra.mxu0 %v2972
      %v3135 = vpop.f32.mrf.mxu0
      %v3136 = vadd.f32 0.0, %v3135
      %v3137 = vpop.f32.mrf.mxu0
      %v3138 = vadd.f32 0.0, %v3137
      %3139 = vmatmul.bf16.gmra.mxu0 %v2973
      %v3140 = vpop.f32.mrf.mxu0
      %v3141 = vadd.f32 0.0, %v3140
      %v3142 = vpop.f32.mrf.mxu0
      %v3143 = vadd.f32 0.0, %v3142
      %3144 = vmatmul.bf16.gmra.mxu0 %v2974
      %v3145 = vpop.f32.mrf.mxu0
      %v3146 = vadd.f32 0.0, %v3145
      %v3147 = vpop.f32.mrf.mxu0
      %v3148 = vadd.f32 0.0, %v3147
      %3149 = vmatmul.bf16.gmra.mxu0 %v2975
      %v3150 = vpop.f32.mrf.mxu0
      %v3151 = vadd.f32 0.0, %v3150
      %v3152 = vpop.f32.mrf.mxu0
      %v3153 = vadd.f32 0.0, %v3152
      %3154 = vmatmul.bf16.gmra.mxu0 %v2976
      %v3155 = vpop.f32.mrf.mxu0
      %v3156 = vadd.f32 0.0, %v3155
      %v3157 = vpop.f32.mrf.mxu0
      %v3158 = vadd.f32 0.0, %v3157
      %3159 = vmatmul.bf16.gmra.mxu0 %v2977
      %v3160 = vpop.f32.mrf.mxu0
      %v3161 = vadd.f32 0.0, %v3160
      %v3162 = vpop.f32.mrf.mxu0
      %v3163 = vadd.f32 0.0, %v3162
      %3164 = vmatmul.bf16.gmra.mxu0 %v2978
      %v3165 = vpop.f32.mrf.mxu0
      %v3166 = vadd.f32 0.0, %v3165
      %v3167 = vpop.f32.mrf.mxu0
      %v3168 = vadd.f32 0.0, %v3167
      %3169 = vmatmul.bf16.gmra.mxu0 %v2979
      %v3170 = vpop.f32.mrf.mxu0
      %v3171 = vadd.f32 0.0, %v3170
      %v3172 = vpop.f32.mrf.mxu0
      %v3173 = vadd.f32 0.0, %v3172
      %3174 = vdwg.mxu0
      %v3175 = vadd.f32 %v2729, %v3087
      %v3176 = vadd.f32 %v2730, %v3136
      %v3177 = vadd.f32 %v2731, %v3089
      %v3178 = vadd.f32 %v2732, %v3138
      %v3179 = vadd.f32 %v2733, %v3092
      %v3180 = vadd.f32 %v2734, %v3141
      %v3181 = vadd.f32 %v2735, %v3094
      %v3182 = vadd.f32 %v2736, %v3143
      %v3183 = vadd.f32 %v2737, %v3097
      %v3184 = vadd.f32 %v2738, %v3146
      %v3185 = vadd.f32 %v2739, %v3099
      %v3186 = vadd.f32 %v2740, %v3148
      %v3187 = vadd.f32 %v2741, %v3102
      %v3188 = vadd.f32 %v2742, %v3151
      %v3189 = vadd.f32 %v2743, %v3104
      %v3190 = vadd.f32 %v2744, %v3153
      %v3191 = vadd.f32 %v2745, %v3107
      %v3192 = vadd.f32 %v2746, %v3156
      %v3193 = vadd.f32 %v2747, %v3109
      %v3194 = vadd.f32 %v2748, %v3158
      %v3195 = vadd.f32 %v2749, %v3112
      %v3196 = vadd.f32 %v2750, %v3161
      %v3197 = vadd.f32 %v2751, %v3114
      %v3198 = vadd.f32 %v2752, %v3163
      %v3199 = vadd.f32 %v2753, %v3117
      %v3200 = vadd.f32 %v2754, %v3166
      %v3201 = vadd.f32 %v2755, %v3119
      %v3202 = vadd.f32 %v2756, %v3168
      %v3203 = vadd.f32 %v2757, %v3122
      %v3204 = vadd.f32 %v2758, %v3171
      %v3205 = vadd.f32 %v2759, %v3124
      %v3206 = vadd.f32 %v2760, %v3173
      %s3207 = scalar_lea.vmem %s3, 512
      %v3208 = vld [vmem:[%s3207] sm:$0xff]
      %v3209 = vld [vmem:[%s3207 + $0x8] sm:$0xff]
      %v3210 = vld [vmem:[%s3207 + $0x10] sm:$0xff]
      %v3211 = vld [vmem:[%s3207 + $0x18] sm:$0xff]
      %v3212 = vld [vmem:[%s3207 + $0x20] sm:$0xff]
      %v3213 = vld [vmem:[%s3207 + $0x28] sm:$0xff]
      %v3214 = vld [vmem:[%s3207 + $0x30] sm:$0xff]
      %v3215 = vld [vmem:[%s3207 + $0x38] sm:$0xff]
      %v3216 = vld [vmem:[%s3207 + $0x40] sm:$0xff]
      %v3217 = vld [vmem:[%s3207 + $0x48] sm:$0xff]
      %v3218 = vld [vmem:[%s3207 + $0x50] sm:$0xff]
      %v3219 = vld [vmem:[%s3207 + $0x58] sm:$0xff]
      %v3220 = vld [vmem:[%s3207 + $0x60] sm:$0xff]
      %v3221 = vld [vmem:[%s3207 + $0x68] sm:$0xff]
      %v3222 = vld [vmem:[%s3207 + $0x70] sm:$0xff]
      %v3223 = vld [vmem:[%s3207 + $0x78] sm:$0xff]
      %v3240 = vunpack.c.l.b16 %v3208
      %v3241 = vunpack.c.h.b16 %v3208
      %v3242 = vunpack.c.l.b16 %v3209
      %v3243 = vunpack.c.h.b16 %v3209
      %v3244 = vunpack.c.l.b16 %v3210
      %v3245 = vunpack.c.h.b16 %v3210
      %v3246 = vunpack.c.l.b16 %v3211
      %v3247 = vunpack.c.h.b16 %v3211
      %v3248 = vunpack.c.l.b16 %v3212
      %v3249 = vunpack.c.h.b16 %v3212
      %v3250 = vunpack.c.l.b16 %v3213
      %v3251 = vunpack.c.h.b16 %v3213
      %v3252 = vunpack.c.l.b16 %v3214
      %v3253 = vunpack.c.h.b16 %v3214
      %v3254 = vunpack.c.l.b16 %v3215
      %v3255 = vunpack.c.h.b16 %v3215
      %v3256 = vunpack.c.l.b16 %v3216
      %v3257 = vunpack.c.h.b16 %v3216
      %v3258 = vunpack.c.l.b16 %v3217
      %v3259 = vunpack.c.h.b16 %v3217
      %v3260 = vunpack.c.l.b16 %v3218
      %v3261 = vunpack.c.h.b16 %v3218
      %v3262 = vunpack.c.l.b16 %v3219
      %v3263 = vunpack.c.h.b16 %v3219
      %v3264 = vunpack.c.l.b16 %v3220
      %v3265 = vunpack.c.h.b16 %v3220
      %v3266 = vunpack.c.l.b16 %v3221
      %v3267 = vunpack.c.h.b16 %v3221
      %v3268 = vunpack.c.l.b16 %v3222
      %v3269 = vunpack.c.h.b16 %v3222
      %v3270 = vunpack.c.l.b16 %v3223
      %v3271 = vunpack.c.h.b16 %v3223
      %v3272 = vpack.c.b16 %v3242, %v3240
      %v3273 = vpack.c.b16 %v3243, %v3241
      %v3274 = vpack.c.b16 %v3246, %v3244
      %v3275 = vpack.c.b16 %v3247, %v3245
      %v3276 = vpack.c.b16 %v3250, %v3248
      %v3277 = vpack.c.b16 %v3251, %v3249
      %v3278 = vpack.c.b16 %v3254, %v3252
      %v3279 = vpack.c.b16 %v3255, %v3253
      %v3280 = vpack.c.b16 %v3258, %v3256
      %v3281 = vpack.c.b16 %v3259, %v3257
      %v3282 = vpack.c.b16 %v3262, %v3260
      %v3283 = vpack.c.b16 %v3263, %v3261
      %v3284 = vpack.c.b16 %v3266, %v3264
      %v3285 = vpack.c.b16 %v3267, %v3265
      %v3286 = vpack.c.b16 %v3270, %v3268
      %v3287 = vpack.c.b16 %v3271, %v3269
      %v3297 = vsel %vm1576, %v3273, 0
      %v3300 = vsel %vm1576, %v3275, 0
      %v3303 = vsel %vm1576, %v3277, 0
      %v3306 = vsel %vm1576, %v3279, 0
      %v3309 = vsel %vm1576, %v3281, 0
      %v3312 = vsel %vm1576, %v3283, 0
      %v3315 = vsel %vm1576, %v3285, 0
      %v3318 = vsel %vm1576, %v3287, 0
      %3320 = vmatpush.bf16.msra.mxu0 %v1484
      %3321 = vmatpush.bf16.msra.mxu0 %v1483
      %3322 = vmatpush.bf16.msra.mxu0 %v1482
      %3323 = vmatpush.bf16.msra.mxu0 %v1481
      %3324 = vmatpush.bf16.msra.mxu0 %v1480
      %3325 = vmatpush.bf16.msra.mxu0 %v1479
      %3326 = vmatpush.bf16.msra.mxu0 %v1478
      %3327 = vmatpush.bf16.msra.mxu0 %v1477
      %3328 = vmatmul.bf16.gmra.mxu0 %v3272
      %v3329 = vpop.f32.mrf.mxu0
      %v3330 = vadd.f32 0.0, %v3329
      %v3331 = vpop.f32.mrf.mxu0
      %v3332 = vadd.f32 0.0, %v3331
      %3333 = vmatmul.bf16.gmra.mxu0 %v3274
      %v3334 = vpop.f32.mrf.mxu0
      %v3335 = vadd.f32 0.0, %v3334
      %v3336 = vpop.f32.mrf.mxu0
      %v3337 = vadd.f32 0.0, %v3336
      %3338 = vmatmul.bf16.gmra.mxu0 %v3276
      %v3339 = vpop.f32.mrf.mxu0
      %v3340 = vadd.f32 0.0, %v3339
      %v3341 = vpop.f32.mrf.mxu0
      %v3342 = vadd.f32 0.0, %v3341
      %3343 = vmatmul.bf16.gmra.mxu0 %v3278
      %v3344 = vpop.f32.mrf.mxu0
      %v3345 = vadd.f32 0.0, %v3344
      %v3346 = vpop.f32.mrf.mxu0
      %v3347 = vadd.f32 0.0, %v3346
      %3348 = vmatmul.bf16.gmra.mxu0 %v3280
      %v3349 = vpop.f32.mrf.mxu0
      %v3350 = vadd.f32 0.0, %v3349
      %v3351 = vpop.f32.mrf.mxu0
      %v3352 = vadd.f32 0.0, %v3351
      %3353 = vmatmul.bf16.gmra.mxu0 %v3282
      %v3354 = vpop.f32.mrf.mxu0
      %v3355 = vadd.f32 0.0, %v3354
      %v3356 = vpop.f32.mrf.mxu0
      %v3357 = vadd.f32 0.0, %v3356
      %3358 = vmatmul.bf16.gmra.mxu0 %v3284
      %v3359 = vpop.f32.mrf.mxu0
      %v3360 = vadd.f32 0.0, %v3359
      %v3361 = vpop.f32.mrf.mxu0
      %v3362 = vadd.f32 0.0, %v3361
      %3363 = vmatmul.bf16.gmra.mxu0 %v3286
      %v3364 = vpop.f32.mrf.mxu0
      %v3365 = vadd.f32 0.0, %v3364
      %v3366 = vpop.f32.mrf.mxu0
      %v3367 = vadd.f32 0.0, %v3366
      %3368 = vdwg.mxu0
      %3369 = vmatpush.bf16.msra.mxu0 0
      %3370 = vmatpush.bf16.msra.mxu0 0
      %3371 = vmatpush.bf16.msra.mxu0 0
      %3372 = vmatpush.bf16.msra.mxu0 0
      %3373 = vmatpush.bf16.msra.mxu0 0
      %3374 = vmatpush.bf16.msra.mxu0 %v1487
      %3375 = vmatpush.bf16.msra.mxu0 %v1486
      %3376 = vmatpush.bf16.msra.mxu0 %v1485
      %3377 = vmatmul.bf16.gmra.mxu0 %v3297
      %v3378 = vpop.f32.mrf.mxu0
      %v3379 = vadd.f32 %v3330, %v3378
      %v3380 = vpop.f32.mrf.mxu0
      %v3381 = vadd.f32 %v3332, %v3380
      %3382 = vmatmul.bf16.gmra.mxu0 %v3300
      %v3383 = vpop.f32.mrf.mxu0
      %v3384 = vadd.f32 %v3335, %v3383
      %v3385 = vpop.f32.mrf.mxu0
      %v3386 = vadd.f32 %v3337, %v3385
      %3387 = vmatmul.bf16.gmra.mxu0 %v3303
      %v3388 = vpop.f32.mrf.mxu0
      %v3389 = vadd.f32 %v3340, %v3388
      %v3390 = vpop.f32.mrf.mxu0
      %v3391 = vadd.f32 %v3342, %v3390
      %3392 = vmatmul.bf16.gmra.mxu0 %v3306
      %v3393 = vpop.f32.mrf.mxu0
      %v3394 = vadd.f32 %v3345, %v3393
      %v3395 = vpop.f32.mrf.mxu0
      %v3396 = vadd.f32 %v3347, %v3395
      %3397 = vmatmul.bf16.gmra.mxu0 %v3309
      %v3398 = vpop.f32.mrf.mxu0
      %v3399 = vadd.f32 %v3350, %v3398
      %v3400 = vpop.f32.mrf.mxu0
      %v3401 = vadd.f32 %v3352, %v3400
      %3402 = vmatmul.bf16.gmra.mxu0 %v3312
      %v3403 = vpop.f32.mrf.mxu0
      %v3404 = vadd.f32 %v3355, %v3403
      %v3405 = vpop.f32.mrf.mxu0
      %v3406 = vadd.f32 %v3357, %v3405
      %3407 = vmatmul.bf16.gmra.mxu0 %v3315
      %v3408 = vpop.f32.mrf.mxu0
      %v3409 = vadd.f32 %v3360, %v3408
      %v3410 = vpop.f32.mrf.mxu0
      %v3411 = vadd.f32 %v3362, %v3410
      %3412 = vmatmul.bf16.gmra.mxu0 %v3318
      %v3413 = vpop.f32.mrf.mxu0
      %v3414 = vadd.f32 %v3365, %v3413
      %v3415 = vpop.f32.mrf.mxu0
      %v3416 = vadd.f32 %v3367, %v3415
      %3417 = vdwg.mxu0
      %v3418 = vpack.c.bf16 %v3381, %v3379
      %v3419 = vpack.c.bf16 %v3386, %v3384
      %v3420 = vpack.c.bf16 %v3391, %v3389
      %v3421 = vpack.c.bf16 %v3396, %v3394
      %v3422 = vpack.c.bf16 %v3401, %v3399
      %v3423 = vpack.c.bf16 %v3406, %v3404
      %v3424 = vpack.c.bf16 %v3411, %v3409
      %v3425 = vpack.c.bf16 %v3416, %v3414
      %s3426 = scalar_lea.vmem %s4, 512
      %v3427 = vld [vmem:[%s3426] sm:$0xff]
      %v3428 = vld [vmem:[%s3426 + $0x8] sm:$0xff]
      %v3429 = vld [vmem:[%s3426 + $0x10] sm:$0xff]
      %v3430 = vld [vmem:[%s3426 + $0x18] sm:$0xff]
      %v3431 = vld [vmem:[%s3426 + $0x20] sm:$0xff]
      %v3432 = vld [vmem:[%s3426 + $0x28] sm:$0xff]
      %v3433 = vld [vmem:[%s3426 + $0x30] sm:$0xff]
      %v3434 = vld [vmem:[%s3426 + $0x38] sm:$0xff]
      %v3435 = vld [vmem:[%s3426 + $0x40] sm:$0xff]
      %v3436 = vld [vmem:[%s3426 + $0x48] sm:$0xff]
      %v3437 = vld [vmem:[%s3426 + $0x50] sm:$0xff]
      %v3438 = vld [vmem:[%s3426 + $0x58] sm:$0xff]
      %v3439 = vld [vmem:[%s3426 + $0x60] sm:$0xff]
      %v3440 = vld [vmem:[%s3426 + $0x68] sm:$0xff]
      %v3441 = vld [vmem:[%s3426 + $0x70] sm:$0xff]
      %v3442 = vld [vmem:[%s3426 + $0x78] sm:$0xff]
      %v3459 = vunpack.c.l.b16 %v3427
      %v3460 = vunpack.c.h.b16 %v3427
      %v3461 = vunpack.c.l.b16 %v3428
      %v3462 = vunpack.c.h.b16 %v3428
      %v3463 = vunpack.c.l.b16 %v3429
      %v3464 = vunpack.c.h.b16 %v3429
      %v3465 = vunpack.c.l.b16 %v3430
      %v3466 = vunpack.c.h.b16 %v3430
      %v3467 = vunpack.c.l.b16 %v3431
      %v3468 = vunpack.c.h.b16 %v3431
      %v3469 = vunpack.c.l.b16 %v3432
      %v3470 = vunpack.c.h.b16 %v3432
      %v3471 = vunpack.c.l.b16 %v3433
      %v3472 = vunpack.c.h.b16 %v3433
      %v3473 = vunpack.c.l.b16 %v3434
      %v3474 = vunpack.c.h.b16 %v3434
      %v3475 = vunpack.c.l.b16 %v3435
      %v3476 = vunpack.c.h.b16 %v3435
      %v3477 = vunpack.c.l.b16 %v3436
      %v3478 = vunpack.c.h.b16 %v3436
      %v3479 = vunpack.c.l.b16 %v3437
      %v3480 = vunpack.c.h.b16 %v3437
      %v3481 = vunpack.c.l.b16 %v3438
      %v3482 = vunpack.c.h.b16 %v3438
      %v3483 = vunpack.c.l.b16 %v3439
      %v3484 = vunpack.c.h.b16 %v3439
      %v3485 = vunpack.c.l.b16 %v3440
      %v3486 = vunpack.c.h.b16 %v3440
      %v3487 = vunpack.c.l.b16 %v3441
      %v3488 = vunpack.c.h.b16 %v3441
      %v3489 = vunpack.c.l.b16 %v3442
      %v3490 = vunpack.c.h.b16 %v3442
      %v3491 = vpack.c.b16 %v3461, %v3459
      %v3492 = vpack.c.b16 %v3462, %v3460
      %v3493 = vpack.c.b16 %v3465, %v3463
      %v3494 = vpack.c.b16 %v3466, %v3464
      %v3495 = vpack.c.b16 %v3469, %v3467
      %v3496 = vpack.c.b16 %v3470, %v3468
      %v3497 = vpack.c.b16 %v3473, %v3471
      %v3498 = vpack.c.b16 %v3474, %v3472
      %v3499 = vpack.c.b16 %v3477, %v3475
      %v3500 = vpack.c.b16 %v3478, %v3476
      %v3501 = vpack.c.b16 %v3481, %v3479
      %v3502 = vpack.c.b16 %v3482, %v3480
      %v3503 = vpack.c.b16 %v3485, %v3483
      %v3504 = vpack.c.b16 %v3486, %v3484
      %v3505 = vpack.c.b16 %v3489, %v3487
      %v3506 = vpack.c.b16 %v3490, %v3488
      %3523 = vmatpush.bf16.msra.mxu0 %v3505
      %3524 = vmatpush.bf16.msra.mxu0 %v3503
      %3525 = vmatpush.bf16.msra.mxu0 %v3501
      %3526 = vmatpush.bf16.msra.mxu0 %v3499
      %3527 = vmatpush.bf16.msra.mxu0 %v3497
      %3528 = vmatpush.bf16.msra.mxu0 %v3495
      %3529 = vmatpush.bf16.msra.mxu0 %v3493
      %3530 = vmatpush.bf16.msra.mxu0 %v3491
      %3531 = vmatmul.bf16.gmra.mxu0 %v3418
      %v3532 = vpop.f32.mrf.mxu0
      %v3533 = vadd.f32 0.0, %v3532
      %v3534 = vpop.f32.mrf.mxu0
      %v3535 = vadd.f32 0.0, %v3534
      %3536 = vmatmul.bf16.gmra.mxu0 %v3419
      %v3537 = vpop.f32.mrf.mxu0
      %v3538 = vadd.f32 0.0, %v3537
      %v3539 = vpop.f32.mrf.mxu0
      %v3540 = vadd.f32 0.0, %v3539
      %3541 = vmatmul.bf16.gmra.mxu0 %v3420
      %v3542 = vpop.f32.mrf.mxu0
      %v3543 = vadd.f32 0.0, %v3542
      %v3544 = vpop.f32.mrf.mxu0
      %v3545 = vadd.f32 0.0, %v3544
      %3546 = vmatmul.bf16.gmra.mxu0 %v3421
      %v3547 = vpop.f32.mrf.mxu0
      %v3548 = vadd.f32 0.0, %v3547
      %v3549 = vpop.f32.mrf.mxu0
      %v3550 = vadd.f32 0.0, %v3549
      %3551 = vmatmul.bf16.gmra.mxu0 %v3422
      %v3552 = vpop.f32.mrf.mxu0
      %v3553 = vadd.f32 0.0, %v3552
      %v3554 = vpop.f32.mrf.mxu0
      %v3555 = vadd.f32 0.0, %v3554
      %3556 = vmatmul.bf16.gmra.mxu0 %v3423
      %v3557 = vpop.f32.mrf.mxu0
      %v3558 = vadd.f32 0.0, %v3557
      %v3559 = vpop.f32.mrf.mxu0
      %v3560 = vadd.f32 0.0, %v3559
      %3561 = vmatmul.bf16.gmra.mxu0 %v3424
      %v3562 = vpop.f32.mrf.mxu0
      %v3563 = vadd.f32 0.0, %v3562
      %v3564 = vpop.f32.mrf.mxu0
      %v3565 = vadd.f32 0.0, %v3564
      %3566 = vmatmul.bf16.gmra.mxu0 %v3425
      %v3567 = vpop.f32.mrf.mxu0
      %v3568 = vadd.f32 0.0, %v3567
      %v3569 = vpop.f32.mrf.mxu0
      %v3570 = vadd.f32 0.0, %v3569
      %3571 = vdwg.mxu0
      %3572 = vmatpush.bf16.msra.mxu0 %v3506
      %3573 = vmatpush.bf16.msra.mxu0 %v3504
      %3574 = vmatpush.bf16.msra.mxu0 %v3502
      %3575 = vmatpush.bf16.msra.mxu0 %v3500
      %3576 = vmatpush.bf16.msra.mxu0 %v3498
      %3577 = vmatpush.bf16.msra.mxu0 %v3496
      %3578 = vmatpush.bf16.msra.mxu0 %v3494
      %3579 = vmatpush.bf16.msra.mxu0 %v3492
      %3580 = vmatmul.bf16.gmra.mxu0 %v3418
      %v3581 = vpop.f32.mrf.mxu0
      %v3582 = vadd.f32 0.0, %v3581
      %v3583 = vpop.f32.mrf.mxu0
      %v3584 = vadd.f32 0.0, %v3583
      %3585 = vmatmul.bf16.gmra.mxu0 %v3419
      %v3586 = vpop.f32.mrf.mxu0
      %v3587 = vadd.f32 0.0, %v3586
      %v3588 = vpop.f32.mrf.mxu0
      %v3589 = vadd.f32 0.0, %v3588
      %3590 = vmatmul.bf16.gmra.mxu0 %v3420
      %v3591 = vpop.f32.mrf.mxu0
      %v3592 = vadd.f32 0.0, %v3591
      %v3593 = vpop.f32.mrf.mxu0
      %v3594 = vadd.f32 0.0, %v3593
      %3595 = vmatmul.bf16.gmra.mxu0 %v3421
      %v3596 = vpop.f32.mrf.mxu0
      %v3597 = vadd.f32 0.0, %v3596
      %v3598 = vpop.f32.mrf.mxu0
      %v3599 = vadd.f32 0.0, %v3598
      %3600 = vmatmul.bf16.gmra.mxu0 %v3422
      %v3601 = vpop.f32.mrf.mxu0
      %v3602 = vadd.f32 0.0, %v3601
      %v3603 = vpop.f32.mrf.mxu0
      %v3604 = vadd.f32 0.0, %v3603
      %3605 = vmatmul.bf16.gmra.mxu0 %v3423
      %v3606 = vpop.f32.mrf.mxu0
      %v3607 = vadd.f32 0.0, %v3606
      %v3608 = vpop.f32.mrf.mxu0
      %v3609 = vadd.f32 0.0, %v3608
      %3610 = vmatmul.bf16.gmra.mxu0 %v3424
      %v3611 = vpop.f32.mrf.mxu0
      %v3612 = vadd.f32 0.0, %v3611
      %v3613 = vpop.f32.mrf.mxu0
      %v3614 = vadd.f32 0.0, %v3613
      %3615 = vmatmul.bf16.gmra.mxu0 %v3425
      %v3616 = vpop.f32.mrf.mxu0
      %v3617 = vadd.f32 0.0, %v3616
      %v3618 = vpop.f32.mrf.mxu0
      %v3619 = vadd.f32 0.0, %v3618
      %3620 = vdwg.mxu0
      %v3621 = vadd.f32 %v3175, %v3533
      %v3622 = vadd.f32 %v3176, %v3582
      %v3623 = vadd.f32 %v3177, %v3535
      %v3624 = vadd.f32 %v3178, %v3584
      %v3625 = vadd.f32 %v3179, %v3538
      %v3626 = vadd.f32 %v3180, %v3587
      %v3627 = vadd.f32 %v3181, %v3540
      %v3628 = vadd.f32 %v3182, %v3589
      %v3629 = vadd.f32 %v3183, %v3543
      %v3630 = vadd.f32 %v3184, %v3592
      %v3631 = vadd.f32 %v3185, %v3545
      %v3632 = vadd.f32 %v3186, %v3594
      %v3633 = vadd.f32 %v3187, %v3548
      %v3634 = vadd.f32 %v3188, %v3597
      %v3635 = vadd.f32 %v3189, %v3550
      %v3636 = vadd.f32 %v3190, %v3599
      %v3637 = vadd.f32 %v3191, %v3553
      %v3638 = vadd.f32 %v3192, %v3602
      %v3639 = vadd.f32 %v3193, %v3555
      %v3640 = vadd.f32 %v3194, %v3604
      %v3641 = vadd.f32 %v3195, %v3558
      %v3642 = vadd.f32 %v3196, %v3607
      %v3643 = vadd.f32 %v3197, %v3560
      %v3644 = vadd.f32 %v3198, %v3609
      %v3645 = vadd.f32 %v3199, %v3563
      %v3646 = vadd.f32 %v3200, %v3612
      %v3647 = vadd.f32 %v3201, %v3565
      %v3648 = vadd.f32 %v3202, %v3614
      %v3649 = vadd.f32 %v3203, %v3568
      %v3650 = vadd.f32 %v3204, %v3617
      %v3651 = vadd.f32 %v3205, %v3570
      %v3652 = vadd.f32 %v3206, %v3619
      %s3653 = scalar_lea.vmem %s3, 640
      %v3654 = vld [vmem:[%s3653] sm:$0xff]
      %v3655 = vld [vmem:[%s3653 + $0x8] sm:$0xff]
      %v3656 = vld [vmem:[%s3653 + $0x10] sm:$0xff]
      %v3657 = vld [vmem:[%s3653 + $0x18] sm:$0xff]
      %v3658 = vld [vmem:[%s3653 + $0x20] sm:$0xff]
      %v3659 = vld [vmem:[%s3653 + $0x28] sm:$0xff]
      %v3660 = vld [vmem:[%s3653 + $0x30] sm:$0xff]
      %v3661 = vld [vmem:[%s3653 + $0x38] sm:$0xff]
      %v3662 = vld [vmem:[%s3653 + $0x40] sm:$0xff]
      %v3663 = vld [vmem:[%s3653 + $0x48] sm:$0xff]
      %v3664 = vld [vmem:[%s3653 + $0x50] sm:$0xff]
      %v3665 = vld [vmem:[%s3653 + $0x58] sm:$0xff]
      %v3666 = vld [vmem:[%s3653 + $0x60] sm:$0xff]
      %v3667 = vld [vmem:[%s3653 + $0x68] sm:$0xff]
      %v3668 = vld [vmem:[%s3653 + $0x70] sm:$0xff]
      %v3669 = vld [vmem:[%s3653 + $0x78] sm:$0xff]
      %v3686 = vunpack.c.l.b16 %v3654
      %v3687 = vunpack.c.h.b16 %v3654
      %v3688 = vunpack.c.l.b16 %v3655
      %v3689 = vunpack.c.h.b16 %v3655
      %v3690 = vunpack.c.l.b16 %v3656
      %v3691 = vunpack.c.h.b16 %v3656
      %v3692 = vunpack.c.l.b16 %v3657
      %v3693 = vunpack.c.h.b16 %v3657
      %v3694 = vunpack.c.l.b16 %v3658
      %v3695 = vunpack.c.h.b16 %v3658
      %v3696 = vunpack.c.l.b16 %v3659
      %v3697 = vunpack.c.h.b16 %v3659
      %v3698 = vunpack.c.l.b16 %v3660
      %v3699 = vunpack.c.h.b16 %v3660
      %v3700 = vunpack.c.l.b16 %v3661
      %v3701 = vunpack.c.h.b16 %v3661
      %v3702 = vunpack.c.l.b16 %v3662
      %v3703 = vunpack.c.h.b16 %v3662
      %v3704 = vunpack.c.l.b16 %v3663
      %v3705 = vunpack.c.h.b16 %v3663
      %v3706 = vunpack.c.l.b16 %v3664
      %v3707 = vunpack.c.h.b16 %v3664
      %v3708 = vunpack.c.l.b16 %v3665
      %v3709 = vunpack.c.h.b16 %v3665
      %v3710 = vunpack.c.l.b16 %v3666
      %v3711 = vunpack.c.h.b16 %v3666
      %v3712 = vunpack.c.l.b16 %v3667
      %v3713 = vunpack.c.h.b16 %v3667
      %v3714 = vunpack.c.l.b16 %v3668
      %v3715 = vunpack.c.h.b16 %v3668
      %v3716 = vunpack.c.l.b16 %v3669
      %v3717 = vunpack.c.h.b16 %v3669
      %v3718 = vpack.c.b16 %v3688, %v3686
      %v3719 = vpack.c.b16 %v3689, %v3687
      %v3720 = vpack.c.b16 %v3692, %v3690
      %v3721 = vpack.c.b16 %v3693, %v3691
      %v3722 = vpack.c.b16 %v3696, %v3694
      %v3723 = vpack.c.b16 %v3697, %v3695
      %v3724 = vpack.c.b16 %v3700, %v3698
      %v3725 = vpack.c.b16 %v3701, %v3699
      %v3726 = vpack.c.b16 %v3704, %v3702
      %v3727 = vpack.c.b16 %v3705, %v3703
      %v3728 = vpack.c.b16 %v3708, %v3706
      %v3729 = vpack.c.b16 %v3709, %v3707
      %v3730 = vpack.c.b16 %v3712, %v3710
      %v3731 = vpack.c.b16 %v3713, %v3711
      %v3732 = vpack.c.b16 %v3716, %v3714
      %v3733 = vpack.c.b16 %v3717, %v3715
      %v3743 = vsel %vm1576, %v3719, 0
      %v3746 = vsel %vm1576, %v3721, 0
      %v3749 = vsel %vm1576, %v3723, 0
      %v3752 = vsel %vm1576, %v3725, 0
      %v3755 = vsel %vm1576, %v3727, 0
      %v3758 = vsel %vm1576, %v3729, 0
      %v3761 = vsel %vm1576, %v3731, 0
      %v3764 = vsel %vm1576, %v3733, 0
      %3766 = vmatpush.bf16.msra.mxu0 %v1484
      %3767 = vmatpush.bf16.msra.mxu0 %v1483
      %3768 = vmatpush.bf16.msra.mxu0 %v1482
      %3769 = vmatpush.bf16.msra.mxu0 %v1481
      %3770 = vmatpush.bf16.msra.mxu0 %v1480
      %3771 = vmatpush.bf16.msra.mxu0 %v1479
      %3772 = vmatpush.bf16.msra.mxu0 %v1478
      %3773 = vmatpush.bf16.msra.mxu0 %v1477
      %3774 = vmatmul.bf16.gmra.mxu0 %v3718
      %v3775 = vpop.f32.mrf.mxu0
      %v3776 = vadd.f32 0.0, %v3775
      %v3777 = vpop.f32.mrf.mxu0
      %v3778 = vadd.f32 0.0, %v3777
      %3779 = vmatmul.bf16.gmra.mxu0 %v3720
      %v3780 = vpop.f32.mrf.mxu0
      %v3781 = vadd.f32 0.0, %v3780
      %v3782 = vpop.f32.mrf.mxu0
      %v3783 = vadd.f32 0.0, %v3782
      %3784 = vmatmul.bf16.gmra.mxu0 %v3722
      %v3785 = vpop.f32.mrf.mxu0
      %v3786 = vadd.f32 0.0, %v3785
      %v3787 = vpop.f32.mrf.mxu0
      %v3788 = vadd.f32 0.0, %v3787
      %3789 = vmatmul.bf16.gmra.mxu0 %v3724
      %v3790 = vpop.f32.mrf.mxu0
      %v3791 = vadd.f32 0.0, %v3790
      %v3792 = vpop.f32.mrf.mxu0
      %v3793 = vadd.f32 0.0, %v3792
      %3794 = vmatmul.bf16.gmra.mxu0 %v3726
      %v3795 = vpop.f32.mrf.mxu0
      %v3796 = vadd.f32 0.0, %v3795
      %v3797 = vpop.f32.mrf.mxu0
      %v3798 = vadd.f32 0.0, %v3797
      %3799 = vmatmul.bf16.gmra.mxu0 %v3728
      %v3800 = vpop.f32.mrf.mxu0
      %v3801 = vadd.f32 0.0, %v3800
      %v3802 = vpop.f32.mrf.mxu0
      %v3803 = vadd.f32 0.0, %v3802
      %3804 = vmatmul.bf16.gmra.mxu0 %v3730
      %v3805 = vpop.f32.mrf.mxu0
      %v3806 = vadd.f32 0.0, %v3805
      %v3807 = vpop.f32.mrf.mxu0
      %v3808 = vadd.f32 0.0, %v3807
      %3809 = vmatmul.bf16.gmra.mxu0 %v3732
      %v3810 = vpop.f32.mrf.mxu0
      %v3811 = vadd.f32 0.0, %v3810
      %v3812 = vpop.f32.mrf.mxu0
      %v3813 = vadd.f32 0.0, %v3812
      %3814 = vdwg.mxu0
      %3815 = vmatpush.bf16.msra.mxu0 0
      %3816 = vmatpush.bf16.msra.mxu0 0
      %3817 = vmatpush.bf16.msra.mxu0 0
      %3818 = vmatpush.bf16.msra.mxu0 0
      %3819 = vmatpush.bf16.msra.mxu0 0
      %3820 = vmatpush.bf16.msra.mxu0 %v1487
      %3821 = vmatpush.bf16.msra.mxu0 %v1486
      %3822 = vmatpush.bf16.msra.mxu0 %v1485
      %3823 = vmatmul.bf16.gmra.mxu0 %v3743
      %v3824 = vpop.f32.mrf.mxu0
      %v3825 = vadd.f32 %v3776, %v3824
      %v3826 = vpop.f32.mrf.mxu0
      %v3827 = vadd.f32 %v3778, %v3826
      %3828 = vmatmul.bf16.gmra.mxu0 %v3746
      %v3829 = vpop.f32.mrf.mxu0
      %v3830 = vadd.f32 %v3781, %v3829
      %v3831 = vpop.f32.mrf.mxu0
      %v3832 = vadd.f32 %v3783, %v3831
      %3833 = vmatmul.bf16.gmra.mxu0 %v3749
      %v3834 = vpop.f32.mrf.mxu0
      %v3835 = vadd.f32 %v3786, %v3834
      %v3836 = vpop.f32.mrf.mxu0
      %v3837 = vadd.f32 %v3788, %v3836
      %3838 = vmatmul.bf16.gmra.mxu0 %v3752
      %v3839 = vpop.f32.mrf.mxu0
      %v3840 = vadd.f32 %v3791, %v3839
      %v3841 = vpop.f32.mrf.mxu0
      %v3842 = vadd.f32 %v3793, %v3841
      %3843 = vmatmul.bf16.gmra.mxu0 %v3755
      %v3844 = vpop.f32.mrf.mxu0
      %v3845 = vadd.f32 %v3796, %v3844
      %v3846 = vpop.f32.mrf.mxu0
      %v3847 = vadd.f32 %v3798, %v3846
      %3848 = vmatmul.bf16.gmra.mxu0 %v3758
      %v3849 = vpop.f32.mrf.mxu0
      %v3850 = vadd.f32 %v3801, %v3849
      %v3851 = vpop.f32.mrf.mxu0
      %v3852 = vadd.f32 %v3803, %v3851
      %3853 = vmatmul.bf16.gmra.mxu0 %v3761
      %v3854 = vpop.f32.mrf.mxu0
      %v3855 = vadd.f32 %v3806, %v3854
      %v3856 = vpop.f32.mrf.mxu0
      %v3857 = vadd.f32 %v3808, %v3856
      %3858 = vmatmul.bf16.gmra.mxu0 %v3764
      %v3859 = vpop.f32.mrf.mxu0
      %v3860 = vadd.f32 %v3811, %v3859
      %v3861 = vpop.f32.mrf.mxu0
      %v3862 = vadd.f32 %v3813, %v3861
      %3863 = vdwg.mxu0
      %v3864 = vpack.c.bf16 %v3827, %v3825
      %v3865 = vpack.c.bf16 %v3832, %v3830
      %v3866 = vpack.c.bf16 %v3837, %v3835
      %v3867 = vpack.c.bf16 %v3842, %v3840
      %v3868 = vpack.c.bf16 %v3847, %v3845
      %v3869 = vpack.c.bf16 %v3852, %v3850
      %v3870 = vpack.c.bf16 %v3857, %v3855
      %v3871 = vpack.c.bf16 %v3862, %v3860
      %s3872 = scalar_lea.vmem %s4, 640
      %v3873 = vld [vmem:[%s3872] sm:$0xff]
      %v3874 = vld [vmem:[%s3872 + $0x8] sm:$0xff]
      %v3875 = vld [vmem:[%s3872 + $0x10] sm:$0xff]
      %v3876 = vld [vmem:[%s3872 + $0x18] sm:$0xff]
      %v3877 = vld [vmem:[%s3872 + $0x20] sm:$0xff]
      %v3878 = vld [vmem:[%s3872 + $0x28] sm:$0xff]
      %v3879 = vld [vmem:[%s3872 + $0x30] sm:$0xff]
      %v3880 = vld [vmem:[%s3872 + $0x38] sm:$0xff]
      %v3881 = vld [vmem:[%s3872 + $0x40] sm:$0xff]
      %v3882 = vld [vmem:[%s3872 + $0x48] sm:$0xff]
      %v3883 = vld [vmem:[%s3872 + $0x50] sm:$0xff]
      %v3884 = vld [vmem:[%s3872 + $0x58] sm:$0xff]
      %v3885 = vld [vmem:[%s3872 + $0x60] sm:$0xff]
      %v3886 = vld [vmem:[%s3872 + $0x68] sm:$0xff]
      %v3887 = vld [vmem:[%s3872 + $0x70] sm:$0xff]
      %v3888 = vld [vmem:[%s3872 + $0x78] sm:$0xff]
      %v3905 = vunpack.c.l.b16 %v3873
      %v3906 = vunpack.c.h.b16 %v3873
      %v3907 = vunpack.c.l.b16 %v3874
      %v3908 = vunpack.c.h.b16 %v3874
      %v3909 = vunpack.c.l.b16 %v3875
      %v3910 = vunpack.c.h.b16 %v3875
      %v3911 = vunpack.c.l.b16 %v3876
      %v3912 = vunpack.c.h.b16 %v3876
      %v3913 = vunpack.c.l.b16 %v3877
      %v3914 = vunpack.c.h.b16 %v3877
      %v3915 = vunpack.c.l.b16 %v3878
      %v3916 = vunpack.c.h.b16 %v3878
      %v3917 = vunpack.c.l.b16 %v3879
      %v3918 = vunpack.c.h.b16 %v3879
      %v3919 = vunpack.c.l.b16 %v3880
      %v3920 = vunpack.c.h.b16 %v3880
      %v3921 = vunpack.c.l.b16 %v3881
      %v3922 = vunpack.c.h.b16 %v3881
      %v3923 = vunpack.c.l.b16 %v3882
      %v3924 = vunpack.c.h.b16 %v3882
      %v3925 = vunpack.c.l.b16 %v3883
      %v3926 = vunpack.c.h.b16 %v3883
      %v3927 = vunpack.c.l.b16 %v3884
      %v3928 = vunpack.c.h.b16 %v3884
      %v3929 = vunpack.c.l.b16 %v3885
      %v3930 = vunpack.c.h.b16 %v3885
      %v3931 = vunpack.c.l.b16 %v3886
      %v3932 = vunpack.c.h.b16 %v3886
      %v3933 = vunpack.c.l.b16 %v3887
      %v3934 = vunpack.c.h.b16 %v3887
      %v3935 = vunpack.c.l.b16 %v3888
      %v3936 = vunpack.c.h.b16 %v3888
      %v3937 = vpack.c.b16 %v3907, %v3905
      %v3938 = vpack.c.b16 %v3908, %v3906
      %v3939 = vpack.c.b16 %v3911, %v3909
      %v3940 = vpack.c.b16 %v3912, %v3910
      %v3941 = vpack.c.b16 %v3915, %v3913
      %v3942 = vpack.c.b16 %v3916, %v3914
      %v3943 = vpack.c.b16 %v3919, %v3917
      %v3944 = vpack.c.b16 %v3920, %v3918
      %v3945 = vpack.c.b16 %v3923, %v3921
      %v3946 = vpack.c.b16 %v3924, %v3922
      %v3947 = vpack.c.b16 %v3927, %v3925
      %v3948 = vpack.c.b16 %v3928, %v3926
      %v3949 = vpack.c.b16 %v3931, %v3929
      %v3950 = vpack.c.b16 %v3932, %v3930
      %v3951 = vpack.c.b16 %v3935, %v3933
      %v3952 = vpack.c.b16 %v3936, %v3934
      %3969 = vmatpush.bf16.msra.mxu0 %v3951
      %3970 = vmatpush.bf16.msra.mxu0 %v3949
      %3971 = vmatpush.bf16.msra.mxu0 %v3947
      %3972 = vmatpush.bf16.msra.mxu0 %v3945
      %3973 = vmatpush.bf16.msra.mxu0 %v3943
      %3974 = vmatpush.bf16.msra.mxu0 %v3941
      %3975 = vmatpush.bf16.msra.mxu0 %v3939
      %3976 = vmatpush.bf16.msra.mxu0 %v3937
      %3977 = vmatmul.bf16.gmra.mxu0 %v3864
      %v3978 = vpop.f32.mrf.mxu0
      %v3979 = vadd.f32 0.0, %v3978
      %v3980 = vpop.f32.mrf.mxu0
      %v3981 = vadd.f32 0.0, %v3980
      %3982 = vmatmul.bf16.gmra.mxu0 %v3865
      %v3983 = vpop.f32.mrf.mxu0
      %v3984 = vadd.f32 0.0, %v3983
      %v3985 = vpop.f32.mrf.mxu0
      %v3986 = vadd.f32 0.0, %v3985
      %3987 = vmatmul.bf16.gmra.mxu0 %v3866
      %v3988 = vpop.f32.mrf.mxu0
      %v3989 = vadd.f32 0.0, %v3988
      %v3990 = vpop.f32.mrf.mxu0
      %v3991 = vadd.f32 0.0, %v3990
      %3992 = vmatmul.bf16.gmra.mxu0 %v3867
      %v3993 = vpop.f32.mrf.mxu0
      %v3994 = vadd.f32 0.0, %v3993
      %v3995 = vpop.f32.mrf.mxu0
      %v3996 = vadd.f32 0.0, %v3995
      %3997 = vmatmul.bf16.gmra.mxu0 %v3868
      %v3998 = vpop.f32.mrf.mxu0
      %v3999 = vadd.f32 0.0, %v3998
      %v4000 = vpop.f32.mrf.mxu0
      %v4001 = vadd.f32 0.0, %v4000
      %4002 = vmatmul.bf16.gmra.mxu0 %v3869
      %v4003 = vpop.f32.mrf.mxu0
      %v4004 = vadd.f32 0.0, %v4003
      %v4005 = vpop.f32.mrf.mxu0
      %v4006 = vadd.f32 0.0, %v4005
      %4007 = vmatmul.bf16.gmra.mxu0 %v3870
      %v4008 = vpop.f32.mrf.mxu0
      %v4009 = vadd.f32 0.0, %v4008
      %v4010 = vpop.f32.mrf.mxu0
      %v4011 = vadd.f32 0.0, %v4010
      %4012 = vmatmul.bf16.gmra.mxu0 %v3871
      %v4013 = vpop.f32.mrf.mxu0
      %v4014 = vadd.f32 0.0, %v4013
      %v4015 = vpop.f32.mrf.mxu0
      %v4016 = vadd.f32 0.0, %v4015
      %4017 = vdwg.mxu0
      %4018 = vmatpush.bf16.msra.mxu0 %v3952
      %4019 = vmatpush.bf16.msra.mxu0 %v3950
      %4020 = vmatpush.bf16.msra.mxu0 %v3948
      %4021 = vmatpush.bf16.msra.mxu0 %v3946
      %4022 = vmatpush.bf16.msra.mxu0 %v3944
      %4023 = vmatpush.bf16.msra.mxu0 %v3942
      %4024 = vmatpush.bf16.msra.mxu0 %v3940
      %4025 = vmatpush.bf16.msra.mxu0 %v3938
      %4026 = vmatmul.bf16.gmra.mxu0 %v3864
      %v4027 = vpop.f32.mrf.mxu0
      %v4028 = vadd.f32 0.0, %v4027
      %v4029 = vpop.f32.mrf.mxu0
      %v4030 = vadd.f32 0.0, %v4029
      %4031 = vmatmul.bf16.gmra.mxu0 %v3865
      %v4032 = vpop.f32.mrf.mxu0
      %v4033 = vadd.f32 0.0, %v4032
      %v4034 = vpop.f32.mrf.mxu0
      %v4035 = vadd.f32 0.0, %v4034
      %4036 = vmatmul.bf16.gmra.mxu0 %v3866
      %v4037 = vpop.f32.mrf.mxu0
      %v4038 = vadd.f32 0.0, %v4037
      %v4039 = vpop.f32.mrf.mxu0
      %v4040 = vadd.f32 0.0, %v4039
      %4041 = vmatmul.bf16.gmra.mxu0 %v3867
      %v4042 = vpop.f32.mrf.mxu0
      %v4043 = vadd.f32 0.0, %v4042
      %v4044 = vpop.f32.mrf.mxu0
      %v4045 = vadd.f32 0.0, %v4044
      %4046 = vmatmul.bf16.gmra.mxu0 %v3868
      %v4047 = vpop.f32.mrf.mxu0
      %v4048 = vadd.f32 0.0, %v4047
      %v4049 = vpop.f32.mrf.mxu0
      %v4050 = vadd.f32 0.0, %v4049
      %4051 = vmatmul.bf16.gmra.mxu0 %v3869
      %v4052 = vpop.f32.mrf.mxu0
      %v4053 = vadd.f32 0.0, %v4052
      %v4054 = vpop.f32.mrf.mxu0
      %v4055 = vadd.f32 0.0, %v4054
      %4056 = vmatmul.bf16.gmra.mxu0 %v3870
      %v4057 = vpop.f32.mrf.mxu0
      %v4058 = vadd.f32 0.0, %v4057
      %v4059 = vpop.f32.mrf.mxu0
      %v4060 = vadd.f32 0.0, %v4059
      %4061 = vmatmul.bf16.gmra.mxu0 %v3871
      %v4062 = vpop.f32.mrf.mxu0
      %v4063 = vadd.f32 0.0, %v4062
      %v4064 = vpop.f32.mrf.mxu0
      %v4065 = vadd.f32 0.0, %v4064
      %4066 = vdwg.mxu0
      %v4067 = vadd.f32 %v3621, %v3979
      %v4068 = vadd.f32 %v3622, %v4028
      %v4069 = vadd.f32 %v3623, %v3981
      %v4070 = vadd.f32 %v3624, %v4030
      %v4071 = vadd.f32 %v3625, %v3984
      %v4072 = vadd.f32 %v3626, %v4033
      %v4073 = vadd.f32 %v3627, %v3986
      %v4074 = vadd.f32 %v3628, %v4035
      %v4075 = vadd.f32 %v3629, %v3989
      %v4076 = vadd.f32 %v3630, %v4038
      %v4077 = vadd.f32 %v3631, %v3991
      %v4078 = vadd.f32 %v3632, %v4040
      %v4079 = vadd.f32 %v3633, %v3994
      %v4080 = vadd.f32 %v3634, %v4043
      %v4081 = vadd.f32 %v3635, %v3996
      %v4082 = vadd.f32 %v3636, %v4045
      %v4083 = vadd.f32 %v3637, %v3999
      %v4084 = vadd.f32 %v3638, %v4048
      %v4085 = vadd.f32 %v3639, %v4001
      %v4086 = vadd.f32 %v3640, %v4050
      %v4087 = vadd.f32 %v3641, %v4004
      %v4088 = vadd.f32 %v3642, %v4053
      %v4089 = vadd.f32 %v3643, %v4006
      %v4090 = vadd.f32 %v3644, %v4055
      %v4091 = vadd.f32 %v3645, %v4009
      %v4092 = vadd.f32 %v3646, %v4058
      %v4093 = vadd.f32 %v3647, %v4011
      %v4094 = vadd.f32 %v3648, %v4060
      %v4095 = vadd.f32 %v3649, %v4014
      %v4096 = vadd.f32 %v3650, %v4063
      %v4097 = vadd.f32 %v3651, %v4016
      %v4098 = vadd.f32 %v3652, %v4065
      %s4099 = scalar_lea.vmem %s3, 768
      %v4100 = vld [vmem:[%s4099] sm:$0xff]
      %v4101 = vld [vmem:[%s4099 + $0x8] sm:$0xff]
      %v4102 = vld [vmem:[%s4099 + $0x10] sm:$0xff]
      %v4103 = vld [vmem:[%s4099 + $0x18] sm:$0xff]
      %v4104 = vld [vmem:[%s4099 + $0x20] sm:$0xff]
      %v4105 = vld [vmem:[%s4099 + $0x28] sm:$0xff]
      %v4106 = vld [vmem:[%s4099 + $0x30] sm:$0xff]
      %v4107 = vld [vmem:[%s4099 + $0x38] sm:$0xff]
      %v4108 = vld [vmem:[%s4099 + $0x40] sm:$0xff]
      %v4109 = vld [vmem:[%s4099 + $0x48] sm:$0xff]
      %v4110 = vld [vmem:[%s4099 + $0x50] sm:$0xff]
      %v4111 = vld [vmem:[%s4099 + $0x58] sm:$0xff]
      %v4112 = vld [vmem:[%s4099 + $0x60] sm:$0xff]
      %v4113 = vld [vmem:[%s4099 + $0x68] sm:$0xff]
      %v4114 = vld [vmem:[%s4099 + $0x70] sm:$0xff]
      %v4115 = vld [vmem:[%s4099 + $0x78] sm:$0xff]
      %v4132 = vunpack.c.l.b16 %v4100
      %v4133 = vunpack.c.h.b16 %v4100
      %v4134 = vunpack.c.l.b16 %v4101
      %v4135 = vunpack.c.h.b16 %v4101
      %v4136 = vunpack.c.l.b16 %v4102
      %v4137 = vunpack.c.h.b16 %v4102
      %v4138 = vunpack.c.l.b16 %v4103
      %v4139 = vunpack.c.h.b16 %v4103
      %v4140 = vunpack.c.l.b16 %v4104
      %v4141 = vunpack.c.h.b16 %v4104
      %v4142 = vunpack.c.l.b16 %v4105
      %v4143 = vunpack.c.h.b16 %v4105
      %v4144 = vunpack.c.l.b16 %v4106
      %v4145 = vunpack.c.h.b16 %v4106
      %v4146 = vunpack.c.l.b16 %v4107
      %v4147 = vunpack.c.h.b16 %v4107
      %v4148 = vunpack.c.l.b16 %v4108
      %v4149 = vunpack.c.h.b16 %v4108
      %v4150 = vunpack.c.l.b16 %v4109
      %v4151 = vunpack.c.h.b16 %v4109
      %v4152 = vunpack.c.l.b16 %v4110
      %v4153 = vunpack.c.h.b16 %v4110
      %v4154 = vunpack.c.l.b16 %v4111
      %v4155 = vunpack.c.h.b16 %v4111
      %v4156 = vunpack.c.l.b16 %v4112
      %v4157 = vunpack.c.h.b16 %v4112
      %v4158 = vunpack.c.l.b16 %v4113
      %v4159 = vunpack.c.h.b16 %v4113
      %v4160 = vunpack.c.l.b16 %v4114
      %v4161 = vunpack.c.h.b16 %v4114
      %v4162 = vunpack.c.l.b16 %v4115
      %v4163 = vunpack.c.h.b16 %v4115
      %v4164 = vpack.c.b16 %v4134, %v4132
      %v4165 = vpack.c.b16 %v4135, %v4133
      %v4166 = vpack.c.b16 %v4138, %v4136
      %v4167 = vpack.c.b16 %v4139, %v4137
      %v4168 = vpack.c.b16 %v4142, %v4140
      %v4169 = vpack.c.b16 %v4143, %v4141
      %v4170 = vpack.c.b16 %v4146, %v4144
      %v4171 = vpack.c.b16 %v4147, %v4145
      %v4172 = vpack.c.b16 %v4150, %v4148
      %v4173 = vpack.c.b16 %v4151, %v4149
      %v4174 = vpack.c.b16 %v4154, %v4152
      %v4175 = vpack.c.b16 %v4155, %v4153
      %v4176 = vpack.c.b16 %v4158, %v4156
      %v4177 = vpack.c.b16 %v4159, %v4157
      %v4178 = vpack.c.b16 %v4162, %v4160
      %v4179 = vpack.c.b16 %v4163, %v4161
      %v4189 = vsel %vm1576, %v4165, 0
      %v4192 = vsel %vm1576, %v4167, 0
      %v4195 = vsel %vm1576, %v4169, 0
      %v4198 = vsel %vm1576, %v4171, 0
      %v4201 = vsel %vm1576, %v4173, 0
      %v4204 = vsel %vm1576, %v4175, 0
      %v4207 = vsel %vm1576, %v4177, 0
      %v4210 = vsel %vm1576, %v4179, 0
      %4212 = vmatpush.bf16.msra.mxu0 %v1484
      %4213 = vmatpush.bf16.msra.mxu0 %v1483
      %4214 = vmatpush.bf16.msra.mxu0 %v1482
      %4215 = vmatpush.bf16.msra.mxu0 %v1481
      %4216 = vmatpush.bf16.msra.mxu0 %v1480
      %4217 = vmatpush.bf16.msra.mxu0 %v1479
      %4218 = vmatpush.bf16.msra.mxu0 %v1478
      %4219 = vmatpush.bf16.msra.mxu0 %v1477
      %4220 = vmatmul.bf16.gmra.mxu0 %v4164
      %v4221 = vpop.f32.mrf.mxu0
      %v4222 = vadd.f32 0.0, %v4221
      %v4223 = vpop.f32.mrf.mxu0
      %v4224 = vadd.f32 0.0, %v4223
      %4225 = vmatmul.bf16.gmra.mxu0 %v4166
      %v4226 = vpop.f32.mrf.mxu0
      %v4227 = vadd.f32 0.0, %v4226
      %v4228 = vpop.f32.mrf.mxu0
      %v4229 = vadd.f32 0.0, %v4228
      %4230 = vmatmul.bf16.gmra.mxu0 %v4168
      %v4231 = vpop.f32.mrf.mxu0
      %v4232 = vadd.f32 0.0, %v4231
      %v4233 = vpop.f32.mrf.mxu0
      %v4234 = vadd.f32 0.0, %v4233
      %4235 = vmatmul.bf16.gmra.mxu0 %v4170
      %v4236 = vpop.f32.mrf.mxu0
      %v4237 = vadd.f32 0.0, %v4236
      %v4238 = vpop.f32.mrf.mxu0
      %v4239 = vadd.f32 0.0, %v4238
      %4240 = vmatmul.bf16.gmra.mxu0 %v4172
      %v4241 = vpop.f32.mrf.mxu0
      %v4242 = vadd.f32 0.0, %v4241
      %v4243 = vpop.f32.mrf.mxu0
      %v4244 = vadd.f32 0.0, %v4243
      %4245 = vmatmul.bf16.gmra.mxu0 %v4174
      %v4246 = vpop.f32.mrf.mxu0
      %v4247 = vadd.f32 0.0, %v4246
      %v4248 = vpop.f32.mrf.mxu0
      %v4249 = vadd.f32 0.0, %v4248
      %4250 = vmatmul.bf16.gmra.mxu0 %v4176
      %v4251 = vpop.f32.mrf.mxu0
      %v4252 = vadd.f32 0.0, %v4251
      %v4253 = vpop.f32.mrf.mxu0
      %v4254 = vadd.f32 0.0, %v4253
      %4255 = vmatmul.bf16.gmra.mxu0 %v4178
      %v4256 = vpop.f32.mrf.mxu0
      %v4257 = vadd.f32 0.0, %v4256
      %v4258 = vpop.f32.mrf.mxu0
      %v4259 = vadd.f32 0.0, %v4258
      %4260 = vdwg.mxu0
      %4261 = vmatpush.bf16.msra.mxu0 0
      %4262 = vmatpush.bf16.msra.mxu0 0
      %4263 = vmatpush.bf16.msra.mxu0 0
      %4264 = vmatpush.bf16.msra.mxu0 0
      %4265 = vmatpush.bf16.msra.mxu0 0
      %4266 = vmatpush.bf16.msra.mxu0 %v1487
      %4267 = vmatpush.bf16.msra.mxu0 %v1486
      %4268 = vmatpush.bf16.msra.mxu0 %v1485
      %4269 = vmatmul.bf16.gmra.mxu0 %v4189
      %v4270 = vpop.f32.mrf.mxu0
      %v4271 = vadd.f32 %v4222, %v4270
      %v4272 = vpop.f32.mrf.mxu0
      %v4273 = vadd.f32 %v4224, %v4272
      %4274 = vmatmul.bf16.gmra.mxu0 %v4192
      %v4275 = vpop.f32.mrf.mxu0
      %v4276 = vadd.f32 %v4227, %v4275
      %v4277 = vpop.f32.mrf.mxu0
      %v4278 = vadd.f32 %v4229, %v4277
      %4279 = vmatmul.bf16.gmra.mxu0 %v4195
      %v4280 = vpop.f32.mrf.mxu0
      %v4281 = vadd.f32 %v4232, %v4280
      %v4282 = vpop.f32.mrf.mxu0
      %v4283 = vadd.f32 %v4234, %v4282
      %4284 = vmatmul.bf16.gmra.mxu0 %v4198
      %v4285 = vpop.f32.mrf.mxu0
      %v4286 = vadd.f32 %v4237, %v4285
      %v4287 = vpop.f32.mrf.mxu0
      %v4288 = vadd.f32 %v4239, %v4287
      %4289 = vmatmul.bf16.gmra.mxu0 %v4201
      %v4290 = vpop.f32.mrf.mxu0
      %v4291 = vadd.f32 %v4242, %v4290
      %v4292 = vpop.f32.mrf.mxu0
      %v4293 = vadd.f32 %v4244, %v4292
      %4294 = vmatmul.bf16.gmra.mxu0 %v4204
      %v4295 = vpop.f32.mrf.mxu0
      %v4296 = vadd.f32 %v4247, %v4295
      %v4297 = vpop.f32.mrf.mxu0
      %v4298 = vadd.f32 %v4249, %v4297
      %4299 = vmatmul.bf16.gmra.mxu0 %v4207
      %v4300 = vpop.f32.mrf.mxu0
      %v4301 = vadd.f32 %v4252, %v4300
      %v4302 = vpop.f32.mrf.mxu0
      %v4303 = vadd.f32 %v4254, %v4302
      %4304 = vmatmul.bf16.gmra.mxu0 %v4210
      %v4305 = vpop.f32.mrf.mxu0
      %v4306 = vadd.f32 %v4257, %v4305
      %v4307 = vpop.f32.mrf.mxu0
      %v4308 = vadd.f32 %v4259, %v4307
      %4309 = vdwg.mxu0
      %v4310 = vpack.c.bf16 %v4273, %v4271
      %v4311 = vpack.c.bf16 %v4278, %v4276
      %v4312 = vpack.c.bf16 %v4283, %v4281
      %v4313 = vpack.c.bf16 %v4288, %v4286
      %v4314 = vpack.c.bf16 %v4293, %v4291
      %v4315 = vpack.c.bf16 %v4298, %v4296
      %v4316 = vpack.c.bf16 %v4303, %v4301
      %v4317 = vpack.c.bf16 %v4308, %v4306
      %s4318 = scalar_lea.vmem %s4, 768
      %v4319 = vld [vmem:[%s4318] sm:$0xff]
      %v4320 = vld [vmem:[%s4318 + $0x8] sm:$0xff]
      %v4321 = vld [vmem:[%s4318 + $0x10] sm:$0xff]
      %v4322 = vld [vmem:[%s4318 + $0x18] sm:$0xff]
      %v4323 = vld [vmem:[%s4318 + $0x20] sm:$0xff]
      %v4324 = vld [vmem:[%s4318 + $0x28] sm:$0xff]
      %v4325 = vld [vmem:[%s4318 + $0x30] sm:$0xff]
      %v4326 = vld [vmem:[%s4318 + $0x38] sm:$0xff]
      %v4327 = vld [vmem:[%s4318 + $0x40] sm:$0xff]
      %v4328 = vld [vmem:[%s4318 + $0x48] sm:$0xff]
      %v4329 = vld [vmem:[%s4318 + $0x50] sm:$0xff]
      %v4330 = vld [vmem:[%s4318 + $0x58] sm:$0xff]
      %v4331 = vld [vmem:[%s4318 + $0x60] sm:$0xff]
      %v4332 = vld [vmem:[%s4318 + $0x68] sm:$0xff]
      %v4333 = vld [vmem:[%s4318 + $0x70] sm:$0xff]
      %v4334 = vld [vmem:[%s4318 + $0x78] sm:$0xff]
      %v4351 = vunpack.c.l.b16 %v4319
      %v4352 = vunpack.c.h.b16 %v4319
      %v4353 = vunpack.c.l.b16 %v4320
      %v4354 = vunpack.c.h.b16 %v4320
      %v4355 = vunpack.c.l.b16 %v4321
      %v4356 = vunpack.c.h.b16 %v4321
      %v4357 = vunpack.c.l.b16 %v4322
      %v4358 = vunpack.c.h.b16 %v4322
      %v4359 = vunpack.c.l.b16 %v4323
      %v4360 = vunpack.c.h.b16 %v4323
      %v4361 = vunpack.c.l.b16 %v4324
      %v4362 = vunpack.c.h.b16 %v4324
      %v4363 = vunpack.c.l.b16 %v4325
      %v4364 = vunpack.c.h.b16 %v4325
      %v4365 = vunpack.c.l.b16 %v4326
      %v4366 = vunpack.c.h.b16 %v4326
      %v4367 = vunpack.c.l.b16 %v4327
      %v4368 = vunpack.c.h.b16 %v4327
      %v4369 = vunpack.c.l.b16 %v4328
      %v4370 = vunpack.c.h.b16 %v4328
      %v4371 = vunpack.c.l.b16 %v4329
      %v4372 = vunpack.c.h.b16 %v4329
      %v4373 = vunpack.c.l.b16 %v4330
      %v4374 = vunpack.c.h.b16 %v4330
      %v4375 = vunpack.c.l.b16 %v4331
      %v4376 = vunpack.c.h.b16 %v4331
      %v4377 = vunpack.c.l.b16 %v4332
      %v4378 = vunpack.c.h.b16 %v4332
      %v4379 = vunpack.c.l.b16 %v4333
      %v4380 = vunpack.c.h.b16 %v4333
      %v4381 = vunpack.c.l.b16 %v4334
      %v4382 = vunpack.c.h.b16 %v4334
      %v4383 = vpack.c.b16 %v4353, %v4351
      %v4384 = vpack.c.b16 %v4354, %v4352
      %v4385 = vpack.c.b16 %v4357, %v4355
      %v4386 = vpack.c.b16 %v4358, %v4356
      %v4387 = vpack.c.b16 %v4361, %v4359
      %v4388 = vpack.c.b16 %v4362, %v4360
      %v4389 = vpack.c.b16 %v4365, %v4363
      %v4390 = vpack.c.b16 %v4366, %v4364
      %v4391 = vpack.c.b16 %v4369, %v4367
      %v4392 = vpack.c.b16 %v4370, %v4368
      %v4393 = vpack.c.b16 %v4373, %v4371
      %v4394 = vpack.c.b16 %v4374, %v4372
      %v4395 = vpack.c.b16 %v4377, %v4375
      %v4396 = vpack.c.b16 %v4378, %v4376
      %v4397 = vpack.c.b16 %v4381, %v4379
      %v4398 = vpack.c.b16 %v4382, %v4380
      %4415 = vmatpush.bf16.msra.mxu0 %v4397
      %4416 = vmatpush.bf16.msra.mxu0 %v4395
      %4417 = vmatpush.bf16.msra.mxu0 %v4393
      %4418 = vmatpush.bf16.msra.mxu0 %v4391
      %4419 = vmatpush.bf16.msra.mxu0 %v4389
      %4420 = vmatpush.bf16.msra.mxu0 %v4387
      %4421 = vmatpush.bf16.msra.mxu0 %v4385
      %4422 = vmatpush.bf16.msra.mxu0 %v4383
      %4423 = vmatmul.bf16.gmra.mxu0 %v4310
      %v4424 = vpop.f32.mrf.mxu0
      %v4425 = vadd.f32 0.0, %v4424
      %v4426 = vpop.f32.mrf.mxu0
      %v4427 = vadd.f32 0.0, %v4426
      %4428 = vmatmul.bf16.gmra.mxu0 %v4311
      %v4429 = vpop.f32.mrf.mxu0
      %v4430 = vadd.f32 0.0, %v4429
      %v4431 = vpop.f32.mrf.mxu0
      %v4432 = vadd.f32 0.0, %v4431
      %4433 = vmatmul.bf16.gmra.mxu0 %v4312
      %v4434 = vpop.f32.mrf.mxu0
      %v4435 = vadd.f32 0.0, %v4434
      %v4436 = vpop.f32.mrf.mxu0
      %v4437 = vadd.f32 0.0, %v4436
      %4438 = vmatmul.bf16.gmra.mxu0 %v4313
      %v4439 = vpop.f32.mrf.mxu0
      %v4440 = vadd.f32 0.0, %v4439
      %v4441 = vpop.f32.mrf.mxu0
      %v4442 = vadd.f32 0.0, %v4441
      %4443 = vmatmul.bf16.gmra.mxu0 %v4314
      %v4444 = vpop.f32.mrf.mxu0
      %v4445 = vadd.f32 0.0, %v4444
      %v4446 = vpop.f32.mrf.mxu0
      %v4447 = vadd.f32 0.0, %v4446
      %4448 = vmatmul.bf16.gmra.mxu0 %v4315
      %v4449 = vpop.f32.mrf.mxu0
      %v4450 = vadd.f32 0.0, %v4449
      %v4451 = vpop.f32.mrf.mxu0
      %v4452 = vadd.f32 0.0, %v4451
      %4453 = vmatmul.bf16.gmra.mxu0 %v4316
      %v4454 = vpop.f32.mrf.mxu0
      %v4455 = vadd.f32 0.0, %v4454
      %v4456 = vpop.f32.mrf.mxu0
      %v4457 = vadd.f32 0.0, %v4456
      %4458 = vmatmul.bf16.gmra.mxu0 %v4317
      %v4459 = vpop.f32.mrf.mxu0
      %v4460 = vadd.f32 0.0, %v4459
      %v4461 = vpop.f32.mrf.mxu0
      %v4462 = vadd.f32 0.0, %v4461
      %4463 = vdwg.mxu0
      %4464 = vmatpush.bf16.msra.mxu0 %v4398
      %4465 = vmatpush.bf16.msra.mxu0 %v4396
      %4466 = vmatpush.bf16.msra.mxu0 %v4394
      %4467 = vmatpush.bf16.msra.mxu0 %v4392
      %4468 = vmatpush.bf16.msra.mxu0 %v4390
      %4469 = vmatpush.bf16.msra.mxu0 %v4388
      %4470 = vmatpush.bf16.msra.mxu0 %v4386
      %4471 = vmatpush.bf16.msra.mxu0 %v4384
      %4472 = vmatmul.bf16.gmra.mxu0 %v4310
      %v4473 = vpop.f32.mrf.mxu0
      %v4474 = vadd.f32 0.0, %v4473
      %v4475 = vpop.f32.mrf.mxu0
      %v4476 = vadd.f32 0.0, %v4475
      %4477 = vmatmul.bf16.gmra.mxu0 %v4311
      %v4478 = vpop.f32.mrf.mxu0
      %v4479 = vadd.f32 0.0, %v4478
      %v4480 = vpop.f32.mrf.mxu0
      %v4481 = vadd.f32 0.0, %v4480
      %4482 = vmatmul.bf16.gmra.mxu0 %v4312
      %v4483 = vpop.f32.mrf.mxu0
      %v4484 = vadd.f32 0.0, %v4483
      %v4485 = vpop.f32.mrf.mxu0
      %v4486 = vadd.f32 0.0, %v4485
      %4487 = vmatmul.bf16.gmra.mxu0 %v4313
      %v4488 = vpop.f32.mrf.mxu0
      %v4489 = vadd.f32 0.0, %v4488
      %v4490 = vpop.f32.mrf.mxu0
      %v4491 = vadd.f32 0.0, %v4490
      %4492 = vmatmul.bf16.gmra.mxu0 %v4314
      %v4493 = vpop.f32.mrf.mxu0
      %v4494 = vadd.f32 0.0, %v4493
      %v4495 = vpop.f32.mrf.mxu0
      %v4496 = vadd.f32 0.0, %v4495
      %4497 = vmatmul.bf16.gmra.mxu0 %v4315
      %v4498 = vpop.f32.mrf.mxu0
      %v4499 = vadd.f32 0.0, %v4498
      %v4500 = vpop.f32.mrf.mxu0
      %v4501 = vadd.f32 0.0, %v4500
      %4502 = vmatmul.bf16.gmra.mxu0 %v4316
      %v4503 = vpop.f32.mrf.mxu0
      %v4504 = vadd.f32 0.0, %v4503
      %v4505 = vpop.f32.mrf.mxu0
      %v4506 = vadd.f32 0.0, %v4505
      %4507 = vmatmul.bf16.gmra.mxu0 %v4317
      %v4508 = vpop.f32.mrf.mxu0
      %v4509 = vadd.f32 0.0, %v4508
      %v4510 = vpop.f32.mrf.mxu0
      %v4511 = vadd.f32 0.0, %v4510
      %4512 = vdwg.mxu0
      %v4513 = vadd.f32 %v4067, %v4425
      %v4514 = vadd.f32 %v4068, %v4474
      %v4515 = vadd.f32 %v4069, %v4427
      %v4516 = vadd.f32 %v4070, %v4476
      %v4517 = vadd.f32 %v4071, %v4430
      %v4518 = vadd.f32 %v4072, %v4479
      %v4519 = vadd.f32 %v4073, %v4432
      %v4520 = vadd.f32 %v4074, %v4481
      %v4521 = vadd.f32 %v4075, %v4435
      %v4522 = vadd.f32 %v4076, %v4484
      %v4523 = vadd.f32 %v4077, %v4437
      %v4524 = vadd.f32 %v4078, %v4486
      %v4525 = vadd.f32 %v4079, %v4440
      %v4526 = vadd.f32 %v4080, %v4489
      %v4527 = vadd.f32 %v4081, %v4442
      %v4528 = vadd.f32 %v4082, %v4491
      %v4529 = vadd.f32 %v4083, %v4445
      %v4530 = vadd.f32 %v4084, %v4494
      %v4531 = vadd.f32 %v4085, %v4447
      %v4532 = vadd.f32 %v4086, %v4496
      %v4533 = vadd.f32 %v4087, %v4450
      %v4534 = vadd.f32 %v4088, %v4499
      %v4535 = vadd.f32 %v4089, %v4452
      %v4536 = vadd.f32 %v4090, %v4501
      %v4537 = vadd.f32 %v4091, %v4455
      %v4538 = vadd.f32 %v4092, %v4504
      %v4539 = vadd.f32 %v4093, %v4457
      %v4540 = vadd.f32 %v4094, %v4506
      %v4541 = vadd.f32 %v4095, %v4460
      %v4542 = vadd.f32 %v4096, %v4509
      %v4543 = vadd.f32 %v4097, %v4462
      %v4544 = vadd.f32 %v4098, %v4511
      %s4545 = scalar_lea.vmem %s3, 896
      %v4546 = vld [vmem:[%s4545] sm:$0xff]
      %v4547 = vld [vmem:[%s4545 + $0x8] sm:$0xff]
      %v4548 = vld [vmem:[%s4545 + $0x10] sm:$0xff]
      %v4549 = vld [vmem:[%s4545 + $0x18] sm:$0xff]
      %v4550 = vld [vmem:[%s4545 + $0x20] sm:$0xff]
      %v4551 = vld [vmem:[%s4545 + $0x28] sm:$0xff]
      %v4552 = vld [vmem:[%s4545 + $0x30] sm:$0xff]
      %v4553 = vld [vmem:[%s4545 + $0x38] sm:$0xff]
      %v4554 = vld [vmem:[%s4545 + $0x40] sm:$0xff]
      %v4555 = vld [vmem:[%s4545 + $0x48] sm:$0xff]
      %v4556 = vld [vmem:[%s4545 + $0x50] sm:$0xff]
      %v4557 = vld [vmem:[%s4545 + $0x58] sm:$0xff]
      %v4558 = vld [vmem:[%s4545 + $0x60] sm:$0xff]
      %v4559 = vld [vmem:[%s4545 + $0x68] sm:$0xff]
      %v4560 = vld [vmem:[%s4545 + $0x70] sm:$0xff]
      %v4561 = vld [vmem:[%s4545 + $0x78] sm:$0xff]
      %v4578 = vunpack.c.l.b16 %v4546
      %v4579 = vunpack.c.h.b16 %v4546
      %v4580 = vunpack.c.l.b16 %v4547
      %v4581 = vunpack.c.h.b16 %v4547
      %v4582 = vunpack.c.l.b16 %v4548
      %v4583 = vunpack.c.h.b16 %v4548
      %v4584 = vunpack.c.l.b16 %v4549
      %v4585 = vunpack.c.h.b16 %v4549
      %v4586 = vunpack.c.l.b16 %v4550
      %v4587 = vunpack.c.h.b16 %v4550
      %v4588 = vunpack.c.l.b16 %v4551
      %v4589 = vunpack.c.h.b16 %v4551
      %v4590 = vunpack.c.l.b16 %v4552
      %v4591 = vunpack.c.h.b16 %v4552
      %v4592 = vunpack.c.l.b16 %v4553
      %v4593 = vunpack.c.h.b16 %v4553
      %v4594 = vunpack.c.l.b16 %v4554
      %v4595 = vunpack.c.h.b16 %v4554
      %v4596 = vunpack.c.l.b16 %v4555
      %v4597 = vunpack.c.h.b16 %v4555
      %v4598 = vunpack.c.l.b16 %v4556
      %v4599 = vunpack.c.h.b16 %v4556
      %v4600 = vunpack.c.l.b16 %v4557
      %v4601 = vunpack.c.h.b16 %v4557
      %v4602 = vunpack.c.l.b16 %v4558
      %v4603 = vunpack.c.h.b16 %v4558
      %v4604 = vunpack.c.l.b16 %v4559
      %v4605 = vunpack.c.h.b16 %v4559
      %v4606 = vunpack.c.l.b16 %v4560
      %v4607 = vunpack.c.h.b16 %v4560
      %v4608 = vunpack.c.l.b16 %v4561
      %v4609 = vunpack.c.h.b16 %v4561
      %v4610 = vpack.c.b16 %v4580, %v4578
      %v4611 = vpack.c.b16 %v4581, %v4579
      %v4612 = vpack.c.b16 %v4584, %v4582
      %v4613 = vpack.c.b16 %v4585, %v4583
      %v4614 = vpack.c.b16 %v4588, %v4586
      %v4615 = vpack.c.b16 %v4589, %v4587
      %v4616 = vpack.c.b16 %v4592, %v4590
      %v4617 = vpack.c.b16 %v4593, %v4591
      %v4618 = vpack.c.b16 %v4596, %v4594
      %v4619 = vpack.c.b16 %v4597, %v4595
      %v4620 = vpack.c.b16 %v4600, %v4598
      %v4621 = vpack.c.b16 %v4601, %v4599
      %v4622 = vpack.c.b16 %v4604, %v4602
      %v4623 = vpack.c.b16 %v4605, %v4603
      %v4624 = vpack.c.b16 %v4608, %v4606
      %v4625 = vpack.c.b16 %v4609, %v4607
      %v4635 = vsel %vm1576, %v4611, 0
      %v4638 = vsel %vm1576, %v4613, 0
      %v4641 = vsel %vm1576, %v4615, 0
      %v4644 = vsel %vm1576, %v4617, 0
      %v4647 = vsel %vm1576, %v4619, 0
      %v4650 = vsel %vm1576, %v4621, 0
      %v4653 = vsel %vm1576, %v4623, 0
      %v4656 = vsel %vm1576, %v4625, 0
      %4658 = vmatpush.bf16.msra.mxu0 %v1484
      %4659 = vmatpush.bf16.msra.mxu0 %v1483
      %4660 = vmatpush.bf16.msra.mxu0 %v1482
      %4661 = vmatpush.bf16.msra.mxu0 %v1481
      %4662 = vmatpush.bf16.msra.mxu0 %v1480
      %4663 = vmatpush.bf16.msra.mxu0 %v1479
      %4664 = vmatpush.bf16.msra.mxu0 %v1478
      %4665 = vmatpush.bf16.msra.mxu0 %v1477
      %4666 = vmatmul.bf16.gmra.mxu0 %v4610
      %v4667 = vpop.f32.mrf.mxu0
      %v4668 = vadd.f32 0.0, %v4667
      %v4669 = vpop.f32.mrf.mxu0
      %v4670 = vadd.f32 0.0, %v4669
      %4671 = vmatmul.bf16.gmra.mxu0 %v4612
      %v4672 = vpop.f32.mrf.mxu0
      %v4673 = vadd.f32 0.0, %v4672
      %v4674 = vpop.f32.mrf.mxu0
      %v4675 = vadd.f32 0.0, %v4674
      %4676 = vmatmul.bf16.gmra.mxu0 %v4614
      %v4677 = vpop.f32.mrf.mxu0
      %v4678 = vadd.f32 0.0, %v4677
      %v4679 = vpop.f32.mrf.mxu0
      %v4680 = vadd.f32 0.0, %v4679
      %4681 = vmatmul.bf16.gmra.mxu0 %v4616
      %v4682 = vpop.f32.mrf.mxu0
      %v4683 = vadd.f32 0.0, %v4682
      %v4684 = vpop.f32.mrf.mxu0
      %v4685 = vadd.f32 0.0, %v4684
      %4686 = vmatmul.bf16.gmra.mxu0 %v4618
      %v4687 = vpop.f32.mrf.mxu0
      %v4688 = vadd.f32 0.0, %v4687
      %v4689 = vpop.f32.mrf.mxu0
      %v4690 = vadd.f32 0.0, %v4689
      %4691 = vmatmul.bf16.gmra.mxu0 %v4620
      %v4692 = vpop.f32.mrf.mxu0
      %v4693 = vadd.f32 0.0, %v4692
      %v4694 = vpop.f32.mrf.mxu0
      %v4695 = vadd.f32 0.0, %v4694
      %4696 = vmatmul.bf16.gmra.mxu0 %v4622
      %v4697 = vpop.f32.mrf.mxu0
      %v4698 = vadd.f32 0.0, %v4697
      %v4699 = vpop.f32.mrf.mxu0
      %v4700 = vadd.f32 0.0, %v4699
      %4701 = vmatmul.bf16.gmra.mxu0 %v4624
      %v4702 = vpop.f32.mrf.mxu0
      %v4703 = vadd.f32 0.0, %v4702
      %v4704 = vpop.f32.mrf.mxu0
      %v4705 = vadd.f32 0.0, %v4704
      %4706 = vdwg.mxu0
      %4707 = vmatpush.bf16.msra.mxu0 0
      %4708 = vmatpush.bf16.msra.mxu0 0
      %4709 = vmatpush.bf16.msra.mxu0 0
      %4710 = vmatpush.bf16.msra.mxu0 0
      %4711 = vmatpush.bf16.msra.mxu0 0
      %4712 = vmatpush.bf16.msra.mxu0 %v1487
      %4713 = vmatpush.bf16.msra.mxu0 %v1486
      %4714 = vmatpush.bf16.msra.mxu0 %v1485
      %4715 = vmatmul.bf16.gmra.mxu0 %v4635
      %v4716 = vpop.f32.mrf.mxu0
      %v4717 = vadd.f32 %v4668, %v4716
      %v4718 = vpop.f32.mrf.mxu0
      %v4719 = vadd.f32 %v4670, %v4718
      %4720 = vmatmul.bf16.gmra.mxu0 %v4638
      %v4721 = vpop.f32.mrf.mxu0
      %v4722 = vadd.f32 %v4673, %v4721
      %v4723 = vpop.f32.mrf.mxu0
      %v4724 = vadd.f32 %v4675, %v4723
      %4725 = vmatmul.bf16.gmra.mxu0 %v4641
      %v4726 = vpop.f32.mrf.mxu0
      %v4727 = vadd.f32 %v4678, %v4726
      %v4728 = vpop.f32.mrf.mxu0
      %v4729 = vadd.f32 %v4680, %v4728
      %4730 = vmatmul.bf16.gmra.mxu0 %v4644
      %v4731 = vpop.f32.mrf.mxu0
      %v4732 = vadd.f32 %v4683, %v4731
      %v4733 = vpop.f32.mrf.mxu0
      %v4734 = vadd.f32 %v4685, %v4733
      %4735 = vmatmul.bf16.gmra.mxu0 %v4647
      %v4736 = vpop.f32.mrf.mxu0
      %v4737 = vadd.f32 %v4688, %v4736
      %v4738 = vpop.f32.mrf.mxu0
      %v4739 = vadd.f32 %v4690, %v4738
      %4740 = vmatmul.bf16.gmra.mxu0 %v4650
      %v4741 = vpop.f32.mrf.mxu0
      %v4742 = vadd.f32 %v4693, %v4741
      %v4743 = vpop.f32.mrf.mxu0
      %v4744 = vadd.f32 %v4695, %v4743
      %4745 = vmatmul.bf16.gmra.mxu0 %v4653
      %v4746 = vpop.f32.mrf.mxu0
      %v4747 = vadd.f32 %v4698, %v4746
      %v4748 = vpop.f32.mrf.mxu0
      %v4749 = vadd.f32 %v4700, %v4748
      %4750 = vmatmul.bf16.gmra.mxu0 %v4656
      %v4751 = vpop.f32.mrf.mxu0
      %v4752 = vadd.f32 %v4703, %v4751
      %v4753 = vpop.f32.mrf.mxu0
      %v4754 = vadd.f32 %v4705, %v4753
      %4755 = vdwg.mxu0
      %v4756 = vpack.c.bf16 %v4719, %v4717
      %v4757 = vpack.c.bf16 %v4724, %v4722
      %v4758 = vpack.c.bf16 %v4729, %v4727
      %v4759 = vpack.c.bf16 %v4734, %v4732
      %v4760 = vpack.c.bf16 %v4739, %v4737
      %v4761 = vpack.c.bf16 %v4744, %v4742
      %v4762 = vpack.c.bf16 %v4749, %v4747
      %v4763 = vpack.c.bf16 %v4754, %v4752
      %s4764 = scalar_lea.vmem %s4, 896
      %v4765 = vld [vmem:[%s4764] sm:$0xff]
      %v4766 = vld [vmem:[%s4764 + $0x8] sm:$0xff]
      %v4767 = vld [vmem:[%s4764 + $0x10] sm:$0xff]
      %v4768 = vld [vmem:[%s4764 + $0x18] sm:$0xff]
      %v4769 = vld [vmem:[%s4764 + $0x20] sm:$0xff]
      %v4770 = vld [vmem:[%s4764 + $0x28] sm:$0xff]
      %v4771 = vld [vmem:[%s4764 + $0x30] sm:$0xff]
      %v4772 = vld [vmem:[%s4764 + $0x38] sm:$0xff]
      %v4773 = vld [vmem:[%s4764 + $0x40] sm:$0xff]
      %v4774 = vld [vmem:[%s4764 + $0x48] sm:$0xff]
      %v4775 = vld [vmem:[%s4764 + $0x50] sm:$0xff]
      %v4776 = vld [vmem:[%s4764 + $0x58] sm:$0xff]
      %v4777 = vld [vmem:[%s4764 + $0x60] sm:$0xff]
      %v4778 = vld [vmem:[%s4764 + $0x68] sm:$0xff]
      %v4779 = vld [vmem:[%s4764 + $0x70] sm:$0xff]
      %v4780 = vld [vmem:[%s4764 + $0x78] sm:$0xff]
      %v4797 = vunpack.c.l.b16 %v4765
      %v4798 = vunpack.c.h.b16 %v4765
      %v4799 = vunpack.c.l.b16 %v4766
      %v4800 = vunpack.c.h.b16 %v4766
      %v4801 = vunpack.c.l.b16 %v4767
      %v4802 = vunpack.c.h.b16 %v4767
      %v4803 = vunpack.c.l.b16 %v4768
      %v4804 = vunpack.c.h.b16 %v4768
      %v4805 = vunpack.c.l.b16 %v4769
      %v4806 = vunpack.c.h.b16 %v4769
      %v4807 = vunpack.c.l.b16 %v4770
      %v4808 = vunpack.c.h.b16 %v4770
      %v4809 = vunpack.c.l.b16 %v4771
      %v4810 = vunpack.c.h.b16 %v4771
      %v4811 = vunpack.c.l.b16 %v4772
      %v4812 = vunpack.c.h.b16 %v4772
      %v4813 = vunpack.c.l.b16 %v4773
      %v4814 = vunpack.c.h.b16 %v4773
      %v4815 = vunpack.c.l.b16 %v4774
      %v4816 = vunpack.c.h.b16 %v4774
      %v4817 = vunpack.c.l.b16 %v4775
      %v4818 = vunpack.c.h.b16 %v4775
      %v4819 = vunpack.c.l.b16 %v4776
      %v4820 = vunpack.c.h.b16 %v4776
      %v4821 = vunpack.c.l.b16 %v4777
      %v4822 = vunpack.c.h.b16 %v4777
      %v4823 = vunpack.c.l.b16 %v4778
      %v4824 = vunpack.c.h.b16 %v4778
      %v4825 = vunpack.c.l.b16 %v4779
      %v4826 = vunpack.c.h.b16 %v4779
      %v4827 = vunpack.c.l.b16 %v4780
      %v4828 = vunpack.c.h.b16 %v4780
      %v4829 = vpack.c.b16 %v4799, %v4797
      %v4830 = vpack.c.b16 %v4800, %v4798
      %v4831 = vpack.c.b16 %v4803, %v4801
      %v4832 = vpack.c.b16 %v4804, %v4802
      %v4833 = vpack.c.b16 %v4807, %v4805
      %v4834 = vpack.c.b16 %v4808, %v4806
      %v4835 = vpack.c.b16 %v4811, %v4809
      %v4836 = vpack.c.b16 %v4812, %v4810
      %v4837 = vpack.c.b16 %v4815, %v4813
      %v4838 = vpack.c.b16 %v4816, %v4814
      %v4839 = vpack.c.b16 %v4819, %v4817
      %v4840 = vpack.c.b16 %v4820, %v4818
      %v4841 = vpack.c.b16 %v4823, %v4821
      %v4842 = vpack.c.b16 %v4824, %v4822
      %v4843 = vpack.c.b16 %v4827, %v4825
      %v4844 = vpack.c.b16 %v4828, %v4826
      %4861 = vmatpush.bf16.msra.mxu0 %v4843
      %4862 = vmatpush.bf16.msra.mxu0 %v4841
      %4863 = vmatpush.bf16.msra.mxu0 %v4839
      %4864 = vmatpush.bf16.msra.mxu0 %v4837
      %4865 = vmatpush.bf16.msra.mxu0 %v4835
      %4866 = vmatpush.bf16.msra.mxu0 %v4833
      %4867 = vmatpush.bf16.msra.mxu0 %v4831
      %4868 = vmatpush.bf16.msra.mxu0 %v4829
      %4869 = vmatmul.bf16.gmra.mxu0 %v4756
      %v4870 = vpop.f32.mrf.mxu0
      %v4871 = vadd.f32 0.0, %v4870
      %v4872 = vpop.f32.mrf.mxu0
      %v4873 = vadd.f32 0.0, %v4872
      %4874 = vmatmul.bf16.gmra.mxu0 %v4757
      %v4875 = vpop.f32.mrf.mxu0
      %v4876 = vadd.f32 0.0, %v4875
      %v4877 = vpop.f32.mrf.mxu0
      %v4878 = vadd.f32 0.0, %v4877
      %4879 = vmatmul.bf16.gmra.mxu0 %v4758
      %v4880 = vpop.f32.mrf.mxu0
      %v4881 = vadd.f32 0.0, %v4880
      %v4882 = vpop.f32.mrf.mxu0
      %v4883 = vadd.f32 0.0, %v4882
      %4884 = vmatmul.bf16.gmra.mxu0 %v4759
      %v4885 = vpop.f32.mrf.mxu0
      %v4886 = vadd.f32 0.0, %v4885
      %v4887 = vpop.f32.mrf.mxu0
      %v4888 = vadd.f32 0.0, %v4887
      %4889 = vmatmul.bf16.gmra.mxu0 %v4760
      %v4890 = vpop.f32.mrf.mxu0
      %v4891 = vadd.f32 0.0, %v4890
      %v4892 = vpop.f32.mrf.mxu0
      %v4893 = vadd.f32 0.0, %v4892
      %4894 = vmatmul.bf16.gmra.mxu0 %v4761
      %v4895 = vpop.f32.mrf.mxu0
      %v4896 = vadd.f32 0.0, %v4895
      %v4897 = vpop.f32.mrf.mxu0
      %v4898 = vadd.f32 0.0, %v4897
      %4899 = vmatmul.bf16.gmra.mxu0 %v4762
      %v4900 = vpop.f32.mrf.mxu0
      %v4901 = vadd.f32 0.0, %v4900
      %v4902 = vpop.f32.mrf.mxu0
      %v4903 = vadd.f32 0.0, %v4902
      %4904 = vmatmul.bf16.gmra.mxu0 %v4763
      %v4905 = vpop.f32.mrf.mxu0
      %v4906 = vadd.f32 0.0, %v4905
      %v4907 = vpop.f32.mrf.mxu0
      %v4908 = vadd.f32 0.0, %v4907
      %4909 = vdwg.mxu0
      %4910 = vmatpush.bf16.msra.mxu0 %v4844
      %4911 = vmatpush.bf16.msra.mxu0 %v4842
      %4912 = vmatpush.bf16.msra.mxu0 %v4840
      %4913 = vmatpush.bf16.msra.mxu0 %v4838
      %4914 = vmatpush.bf16.msra.mxu0 %v4836
      %4915 = vmatpush.bf16.msra.mxu0 %v4834
      %4916 = vmatpush.bf16.msra.mxu0 %v4832
      %4917 = vmatpush.bf16.msra.mxu0 %v4830
      %4918 = vmatmul.bf16.gmra.mxu0 %v4756
      %v4919 = vpop.f32.mrf.mxu0
      %v4920 = vadd.f32 0.0, %v4919
      %v4921 = vpop.f32.mrf.mxu0
      %v4922 = vadd.f32 0.0, %v4921
      %4923 = vmatmul.bf16.gmra.mxu0 %v4757
      %v4924 = vpop.f32.mrf.mxu0
      %v4925 = vadd.f32 0.0, %v4924
      %v4926 = vpop.f32.mrf.mxu0
      %v4927 = vadd.f32 0.0, %v4926
      %4928 = vmatmul.bf16.gmra.mxu0 %v4758
      %v4929 = vpop.f32.mrf.mxu0
      %v4930 = vadd.f32 0.0, %v4929
      %v4931 = vpop.f32.mrf.mxu0
      %v4932 = vadd.f32 0.0, %v4931
      %4933 = vmatmul.bf16.gmra.mxu0 %v4759
      %v4934 = vpop.f32.mrf.mxu0
      %v4935 = vadd.f32 0.0, %v4934
      %v4936 = vpop.f32.mrf.mxu0
      %v4937 = vadd.f32 0.0, %v4936
      %4938 = vmatmul.bf16.gmra.mxu0 %v4760
      %v4939 = vpop.f32.mrf.mxu0
      %v4940 = vadd.f32 0.0, %v4939
      %v4941 = vpop.f32.mrf.mxu0
      %v4942 = vadd.f32 0.0, %v4941
      %4943 = vmatmul.bf16.gmra.mxu0 %v4761
      %v4944 = vpop.f32.mrf.mxu0
      %v4945 = vadd.f32 0.0, %v4944
      %v4946 = vpop.f32.mrf.mxu0
      %v4947 = vadd.f32 0.0, %v4946
      %4948 = vmatmul.bf16.gmra.mxu0 %v4762
      %v4949 = vpop.f32.mrf.mxu0
      %v4950 = vadd.f32 0.0, %v4949
      %v4951 = vpop.f32.mrf.mxu0
      %v4952 = vadd.f32 0.0, %v4951
      %4953 = vmatmul.bf16.gmra.mxu0 %v4763
      %v4954 = vpop.f32.mrf.mxu0
      %v4955 = vadd.f32 0.0, %v4954
      %v4956 = vpop.f32.mrf.mxu0
      %v4957 = vadd.f32 0.0, %v4956
      %4958 = vdwg.mxu0
      %v4959 = vadd.f32 %v4513, %v4871
      %v4960 = vadd.f32 %v4514, %v4920
      %v4961 = vadd.f32 %v4515, %v4873
      %v4962 = vadd.f32 %v4516, %v4922
      %v4963 = vadd.f32 %v4517, %v4876
      %v4964 = vadd.f32 %v4518, %v4925
      %v4965 = vadd.f32 %v4519, %v4878
      %v4966 = vadd.f32 %v4520, %v4927
      %v4967 = vadd.f32 %v4521, %v4881
      %v4968 = vadd.f32 %v4522, %v4930
      %v4969 = vadd.f32 %v4523, %v4883
      %v4970 = vadd.f32 %v4524, %v4932
      %v4971 = vadd.f32 %v4525, %v4886
      %v4972 = vadd.f32 %v4526, %v4935
      %v4973 = vadd.f32 %v4527, %v4888
      %v4974 = vadd.f32 %v4528, %v4937
      %v4975 = vadd.f32 %v4529, %v4891
      %v4976 = vadd.f32 %v4530, %v4940
      %v4977 = vadd.f32 %v4531, %v4893
      %v4978 = vadd.f32 %v4532, %v4942
      %v4979 = vadd.f32 %v4533, %v4896
      %v4980 = vadd.f32 %v4534, %v4945
      %v4981 = vadd.f32 %v4535, %v4898
      %v4982 = vadd.f32 %v4536, %v4947
      %v4983 = vadd.f32 %v4537, %v4901
      %v4984 = vadd.f32 %v4538, %v4950
      %v4985 = vadd.f32 %v4539, %v4903
      %v4986 = vadd.f32 %v4540, %v4952
      %v4987 = vadd.f32 %v4541, %v4906
      %v4988 = vadd.f32 %v4542, %v4955
      %v4989 = vadd.f32 %v4543, %v4908
      %v4990 = vadd.f32 %v4544, %v4957
      %s4991 = scalar_lea.vmem %s3, 1024
      %v4992 = vld [vmem:[%s4991] sm:$0xff]
      %v4993 = vld [vmem:[%s4991 + $0x8] sm:$0xff]
      %v4994 = vld [vmem:[%s4991 + $0x10] sm:$0xff]
      %v4995 = vld [vmem:[%s4991 + $0x18] sm:$0xff]
      %v4996 = vld [vmem:[%s4991 + $0x20] sm:$0xff]
      %v4997 = vld [vmem:[%s4991 + $0x28] sm:$0xff]
      %v4998 = vld [vmem:[%s4991 + $0x30] sm:$0xff]
      %v4999 = vld [vmem:[%s4991 + $0x38] sm:$0xff]
      %v5000 = vld [vmem:[%s4991 + $0x40] sm:$0xff]
      %v5001 = vld [vmem:[%s4991 + $0x48] sm:$0xff]
      %v5002 = vld [vmem:[%s4991 + $0x50] sm:$0xff]
      %v5003 = vld [vmem:[%s4991 + $0x58] sm:$0xff]
      %v5004 = vld [vmem:[%s4991 + $0x60] sm:$0xff]
      %v5005 = vld [vmem:[%s4991 + $0x68] sm:$0xff]
      %v5006 = vld [vmem:[%s4991 + $0x70] sm:$0xff]
      %v5007 = vld [vmem:[%s4991 + $0x78] sm:$0xff]
      %v5024 = vunpack.c.l.b16 %v4992
      %v5025 = vunpack.c.h.b16 %v4992
      %v5026 = vunpack.c.l.b16 %v4993
      %v5027 = vunpack.c.h.b16 %v4993
      %v5028 = vunpack.c.l.b16 %v4994
      %v5029 = vunpack.c.h.b16 %v4994
      %v5030 = vunpack.c.l.b16 %v4995
      %v5031 = vunpack.c.h.b16 %v4995
      %v5032 = vunpack.c.l.b16 %v4996
      %v5033 = vunpack.c.h.b16 %v4996
      %v5034 = vunpack.c.l.b16 %v4997
      %v5035 = vunpack.c.h.b16 %v4997
      %v5036 = vunpack.c.l.b16 %v4998
      %v5037 = vunpack.c.h.b16 %v4998
      %v5038 = vunpack.c.l.b16 %v4999
      %v5039 = vunpack.c.h.b16 %v4999
      %v5040 = vunpack.c.l.b16 %v5000
      %v5041 = vunpack.c.h.b16 %v5000
      %v5042 = vunpack.c.l.b16 %v5001
      %v5043 = vunpack.c.h.b16 %v5001
      %v5044 = vunpack.c.l.b16 %v5002
      %v5045 = vunpack.c.h.b16 %v5002
      %v5046 = vunpack.c.l.b16 %v5003
      %v5047 = vunpack.c.h.b16 %v5003
      %v5048 = vunpack.c.l.b16 %v5004
      %v5049 = vunpack.c.h.b16 %v5004
      %v5050 = vunpack.c.l.b16 %v5005
      %v5051 = vunpack.c.h.b16 %v5005
      %v5052 = vunpack.c.l.b16 %v5006
      %v5053 = vunpack.c.h.b16 %v5006
      %v5054 = vunpack.c.l.b16 %v5007
      %v5055 = vunpack.c.h.b16 %v5007
      %v5056 = vpack.c.b16 %v5026, %v5024
      %v5057 = vpack.c.b16 %v5027, %v5025
      %v5058 = vpack.c.b16 %v5030, %v5028
      %v5059 = vpack.c.b16 %v5031, %v5029
      %v5060 = vpack.c.b16 %v5034, %v5032
      %v5061 = vpack.c.b16 %v5035, %v5033
      %v5062 = vpack.c.b16 %v5038, %v5036
      %v5063 = vpack.c.b16 %v5039, %v5037
      %v5064 = vpack.c.b16 %v5042, %v5040
      %v5065 = vpack.c.b16 %v5043, %v5041
      %v5066 = vpack.c.b16 %v5046, %v5044
      %v5067 = vpack.c.b16 %v5047, %v5045
      %v5068 = vpack.c.b16 %v5050, %v5048
      %v5069 = vpack.c.b16 %v5051, %v5049
      %v5070 = vpack.c.b16 %v5054, %v5052
      %v5071 = vpack.c.b16 %v5055, %v5053
      %v5081 = vsel %vm1576, %v5057, 0
      %v5084 = vsel %vm1576, %v5059, 0
      %v5087 = vsel %vm1576, %v5061, 0
      %v5090 = vsel %vm1576, %v5063, 0
      %v5093 = vsel %vm1576, %v5065, 0
      %v5096 = vsel %vm1576, %v5067, 0
      %v5099 = vsel %vm1576, %v5069, 0
      %v5102 = vsel %vm1576, %v5071, 0
      %5104 = vmatpush.bf16.msra.mxu0 %v1484
      %5105 = vmatpush.bf16.msra.mxu0 %v1483
      %5106 = vmatpush.bf16.msra.mxu0 %v1482
      %5107 = vmatpush.bf16.msra.mxu0 %v1481
      %5108 = vmatpush.bf16.msra.mxu0 %v1480
      %5109 = vmatpush.bf16.msra.mxu0 %v1479
      %5110 = vmatpush.bf16.msra.mxu0 %v1478
      %5111 = vmatpush.bf16.msra.mxu0 %v1477
      %5112 = vmatmul.bf16.gmra.mxu0 %v5056
      %v5113 = vpop.f32.mrf.mxu0
      %v5114 = vadd.f32 0.0, %v5113
      %v5115 = vpop.f32.mrf.mxu0
      %v5116 = vadd.f32 0.0, %v5115
      %5117 = vmatmul.bf16.gmra.mxu0 %v5058
      %v5118 = vpop.f32.mrf.mxu0
      %v5119 = vadd.f32 0.0, %v5118
      %v5120 = vpop.f32.mrf.mxu0
      %v5121 = vadd.f32 0.0, %v5120
      %5122 = vmatmul.bf16.gmra.mxu0 %v5060
      %v5123 = vpop.f32.mrf.mxu0
      %v5124 = vadd.f32 0.0, %v5123
      %v5125 = vpop.f32.mrf.mxu0
      %v5126 = vadd.f32 0.0, %v5125
      %5127 = vmatmul.bf16.gmra.mxu0 %v5062
      %v5128 = vpop.f32.mrf.mxu0
      %v5129 = vadd.f32 0.0, %v5128
      %v5130 = vpop.f32.mrf.mxu0
      %v5131 = vadd.f32 0.0, %v5130
      %5132 = vmatmul.bf16.gmra.mxu0 %v5064
      %v5133 = vpop.f32.mrf.mxu0
      %v5134 = vadd.f32 0.0, %v5133
      %v5135 = vpop.f32.mrf.mxu0
      %v5136 = vadd.f32 0.0, %v5135
      %5137 = vmatmul.bf16.gmra.mxu0 %v5066
      %v5138 = vpop.f32.mrf.mxu0
      %v5139 = vadd.f32 0.0, %v5138
      %v5140 = vpop.f32.mrf.mxu0
      %v5141 = vadd.f32 0.0, %v5140
      %5142 = vmatmul.bf16.gmra.mxu0 %v5068
      %v5143 = vpop.f32.mrf.mxu0
      %v5144 = vadd.f32 0.0, %v5143
      %v5145 = vpop.f32.mrf.mxu0
      %v5146 = vadd.f32 0.0, %v5145
      %5147 = vmatmul.bf16.gmra.mxu0 %v5070
      %v5148 = vpop.f32.mrf.mxu0
      %v5149 = vadd.f32 0.0, %v5148
      %v5150 = vpop.f32.mrf.mxu0
      %v5151 = vadd.f32 0.0, %v5150
      %5152 = vdwg.mxu0
      %5153 = vmatpush.bf16.msra.mxu0 0
      %5154 = vmatpush.bf16.msra.mxu0 0
      %5155 = vmatpush.bf16.msra.mxu0 0
      %5156 = vmatpush.bf16.msra.mxu0 0
      %5157 = vmatpush.bf16.msra.mxu0 0
      %5158 = vmatpush.bf16.msra.mxu0 %v1487
      %5159 = vmatpush.bf16.msra.mxu0 %v1486
      %5160 = vmatpush.bf16.msra.mxu0 %v1485
      %5161 = vmatmul.bf16.gmra.mxu0 %v5081
      %v5162 = vpop.f32.mrf.mxu0
      %v5163 = vadd.f32 %v5114, %v5162
      %v5164 = vpop.f32.mrf.mxu0
      %v5165 = vadd.f32 %v5116, %v5164
      %5166 = vmatmul.bf16.gmra.mxu0 %v5084
      %v5167 = vpop.f32.mrf.mxu0
      %v5168 = vadd.f32 %v5119, %v5167
      %v5169 = vpop.f32.mrf.mxu0
      %v5170 = vadd.f32 %v5121, %v5169
      %5171 = vmatmul.bf16.gmra.mxu0 %v5087
      %v5172 = vpop.f32.mrf.mxu0
      %v5173 = vadd.f32 %v5124, %v5172
      %v5174 = vpop.f32.mrf.mxu0
      %v5175 = vadd.f32 %v5126, %v5174
      %5176 = vmatmul.bf16.gmra.mxu0 %v5090
      %v5177 = vpop.f32.mrf.mxu0
      %v5178 = vadd.f32 %v5129, %v5177
      %v5179 = vpop.f32.mrf.mxu0
      %v5180 = vadd.f32 %v5131, %v5179
      %5181 = vmatmul.bf16.gmra.mxu0 %v5093
      %v5182 = vpop.f32.mrf.mxu0
      %v5183 = vadd.f32 %v5134, %v5182
      %v5184 = vpop.f32.mrf.mxu0
      %v5185 = vadd.f32 %v5136, %v5184
      %5186 = vmatmul.bf16.gmra.mxu0 %v5096
      %v5187 = vpop.f32.mrf.mxu0
      %v5188 = vadd.f32 %v5139, %v5187
      %v5189 = vpop.f32.mrf.mxu0
      %v5190 = vadd.f32 %v5141, %v5189
      %5191 = vmatmul.bf16.gmra.mxu0 %v5099
      %v5192 = vpop.f32.mrf.mxu0
      %v5193 = vadd.f32 %v5144, %v5192
      %v5194 = vpop.f32.mrf.mxu0
      %v5195 = vadd.f32 %v5146, %v5194
      %5196 = vmatmul.bf16.gmra.mxu0 %v5102
      %v5197 = vpop.f32.mrf.mxu0
      %v5198 = vadd.f32 %v5149, %v5197
      %v5199 = vpop.f32.mrf.mxu0
      %v5200 = vadd.f32 %v5151, %v5199
      %5201 = vdwg.mxu0
      %v5202 = vpack.c.bf16 %v5165, %v5163
      %v5203 = vpack.c.bf16 %v5170, %v5168
      %v5204 = vpack.c.bf16 %v5175, %v5173
      %v5205 = vpack.c.bf16 %v5180, %v5178
      %v5206 = vpack.c.bf16 %v5185, %v5183
      %v5207 = vpack.c.bf16 %v5190, %v5188
      %v5208 = vpack.c.bf16 %v5195, %v5193
      %v5209 = vpack.c.bf16 %v5200, %v5198
      %s5210 = scalar_lea.vmem %s4, 1024
      %v5211 = vld [vmem:[%s5210] sm:$0xff]
      %v5212 = vld [vmem:[%s5210 + $0x8] sm:$0xff]
      %v5213 = vld [vmem:[%s5210 + $0x10] sm:$0xff]
      %v5214 = vld [vmem:[%s5210 + $0x18] sm:$0xff]
      %v5215 = vld [vmem:[%s5210 + $0x20] sm:$0xff]
      %v5216 = vld [vmem:[%s5210 + $0x28] sm:$0xff]
      %v5217 = vld [vmem:[%s5210 + $0x30] sm:$0xff]
      %v5218 = vld [vmem:[%s5210 + $0x38] sm:$0xff]
      %v5219 = vld [vmem:[%s5210 + $0x40] sm:$0xff]
      %v5220 = vld [vmem:[%s5210 + $0x48] sm:$0xff]
      %v5221 = vld [vmem:[%s5210 + $0x50] sm:$0xff]
      %v5222 = vld [vmem:[%s5210 + $0x58] sm:$0xff]
      %v5223 = vld [vmem:[%s5210 + $0x60] sm:$0xff]
      %v5224 = vld [vmem:[%s5210 + $0x68] sm:$0xff]
      %v5225 = vld [vmem:[%s5210 + $0x70] sm:$0xff]
      %v5226 = vld [vmem:[%s5210 + $0x78] sm:$0xff]
      %v5243 = vunpack.c.l.b16 %v5211
      %v5244 = vunpack.c.h.b16 %v5211
      %v5245 = vunpack.c.l.b16 %v5212
      %v5246 = vunpack.c.h.b16 %v5212
      %v5247 = vunpack.c.l.b16 %v5213
      %v5248 = vunpack.c.h.b16 %v5213
      %v5249 = vunpack.c.l.b16 %v5214
      %v5250 = vunpack.c.h.b16 %v5214
      %v5251 = vunpack.c.l.b16 %v5215
      %v5252 = vunpack.c.h.b16 %v5215
      %v5253 = vunpack.c.l.b16 %v5216
      %v5254 = vunpack.c.h.b16 %v5216
      %v5255 = vunpack.c.l.b16 %v5217
      %v5256 = vunpack.c.h.b16 %v5217
      %v5257 = vunpack.c.l.b16 %v5218
      %v5258 = vunpack.c.h.b16 %v5218
      %v5259 = vunpack.c.l.b16 %v5219
      %v5260 = vunpack.c.h.b16 %v5219
      %v5261 = vunpack.c.l.b16 %v5220
      %v5262 = vunpack.c.h.b16 %v5220
      %v5263 = vunpack.c.l.b16 %v5221
      %v5264 = vunpack.c.h.b16 %v5221
      %v5265 = vunpack.c.l.b16 %v5222
      %v5266 = vunpack.c.h.b16 %v5222
      %v5267 = vunpack.c.l.b16 %v5223
      %v5268 = vunpack.c.h.b16 %v5223
      %v5269 = vunpack.c.l.b16 %v5224
      %v5270 = vunpack.c.h.b16 %v5224
      %v5271 = vunpack.c.l.b16 %v5225
      %v5272 = vunpack.c.h.b16 %v5225
      %v5273 = vunpack.c.l.b16 %v5226
      %v5274 = vunpack.c.h.b16 %v5226
      %v5275 = vpack.c.b16 %v5245, %v5243
      %v5276 = vpack.c.b16 %v5246, %v5244
      %v5277 = vpack.c.b16 %v5249, %v5247
      %v5278 = vpack.c.b16 %v5250, %v5248
      %v5279 = vpack.c.b16 %v5253, %v5251
      %v5280 = vpack.c.b16 %v5254, %v5252
      %v5281 = vpack.c.b16 %v5257, %v5255
      %v5282 = vpack.c.b16 %v5258, %v5256
      %v5283 = vpack.c.b16 %v5261, %v5259
      %v5284 = vpack.c.b16 %v5262, %v5260
      %v5285 = vpack.c.b16 %v5265, %v5263
      %v5286 = vpack.c.b16 %v5266, %v5264
      %v5287 = vpack.c.b16 %v5269, %v5267
      %v5288 = vpack.c.b16 %v5270, %v5268
      %v5289 = vpack.c.b16 %v5273, %v5271
      %v5290 = vpack.c.b16 %v5274, %v5272
      %5307 = vmatpush.bf16.msra.mxu0 %v5289
      %5308 = vmatpush.bf16.msra.mxu0 %v5287
      %5309 = vmatpush.bf16.msra.mxu0 %v5285
      %5310 = vmatpush.bf16.msra.mxu0 %v5283
      %5311 = vmatpush.bf16.msra.mxu0 %v5281
      %5312 = vmatpush.bf16.msra.mxu0 %v5279
      %5313 = vmatpush.bf16.msra.mxu0 %v5277
      %5314 = vmatpush.bf16.msra.mxu0 %v5275
      %5315 = vmatmul.bf16.gmra.mxu0 %v5202
      %v5316 = vpop.f32.mrf.mxu0
      %v5317 = vadd.f32 0.0, %v5316
      %v5318 = vpop.f32.mrf.mxu0
      %v5319 = vadd.f32 0.0, %v5318
      %5320 = vmatmul.bf16.gmra.mxu0 %v5203
      %v5321 = vpop.f32.mrf.mxu0
      %v5322 = vadd.f32 0.0, %v5321
      %v5323 = vpop.f32.mrf.mxu0
      %v5324 = vadd.f32 0.0, %v5323
      %5325 = vmatmul.bf16.gmra.mxu0 %v5204
      %v5326 = vpop.f32.mrf.mxu0
      %v5327 = vadd.f32 0.0, %v5326
      %v5328 = vpop.f32.mrf.mxu0
      %v5329 = vadd.f32 0.0, %v5328
      %5330 = vmatmul.bf16.gmra.mxu0 %v5205
      %v5331 = vpop.f32.mrf.mxu0
      %v5332 = vadd.f32 0.0, %v5331
      %v5333 = vpop.f32.mrf.mxu0
      %v5334 = vadd.f32 0.0, %v5333
      %5335 = vmatmul.bf16.gmra.mxu0 %v5206
      %v5336 = vpop.f32.mrf.mxu0
      %v5337 = vadd.f32 0.0, %v5336
      %v5338 = vpop.f32.mrf.mxu0
      %v5339 = vadd.f32 0.0, %v5338
      %5340 = vmatmul.bf16.gmra.mxu0 %v5207
      %v5341 = vpop.f32.mrf.mxu0
      %v5342 = vadd.f32 0.0, %v5341
      %v5343 = vpop.f32.mrf.mxu0
      %v5344 = vadd.f32 0.0, %v5343
      %5345 = vmatmul.bf16.gmra.mxu0 %v5208
      %v5346 = vpop.f32.mrf.mxu0
      %v5347 = vadd.f32 0.0, %v5346
      %v5348 = vpop.f32.mrf.mxu0
      %v5349 = vadd.f32 0.0, %v5348
      %5350 = vmatmul.bf16.gmra.mxu0 %v5209
      %v5351 = vpop.f32.mrf.mxu0
      %v5352 = vadd.f32 0.0, %v5351
      %v5353 = vpop.f32.mrf.mxu0
      %v5354 = vadd.f32 0.0, %v5353
      %5355 = vdwg.mxu0
      %5356 = vmatpush.bf16.msra.mxu0 %v5290
      %5357 = vmatpush.bf16.msra.mxu0 %v5288
      %5358 = vmatpush.bf16.msra.mxu0 %v5286
      %5359 = vmatpush.bf16.msra.mxu0 %v5284
      %5360 = vmatpush.bf16.msra.mxu0 %v5282
      %5361 = vmatpush.bf16.msra.mxu0 %v5280
      %5362 = vmatpush.bf16.msra.mxu0 %v5278
      %5363 = vmatpush.bf16.msra.mxu0 %v5276
      %5364 = vmatmul.bf16.gmra.mxu0 %v5202
      %v5365 = vpop.f32.mrf.mxu0
      %v5366 = vadd.f32 0.0, %v5365
      %v5367 = vpop.f32.mrf.mxu0
      %v5368 = vadd.f32 0.0, %v5367
      %5369 = vmatmul.bf16.gmra.mxu0 %v5203
      %v5370 = vpop.f32.mrf.mxu0
      %v5371 = vadd.f32 0.0, %v5370
      %v5372 = vpop.f32.mrf.mxu0
      %v5373 = vadd.f32 0.0, %v5372
      %5374 = vmatmul.bf16.gmra.mxu0 %v5204
      %v5375 = vpop.f32.mrf.mxu0
      %v5376 = vadd.f32 0.0, %v5375
      %v5377 = vpop.f32.mrf.mxu0
      %v5378 = vadd.f32 0.0, %v5377
      %5379 = vmatmul.bf16.gmra.mxu0 %v5205
      %v5380 = vpop.f32.mrf.mxu0
      %v5381 = vadd.f32 0.0, %v5380
      %v5382 = vpop.f32.mrf.mxu0
      %v5383 = vadd.f32 0.0, %v5382
      %5384 = vmatmul.bf16.gmra.mxu0 %v5206
      %v5385 = vpop.f32.mrf.mxu0
      %v5386 = vadd.f32 0.0, %v5385
      %v5387 = vpop.f32.mrf.mxu0
      %v5388 = vadd.f32 0.0, %v5387
      %5389 = vmatmul.bf16.gmra.mxu0 %v5207
      %v5390 = vpop.f32.mrf.mxu0
      %v5391 = vadd.f32 0.0, %v5390
      %v5392 = vpop.f32.mrf.mxu0
      %v5393 = vadd.f32 0.0, %v5392
      %5394 = vmatmul.bf16.gmra.mxu0 %v5208
      %v5395 = vpop.f32.mrf.mxu0
      %v5396 = vadd.f32 0.0, %v5395
      %v5397 = vpop.f32.mrf.mxu0
      %v5398 = vadd.f32 0.0, %v5397
      %5399 = vmatmul.bf16.gmra.mxu0 %v5209
      %v5400 = vpop.f32.mrf.mxu0
      %v5401 = vadd.f32 0.0, %v5400
      %v5402 = vpop.f32.mrf.mxu0
      %v5403 = vadd.f32 0.0, %v5402
      %5404 = vdwg.mxu0
      %v5405 = vadd.f32 %v4959, %v5317
      %v5406 = vadd.f32 %v4960, %v5366
      %v5407 = vadd.f32 %v4961, %v5319
      %v5408 = vadd.f32 %v4962, %v5368
      %v5409 = vadd.f32 %v4963, %v5322
      %v5410 = vadd.f32 %v4964, %v5371
      %v5411 = vadd.f32 %v4965, %v5324
      %v5412 = vadd.f32 %v4966, %v5373
      %v5413 = vadd.f32 %v4967, %v5327
      %v5414 = vadd.f32 %v4968, %v5376
      %v5415 = vadd.f32 %v4969, %v5329
      %v5416 = vadd.f32 %v4970, %v5378
      %v5417 = vadd.f32 %v4971, %v5332
      %v5418 = vadd.f32 %v4972, %v5381
      %v5419 = vadd.f32 %v4973, %v5334
      %v5420 = vadd.f32 %v4974, %v5383
      %v5421 = vadd.f32 %v4975, %v5337
      %v5422 = vadd.f32 %v4976, %v5386
      %v5423 = vadd.f32 %v4977, %v5339
      %v5424 = vadd.f32 %v4978, %v5388
      %v5425 = vadd.f32 %v4979, %v5342
      %v5426 = vadd.f32 %v4980, %v5391
      %v5427 = vadd.f32 %v4981, %v5344
      %v5428 = vadd.f32 %v4982, %v5393
      %v5429 = vadd.f32 %v4983, %v5347
      %v5430 = vadd.f32 %v4984, %v5396
      %v5431 = vadd.f32 %v4985, %v5349
      %v5432 = vadd.f32 %v4986, %v5398
      %v5433 = vadd.f32 %v4987, %v5352
      %v5434 = vadd.f32 %v4988, %v5401
      %v5435 = vadd.f32 %v4989, %v5354
      %v5436 = vadd.f32 %v4990, %v5403
      %v5437 = vmax.f32 %v5405, %v5413
      %v5438 = vmax.f32 %v5406, %v5414
      %v5439 = vmax.f32 %v5407, %v5415
      %v5440 = vmax.f32 %v5408, %v5416
      %v5441 = vmax.f32 %v5409, %v5417
      %v5442 = vmax.f32 %v5410, %v5418
      %v5443 = vmax.f32 %v5411, %v5419
      %v5444 = vmax.f32 %v5412, %v5420
      %v5445 = vmax.f32 %v5421, %v5429
      %v5446 = vmax.f32 %v5422, %v5430
      %v5447 = vmax.f32 %v5423, %v5431
      %v5448 = vmax.f32 %v5424, %v5432
      %v5449 = vmax.f32 %v5425, %v5433
      %v5450 = vmax.f32 %v5426, %v5434
      %v5451 = vmax.f32 %v5427, %v5435
      %v5452 = vmax.f32 %v5428, %v5436
      %v5453 = vmax.f32 %v5437, %v5445
      %v5454 = vmax.f32 %v5438, %v5446
      %v5455 = vmax.f32 %v5439, %v5447
      %v5456 = vmax.f32 %v5440, %v5448
      %v5457 = vmax.f32 %v5441, %v5449
      %v5458 = vmax.f32 %v5442, %v5450
      %v5459 = vmax.f32 %v5443, %v5451
      %v5460 = vmax.f32 %v5444, %v5452
      %v5461 = vld [vmem:[%s5] sm:$0x3]
      %v5463 = vperm.slane %v5461, 0
      %v5464 = vperm.slane %v5461, 1
      %v5467 = vadd.f32 %v5453, %v5463
      %v5468 = vadd.f32 %v5454, %v5464
      %v5469 = vadd.f32 %v5455, %v5463
      %v5470 = vadd.f32 %v5456, %v5464
      %v5471 = vadd.f32 %v5457, %v5463
      %v5472 = vadd.f32 %v5458, %v5464
      %v5473 = vadd.f32 %v5459, %v5463
      %v5474 = vadd.f32 %v5460, %v5464
      %v5475 = vmax.f32 %v5467, 0.0
      %v5476 = vmax.f32 %v5468, 0.0
      %v5477 = vmax.f32 %v5469, 0.0
      %v5478 = vmax.f32 %v5470, 0.0
      %v5479 = vmax.f32 %v5471, 0.0
      %v5480 = vmax.f32 %v5472, 0.0
      %v5481 = vmax.f32 %v5473, 0.0
      %v5482 = vmax.f32 %v5474, 0.0
      %v5483 = vpack.c.bf16 %v5477, %v5475
      %v5484 = vpack.c.bf16 %v5478, %v5476
      %v5485 = vpack.c.bf16 %v5481, %v5479
      %v5486 = vpack.c.bf16 %v5482, %v5480
      %v5487 = vld [vmem:[%s6] sm:$0xf]
      %vm5488 = vcmask 261120
      %v5490 = vsel %vm5488, %v5487, 0
      %5492 = vmatpush.bf16.msra.mxu0 0
      %5493 = vmatpush.bf16.msra.mxu0 0
      %5494 = vmatpush.bf16.msra.mxu0 0
      %5495 = vmatpush.bf16.msra.mxu0 0
      %5496 = vmatpush.bf16.msra.mxu0 0
      %5497 = vmatpush.bf16.msra.mxu0 0
      %5498 = vmatpush.bf16.msra.mxu0 %v5485
      %5499 = vmatpush.bf16.msra.mxu0 %v5483
      %5500 = vmatmul.bf16.gmra.mxu0 %v5490
      %v5501 = vpop.f32.mrf.mxu0
      %v5502 = vadd.f32 0.0, %v5501
      %v5503 = vpop.f32.mrf.mxu0
      %5504 = vdwg.mxu0
      %5505 = vmatpush.bf16.msra.mxu0 0
      %5506 = vmatpush.bf16.msra.mxu0 0
      %5507 = vmatpush.bf16.msra.mxu0 0
      %5508 = vmatpush.bf16.msra.mxu0 0
      %5509 = vmatpush.bf16.msra.mxu0 0
      %5510 = vmatpush.bf16.msra.mxu0 0
      %5511 = vmatpush.bf16.msra.mxu0 %v5486
      %5512 = vmatpush.bf16.msra.mxu0 %v5484
      %5513 = vmatmul.bf16.gmra.mxu0 %v5490
      %v5514 = vpop.f32.mrf.mxu0
      %v5515 = vadd.f32 0.0, %v5514
      %v5516 = vpop.f32.mrf.mxu0
      %5517 = vdwg.mxu0
      %v5518 = vpack.c.bf16 %v5502, %v5502
      %v5519 = vpack.c.bf16 %v5515, %v5515
      %v5520 = vld [vmem:[%s7] sm:$0xff]
      %v5521 = vld [vmem:[%s7 + $0x8] sm:$0xff]
      %v5522 = vld [vmem:[%s7 + $0x10] sm:$0xff]
      %v5523 = vld [vmem:[%s7 + $0x18] sm:$0xff]
      %v5524 = vld [vmem:[%s7 + $0x20] sm:$0xff]
      %v5525 = vld [vmem:[%s7 + $0x28] sm:$0xff]
      %v5526 = vld [vmem:[%s7 + $0x30] sm:$0xff]
      %v5527 = vld [vmem:[%s7 + $0x38] sm:$0xff]
      %v5528 = vld [vmem:[%s7 + $0x40] sm:$0xff]
      %v5529 = vld [vmem:[%s7 + $0x48] sm:$0xff]
      %v5530 = vld [vmem:[%s7 + $0x50] sm:$0xff]
      %v5531 = vld [vmem:[%s7 + $0x58] sm:$0xff]
      %v5532 = vld [vmem:[%s7 + $0x60] sm:$0xff]
      %v5533 = vld [vmem:[%s7 + $0x68] sm:$0xff]
      %v5534 = vld [vmem:[%s7 + $0x70] sm:$0xff]
      %v5535 = vld [vmem:[%s7 + $0x78] sm:$0xff]
      %v5536 = vld [vmem:[%s7 + $0x80] sm:$0xff]
      %v5537 = vld [vmem:[%s7 + $0x88] sm:$0xff]
      %v5538 = vld [vmem:[%s7 + $0x90] sm:$0xff]
      %v5539 = vld [vmem:[%s7 + $0x98] sm:$0xff]
      %v5540 = vld [vmem:[%s7 + $0xa0] sm:$0xff]
      %v5541 = vld [vmem:[%s7 + $0xa8] sm:$0xff]
      %v5542 = vld [vmem:[%s7 + $0xb0] sm:$0xff]
      %v5543 = vld [vmem:[%s7 + $0xb8] sm:$0xff]
      %v5544 = vld [vmem:[%s7 + $0xc0] sm:$0xff]
      %v5545 = vld [vmem:[%s7 + $0xc8] sm:$0xff]
      %v5546 = vld [vmem:[%s7 + $0xd0] sm:$0xff]
      %v5547 = vld [vmem:[%s7 + $0xd8] sm:$0xff]
      %v5548 = vld [vmem:[%s7 + $0xe0] sm:$0xff]
      %v5549 = vld [vmem:[%s7 + $0xe8] sm:$0xff]
      %v5550 = vld [vmem:[%s7 + $0xf0] sm:$0xff]
      %v5551 = vld [vmem:[%s7 + $0xf8] sm:$0xff]
      %s5552 = scalar_lea.vmem %s6, 4
      %v5553 = vld [vmem:[%s5552] sm:$0xf]
      %v5555 = vsel %vm5488, %v5553, 0
      %5557 = vmatpush.bf16.msra.mxu0 0
      %5558 = vmatpush.bf16.msra.mxu0 0
      %5559 = vmatpush.bf16.msra.mxu0 0
      %5560 = vmatpush.bf16.msra.mxu0 0
      %5561 = vmatpush.bf16.msra.mxu0 0
      %5562 = vmatpush.bf16.msra.mxu0 0
      %5563 = vmatpush.bf16.msra.mxu0 %v5485
      %5564 = vmatpush.bf16.msra.mxu0 %v5483
      %5565 = vmatmul.bf16.gmra.mxu0 %v5555
      %v5566 = vpop.f32.mrf.mxu0
      %v5567 = vadd.f32 0.0, %v5566
      %v5568 = vpop.f32.mrf.mxu0
      %5569 = vdwg.mxu0
      %5570 = vmatpush.bf16.msra.mxu0 0
      %5571 = vmatpush.bf16.msra.mxu0 0
      %5572 = vmatpush.bf16.msra.mxu0 0
      %5573 = vmatpush.bf16.msra.mxu0 0
      %5574 = vmatpush.bf16.msra.mxu0 0
      %5575 = vmatpush.bf16.msra.mxu0 0
      %5576 = vmatpush.bf16.msra.mxu0 %v5486
      %5577 = vmatpush.bf16.msra.mxu0 %v5484
      %5578 = vmatmul.bf16.gmra.mxu0 %v5555
      %v5579 = vpop.f32.mrf.mxu0
      %v5580 = vadd.f32 0.0, %v5579
      %v5581 = vpop.f32.mrf.mxu0
      %5582 = vdwg.mxu0
      %v5583 = vpack.c.bf16 %v5567, %v5567
      %v5584 = vpack.c.bf16 %v5580, %v5580
      %s5585 = scalar_lea.vmem %s7, 256
      %v5586 = vld [vmem:[%s5585] sm:$0xff]
      %v5587 = vld [vmem:[%s5585 + $0x8] sm:$0xff]
      %v5588 = vld [vmem:[%s5585 + $0x10] sm:$0xff]
      %v5589 = vld [vmem:[%s5585 + $0x18] sm:$0xff]
      %v5590 = vld [vmem:[%s5585 + $0x20] sm:$0xff]
      %v5591 = vld [vmem:[%s5585 + $0x28] sm:$0xff]
      %v5592 = vld [vmem:[%s5585 + $0x30] sm:$0xff]
      %v5593 = vld [vmem:[%s5585 + $0x38] sm:$0xff]
      %v5594 = vld [vmem:[%s5585 + $0x40] sm:$0xff]
      %v5595 = vld [vmem:[%s5585 + $0x48] sm:$0xff]
      %v5596 = vld [vmem:[%s5585 + $0x50] sm:$0xff]
      %v5597 = vld [vmem:[%s5585 + $0x58] sm:$0xff]
      %v5598 = vld [vmem:[%s5585 + $0x60] sm:$0xff]
      %v5599 = vld [vmem:[%s5585 + $0x68] sm:$0xff]
      %v5600 = vld [vmem:[%s5585 + $0x70] sm:$0xff]
      %v5601 = vld [vmem:[%s5585 + $0x78] sm:$0xff]
      %v5602 = vld [vmem:[%s5585 + $0x80] sm:$0xff]
      %v5603 = vld [vmem:[%s5585 + $0x88] sm:$0xff]
      %v5604 = vld [vmem:[%s5585 + $0x90] sm:$0xff]
      %v5605 = vld [vmem:[%s5585 + $0x98] sm:$0xff]
      %v5606 = vld [vmem:[%s5585 + $0xa0] sm:$0xff]
      %v5607 = vld [vmem:[%s5585 + $0xa8] sm:$0xff]
      %v5608 = vld [vmem:[%s5585 + $0xb0] sm:$0xff]
      %v5609 = vld [vmem:[%s5585 + $0xb8] sm:$0xff]
      %v5610 = vld [vmem:[%s5585 + $0xc0] sm:$0xff]
      %v5611 = vld [vmem:[%s5585 + $0xc8] sm:$0xff]
      %v5612 = vld [vmem:[%s5585 + $0xd0] sm:$0xff]
      %v5613 = vld [vmem:[%s5585 + $0xd8] sm:$0xff]
      %v5614 = vld [vmem:[%s5585 + $0xe0] sm:$0xff]
      %v5615 = vld [vmem:[%s5585 + $0xe8] sm:$0xff]
      %v5616 = vld [vmem:[%s5585 + $0xf0] sm:$0xff]
      %v5617 = vld [vmem:[%s5585 + $0xf8] sm:$0xff]
      %v5650 = vunpack.c.l.b16 %v5586
      %v5651 = vunpack.c.h.b16 %v5586
      %v5652 = vunpack.c.l.b16 %v5587
      %v5653 = vunpack.c.h.b16 %v5587
      %v5654 = vunpack.c.l.b16 %v5588
      %v5655 = vunpack.c.h.b16 %v5588
      %v5656 = vunpack.c.l.b16 %v5589
      %v5657 = vunpack.c.h.b16 %v5589
      %v5658 = vunpack.c.l.b16 %v5590
      %v5659 = vunpack.c.h.b16 %v5590
      %v5660 = vunpack.c.l.b16 %v5591
      %v5661 = vunpack.c.h.b16 %v5591
      %v5662 = vunpack.c.l.b16 %v5592
      %v5663 = vunpack.c.h.b16 %v5592
      %v5664 = vunpack.c.l.b16 %v5593
      %v5665 = vunpack.c.h.b16 %v5593
      %v5666 = vunpack.c.l.b16 %v5594
      %v5667 = vunpack.c.h.b16 %v5594
      %v5668 = vunpack.c.l.b16 %v5595
      %v5669 = vunpack.c.h.b16 %v5595
      %v5670 = vunpack.c.l.b16 %v5596
      %v5671 = vunpack.c.h.b16 %v5596
      %v5672 = vunpack.c.l.b16 %v5597
      %v5673 = vunpack.c.h.b16 %v5597
      %v5674 = vunpack.c.l.b16 %v5598
      %v5675 = vunpack.c.h.b16 %v5598
      %v5676 = vunpack.c.l.b16 %v5599
      %v5677 = vunpack.c.h.b16 %v5599
      %v5678 = vunpack.c.l.b16 %v5600
      %v5679 = vunpack.c.h.b16 %v5600
      %v5680 = vunpack.c.l.b16 %v5601
      %v5681 = vunpack.c.h.b16 %v5601
      %v5682 = vunpack.c.l.b16 %v5602
      %v5683 = vunpack.c.h.b16 %v5602
      %v5684 = vunpack.c.l.b16 %v5603
      %v5685 = vunpack.c.h.b16 %v5603
      %v5686 = vunpack.c.l.b16 %v5604
      %v5687 = vunpack.c.h.b16 %v5604
      %v5688 = vunpack.c.l.b16 %v5605
      %v5689 = vunpack.c.h.b16 %v5605
      %v5690 = vunpack.c.l.b16 %v5606
      %v5691 = vunpack.c.h.b16 %v5606
      %v5692 = vunpack.c.l.b16 %v5607
      %v5693 = vunpack.c.h.b16 %v5607
      %v5694 = vunpack.c.l.b16 %v5608
      %v5695 = vunpack.c.h.b16 %v5608
      %v5696 = vunpack.c.l.b16 %v5609
      %v5697 = vunpack.c.h.b16 %v5609
      %v5698 = vunpack.c.l.b16 %v5610
      %v5699 = vunpack.c.h.b16 %v5610
      %v5700 = vunpack.c.l.b16 %v5611
      %v5701 = vunpack.c.h.b16 %v5611
      %v5702 = vunpack.c.l.b16 %v5612
      %v5703 = vunpack.c.h.b16 %v5612
      %v5704 = vunpack.c.l.b16 %v5613
      %v5705 = vunpack.c.h.b16 %v5613
      %v5706 = vunpack.c.l.b16 %v5614
      %v5707 = vunpack.c.h.b16 %v5614
      %v5708 = vunpack.c.l.b16 %v5615
      %v5709 = vunpack.c.h.b16 %v5615
      %v5710 = vunpack.c.l.b16 %v5616
      %v5711 = vunpack.c.h.b16 %v5616
      %v5712 = vunpack.c.l.b16 %v5617
      %v5713 = vunpack.c.h.b16 %v5617
      %v5714 = vpack.c.b16 %v5652, %v5650
      %v5715 = vpack.c.b16 %v5653, %v5651
      %v5716 = vpack.c.b16 %v5656, %v5654
      %v5717 = vpack.c.b16 %v5657, %v5655
      %v5718 = vpack.c.b16 %v5660, %v5658
      %v5719 = vpack.c.b16 %v5661, %v5659
      %v5720 = vpack.c.b16 %v5664, %v5662
      %v5721 = vpack.c.b16 %v5665, %v5663
      %v5722 = vpack.c.b16 %v5668, %v5666
      %v5723 = vpack.c.b16 %v5669, %v5667
      %v5724 = vpack.c.b16 %v5672, %v5670
      %v5725 = vpack.c.b16 %v5673, %v5671
      %v5726 = vpack.c.b16 %v5676, %v5674
      %v5727 = vpack.c.b16 %v5677, %v5675
      %v5728 = vpack.c.b16 %v5680, %v5678
      %v5729 = vpack.c.b16 %v5681, %v5679
      %v5730 = vpack.c.b16 %v5684, %v5682
      %v5731 = vpack.c.b16 %v5685, %v5683
      %v5732 = vpack.c.b16 %v5688, %v5686
      %v5733 = vpack.c.b16 %v5689, %v5687
      %v5734 = vpack.c.b16 %v5692, %v5690
      %v5735 = vpack.c.b16 %v5693, %v5691
      %v5736 = vpack.c.b16 %v5696, %v5694
      %v5737 = vpack.c.b16 %v5697, %v5695
      %v5738 = vpack.c.b16 %v5700, %v5698
      %v5739 = vpack.c.b16 %v5701, %v5699
      %v5740 = vpack.c.b16 %v5704, %v5702
      %v5741 = vpack.c.b16 %v5705, %v5703
      %v5742 = vpack.c.b16 %v5708, %v5706
      %v5743 = vpack.c.b16 %v5709, %v5707
      %v5744 = vpack.c.b16 %v5712, %v5710
      %v5745 = vpack.c.b16 %v5713, %v5711
      %5778 = vmatpush.bf16.msra.mxu0 %v5728
      %5779 = vmatpush.bf16.msra.mxu0 %v5726
      %5780 = vmatpush.bf16.msra.mxu0 %v5724
      %5781 = vmatpush.bf16.msra.mxu0 %v5722
      %5782 = vmatpush.bf16.msra.mxu0 %v5720
      %5783 = vmatpush.bf16.msra.mxu0 %v5718
      %5784 = vmatpush.bf16.msra.mxu0 %v5716
      %5785 = vmatpush.bf16.msra.mxu0 %v5714
      %5786 = vmatmul.bf16.gmra.mxu0 %v5583
      %v5787 = vpop.f32.mrf.mxu0
      %v5788 = vadd.f32 0.0, %v5787
      %v5789 = vpop.f32.mrf.mxu0
      %5790 = vdwg.mxu0
      %5791 = vmatpush.bf16.msra.mxu0 %v5744
      %5792 = vmatpush.bf16.msra.mxu0 %v5742
      %5793 = vmatpush.bf16.msra.mxu0 %v5740
      %5794 = vmatpush.bf16.msra.mxu0 %v5738
      %5795 = vmatpush.bf16.msra.mxu0 %v5736
      %5796 = vmatpush.bf16.msra.mxu0 %v5734
      %5797 = vmatpush.bf16.msra.mxu0 %v5732
      %5798 = vmatpush.bf16.msra.mxu0 %v5730
      %5799 = vmatmul.bf16.gmra.mxu0 %v5584
      %v5800 = vpop.f32.mrf.mxu0
      %v5801 = vadd.f32 %v5788, %v5800
      %v5802 = vpop.f32.mrf.mxu0
      %5803 = vdwg.mxu0
      %5804 = vmatpush.bf16.msra.mxu0 %v5729
      %5805 = vmatpush.bf16.msra.mxu0 %v5727
      %5806 = vmatpush.bf16.msra.mxu0 %v5725
      %5807 = vmatpush.bf16.msra.mxu0 %v5723
      %5808 = vmatpush.bf16.msra.mxu0 %v5721
      %5809 = vmatpush.bf16.msra.mxu0 %v5719
      %5810 = vmatpush.bf16.msra.mxu0 %v5717
      %5811 = vmatpush.bf16.msra.mxu0 %v5715
      %5812 = vmatmul.bf16.gmra.mxu0 %v5583
      %v5813 = vpop.f32.mrf.mxu0
      %v5814 = vadd.f32 0.0, %v5813
      %v5815 = vpop.f32.mrf.mxu0
      %5816 = vdwg.mxu0
      %5817 = vmatpush.bf16.msra.mxu0 %v5745
      %5818 = vmatpush.bf16.msra.mxu0 %v5743
      %5819 = vmatpush.bf16.msra.mxu0 %v5741
      %5820 = vmatpush.bf16.msra.mxu0 %v5739
      %5821 = vmatpush.bf16.msra.mxu0 %v5737
      %5822 = vmatpush.bf16.msra.mxu0 %v5735
      %5823 = vmatpush.bf16.msra.mxu0 %v5733
      %5824 = vmatpush.bf16.msra.mxu0 %v5731
      %5825 = vmatmul.bf16.gmra.mxu0 %v5584
      %v5826 = vpop.f32.mrf.mxu0
      %v5827 = vadd.f32 %v5814, %v5826
      %v5828 = vpop.f32.mrf.mxu0
      %5829 = vdwg.mxu0
      %v5862 = vunpack.c.l.b16 %v5520
      %v5863 = vunpack.c.h.b16 %v5520
      %v5864 = vunpack.c.l.b16 %v5521
      %v5865 = vunpack.c.h.b16 %v5521
      %v5866 = vunpack.c.l.b16 %v5522
      %v5867 = vunpack.c.h.b16 %v5522
      %v5868 = vunpack.c.l.b16 %v5523
      %v5869 = vunpack.c.h.b16 %v5523
      %v5870 = vunpack.c.l.b16 %v5524
      %v5871 = vunpack.c.h.b16 %v5524
      %v5872 = vunpack.c.l.b16 %v5525
      %v5873 = vunpack.c.h.b16 %v5525
      %v5874 = vunpack.c.l.b16 %v5526
      %v5875 = vunpack.c.h.b16 %v5526
      %v5876 = vunpack.c.l.b16 %v5527
      %v5877 = vunpack.c.h.b16 %v5527
      %v5878 = vunpack.c.l.b16 %v5528
      %v5879 = vunpack.c.h.b16 %v5528
      %v5880 = vunpack.c.l.b16 %v5529
      %v5881 = vunpack.c.h.b16 %v5529
      %v5882 = vunpack.c.l.b16 %v5530
      %v5883 = vunpack.c.h.b16 %v5530
      %v5884 = vunpack.c.l.b16 %v5531
      %v5885 = vunpack.c.h.b16 %v5531
      %v5886 = vunpack.c.l.b16 %v5532
      %v5887 = vunpack.c.h.b16 %v5532
      %v5888 = vunpack.c.l.b16 %v5533
      %v5889 = vunpack.c.h.b16 %v5533
      %v5890 = vunpack.c.l.b16 %v5534
      %v5891 = vunpack.c.h.b16 %v5534
      %v5892 = vunpack.c.l.b16 %v5535
      %v5893 = vunpack.c.h.b16 %v5535
      %v5894 = vunpack.c.l.b16 %v5536
      %v5895 = vunpack.c.h.b16 %v5536
      %v5896 = vunpack.c.l.b16 %v5537
      %v5897 = vunpack.c.h.b16 %v5537
      %v5898 = vunpack.c.l.b16 %v5538
      %v5899 = vunpack.c.h.b16 %v5538
      %v5900 = vunpack.c.l.b16 %v5539
      %v5901 = vunpack.c.h.b16 %v5539
      %v5902 = vunpack.c.l.b16 %v5540
      %v5903 = vunpack.c.h.b16 %v5540
      %v5904 = vunpack.c.l.b16 %v5541
      %v5905 = vunpack.c.h.b16 %v5541
      %v5906 = vunpack.c.l.b16 %v5542
      %v5907 = vunpack.c.h.b16 %v5542
      %v5908 = vunpack.c.l.b16 %v5543
      %v5909 = vunpack.c.h.b16 %v5543
      %v5910 = vunpack.c.l.b16 %v5544
      %v5911 = vunpack.c.h.b16 %v5544
      %v5912 = vunpack.c.l.b16 %v5545
      %v5913 = vunpack.c.h.b16 %v5545
      %v5914 = vunpack.c.l.b16 %v5546
      %v5915 = vunpack.c.h.b16 %v5546
      %v5916 = vunpack.c.l.b16 %v5547
      %v5917 = vunpack.c.h.b16 %v5547
      %v5918 = vunpack.c.l.b16 %v5548
      %v5919 = vunpack.c.h.b16 %v5548
      %v5920 = vunpack.c.l.b16 %v5549
      %v5921 = vunpack.c.h.b16 %v5549
      %v5922 = vunpack.c.l.b16 %v5550
      %v5923 = vunpack.c.h.b16 %v5550
      %v5924 = vunpack.c.l.b16 %v5551
      %v5925 = vunpack.c.h.b16 %v5551
      %v5926 = vpack.c.b16 %v5864, %v5862
      %v5927 = vpack.c.b16 %v5865, %v5863
      %v5928 = vpack.c.b16 %v5868, %v5866
      %v5929 = vpack.c.b16 %v5869, %v5867
      %v5930 = vpack.c.b16 %v5872, %v5870
      %v5931 = vpack.c.b16 %v5873, %v5871
      %v5932 = vpack.c.b16 %v5876, %v5874
      %v5933 = vpack.c.b16 %v5877, %v5875
      %v5934 = vpack.c.b16 %v5880, %v5878
      %v5935 = vpack.c.b16 %v5881, %v5879
      %v5936 = vpack.c.b16 %v5884, %v5882
      %v5937 = vpack.c.b16 %v5885, %v5883
      %v5938 = vpack.c.b16 %v5888, %v5886
      %v5939 = vpack.c.b16 %v5889, %v5887
      %v5940 = vpack.c.b16 %v5892, %v5890
      %v5941 = vpack.c.b16 %v5893, %v5891
      %v5942 = vpack.c.b16 %v5896, %v5894
      %v5943 = vpack.c.b16 %v5897, %v5895
      %v5944 = vpack.c.b16 %v5900, %v5898
      %v5945 = vpack.c.b16 %v5901, %v5899
      %v5946 = vpack.c.b16 %v5904, %v5902
      %v5947 = vpack.c.b16 %v5905, %v5903
      %v5948 = vpack.c.b16 %v5908, %v5906
      %v5949 = vpack.c.b16 %v5909, %v5907
      %v5950 = vpack.c.b16 %v5912, %v5910
      %v5951 = vpack.c.b16 %v5913, %v5911
      %v5952 = vpack.c.b16 %v5916, %v5914
      %v5953 = vpack.c.b16 %v5917, %v5915
      %v5954 = vpack.c.b16 %v5920, %v5918
      %v5955 = vpack.c.b16 %v5921, %v5919
      %v5956 = vpack.c.b16 %v5924, %v5922
      %v5957 = vpack.c.b16 %v5925, %v5923
      %5990 = vmatpush.bf16.msra.mxu0 %v5940
      %5991 = vmatpush.bf16.msra.mxu0 %v5938
      %5992 = vmatpush.bf16.msra.mxu0 %v5936
      %5993 = vmatpush.bf16.msra.mxu0 %v5934
      %5994 = vmatpush.bf16.msra.mxu0 %v5932
      %5995 = vmatpush.bf16.msra.mxu0 %v5930
      %5996 = vmatpush.bf16.msra.mxu0 %v5928
      %5997 = vmatpush.bf16.msra.mxu0 %v5926
      %5998 = vmatmul.bf16.gmra.mxu0 %v5518
      %v5999 = vpop.f32.mrf.mxu0
      %v6000 = vadd.f32 %v5801, %v5999
      %v6001 = vpop.f32.mrf.mxu0
      %6002 = vdwg.mxu0
      %6003 = vmatpush.bf16.msra.mxu0 %v5956
      %6004 = vmatpush.bf16.msra.mxu0 %v5954
      %6005 = vmatpush.bf16.msra.mxu0 %v5952
      %6006 = vmatpush.bf16.msra.mxu0 %v5950
      %6007 = vmatpush.bf16.msra.mxu0 %v5948
      %6008 = vmatpush.bf16.msra.mxu0 %v5946
      %6009 = vmatpush.bf16.msra.mxu0 %v5944
      %6010 = vmatpush.bf16.msra.mxu0 %v5942
      %6011 = vmatmul.bf16.gmra.mxu0 %v5519
      %v6012 = vpop.f32.mrf.mxu0
      %v6013 = vadd.f32 %v6000, %v6012
      %v6014 = vpop.f32.mrf.mxu0
      %6015 = vdwg.mxu0
      %6016 = vmatpush.bf16.msra.mxu0 %v5941
      %6017 = vmatpush.bf16.msra.mxu0 %v5939
      %6018 = vmatpush.bf16.msra.mxu0 %v5937
      %6019 = vmatpush.bf16.msra.mxu0 %v5935
      %6020 = vmatpush.bf16.msra.mxu0 %v5933
      %6021 = vmatpush.bf16.msra.mxu0 %v5931
      %6022 = vmatpush.bf16.msra.mxu0 %v5929
      %6023 = vmatpush.bf16.msra.mxu0 %v5927
      %6024 = vmatmul.bf16.gmra.mxu0 %v5518
      %v6025 = vpop.f32.mrf.mxu0
      %v6026 = vadd.f32 %v5827, %v6025
      %v6027 = vpop.f32.mrf.mxu0
      %6028 = vdwg.mxu0
      %6029 = vmatpush.bf16.msra.mxu0 %v5957
      %6030 = vmatpush.bf16.msra.mxu0 %v5955
      %6031 = vmatpush.bf16.msra.mxu0 %v5953
      %6032 = vmatpush.bf16.msra.mxu0 %v5951
      %6033 = vmatpush.bf16.msra.mxu0 %v5949
      %6034 = vmatpush.bf16.msra.mxu0 %v5947
      %6035 = vmatpush.bf16.msra.mxu0 %v5945
      %6036 = vmatpush.bf16.msra.mxu0 %v5943
      %6037 = vmatmul.bf16.gmra.mxu0 %v5519
      %v6038 = vpop.f32.mrf.mxu0
      %v6039 = vadd.f32 %v6026, %v6038
      %v6040 = vpop.f32.mrf.mxu0
      %6041 = vdwg.mxu0
      %s6042 = scalar_lea.vmem %s6, 8
      %v6043 = vld [vmem:[%s6042] sm:$0xf]
      %v6045 = vsel %vm5488, %v6043, 0
      %6047 = vmatpush.bf16.msra.mxu0 0
      %6048 = vmatpush.bf16.msra.mxu0 0
      %6049 = vmatpush.bf16.msra.mxu0 0
      %6050 = vmatpush.bf16.msra.mxu0 0
      %6051 = vmatpush.bf16.msra.mxu0 0
      %6052 = vmatpush.bf16.msra.mxu0 0
      %6053 = vmatpush.bf16.msra.mxu0 %v5485
      %6054 = vmatpush.bf16.msra.mxu0 %v5483
      %6055 = vmatmul.bf16.gmra.mxu0 %v6045
      %v6056 = vpop.f32.mrf.mxu0
      %v6057 = vadd.f32 0.0, %v6056
      %v6058 = vpop.f32.mrf.mxu0
      %6059 = vdwg.mxu0
      %6060 = vmatpush.bf16.msra.mxu0 0
      %6061 = vmatpush.bf16.msra.mxu0 0
      %6062 = vmatpush.bf16.msra.mxu0 0
      %6063 = vmatpush.bf16.msra.mxu0 0
      %6064 = vmatpush.bf16.msra.mxu0 0
      %6065 = vmatpush.bf16.msra.mxu0 0
      %6066 = vmatpush.bf16.msra.mxu0 %v5486
      %6067 = vmatpush.bf16.msra.mxu0 %v5484
      %6068 = vmatmul.bf16.gmra.mxu0 %v6045
      %v6069 = vpop.f32.mrf.mxu0
      %v6070 = vadd.f32 0.0, %v6069
      %v6071 = vpop.f32.mrf.mxu0
      %6072 = vdwg.mxu0
      %v6073 = vpack.c.bf16 %v6057, %v6057
      %v6074 = vpack.c.bf16 %v6070, %v6070
      %s6075 = scalar_lea.vmem %s7, 512
      %v6076 = vld [vmem:[%s6075] sm:$0xff]
      %v6077 = vld [vmem:[%s6075 + $0x8] sm:$0xff]
      %v6078 = vld [vmem:[%s6075 + $0x10] sm:$0xff]
      %v6079 = vld [vmem:[%s6075 + $0x18] sm:$0xff]
      %v6080 = vld [vmem:[%s6075 + $0x20] sm:$0xff]
      %v6081 = vld [vmem:[%s6075 + $0x28] sm:$0xff]
      %v6082 = vld [vmem:[%s6075 + $0x30] sm:$0xff]
      %v6083 = vld [vmem:[%s6075 + $0x38] sm:$0xff]
      %v6084 = vld [vmem:[%s6075 + $0x40] sm:$0xff]
      %v6085 = vld [vmem:[%s6075 + $0x48] sm:$0xff]
      %v6086 = vld [vmem:[%s6075 + $0x50] sm:$0xff]
      %v6087 = vld [vmem:[%s6075 + $0x58] sm:$0xff]
      %v6088 = vld [vmem:[%s6075 + $0x60] sm:$0xff]
      %v6089 = vld [vmem:[%s6075 + $0x68] sm:$0xff]
      %v6090 = vld [vmem:[%s6075 + $0x70] sm:$0xff]
      %v6091 = vld [vmem:[%s6075 + $0x78] sm:$0xff]
      %v6092 = vld [vmem:[%s6075 + $0x80] sm:$0xff]
      %v6093 = vld [vmem:[%s6075 + $0x88] sm:$0xff]
      %v6094 = vld [vmem:[%s6075 + $0x90] sm:$0xff]
      %v6095 = vld [vmem:[%s6075 + $0x98] sm:$0xff]
      %v6096 = vld [vmem:[%s6075 + $0xa0] sm:$0xff]
      %v6097 = vld [vmem:[%s6075 + $0xa8] sm:$0xff]
      %v6098 = vld [vmem:[%s6075 + $0xb0] sm:$0xff]
      %v6099 = vld [vmem:[%s6075 + $0xb8] sm:$0xff]
      %v6100 = vld [vmem:[%s6075 + $0xc0] sm:$0xff]
      %v6101 = vld [vmem:[%s6075 + $0xc8] sm:$0xff]
      %v6102 = vld [vmem:[%s6075 + $0xd0] sm:$0xff]
      %v6103 = vld [vmem:[%s6075 + $0xd8] sm:$0xff]
      %v6104 = vld [vmem:[%s6075 + $0xe0] sm:$0xff]
      %v6105 = vld [vmem:[%s6075 + $0xe8] sm:$0xff]
      %v6106 = vld [vmem:[%s6075 + $0xf0] sm:$0xff]
      %v6107 = vld [vmem:[%s6075 + $0xf8] sm:$0xff]
      %v6140 = vunpack.c.l.b16 %v6076
      %v6141 = vunpack.c.h.b16 %v6076
      %v6142 = vunpack.c.l.b16 %v6077
      %v6143 = vunpack.c.h.b16 %v6077
      %v6144 = vunpack.c.l.b16 %v6078
      %v6145 = vunpack.c.h.b16 %v6078
      %v6146 = vunpack.c.l.b16 %v6079
      %v6147 = vunpack.c.h.b16 %v6079
      %v6148 = vunpack.c.l.b16 %v6080
      %v6149 = vunpack.c.h.b16 %v6080
      %v6150 = vunpack.c.l.b16 %v6081
      %v6151 = vunpack.c.h.b16 %v6081
      %v6152 = vunpack.c.l.b16 %v6082
      %v6153 = vunpack.c.h.b16 %v6082
      %v6154 = vunpack.c.l.b16 %v6083
      %v6155 = vunpack.c.h.b16 %v6083
      %v6156 = vunpack.c.l.b16 %v6084
      %v6157 = vunpack.c.h.b16 %v6084
      %v6158 = vunpack.c.l.b16 %v6085
      %v6159 = vunpack.c.h.b16 %v6085
      %v6160 = vunpack.c.l.b16 %v6086
      %v6161 = vunpack.c.h.b16 %v6086
      %v6162 = vunpack.c.l.b16 %v6087
      %v6163 = vunpack.c.h.b16 %v6087
      %v6164 = vunpack.c.l.b16 %v6088
      %v6165 = vunpack.c.h.b16 %v6088
      %v6166 = vunpack.c.l.b16 %v6089
      %v6167 = vunpack.c.h.b16 %v6089
      %v6168 = vunpack.c.l.b16 %v6090
      %v6169 = vunpack.c.h.b16 %v6090
      %v6170 = vunpack.c.l.b16 %v6091
      %v6171 = vunpack.c.h.b16 %v6091
      %v6172 = vunpack.c.l.b16 %v6092
      %v6173 = vunpack.c.h.b16 %v6092
      %v6174 = vunpack.c.l.b16 %v6093
      %v6175 = vunpack.c.h.b16 %v6093
      %v6176 = vunpack.c.l.b16 %v6094
      %v6177 = vunpack.c.h.b16 %v6094
      %v6178 = vunpack.c.l.b16 %v6095
      %v6179 = vunpack.c.h.b16 %v6095
      %v6180 = vunpack.c.l.b16 %v6096
      %v6181 = vunpack.c.h.b16 %v6096
      %v6182 = vunpack.c.l.b16 %v6097
      %v6183 = vunpack.c.h.b16 %v6097
      %v6184 = vunpack.c.l.b16 %v6098
      %v6185 = vunpack.c.h.b16 %v6098
      %v6186 = vunpack.c.l.b16 %v6099
      %v6187 = vunpack.c.h.b16 %v6099
      %v6188 = vunpack.c.l.b16 %v6100
      %v6189 = vunpack.c.h.b16 %v6100
      %v6190 = vunpack.c.l.b16 %v6101
      %v6191 = vunpack.c.h.b16 %v6101
      %v6192 = vunpack.c.l.b16 %v6102
      %v6193 = vunpack.c.h.b16 %v6102
      %v6194 = vunpack.c.l.b16 %v6103
      %v6195 = vunpack.c.h.b16 %v6103
      %v6196 = vunpack.c.l.b16 %v6104
      %v6197 = vunpack.c.h.b16 %v6104
      %v6198 = vunpack.c.l.b16 %v6105
      %v6199 = vunpack.c.h.b16 %v6105
      %v6200 = vunpack.c.l.b16 %v6106
      %v6201 = vunpack.c.h.b16 %v6106
      %v6202 = vunpack.c.l.b16 %v6107
      %v6203 = vunpack.c.h.b16 %v6107
      %v6204 = vpack.c.b16 %v6142, %v6140
      %v6205 = vpack.c.b16 %v6143, %v6141
      %v6206 = vpack.c.b16 %v6146, %v6144
      %v6207 = vpack.c.b16 %v6147, %v6145
      %v6208 = vpack.c.b16 %v6150, %v6148
      %v6209 = vpack.c.b16 %v6151, %v6149
      %v6210 = vpack.c.b16 %v6154, %v6152
      %v6211 = vpack.c.b16 %v6155, %v6153
      %v6212 = vpack.c.b16 %v6158, %v6156
      %v6213 = vpack.c.b16 %v6159, %v6157
      %v6214 = vpack.c.b16 %v6162, %v6160
      %v6215 = vpack.c.b16 %v6163, %v6161
      %v6216 = vpack.c.b16 %v6166, %v6164
      %v6217 = vpack.c.b16 %v6167, %v6165
      %v6218 = vpack.c.b16 %v6170, %v6168
      %v6219 = vpack.c.b16 %v6171, %v6169
      %v6220 = vpack.c.b16 %v6174, %v6172
      %v6221 = vpack.c.b16 %v6175, %v6173
      %v6222 = vpack.c.b16 %v6178, %v6176
      %v6223 = vpack.c.b16 %v6179, %v6177
      %v6224 = vpack.c.b16 %v6182, %v6180
      %v6225 = vpack.c.b16 %v6183, %v6181
      %v6226 = vpack.c.b16 %v6186, %v6184
      %v6227 = vpack.c.b16 %v6187, %v6185
      %v6228 = vpack.c.b16 %v6190, %v6188
      %v6229 = vpack.c.b16 %v6191, %v6189
      %v6230 = vpack.c.b16 %v6194, %v6192
      %v6231 = vpack.c.b16 %v6195, %v6193
      %v6232 = vpack.c.b16 %v6198, %v6196
      %v6233 = vpack.c.b16 %v6199, %v6197
      %v6234 = vpack.c.b16 %v6202, %v6200
      %v6235 = vpack.c.b16 %v6203, %v6201
      %6268 = vmatpush.bf16.msra.mxu0 %v6218
      %6269 = vmatpush.bf16.msra.mxu0 %v6216
      %6270 = vmatpush.bf16.msra.mxu0 %v6214
      %6271 = vmatpush.bf16.msra.mxu0 %v6212
      %6272 = vmatpush.bf16.msra.mxu0 %v6210
      %6273 = vmatpush.bf16.msra.mxu0 %v6208
      %6274 = vmatpush.bf16.msra.mxu0 %v6206
      %6275 = vmatpush.bf16.msra.mxu0 %v6204
      %6276 = vmatmul.bf16.gmra.mxu0 %v6073
      %v6277 = vpop.f32.mrf.mxu0
      %v6278 = vadd.f32 0.0, %v6277
      %v6279 = vpop.f32.mrf.mxu0
      %6280 = vdwg.mxu0
      %6281 = vmatpush.bf16.msra.mxu0 %v6234
      %6282 = vmatpush.bf16.msra.mxu0 %v6232
      %6283 = vmatpush.bf16.msra.mxu0 %v6230
      %6284 = vmatpush.bf16.msra.mxu0 %v6228
      %6285 = vmatpush.bf16.msra.mxu0 %v6226
      %6286 = vmatpush.bf16.msra.mxu0 %v6224
      %6287 = vmatpush.bf16.msra.mxu0 %v6222
      %6288 = vmatpush.bf16.msra.mxu0 %v6220
      %6289 = vmatmul.bf16.gmra.mxu0 %v6074
      %v6290 = vpop.f32.mrf.mxu0
      %v6291 = vadd.f32 %v6278, %v6290
      %v6292 = vpop.f32.mrf.mxu0
      %6293 = vdwg.mxu0
      %6294 = vmatpush.bf16.msra.mxu0 %v6219
      %6295 = vmatpush.bf16.msra.mxu0 %v6217
      %6296 = vmatpush.bf16.msra.mxu0 %v6215
      %6297 = vmatpush.bf16.msra.mxu0 %v6213
      %6298 = vmatpush.bf16.msra.mxu0 %v6211
      %6299 = vmatpush.bf16.msra.mxu0 %v6209
      %6300 = vmatpush.bf16.msra.mxu0 %v6207
      %6301 = vmatpush.bf16.msra.mxu0 %v6205
      %6302 = vmatmul.bf16.gmra.mxu0 %v6073
      %v6303 = vpop.f32.mrf.mxu0
      %v6304 = vadd.f32 0.0, %v6303
      %v6305 = vpop.f32.mrf.mxu0
      %6306 = vdwg.mxu0
      %6307 = vmatpush.bf16.msra.mxu0 %v6235
      %6308 = vmatpush.bf16.msra.mxu0 %v6233
      %6309 = vmatpush.bf16.msra.mxu0 %v6231
      %6310 = vmatpush.bf16.msra.mxu0 %v6229
      %6311 = vmatpush.bf16.msra.mxu0 %v6227
      %6312 = vmatpush.bf16.msra.mxu0 %v6225
      %6313 = vmatpush.bf16.msra.mxu0 %v6223
      %6314 = vmatpush.bf16.msra.mxu0 %v6221
      %6315 = vmatmul.bf16.gmra.mxu0 %v6074
      %v6316 = vpop.f32.mrf.mxu0
      %v6317 = vadd.f32 %v6304, %v6316
      %v6318 = vpop.f32.mrf.mxu0
      %6319 = vdwg.mxu0
      %v6320 = vadd.f32 %v6013, %v6291
      %v6321 = vadd.f32 %v6039, %v6317
      %s6322 = scalar_lea.vmem %s6, 12
      %v6323 = vld [vmem:[%s6322] sm:$0xf]
      %v6325 = vsel %vm5488, %v6323, 0
      %6327 = vmatpush.bf16.msra.mxu0 0
      %6328 = vmatpush.bf16.msra.mxu0 0
      %6329 = vmatpush.bf16.msra.mxu0 0
      %6330 = vmatpush.bf16.msra.mxu0 0
      %6331 = vmatpush.bf16.msra.mxu0 0
      %6332 = vmatpush.bf16.msra.mxu0 0
      %6333 = vmatpush.bf16.msra.mxu0 %v5485
      %6334 = vmatpush.bf16.msra.mxu0 %v5483
      %6335 = vmatmul.bf16.gmra.mxu0 %v6325
      %v6336 = vpop.f32.mrf.mxu0
      %v6337 = vadd.f32 0.0, %v6336
      %v6338 = vpop.f32.mrf.mxu0
      %6339 = vdwg.mxu0
      %6340 = vmatpush.bf16.msra.mxu0 0
      %6341 = vmatpush.bf16.msra.mxu0 0
      %6342 = vmatpush.bf16.msra.mxu0 0
      %6343 = vmatpush.bf16.msra.mxu0 0
      %6344 = vmatpush.bf16.msra.mxu0 0
      %6345 = vmatpush.bf16.msra.mxu0 0
      %6346 = vmatpush.bf16.msra.mxu0 %v5486
      %6347 = vmatpush.bf16.msra.mxu0 %v5484
      %6348 = vmatmul.bf16.gmra.mxu0 %v6325
      %v6349 = vpop.f32.mrf.mxu0
      %v6350 = vadd.f32 0.0, %v6349
      %v6351 = vpop.f32.mrf.mxu0
      %6352 = vdwg.mxu0
      %v6353 = vpack.c.bf16 %v6337, %v6337
      %v6354 = vpack.c.bf16 %v6350, %v6350
      %s6355 = scalar_lea.vmem %s7, 768
      %v6356 = vld [vmem:[%s6355] sm:$0xff]
      %v6357 = vld [vmem:[%s6355 + $0x8] sm:$0xff]
      %v6358 = vld [vmem:[%s6355 + $0x10] sm:$0xff]
      %v6359 = vld [vmem:[%s6355 + $0x18] sm:$0xff]
      %v6360 = vld [vmem:[%s6355 + $0x20] sm:$0xff]
      %v6361 = vld [vmem:[%s6355 + $0x28] sm:$0xff]
      %v6362 = vld [vmem:[%s6355 + $0x30] sm:$0xff]
      %v6363 = vld [vmem:[%s6355 + $0x38] sm:$0xff]
      %v6364 = vld [vmem:[%s6355 + $0x40] sm:$0xff]
      %v6365 = vld [vmem:[%s6355 + $0x48] sm:$0xff]
      %v6366 = vld [vmem:[%s6355 + $0x50] sm:$0xff]
      %v6367 = vld [vmem:[%s6355 + $0x58] sm:$0xff]
      %v6368 = vld [vmem:[%s6355 + $0x60] sm:$0xff]
      %v6369 = vld [vmem:[%s6355 + $0x68] sm:$0xff]
      %v6370 = vld [vmem:[%s6355 + $0x70] sm:$0xff]
      %v6371 = vld [vmem:[%s6355 + $0x78] sm:$0xff]
      %v6372 = vld [vmem:[%s6355 + $0x80] sm:$0xff]
      %v6373 = vld [vmem:[%s6355 + $0x88] sm:$0xff]
      %v6374 = vld [vmem:[%s6355 + $0x90] sm:$0xff]
      %v6375 = vld [vmem:[%s6355 + $0x98] sm:$0xff]
      %v6376 = vld [vmem:[%s6355 + $0xa0] sm:$0xff]
      %v6377 = vld [vmem:[%s6355 + $0xa8] sm:$0xff]
      %v6378 = vld [vmem:[%s6355 + $0xb0] sm:$0xff]
      %v6379 = vld [vmem:[%s6355 + $0xb8] sm:$0xff]
      %v6380 = vld [vmem:[%s6355 + $0xc0] sm:$0xff]
      %v6381 = vld [vmem:[%s6355 + $0xc8] sm:$0xff]
      %v6382 = vld [vmem:[%s6355 + $0xd0] sm:$0xff]
      %v6383 = vld [vmem:[%s6355 + $0xd8] sm:$0xff]
      %v6384 = vld [vmem:[%s6355 + $0xe0] sm:$0xff]
      %v6385 = vld [vmem:[%s6355 + $0xe8] sm:$0xff]
      %v6386 = vld [vmem:[%s6355 + $0xf0] sm:$0xff]
      %v6387 = vld [vmem:[%s6355 + $0xf8] sm:$0xff]
      %v6420 = vunpack.c.l.b16 %v6356
      %v6421 = vunpack.c.h.b16 %v6356
      %v6422 = vunpack.c.l.b16 %v6357
      %v6423 = vunpack.c.h.b16 %v6357
      %v6424 = vunpack.c.l.b16 %v6358
      %v6425 = vunpack.c.h.b16 %v6358
      %v6426 = vunpack.c.l.b16 %v6359
      %v6427 = vunpack.c.h.b16 %v6359
      %v6428 = vunpack.c.l.b16 %v6360
      %v6429 = vunpack.c.h.b16 %v6360
      %v6430 = vunpack.c.l.b16 %v6361
      %v6431 = vunpack.c.h.b16 %v6361
      %v6432 = vunpack.c.l.b16 %v6362
      %v6433 = vunpack.c.h.b16 %v6362
      %v6434 = vunpack.c.l.b16 %v6363
      %v6435 = vunpack.c.h.b16 %v6363
      %v6436 = vunpack.c.l.b16 %v6364
      %v6437 = vunpack.c.h.b16 %v6364
      %v6438 = vunpack.c.l.b16 %v6365
      %v6439 = vunpack.c.h.b16 %v6365
      %v6440 = vunpack.c.l.b16 %v6366
      %v6441 = vunpack.c.h.b16 %v6366
      %v6442 = vunpack.c.l.b16 %v6367
      %v6443 = vunpack.c.h.b16 %v6367
      %v6444 = vunpack.c.l.b16 %v6368
      %v6445 = vunpack.c.h.b16 %v6368
      %v6446 = vunpack.c.l.b16 %v6369
      %v6447 = vunpack.c.h.b16 %v6369
      %v6448 = vunpack.c.l.b16 %v6370
      %v6449 = vunpack.c.h.b16 %v6370
      %v6450 = vunpack.c.l.b16 %v6371
      %v6451 = vunpack.c.h.b16 %v6371
      %v6452 = vunpack.c.l.b16 %v6372
      %v6453 = vunpack.c.h.b16 %v6372
      %v6454 = vunpack.c.l.b16 %v6373
      %v6455 = vunpack.c.h.b16 %v6373
      %v6456 = vunpack.c.l.b16 %v6374
      %v6457 = vunpack.c.h.b16 %v6374
      %v6458 = vunpack.c.l.b16 %v6375
      %v6459 = vunpack.c.h.b16 %v6375
      %v6460 = vunpack.c.l.b16 %v6376
      %v6461 = vunpack.c.h.b16 %v6376
      %v6462 = vunpack.c.l.b16 %v6377
      %v6463 = vunpack.c.h.b16 %v6377
      %v6464 = vunpack.c.l.b16 %v6378
      %v6465 = vunpack.c.h.b16 %v6378
      %v6466 = vunpack.c.l.b16 %v6379
      %v6467 = vunpack.c.h.b16 %v6379
      %v6468 = vunpack.c.l.b16 %v6380
      %v6469 = vunpack.c.h.b16 %v6380
      %v6470 = vunpack.c.l.b16 %v6381
      %v6471 = vunpack.c.h.b16 %v6381
      %v6472 = vunpack.c.l.b16 %v6382
      %v6473 = vunpack.c.h.b16 %v6382
      %v6474 = vunpack.c.l.b16 %v6383
      %v6475 = vunpack.c.h.b16 %v6383
      %v6476 = vunpack.c.l.b16 %v6384
      %v6477 = vunpack.c.h.b16 %v6384
      %v6478 = vunpack.c.l.b16 %v6385
      %v6479 = vunpack.c.h.b16 %v6385
      %v6480 = vunpack.c.l.b16 %v6386
      %v6481 = vunpack.c.h.b16 %v6386
      %v6482 = vunpack.c.l.b16 %v6387
      %v6483 = vunpack.c.h.b16 %v6387
      %v6484 = vpack.c.b16 %v6422, %v6420
      %v6485 = vpack.c.b16 %v6423, %v6421
      %v6486 = vpack.c.b16 %v6426, %v6424
      %v6487 = vpack.c.b16 %v6427, %v6425
      %v6488 = vpack.c.b16 %v6430, %v6428
      %v6489 = vpack.c.b16 %v6431, %v6429
      %v6490 = vpack.c.b16 %v6434, %v6432
      %v6491 = vpack.c.b16 %v6435, %v6433
      %v6492 = vpack.c.b16 %v6438, %v6436
      %v6493 = vpack.c.b16 %v6439, %v6437
      %v6494 = vpack.c.b16 %v6442, %v6440
      %v6495 = vpack.c.b16 %v6443, %v6441
      %v6496 = vpack.c.b16 %v6446, %v6444
      %v6497 = vpack.c.b16 %v6447, %v6445
      %v6498 = vpack.c.b16 %v6450, %v6448
      %v6499 = vpack.c.b16 %v6451, %v6449
      %v6500 = vpack.c.b16 %v6454, %v6452
      %v6501 = vpack.c.b16 %v6455, %v6453
      %v6502 = vpack.c.b16 %v6458, %v6456
      %v6503 = vpack.c.b16 %v6459, %v6457
      %v6504 = vpack.c.b16 %v6462, %v6460
      %v6505 = vpack.c.b16 %v6463, %v6461
      %v6506 = vpack.c.b16 %v6466, %v6464
      %v6507 = vpack.c.b16 %v6467, %v6465
      %v6508 = vpack.c.b16 %v6470, %v6468
      %v6509 = vpack.c.b16 %v6471, %v6469
      %v6510 = vpack.c.b16 %v6474, %v6472
      %v6511 = vpack.c.b16 %v6475, %v6473
      %v6512 = vpack.c.b16 %v6478, %v6476
      %v6513 = vpack.c.b16 %v6479, %v6477
      %v6514 = vpack.c.b16 %v6482, %v6480
      %v6515 = vpack.c.b16 %v6483, %v6481
      %6548 = vmatpush.bf16.msra.mxu0 %v6498
      %6549 = vmatpush.bf16.msra.mxu0 %v6496
      %6550 = vmatpush.bf16.msra.mxu0 %v6494
      %6551 = vmatpush.bf16.msra.mxu0 %v6492
      %6552 = vmatpush.bf16.msra.mxu0 %v6490
      %6553 = vmatpush.bf16.msra.mxu0 %v6488
      %6554 = vmatpush.bf16.msra.mxu0 %v6486
      %6555 = vmatpush.bf16.msra.mxu0 %v6484
      %6556 = vmatmul.bf16.gmra.mxu0 %v6353
      %v6557 = vpop.f32.mrf.mxu0
      %v6558 = vadd.f32 0.0, %v6557
      %v6559 = vpop.f32.mrf.mxu0
      %6560 = vdwg.mxu0
      %6561 = vmatpush.bf16.msra.mxu0 %v6514
      %6562 = vmatpush.bf16.msra.mxu0 %v6512
      %6563 = vmatpush.bf16.msra.mxu0 %v6510
      %6564 = vmatpush.bf16.msra.mxu0 %v6508
      %6565 = vmatpush.bf16.msra.mxu0 %v6506
      %6566 = vmatpush.bf16.msra.mxu0 %v6504
      %6567 = vmatpush.bf16.msra.mxu0 %v6502
      %6568 = vmatpush.bf16.msra.mxu0 %v6500
      %6569 = vmatmul.bf16.gmra.mxu0 %v6354
      %v6570 = vpop.f32.mrf.mxu0
      %v6571 = vadd.f32 %v6558, %v6570
      %v6572 = vpop.f32.mrf.mxu0
      %6573 = vdwg.mxu0
      %6574 = vmatpush.bf16.msra.mxu0 %v6499
      %6575 = vmatpush.bf16.msra.mxu0 %v6497
      %6576 = vmatpush.bf16.msra.mxu0 %v6495
      %6577 = vmatpush.bf16.msra.mxu0 %v6493
      %6578 = vmatpush.bf16.msra.mxu0 %v6491
      %6579 = vmatpush.bf16.msra.mxu0 %v6489
      %6580 = vmatpush.bf16.msra.mxu0 %v6487
      %6581 = vmatpush.bf16.msra.mxu0 %v6485
      %6582 = vmatmul.bf16.gmra.mxu0 %v6353
      %v6583 = vpop.f32.mrf.mxu0
      %v6584 = vadd.f32 0.0, %v6583
      %v6585 = vpop.f32.mrf.mxu0
      %6586 = vdwg.mxu0
      %6587 = vmatpush.bf16.msra.mxu0 %v6515
      %6588 = vmatpush.bf16.msra.mxu0 %v6513
      %6589 = vmatpush.bf16.msra.mxu0 %v6511
      %6590 = vmatpush.bf16.msra.mxu0 %v6509
      %6591 = vmatpush.bf16.msra.mxu0 %v6507
      %6592 = vmatpush.bf16.msra.mxu0 %v6505
      %6593 = vmatpush.bf16.msra.mxu0 %v6503
      %6594 = vmatpush.bf16.msra.mxu0 %v6501
      %6595 = vmatmul.bf16.gmra.mxu0 %v6354
      %v6596 = vpop.f32.mrf.mxu0
      %v6597 = vadd.f32 %v6584, %v6596
      %v6598 = vpop.f32.mrf.mxu0
      %6599 = vdwg.mxu0
      %v6600 = vadd.f32 %v6320, %v6571
      %v6601 = vadd.f32 %v6321, %v6597
      %s6602 = scalar_lea.vmem %s6, 16
      %v6603 = vld [vmem:[%s6602] sm:$0xf]
      %v6605 = vsel %vm5488, %v6603, 0
      %6607 = vmatpush.bf16.msra.mxu0 0
      %6608 = vmatpush.bf16.msra.mxu0 0
      %6609 = vmatpush.bf16.msra.mxu0 0
      %6610 = vmatpush.bf16.msra.mxu0 0
      %6611 = vmatpush.bf16.msra.mxu0 0
      %6612 = vmatpush.bf16.msra.mxu0 0
      %6613 = vmatpush.bf16.msra.mxu0 %v5485
      %6614 = vmatpush.bf16.msra.mxu0 %v5483
      %6615 = vmatmul.bf16.gmra.mxu0 %v6605
      %v6616 = vpop.f32.mrf.mxu0
      %v6617 = vadd.f32 0.0, %v6616
      %v6618 = vpop.f32.mrf.mxu0
      %6619 = vdwg.mxu0
      %6620 = vmatpush.bf16.msra.mxu0 0
      %6621 = vmatpush.bf16.msra.mxu0 0
      %6622 = vmatpush.bf16.msra.mxu0 0
      %6623 = vmatpush.bf16.msra.mxu0 0
      %6624 = vmatpush.bf16.msra.mxu0 0
      %6625 = vmatpush.bf16.msra.mxu0 0
      %6626 = vmatpush.bf16.msra.mxu0 %v5486
      %6627 = vmatpush.bf16.msra.mxu0 %v5484
      %6628 = vmatmul.bf16.gmra.mxu0 %v6605
      %v6629 = vpop.f32.mrf.mxu0
      %v6630 = vadd.f32 0.0, %v6629
      %v6631 = vpop.f32.mrf.mxu0
      %6632 = vdwg.mxu0
      %v6633 = vpack.c.bf16 %v6617, %v6617
      %v6634 = vpack.c.bf16 %v6630, %v6630
      %s6635 = scalar_lea.vmem %s7, 1024
      %v6636 = vld [vmem:[%s6635] sm:$0xff]
      %v6637 = vld [vmem:[%s6635 + $0x8] sm:$0xff]
      %v6638 = vld [vmem:[%s6635 + $0x10] sm:$0xff]
      %v6639 = vld [vmem:[%s6635 + $0x18] sm:$0xff]
      %v6640 = vld [vmem:[%s6635 + $0x20] sm:$0xff]
      %v6641 = vld [vmem:[%s6635 + $0x28] sm:$0xff]
      %v6642 = vld [vmem:[%s6635 + $0x30] sm:$0xff]
      %v6643 = vld [vmem:[%s6635 + $0x38] sm:$0xff]
      %v6644 = vld [vmem:[%s6635 + $0x40] sm:$0xff]
      %v6645 = vld [vmem:[%s6635 + $0x48] sm:$0xff]
      %v6646 = vld [vmem:[%s6635 + $0x50] sm:$0xff]
      %v6647 = vld [vmem:[%s6635 + $0x58] sm:$0xff]
      %v6648 = vld [vmem:[%s6635 + $0x60] sm:$0xff]
      %v6649 = vld [vmem:[%s6635 + $0x68] sm:$0xff]
      %v6650 = vld [vmem:[%s6635 + $0x70] sm:$0xff]
      %v6651 = vld [vmem:[%s6635 + $0x78] sm:$0xff]
      %v6652 = vld [vmem:[%s6635 + $0x80] sm:$0xff]
      %v6653 = vld [vmem:[%s6635 + $0x88] sm:$0xff]
      %v6654 = vld [vmem:[%s6635 + $0x90] sm:$0xff]
      %v6655 = vld [vmem:[%s6635 + $0x98] sm:$0xff]
      %v6656 = vld [vmem:[%s6635 + $0xa0] sm:$0xff]
      %v6657 = vld [vmem:[%s6635 + $0xa8] sm:$0xff]
      %v6658 = vld [vmem:[%s6635 + $0xb0] sm:$0xff]
      %v6659 = vld [vmem:[%s6635 + $0xb8] sm:$0xff]
      %v6660 = vld [vmem:[%s6635 + $0xc0] sm:$0xff]
      %v6661 = vld [vmem:[%s6635 + $0xc8] sm:$0xff]
      %v6662 = vld [vmem:[%s6635 + $0xd0] sm:$0xff]
      %v6663 = vld [vmem:[%s6635 + $0xd8] sm:$0xff]
      %v6664 = vld [vmem:[%s6635 + $0xe0] sm:$0xff]
      %v6665 = vld [vmem:[%s6635 + $0xe8] sm:$0xff]
      %v6666 = vld [vmem:[%s6635 + $0xf0] sm:$0xff]
      %v6667 = vld [vmem:[%s6635 + $0xf8] sm:$0xff]
      %v6700 = vunpack.c.l.b16 %v6636
      %v6701 = vunpack.c.h.b16 %v6636
      %v6702 = vunpack.c.l.b16 %v6637
      %v6703 = vunpack.c.h.b16 %v6637
      %v6704 = vunpack.c.l.b16 %v6638
      %v6705 = vunpack.c.h.b16 %v6638
      %v6706 = vunpack.c.l.b16 %v6639
      %v6707 = vunpack.c.h.b16 %v6639
      %v6708 = vunpack.c.l.b16 %v6640
      %v6709 = vunpack.c.h.b16 %v6640
      %v6710 = vunpack.c.l.b16 %v6641
      %v6711 = vunpack.c.h.b16 %v6641
      %v6712 = vunpack.c.l.b16 %v6642
      %v6713 = vunpack.c.h.b16 %v6642
      %v6714 = vunpack.c.l.b16 %v6643
      %v6715 = vunpack.c.h.b16 %v6643
      %v6716 = vunpack.c.l.b16 %v6644
      %v6717 = vunpack.c.h.b16 %v6644
      %v6718 = vunpack.c.l.b16 %v6645
      %v6719 = vunpack.c.h.b16 %v6645
      %v6720 = vunpack.c.l.b16 %v6646
      %v6721 = vunpack.c.h.b16 %v6646
      %v6722 = vunpack.c.l.b16 %v6647
      %v6723 = vunpack.c.h.b16 %v6647
      %v6724 = vunpack.c.l.b16 %v6648
      %v6725 = vunpack.c.h.b16 %v6648
      %v6726 = vunpack.c.l.b16 %v6649
      %v6727 = vunpack.c.h.b16 %v6649
      %v6728 = vunpack.c.l.b16 %v6650
      %v6729 = vunpack.c.h.b16 %v6650
      %v6730 = vunpack.c.l.b16 %v6651
      %v6731 = vunpack.c.h.b16 %v6651
      %v6732 = vunpack.c.l.b16 %v6652
      %v6733 = vunpack.c.h.b16 %v6652
      %v6734 = vunpack.c.l.b16 %v6653
      %v6735 = vunpack.c.h.b16 %v6653
      %v6736 = vunpack.c.l.b16 %v6654
      %v6737 = vunpack.c.h.b16 %v6654
      %v6738 = vunpack.c.l.b16 %v6655
      %v6739 = vunpack.c.h.b16 %v6655
      %v6740 = vunpack.c.l.b16 %v6656
      %v6741 = vunpack.c.h.b16 %v6656
      %v6742 = vunpack.c.l.b16 %v6657
      %v6743 = vunpack.c.h.b16 %v6657
      %v6744 = vunpack.c.l.b16 %v6658
      %v6745 = vunpack.c.h.b16 %v6658
      %v6746 = vunpack.c.l.b16 %v6659
      %v6747 = vunpack.c.h.b16 %v6659
      %v6748 = vunpack.c.l.b16 %v6660
      %v6749 = vunpack.c.h.b16 %v6660
      %v6750 = vunpack.c.l.b16 %v6661
      %v6751 = vunpack.c.h.b16 %v6661
      %v6752 = vunpack.c.l.b16 %v6662
      %v6753 = vunpack.c.h.b16 %v6662
      %v6754 = vunpack.c.l.b16 %v6663
      %v6755 = vunpack.c.h.b16 %v6663
      %v6756 = vunpack.c.l.b16 %v6664
      %v6757 = vunpack.c.h.b16 %v6664
      %v6758 = vunpack.c.l.b16 %v6665
      %v6759 = vunpack.c.h.b16 %v6665
      %v6760 = vunpack.c.l.b16 %v6666
      %v6761 = vunpack.c.h.b16 %v6666
      %v6762 = vunpack.c.l.b16 %v6667
      %v6763 = vunpack.c.h.b16 %v6667
      %v6764 = vpack.c.b16 %v6702, %v6700
      %v6765 = vpack.c.b16 %v6703, %v6701
      %v6766 = vpack.c.b16 %v6706, %v6704
      %v6767 = vpack.c.b16 %v6707, %v6705
      %v6768 = vpack.c.b16 %v6710, %v6708
      %v6769 = vpack.c.b16 %v6711, %v6709
      %v6770 = vpack.c.b16 %v6714, %v6712
      %v6771 = vpack.c.b16 %v6715, %v6713
      %v6772 = vpack.c.b16 %v6718, %v6716
      %v6773 = vpack.c.b16 %v6719, %v6717
      %v6774 = vpack.c.b16 %v6722, %v6720
      %v6775 = vpack.c.b16 %v6723, %v6721
      %v6776 = vpack.c.b16 %v6726, %v6724
      %v6777 = vpack.c.b16 %v6727, %v6725
      %v6778 = vpack.c.b16 %v6730, %v6728
      %v6779 = vpack.c.b16 %v6731, %v6729
      %v6780 = vpack.c.b16 %v6734, %v6732
      %v6781 = vpack.c.b16 %v6735, %v6733
      %v6782 = vpack.c.b16 %v6738, %v6736
      %v6783 = vpack.c.b16 %v6739, %v6737
      %v6784 = vpack.c.b16 %v6742, %v6740
      %v6785 = vpack.c.b16 %v6743, %v6741
      %v6786 = vpack.c.b16 %v6746, %v6744
      %v6787 = vpack.c.b16 %v6747, %v6745
      %v6788 = vpack.c.b16 %v6750, %v6748
      %v6789 = vpack.c.b16 %v6751, %v6749
      %v6790 = vpack.c.b16 %v6754, %v6752
      %v6791 = vpack.c.b16 %v6755, %v6753
      %v6792 = vpack.c.b16 %v6758, %v6756
      %v6793 = vpack.c.b16 %v6759, %v6757
      %v6794 = vpack.c.b16 %v6762, %v6760
      %v6795 = vpack.c.b16 %v6763, %v6761
      %6828 = vmatpush.bf16.msra.mxu0 %v6778
      %6829 = vmatpush.bf16.msra.mxu0 %v6776
      %6830 = vmatpush.bf16.msra.mxu0 %v6774
      %6831 = vmatpush.bf16.msra.mxu0 %v6772
      %6832 = vmatpush.bf16.msra.mxu0 %v6770
      %6833 = vmatpush.bf16.msra.mxu0 %v6768
      %6834 = vmatpush.bf16.msra.mxu0 %v6766
      %6835 = vmatpush.bf16.msra.mxu0 %v6764
      %6836 = vmatmul.bf16.gmra.mxu0 %v6633
      %v6837 = vpop.f32.mrf.mxu0
      %v6838 = vadd.f32 0.0, %v6837
      %v6839 = vpop.f32.mrf.mxu0
      %6840 = vdwg.mxu0
      %6841 = vmatpush.bf16.msra.mxu0 %v6794
      %6842 = vmatpush.bf16.msra.mxu0 %v6792
      %6843 = vmatpush.bf16.msra.mxu0 %v6790
      %6844 = vmatpush.bf16.msra.mxu0 %v6788
      %6845 = vmatpush.bf16.msra.mxu0 %v6786
      %6846 = vmatpush.bf16.msra.mxu0 %v6784
      %6847 = vmatpush.bf16.msra.mxu0 %v6782
      %6848 = vmatpush.bf16.msra.mxu0 %v6780
      %6849 = vmatmul.bf16.gmra.mxu0 %v6634
      %v6850 = vpop.f32.mrf.mxu0
      %v6851 = vadd.f32 %v6838, %v6850
      %v6852 = vpop.f32.mrf.mxu0
      %6853 = vdwg.mxu0
      %6854 = vmatpush.bf16.msra.mxu0 %v6779
      %6855 = vmatpush.bf16.msra.mxu0 %v6777
      %6856 = vmatpush.bf16.msra.mxu0 %v6775
      %6857 = vmatpush.bf16.msra.mxu0 %v6773
      %6858 = vmatpush.bf16.msra.mxu0 %v6771
      %6859 = vmatpush.bf16.msra.mxu0 %v6769
      %6860 = vmatpush.bf16.msra.mxu0 %v6767
      %6861 = vmatpush.bf16.msra.mxu0 %v6765
      %6862 = vmatmul.bf16.gmra.mxu0 %v6633
      %v6863 = vpop.f32.mrf.mxu0
      %v6864 = vadd.f32 0.0, %v6863
      %v6865 = vpop.f32.mrf.mxu0
      %6866 = vdwg.mxu0
      %6867 = vmatpush.bf16.msra.mxu0 %v6795
      %6868 = vmatpush.bf16.msra.mxu0 %v6793
      %6869 = vmatpush.bf16.msra.mxu0 %v6791
      %6870 = vmatpush.bf16.msra.mxu0 %v6789
      %6871 = vmatpush.bf16.msra.mxu0 %v6787
      %6872 = vmatpush.bf16.msra.mxu0 %v6785
      %6873 = vmatpush.bf16.msra.mxu0 %v6783
      %6874 = vmatpush.bf16.msra.mxu0 %v6781
      %6875 = vmatmul.bf16.gmra.mxu0 %v6634
      %v6876 = vpop.f32.mrf.mxu0
      %v6877 = vadd.f32 %v6864, %v6876
      %v6878 = vpop.f32.mrf.mxu0
      %6879 = vdwg.mxu0
      %v6880 = vadd.f32 %v6600, %v6851
      %v6881 = vadd.f32 %v6601, %v6877
      %s6882 = scalar_lea.vmem %s6, 20
      %v6883 = vld [vmem:[%s6882] sm:$0xf]
      %v6885 = vsel %vm5488, %v6883, 0
      %6887 = vmatpush.bf16.msra.mxu0 0
      %6888 = vmatpush.bf16.msra.mxu0 0
      %6889 = vmatpush.bf16.msra.mxu0 0
      %6890 = vmatpush.bf16.msra.mxu0 0
      %6891 = vmatpush.bf16.msra.mxu0 0
      %6892 = vmatpush.bf16.msra.mxu0 0
      %6893 = vmatpush.bf16.msra.mxu0 %v5485
      %6894 = vmatpush.bf16.msra.mxu0 %v5483
      %6895 = vmatmul.bf16.gmra.mxu0 %v6885
      %v6896 = vpop.f32.mrf.mxu0
      %v6897 = vadd.f32 0.0, %v6896
      %v6898 = vpop.f32.mrf.mxu0
      %6899 = vdwg.mxu0
      %6900 = vmatpush.bf16.msra.mxu0 0
      %6901 = vmatpush.bf16.msra.mxu0 0
      %6902 = vmatpush.bf16.msra.mxu0 0
      %6903 = vmatpush.bf16.msra.mxu0 0
      %6904 = vmatpush.bf16.msra.mxu0 0
      %6905 = vmatpush.bf16.msra.mxu0 0
      %6906 = vmatpush.bf16.msra.mxu0 %v5486
      %6907 = vmatpush.bf16.msra.mxu0 %v5484
      %6908 = vmatmul.bf16.gmra.mxu0 %v6885
      %v6909 = vpop.f32.mrf.mxu0
      %v6910 = vadd.f32 0.0, %v6909
      %v6911 = vpop.f32.mrf.mxu0
      %6912 = vdwg.mxu0
      %v6913 = vpack.c.bf16 %v6897, %v6897
      %v6914 = vpack.c.bf16 %v6910, %v6910
      %s6915 = scalar_lea.vmem %s7, 1280
      %v6916 = vld [vmem:[%s6915] sm:$0xff]
      %v6917 = vld [vmem:[%s6915 + $0x8] sm:$0xff]
      %v6918 = vld [vmem:[%s6915 + $0x10] sm:$0xff]
      %v6919 = vld [vmem:[%s6915 + $0x18] sm:$0xff]
      %v6920 = vld [vmem:[%s6915 + $0x20] sm:$0xff]
      %v6921 = vld [vmem:[%s6915 + $0x28] sm:$0xff]
      %v6922 = vld [vmem:[%s6915 + $0x30] sm:$0xff]
      %v6923 = vld [vmem:[%s6915 + $0x38] sm:$0xff]
      %v6924 = vld [vmem:[%s6915 + $0x40] sm:$0xff]
      %v6925 = vld [vmem:[%s6915 + $0x48] sm:$0xff]
      %v6926 = vld [vmem:[%s6915 + $0x50] sm:$0xff]
      %v6927 = vld [vmem:[%s6915 + $0x58] sm:$0xff]
      %v6928 = vld [vmem:[%s6915 + $0x60] sm:$0xff]
      %v6929 = vld [vmem:[%s6915 + $0x68] sm:$0xff]
      %v6930 = vld [vmem:[%s6915 + $0x70] sm:$0xff]
      %v6931 = vld [vmem:[%s6915 + $0x78] sm:$0xff]
      %v6932 = vld [vmem:[%s6915 + $0x80] sm:$0xff]
      %v6933 = vld [vmem:[%s6915 + $0x88] sm:$0xff]
      %v6934 = vld [vmem:[%s6915 + $0x90] sm:$0xff]
      %v6935 = vld [vmem:[%s6915 + $0x98] sm:$0xff]
      %v6936 = vld [vmem:[%s6915 + $0xa0] sm:$0xff]
      %v6937 = vld [vmem:[%s6915 + $0xa8] sm:$0xff]
      %v6938 = vld [vmem:[%s6915 + $0xb0] sm:$0xff]
      %v6939 = vld [vmem:[%s6915 + $0xb8] sm:$0xff]
      %v6940 = vld [vmem:[%s6915 + $0xc0] sm:$0xff]
      %v6941 = vld [vmem:[%s6915 + $0xc8] sm:$0xff]
      %v6942 = vld [vmem:[%s6915 + $0xd0] sm:$0xff]
      %v6943 = vld [vmem:[%s6915 + $0xd8] sm:$0xff]
      %v6944 = vld [vmem:[%s6915 + $0xe0] sm:$0xff]
      %v6945 = vld [vmem:[%s6915 + $0xe8] sm:$0xff]
      %v6946 = vld [vmem:[%s6915 + $0xf0] sm:$0xff]
      %v6947 = vld [vmem:[%s6915 + $0xf8] sm:$0xff]
      %v6980 = vunpack.c.l.b16 %v6916
      %v6981 = vunpack.c.h.b16 %v6916
      %v6982 = vunpack.c.l.b16 %v6917
      %v6983 = vunpack.c.h.b16 %v6917
      %v6984 = vunpack.c.l.b16 %v6918
      %v6985 = vunpack.c.h.b16 %v6918
      %v6986 = vunpack.c.l.b16 %v6919
      %v6987 = vunpack.c.h.b16 %v6919
      %v6988 = vunpack.c.l.b16 %v6920
      %v6989 = vunpack.c.h.b16 %v6920
      %v6990 = vunpack.c.l.b16 %v6921
      %v6991 = vunpack.c.h.b16 %v6921
      %v6992 = vunpack.c.l.b16 %v6922
      %v6993 = vunpack.c.h.b16 %v6922
      %v6994 = vunpack.c.l.b16 %v6923
      %v6995 = vunpack.c.h.b16 %v6923
      %v6996 = vunpack.c.l.b16 %v6924
      %v6997 = vunpack.c.h.b16 %v6924
      %v6998 = vunpack.c.l.b16 %v6925
      %v6999 = vunpack.c.h.b16 %v6925
      %v7000 = vunpack.c.l.b16 %v6926
      %v7001 = vunpack.c.h.b16 %v6926
      %v7002 = vunpack.c.l.b16 %v6927
      %v7003 = vunpack.c.h.b16 %v6927
      %v7004 = vunpack.c.l.b16 %v6928
      %v7005 = vunpack.c.h.b16 %v6928
      %v7006 = vunpack.c.l.b16 %v6929
      %v7007 = vunpack.c.h.b16 %v6929
      %v7008 = vunpack.c.l.b16 %v6930
      %v7009 = vunpack.c.h.b16 %v6930
      %v7010 = vunpack.c.l.b16 %v6931
      %v7011 = vunpack.c.h.b16 %v6931
      %v7012 = vunpack.c.l.b16 %v6932
      %v7013 = vunpack.c.h.b16 %v6932
      %v7014 = vunpack.c.l.b16 %v6933
      %v7015 = vunpack.c.h.b16 %v6933
      %v7016 = vunpack.c.l.b16 %v6934
      %v7017 = vunpack.c.h.b16 %v6934
      %v7018 = vunpack.c.l.b16 %v6935
      %v7019 = vunpack.c.h.b16 %v6935
      %v7020 = vunpack.c.l.b16 %v6936
      %v7021 = vunpack.c.h.b16 %v6936
      %v7022 = vunpack.c.l.b16 %v6937
      %v7023 = vunpack.c.h.b16 %v6937
      %v7024 = vunpack.c.l.b16 %v6938
      %v7025 = vunpack.c.h.b16 %v6938
      %v7026 = vunpack.c.l.b16 %v6939
      %v7027 = vunpack.c.h.b16 %v6939
      %v7028 = vunpack.c.l.b16 %v6940
      %v7029 = vunpack.c.h.b16 %v6940
      %v7030 = vunpack.c.l.b16 %v6941
      %v7031 = vunpack.c.h.b16 %v6941
      %v7032 = vunpack.c.l.b16 %v6942
      %v7033 = vunpack.c.h.b16 %v6942
      %v7034 = vunpack.c.l.b16 %v6943
      %v7035 = vunpack.c.h.b16 %v6943
      %v7036 = vunpack.c.l.b16 %v6944
      %v7037 = vunpack.c.h.b16 %v6944
      %v7038 = vunpack.c.l.b16 %v6945
      %v7039 = vunpack.c.h.b16 %v6945
      %v7040 = vunpack.c.l.b16 %v6946
      %v7041 = vunpack.c.h.b16 %v6946
      %v7042 = vunpack.c.l.b16 %v6947
      %v7043 = vunpack.c.h.b16 %v6947
      %v7044 = vpack.c.b16 %v6982, %v6980
      %v7045 = vpack.c.b16 %v6983, %v6981
      %v7046 = vpack.c.b16 %v6986, %v6984
      %v7047 = vpack.c.b16 %v6987, %v6985
      %v7048 = vpack.c.b16 %v6990, %v6988
      %v7049 = vpack.c.b16 %v6991, %v6989
      %v7050 = vpack.c.b16 %v6994, %v6992
      %v7051 = vpack.c.b16 %v6995, %v6993
      %v7052 = vpack.c.b16 %v6998, %v6996
      %v7053 = vpack.c.b16 %v6999, %v6997
      %v7054 = vpack.c.b16 %v7002, %v7000
      %v7055 = vpack.c.b16 %v7003, %v7001
      %v7056 = vpack.c.b16 %v7006, %v7004
      %v7057 = vpack.c.b16 %v7007, %v7005
      %v7058 = vpack.c.b16 %v7010, %v7008
      %v7059 = vpack.c.b16 %v7011, %v7009
      %v7060 = vpack.c.b16 %v7014, %v7012
      %v7061 = vpack.c.b16 %v7015, %v7013
      %v7062 = vpack.c.b16 %v7018, %v7016
      %v7063 = vpack.c.b16 %v7019, %v7017
      %v7064 = vpack.c.b16 %v7022, %v7020
      %v7065 = vpack.c.b16 %v7023, %v7021
      %v7066 = vpack.c.b16 %v7026, %v7024
      %v7067 = vpack.c.b16 %v7027, %v7025
      %v7068 = vpack.c.b16 %v7030, %v7028
      %v7069 = vpack.c.b16 %v7031, %v7029
      %v7070 = vpack.c.b16 %v7034, %v7032
      %v7071 = vpack.c.b16 %v7035, %v7033
      %v7072 = vpack.c.b16 %v7038, %v7036
      %v7073 = vpack.c.b16 %v7039, %v7037
      %v7074 = vpack.c.b16 %v7042, %v7040
      %v7075 = vpack.c.b16 %v7043, %v7041
      %7108 = vmatpush.bf16.msra.mxu0 %v7058
      %7109 = vmatpush.bf16.msra.mxu0 %v7056
      %7110 = vmatpush.bf16.msra.mxu0 %v7054
      %7111 = vmatpush.bf16.msra.mxu0 %v7052
      %7112 = vmatpush.bf16.msra.mxu0 %v7050
      %7113 = vmatpush.bf16.msra.mxu0 %v7048
      %7114 = vmatpush.bf16.msra.mxu0 %v7046
      %7115 = vmatpush.bf16.msra.mxu0 %v7044
      %7116 = vmatmul.bf16.gmra.mxu0 %v6913
      %v7117 = vpop.f32.mrf.mxu0
      %v7118 = vadd.f32 0.0, %v7117
      %v7119 = vpop.f32.mrf.mxu0
      %7120 = vdwg.mxu0
      %7121 = vmatpush.bf16.msra.mxu0 %v7074
      %7122 = vmatpush.bf16.msra.mxu0 %v7072
      %7123 = vmatpush.bf16.msra.mxu0 %v7070
      %7124 = vmatpush.bf16.msra.mxu0 %v7068
      %7125 = vmatpush.bf16.msra.mxu0 %v7066
      %7126 = vmatpush.bf16.msra.mxu0 %v7064
      %7127 = vmatpush.bf16.msra.mxu0 %v7062
      %7128 = vmatpush.bf16.msra.mxu0 %v7060
      %7129 = vmatmul.bf16.gmra.mxu0 %v6914
      %v7130 = vpop.f32.mrf.mxu0
      %v7131 = vadd.f32 %v7118, %v7130
      %v7132 = vpop.f32.mrf.mxu0
      %7133 = vdwg.mxu0
      %7134 = vmatpush.bf16.msra.mxu0 %v7059
      %7135 = vmatpush.bf16.msra.mxu0 %v7057
      %7136 = vmatpush.bf16.msra.mxu0 %v7055
      %7137 = vmatpush.bf16.msra.mxu0 %v7053
      %7138 = vmatpush.bf16.msra.mxu0 %v7051
      %7139 = vmatpush.bf16.msra.mxu0 %v7049
      %7140 = vmatpush.bf16.msra.mxu0 %v7047
      %7141 = vmatpush.bf16.msra.mxu0 %v7045
      %7142 = vmatmul.bf16.gmra.mxu0 %v6913
      %v7143 = vpop.f32.mrf.mxu0
      %v7144 = vadd.f32 0.0, %v7143
      %v7145 = vpop.f32.mrf.mxu0
      %7146 = vdwg.mxu0
      %7147 = vmatpush.bf16.msra.mxu0 %v7075
      %7148 = vmatpush.bf16.msra.mxu0 %v7073
      %7149 = vmatpush.bf16.msra.mxu0 %v7071
      %7150 = vmatpush.bf16.msra.mxu0 %v7069
      %7151 = vmatpush.bf16.msra.mxu0 %v7067
      %7152 = vmatpush.bf16.msra.mxu0 %v7065
      %7153 = vmatpush.bf16.msra.mxu0 %v7063
      %7154 = vmatpush.bf16.msra.mxu0 %v7061
      %7155 = vmatmul.bf16.gmra.mxu0 %v6914
      %v7156 = vpop.f32.mrf.mxu0
      %v7157 = vadd.f32 %v7144, %v7156
      %v7158 = vpop.f32.mrf.mxu0
      %7159 = vdwg.mxu0
      %v7160 = vadd.f32 %v6880, %v7131
      %v7161 = vadd.f32 %v6881, %v7157
      %s7162 = scalar_lea.vmem %s6, 24
      %v7163 = vld [vmem:[%s7162] sm:$0xf]
      %v7165 = vsel %vm5488, %v7163, 0
      %7167 = vmatpush.bf16.msra.mxu0 0
      %7168 = vmatpush.bf16.msra.mxu0 0
      %7169 = vmatpush.bf16.msra.mxu0 0
      %7170 = vmatpush.bf16.msra.mxu0 0
      %7171 = vmatpush.bf16.msra.mxu0 0
      %7172 = vmatpush.bf16.msra.mxu0 0
      %7173 = vmatpush.bf16.msra.mxu0 %v5485
      %7174 = vmatpush.bf16.msra.mxu0 %v5483
      %7175 = vmatmul.bf16.gmra.mxu0 %v7165
      %v7176 = vpop.f32.mrf.mxu0
      %v7177 = vadd.f32 0.0, %v7176
      %v7178 = vpop.f32.mrf.mxu0
      %7179 = vdwg.mxu0
      %7180 = vmatpush.bf16.msra.mxu0 0
      %7181 = vmatpush.bf16.msra.mxu0 0
      %7182 = vmatpush.bf16.msra.mxu0 0
      %7183 = vmatpush.bf16.msra.mxu0 0
      %7184 = vmatpush.bf16.msra.mxu0 0
      %7185 = vmatpush.bf16.msra.mxu0 0
      %7186 = vmatpush.bf16.msra.mxu0 %v5486
      %7187 = vmatpush.bf16.msra.mxu0 %v5484
      %7188 = vmatmul.bf16.gmra.mxu0 %v7165
      %v7189 = vpop.f32.mrf.mxu0
      %v7190 = vadd.f32 0.0, %v7189
      %v7191 = vpop.f32.mrf.mxu0
      %7192 = vdwg.mxu0
      %v7193 = vpack.c.bf16 %v7177, %v7177
      %v7194 = vpack.c.bf16 %v7190, %v7190
      %s7195 = scalar_lea.vmem %s7, 1536
      %v7196 = vld [vmem:[%s7195] sm:$0xff]
      %v7197 = vld [vmem:[%s7195 + $0x8] sm:$0xff]
      %v7198 = vld [vmem:[%s7195 + $0x10] sm:$0xff]
      %v7199 = vld [vmem:[%s7195 + $0x18] sm:$0xff]
      %v7200 = vld [vmem:[%s7195 + $0x20] sm:$0xff]
      %v7201 = vld [vmem:[%s7195 + $0x28] sm:$0xff]
      %v7202 = vld [vmem:[%s7195 + $0x30] sm:$0xff]
      %v7203 = vld [vmem:[%s7195 + $0x38] sm:$0xff]
      %v7204 = vld [vmem:[%s7195 + $0x40] sm:$0xff]
      %v7205 = vld [vmem:[%s7195 + $0x48] sm:$0xff]
      %v7206 = vld [vmem:[%s7195 + $0x50] sm:$0xff]
      %v7207 = vld [vmem:[%s7195 + $0x58] sm:$0xff]
      %v7208 = vld [vmem:[%s7195 + $0x60] sm:$0xff]
      %v7209 = vld [vmem:[%s7195 + $0x68] sm:$0xff]
      %v7210 = vld [vmem:[%s7195 + $0x70] sm:$0xff]
      %v7211 = vld [vmem:[%s7195 + $0x78] sm:$0xff]
      %v7212 = vld [vmem:[%s7195 + $0x80] sm:$0xff]
      %v7213 = vld [vmem:[%s7195 + $0x88] sm:$0xff]
      %v7214 = vld [vmem:[%s7195 + $0x90] sm:$0xff]
      %v7215 = vld [vmem:[%s7195 + $0x98] sm:$0xff]
      %v7216 = vld [vmem:[%s7195 + $0xa0] sm:$0xff]
      %v7217 = vld [vmem:[%s7195 + $0xa8] sm:$0xff]
      %v7218 = vld [vmem:[%s7195 + $0xb0] sm:$0xff]
      %v7219 = vld [vmem:[%s7195 + $0xb8] sm:$0xff]
      %v7220 = vld [vmem:[%s7195 + $0xc0] sm:$0xff]
      %v7221 = vld [vmem:[%s7195 + $0xc8] sm:$0xff]
      %v7222 = vld [vmem:[%s7195 + $0xd0] sm:$0xff]
      %v7223 = vld [vmem:[%s7195 + $0xd8] sm:$0xff]
      %v7224 = vld [vmem:[%s7195 + $0xe0] sm:$0xff]
      %v7225 = vld [vmem:[%s7195 + $0xe8] sm:$0xff]
      %v7226 = vld [vmem:[%s7195 + $0xf0] sm:$0xff]
      %v7227 = vld [vmem:[%s7195 + $0xf8] sm:$0xff]
      %v7260 = vunpack.c.l.b16 %v7196
      %v7261 = vunpack.c.h.b16 %v7196
      %v7262 = vunpack.c.l.b16 %v7197
      %v7263 = vunpack.c.h.b16 %v7197
      %v7264 = vunpack.c.l.b16 %v7198
      %v7265 = vunpack.c.h.b16 %v7198
      %v7266 = vunpack.c.l.b16 %v7199
      %v7267 = vunpack.c.h.b16 %v7199
      %v7268 = vunpack.c.l.b16 %v7200
      %v7269 = vunpack.c.h.b16 %v7200
      %v7270 = vunpack.c.l.b16 %v7201
      %v7271 = vunpack.c.h.b16 %v7201
      %v7272 = vunpack.c.l.b16 %v7202
      %v7273 = vunpack.c.h.b16 %v7202
      %v7274 = vunpack.c.l.b16 %v7203
      %v7275 = vunpack.c.h.b16 %v7203
      %v7276 = vunpack.c.l.b16 %v7204
      %v7277 = vunpack.c.h.b16 %v7204
      %v7278 = vunpack.c.l.b16 %v7205
      %v7279 = vunpack.c.h.b16 %v7205
      %v7280 = vunpack.c.l.b16 %v7206
      %v7281 = vunpack.c.h.b16 %v7206
      %v7282 = vunpack.c.l.b16 %v7207
      %v7283 = vunpack.c.h.b16 %v7207
      %v7284 = vunpack.c.l.b16 %v7208
      %v7285 = vunpack.c.h.b16 %v7208
      %v7286 = vunpack.c.l.b16 %v7209
      %v7287 = vunpack.c.h.b16 %v7209
      %v7288 = vunpack.c.l.b16 %v7210
      %v7289 = vunpack.c.h.b16 %v7210
      %v7290 = vunpack.c.l.b16 %v7211
      %v7291 = vunpack.c.h.b16 %v7211
      %v7292 = vunpack.c.l.b16 %v7212
      %v7293 = vunpack.c.h.b16 %v7212
      %v7294 = vunpack.c.l.b16 %v7213
      %v7295 = vunpack.c.h.b16 %v7213
      %v7296 = vunpack.c.l.b16 %v7214
      %v7297 = vunpack.c.h.b16 %v7214
      %v7298 = vunpack.c.l.b16 %v7215
      %v7299 = vunpack.c.h.b16 %v7215
      %v7300 = vunpack.c.l.b16 %v7216
      %v7301 = vunpack.c.h.b16 %v7216
      %v7302 = vunpack.c.l.b16 %v7217
      %v7303 = vunpack.c.h.b16 %v7217
      %v7304 = vunpack.c.l.b16 %v7218
      %v7305 = vunpack.c.h.b16 %v7218
      %v7306 = vunpack.c.l.b16 %v7219
      %v7307 = vunpack.c.h.b16 %v7219
      %v7308 = vunpack.c.l.b16 %v7220
      %v7309 = vunpack.c.h.b16 %v7220
      %v7310 = vunpack.c.l.b16 %v7221
      %v7311 = vunpack.c.h.b16 %v7221
      %v7312 = vunpack.c.l.b16 %v7222
      %v7313 = vunpack.c.h.b16 %v7222
      %v7314 = vunpack.c.l.b16 %v7223
      %v7315 = vunpack.c.h.b16 %v7223
      %v7316 = vunpack.c.l.b16 %v7224
      %v7317 = vunpack.c.h.b16 %v7224
      %v7318 = vunpack.c.l.b16 %v7225
      %v7319 = vunpack.c.h.b16 %v7225
      %v7320 = vunpack.c.l.b16 %v7226
      %v7321 = vunpack.c.h.b16 %v7226
      %v7322 = vunpack.c.l.b16 %v7227
      %v7323 = vunpack.c.h.b16 %v7227
      %v7324 = vpack.c.b16 %v7262, %v7260
      %v7325 = vpack.c.b16 %v7263, %v7261
      %v7326 = vpack.c.b16 %v7266, %v7264
      %v7327 = vpack.c.b16 %v7267, %v7265
      %v7328 = vpack.c.b16 %v7270, %v7268
      %v7329 = vpack.c.b16 %v7271, %v7269
      %v7330 = vpack.c.b16 %v7274, %v7272
      %v7331 = vpack.c.b16 %v7275, %v7273
      %v7332 = vpack.c.b16 %v7278, %v7276
      %v7333 = vpack.c.b16 %v7279, %v7277
      %v7334 = vpack.c.b16 %v7282, %v7280
      %v7335 = vpack.c.b16 %v7283, %v7281
      %v7336 = vpack.c.b16 %v7286, %v7284
      %v7337 = vpack.c.b16 %v7287, %v7285
      %v7338 = vpack.c.b16 %v7290, %v7288
      %v7339 = vpack.c.b16 %v7291, %v7289
      %v7340 = vpack.c.b16 %v7294, %v7292
      %v7341 = vpack.c.b16 %v7295, %v7293
      %v7342 = vpack.c.b16 %v7298, %v7296
      %v7343 = vpack.c.b16 %v7299, %v7297
      %v7344 = vpack.c.b16 %v7302, %v7300
      %v7345 = vpack.c.b16 %v7303, %v7301
      %v7346 = vpack.c.b16 %v7306, %v7304
      %v7347 = vpack.c.b16 %v7307, %v7305
      %v7348 = vpack.c.b16 %v7310, %v7308
      %v7349 = vpack.c.b16 %v7311, %v7309
      %v7350 = vpack.c.b16 %v7314, %v7312
      %v7351 = vpack.c.b16 %v7315, %v7313
      %v7352 = vpack.c.b16 %v7318, %v7316
      %v7353 = vpack.c.b16 %v7319, %v7317
      %v7354 = vpack.c.b16 %v7322, %v7320
      %v7355 = vpack.c.b16 %v7323, %v7321
      %7388 = vmatpush.bf16.msra.mxu0 %v7338
      %7389 = vmatpush.bf16.msra.mxu0 %v7336
      %7390 = vmatpush.bf16.msra.mxu0 %v7334
      %7391 = vmatpush.bf16.msra.mxu0 %v7332
      %7392 = vmatpush.bf16.msra.mxu0 %v7330
      %7393 = vmatpush.bf16.msra.mxu0 %v7328
      %7394 = vmatpush.bf16.msra.mxu0 %v7326
      %7395 = vmatpush.bf16.msra.mxu0 %v7324
      %7396 = vmatmul.bf16.gmra.mxu0 %v7193
      %v7397 = vpop.f32.mrf.mxu0
      %v7398 = vadd.f32 0.0, %v7397
      %v7399 = vpop.f32.mrf.mxu0
      %7400 = vdwg.mxu0
      %7401 = vmatpush.bf16.msra.mxu0 %v7354
      %7402 = vmatpush.bf16.msra.mxu0 %v7352
      %7403 = vmatpush.bf16.msra.mxu0 %v7350
      %7404 = vmatpush.bf16.msra.mxu0 %v7348
      %7405 = vmatpush.bf16.msra.mxu0 %v7346
      %7406 = vmatpush.bf16.msra.mxu0 %v7344
      %7407 = vmatpush.bf16.msra.mxu0 %v7342
      %7408 = vmatpush.bf16.msra.mxu0 %v7340
      %7409 = vmatmul.bf16.gmra.mxu0 %v7194
      %v7410 = vpop.f32.mrf.mxu0
      %v7411 = vadd.f32 %v7398, %v7410
      %v7412 = vpop.f32.mrf.mxu0
      %7413 = vdwg.mxu0
      %7414 = vmatpush.bf16.msra.mxu0 %v7339
      %7415 = vmatpush.bf16.msra.mxu0 %v7337
      %7416 = vmatpush.bf16.msra.mxu0 %v7335
      %7417 = vmatpush.bf16.msra.mxu0 %v7333
      %7418 = vmatpush.bf16.msra.mxu0 %v7331
      %7419 = vmatpush.bf16.msra.mxu0 %v7329
      %7420 = vmatpush.bf16.msra.mxu0 %v7327
      %7421 = vmatpush.bf16.msra.mxu0 %v7325
      %7422 = vmatmul.bf16.gmra.mxu0 %v7193
      %v7423 = vpop.f32.mrf.mxu0
      %v7424 = vadd.f32 0.0, %v7423
      %v7425 = vpop.f32.mrf.mxu0
      %7426 = vdwg.mxu0
      %7427 = vmatpush.bf16.msra.mxu0 %v7355
      %7428 = vmatpush.bf16.msra.mxu0 %v7353
      %7429 = vmatpush.bf16.msra.mxu0 %v7351
      %7430 = vmatpush.bf16.msra.mxu0 %v7349
      %7431 = vmatpush.bf16.msra.mxu0 %v7347
      %7432 = vmatpush.bf16.msra.mxu0 %v7345
      %7433 = vmatpush.bf16.msra.mxu0 %v7343
      %7434 = vmatpush.bf16.msra.mxu0 %v7341
      %7435 = vmatmul.bf16.gmra.mxu0 %v7194
      %v7436 = vpop.f32.mrf.mxu0
      %v7437 = vadd.f32 %v7424, %v7436
      %v7438 = vpop.f32.mrf.mxu0
      %7439 = vdwg.mxu0
      %v7440 = vadd.f32 %v7160, %v7411
      %v7441 = vadd.f32 %v7161, %v7437
      %s7442 = scalar_lea.vmem %s6, 28
      %v7443 = vld [vmem:[%s7442] sm:$0xf]
      %v7445 = vsel %vm5488, %v7443, 0
      %7447 = vmatpush.bf16.msra.mxu0 0
      %7448 = vmatpush.bf16.msra.mxu0 0
      %7449 = vmatpush.bf16.msra.mxu0 0
      %7450 = vmatpush.bf16.msra.mxu0 0
      %7451 = vmatpush.bf16.msra.mxu0 0
      %7452 = vmatpush.bf16.msra.mxu0 0
      %7453 = vmatpush.bf16.msra.mxu0 %v5485
      %7454 = vmatpush.bf16.msra.mxu0 %v5483
      %7455 = vmatmul.bf16.gmra.mxu0 %v7445
      %v7456 = vpop.f32.mrf.mxu0
      %v7457 = vadd.f32 0.0, %v7456
      %v7458 = vpop.f32.mrf.mxu0
      %7459 = vdwg.mxu0
      %7460 = vmatpush.bf16.msra.mxu0 0
      %7461 = vmatpush.bf16.msra.mxu0 0
      %7462 = vmatpush.bf16.msra.mxu0 0
      %7463 = vmatpush.bf16.msra.mxu0 0
      %7464 = vmatpush.bf16.msra.mxu0 0
      %7465 = vmatpush.bf16.msra.mxu0 0
      %7466 = vmatpush.bf16.msra.mxu0 %v5486
      %7467 = vmatpush.bf16.msra.mxu0 %v5484
      %7468 = vmatmul.bf16.gmra.mxu0 %v7445
      %v7469 = vpop.f32.mrf.mxu0
      %v7470 = vadd.f32 0.0, %v7469
      %v7471 = vpop.f32.mrf.mxu0
      %7472 = vdwg.mxu0
      %v7473 = vpack.c.bf16 %v7457, %v7457
      %v7474 = vpack.c.bf16 %v7470, %v7470
      %s7475 = scalar_lea.vmem %s7, 1792
      %v7476 = vld [vmem:[%s7475] sm:$0xff]
      %v7477 = vld [vmem:[%s7475 + $0x8] sm:$0xff]
      %v7478 = vld [vmem:[%s7475 + $0x10] sm:$0xff]
      %v7479 = vld [vmem:[%s7475 + $0x18] sm:$0xff]
      %v7480 = vld [vmem:[%s7475 + $0x20] sm:$0xff]
      %v7481 = vld [vmem:[%s7475 + $0x28] sm:$0xff]
      %v7482 = vld [vmem:[%s7475 + $0x30] sm:$0xff]
      %v7483 = vld [vmem:[%s7475 + $0x38] sm:$0xff]
      %v7484 = vld [vmem:[%s7475 + $0x40] sm:$0xff]
      %v7485 = vld [vmem:[%s7475 + $0x48] sm:$0xff]
      %v7486 = vld [vmem:[%s7475 + $0x50] sm:$0xff]
      %v7487 = vld [vmem:[%s7475 + $0x58] sm:$0xff]
      %v7488 = vld [vmem:[%s7475 + $0x60] sm:$0xff]
      %v7489 = vld [vmem:[%s7475 + $0x68] sm:$0xff]
      %v7490 = vld [vmem:[%s7475 + $0x70] sm:$0xff]
      %v7491 = vld [vmem:[%s7475 + $0x78] sm:$0xff]
      %v7492 = vld [vmem:[%s7475 + $0x80] sm:$0xff]
      %v7493 = vld [vmem:[%s7475 + $0x88] sm:$0xff]
      %v7494 = vld [vmem:[%s7475 + $0x90] sm:$0xff]
      %v7495 = vld [vmem:[%s7475 + $0x98] sm:$0xff]
      %v7496 = vld [vmem:[%s7475 + $0xa0] sm:$0xff]
      %v7497 = vld [vmem:[%s7475 + $0xa8] sm:$0xff]
      %v7498 = vld [vmem:[%s7475 + $0xb0] sm:$0xff]
      %v7499 = vld [vmem:[%s7475 + $0xb8] sm:$0xff]
      %v7500 = vld [vmem:[%s7475 + $0xc0] sm:$0xff]
      %v7501 = vld [vmem:[%s7475 + $0xc8] sm:$0xff]
      %v7502 = vld [vmem:[%s7475 + $0xd0] sm:$0xff]
      %v7503 = vld [vmem:[%s7475 + $0xd8] sm:$0xff]
      %v7504 = vld [vmem:[%s7475 + $0xe0] sm:$0xff]
      %v7505 = vld [vmem:[%s7475 + $0xe8] sm:$0xff]
      %v7506 = vld [vmem:[%s7475 + $0xf0] sm:$0xff]
      %v7507 = vld [vmem:[%s7475 + $0xf8] sm:$0xff]
      %v7540 = vunpack.c.l.b16 %v7476
      %v7541 = vunpack.c.h.b16 %v7476
      %v7542 = vunpack.c.l.b16 %v7477
      %v7543 = vunpack.c.h.b16 %v7477
      %v7544 = vunpack.c.l.b16 %v7478
      %v7545 = vunpack.c.h.b16 %v7478
      %v7546 = vunpack.c.l.b16 %v7479
      %v7547 = vunpack.c.h.b16 %v7479
      %v7548 = vunpack.c.l.b16 %v7480
      %v7549 = vunpack.c.h.b16 %v7480
      %v7550 = vunpack.c.l.b16 %v7481
      %v7551 = vunpack.c.h.b16 %v7481
      %v7552 = vunpack.c.l.b16 %v7482
      %v7553 = vunpack.c.h.b16 %v7482
      %v7554 = vunpack.c.l.b16 %v7483
      %v7555 = vunpack.c.h.b16 %v7483
      %v7556 = vunpack.c.l.b16 %v7484
      %v7557 = vunpack.c.h.b16 %v7484
      %v7558 = vunpack.c.l.b16 %v7485
      %v7559 = vunpack.c.h.b16 %v7485
      %v7560 = vunpack.c.l.b16 %v7486
      %v7561 = vunpack.c.h.b16 %v7486
      %v7562 = vunpack.c.l.b16 %v7487
      %v7563 = vunpack.c.h.b16 %v7487
      %v7564 = vunpack.c.l.b16 %v7488
      %v7565 = vunpack.c.h.b16 %v7488
      %v7566 = vunpack.c.l.b16 %v7489
      %v7567 = vunpack.c.h.b16 %v7489
      %v7568 = vunpack.c.l.b16 %v7490
      %v7569 = vunpack.c.h.b16 %v7490
      %v7570 = vunpack.c.l.b16 %v7491
      %v7571 = vunpack.c.h.b16 %v7491
      %v7572 = vunpack.c.l.b16 %v7492
      %v7573 = vunpack.c.h.b16 %v7492
      %v7574 = vunpack.c.l.b16 %v7493
      %v7575 = vunpack.c.h.b16 %v7493
      %v7576 = vunpack.c.l.b16 %v7494
      %v7577 = vunpack.c.h.b16 %v7494
      %v7578 = vunpack.c.l.b16 %v7495
      %v7579 = vunpack.c.h.b16 %v7495
      %v7580 = vunpack.c.l.b16 %v7496
      %v7581 = vunpack.c.h.b16 %v7496
      %v7582 = vunpack.c.l.b16 %v7497
      %v7583 = vunpack.c.h.b16 %v7497
      %v7584 = vunpack.c.l.b16 %v7498
      %v7585 = vunpack.c.h.b16 %v7498
      %v7586 = vunpack.c.l.b16 %v7499
      %v7587 = vunpack.c.h.b16 %v7499
      %v7588 = vunpack.c.l.b16 %v7500
      %v7589 = vunpack.c.h.b16 %v7500
      %v7590 = vunpack.c.l.b16 %v7501
      %v7591 = vunpack.c.h.b16 %v7501
      %v7592 = vunpack.c.l.b16 %v7502
      %v7593 = vunpack.c.h.b16 %v7502
      %v7594 = vunpack.c.l.b16 %v7503
      %v7595 = vunpack.c.h.b16 %v7503
      %v7596 = vunpack.c.l.b16 %v7504
      %v7597 = vunpack.c.h.b16 %v7504
      %v7598 = vunpack.c.l.b16 %v7505
      %v7599 = vunpack.c.h.b16 %v7505
      %v7600 = vunpack.c.l.b16 %v7506
      %v7601 = vunpack.c.h.b16 %v7506
      %v7602 = vunpack.c.l.b16 %v7507
      %v7603 = vunpack.c.h.b16 %v7507
      %v7604 = vpack.c.b16 %v7542, %v7540
      %v7605 = vpack.c.b16 %v7543, %v7541
      %v7606 = vpack.c.b16 %v7546, %v7544
      %v7607 = vpack.c.b16 %v7547, %v7545
      %v7608 = vpack.c.b16 %v7550, %v7548
      %v7609 = vpack.c.b16 %v7551, %v7549
      %v7610 = vpack.c.b16 %v7554, %v7552
      %v7611 = vpack.c.b16 %v7555, %v7553
      %v7612 = vpack.c.b16 %v7558, %v7556
      %v7613 = vpack.c.b16 %v7559, %v7557
      %v7614 = vpack.c.b16 %v7562, %v7560
      %v7615 = vpack.c.b16 %v7563, %v7561
      %v7616 = vpack.c.b16 %v7566, %v7564
      %v7617 = vpack.c.b16 %v7567, %v7565
      %v7618 = vpack.c.b16 %v7570, %v7568
      %v7619 = vpack.c.b16 %v7571, %v7569
      %v7620 = vpack.c.b16 %v7574, %v7572
      %v7621 = vpack.c.b16 %v7575, %v7573
      %v7622 = vpack.c.b16 %v7578, %v7576
      %v7623 = vpack.c.b16 %v7579, %v7577
      %v7624 = vpack.c.b16 %v7582, %v7580
      %v7625 = vpack.c.b16 %v7583, %v7581
      %v7626 = vpack.c.b16 %v7586, %v7584
      %v7627 = vpack.c.b16 %v7587, %v7585
      %v7628 = vpack.c.b16 %v7590, %v7588
      %v7629 = vpack.c.b16 %v7591, %v7589
      %v7630 = vpack.c.b16 %v7594, %v7592
      %v7631 = vpack.c.b16 %v7595, %v7593
      %v7632 = vpack.c.b16 %v7598, %v7596
      %v7633 = vpack.c.b16 %v7599, %v7597
      %v7634 = vpack.c.b16 %v7602, %v7600
      %v7635 = vpack.c.b16 %v7603, %v7601
      %7668 = vmatpush.bf16.msra.mxu0 %v7618
      %7669 = vmatpush.bf16.msra.mxu0 %v7616
      %7670 = vmatpush.bf16.msra.mxu0 %v7614
      %7671 = vmatpush.bf16.msra.mxu0 %v7612
      %7672 = vmatpush.bf16.msra.mxu0 %v7610
      %7673 = vmatpush.bf16.msra.mxu0 %v7608
      %7674 = vmatpush.bf16.msra.mxu0 %v7606
      %7675 = vmatpush.bf16.msra.mxu0 %v7604
      %7676 = vmatmul.bf16.gmra.mxu0 %v7473
      %v7677 = vpop.f32.mrf.mxu0
      %v7678 = vadd.f32 0.0, %v7677
      %v7679 = vpop.f32.mrf.mxu0
      %7680 = vdwg.mxu0
      %7681 = vmatpush.bf16.msra.mxu0 %v7634
      %7682 = vmatpush.bf16.msra.mxu0 %v7632
      %7683 = vmatpush.bf16.msra.mxu0 %v7630
      %7684 = vmatpush.bf16.msra.mxu0 %v7628
      %7685 = vmatpush.bf16.msra.mxu0 %v7626
      %7686 = vmatpush.bf16.msra.mxu0 %v7624
      %7687 = vmatpush.bf16.msra.mxu0 %v7622
      %7688 = vmatpush.bf16.msra.mxu0 %v7620
      %7689 = vmatmul.bf16.gmra.mxu0 %v7474
      %v7690 = vpop.f32.mrf.mxu0
      %v7691 = vadd.f32 %v7678, %v7690
      %v7692 = vpop.f32.mrf.mxu0
      %7693 = vdwg.mxu0
      %7694 = vmatpush.bf16.msra.mxu0 %v7619
      %7695 = vmatpush.bf16.msra.mxu0 %v7617
      %7696 = vmatpush.bf16.msra.mxu0 %v7615
      %7697 = vmatpush.bf16.msra.mxu0 %v7613
      %7698 = vmatpush.bf16.msra.mxu0 %v7611
      %7699 = vmatpush.bf16.msra.mxu0 %v7609
      %7700 = vmatpush.bf16.msra.mxu0 %v7607
      %7701 = vmatpush.bf16.msra.mxu0 %v7605
      %7702 = vmatmul.bf16.gmra.mxu0 %v7473
      %v7703 = vpop.f32.mrf.mxu0
      %v7704 = vadd.f32 0.0, %v7703
      %v7705 = vpop.f32.mrf.mxu0
      %7706 = vdwg.mxu0
      %7707 = vmatpush.bf16.msra.mxu0 %v7635
      %7708 = vmatpush.bf16.msra.mxu0 %v7633
      %7709 = vmatpush.bf16.msra.mxu0 %v7631
      %7710 = vmatpush.bf16.msra.mxu0 %v7629
      %7711 = vmatpush.bf16.msra.mxu0 %v7627
      %7712 = vmatpush.bf16.msra.mxu0 %v7625
      %7713 = vmatpush.bf16.msra.mxu0 %v7623
      %7714 = vmatpush.bf16.msra.mxu0 %v7621
      %7715 = vmatmul.bf16.gmra.mxu0 %v7474
      %v7716 = vpop.f32.mrf.mxu0
      %v7717 = vadd.f32 %v7704, %v7716
      %v7718 = vpop.f32.mrf.mxu0
      %7719 = vdwg.mxu0
      %v7720 = vadd.f32 %v7440, %v7691
      %v7721 = vadd.f32 %v7441, %v7717
      %s7722 = scalar_lea.vmem %s6, 32
      %v7723 = vld [vmem:[%s7722] sm:$0xf]
      %v7725 = vsel %vm5488, %v7723, 0
      %7727 = vmatpush.bf16.msra.mxu0 0
      %7728 = vmatpush.bf16.msra.mxu0 0
      %7729 = vmatpush.bf16.msra.mxu0 0
      %7730 = vmatpush.bf16.msra.mxu0 0
      %7731 = vmatpush.bf16.msra.mxu0 0
      %7732 = vmatpush.bf16.msra.mxu0 0
      %7733 = vmatpush.bf16.msra.mxu0 %v5485
      %7734 = vmatpush.bf16.msra.mxu0 %v5483
      %7735 = vmatmul.bf16.gmra.mxu0 %v7725
      %v7736 = vpop.f32.mrf.mxu0
      %v7737 = vadd.f32 0.0, %v7736
      %v7738 = vpop.f32.mrf.mxu0
      %7739 = vdwg.mxu0
      %7740 = vmatpush.bf16.msra.mxu0 0
      %7741 = vmatpush.bf16.msra.mxu0 0
      %7742 = vmatpush.bf16.msra.mxu0 0
      %7743 = vmatpush.bf16.msra.mxu0 0
      %7744 = vmatpush.bf16.msra.mxu0 0
      %7745 = vmatpush.bf16.msra.mxu0 0
      %7746 = vmatpush.bf16.msra.mxu0 %v5486
      %7747 = vmatpush.bf16.msra.mxu0 %v5484
      %7748 = vmatmul.bf16.gmra.mxu0 %v7725
      %v7749 = vpop.f32.mrf.mxu0
      %v7750 = vadd.f32 0.0, %v7749
      %v7751 = vpop.f32.mrf.mxu0
      %7752 = vdwg.mxu0
      %v7753 = vpack.c.bf16 %v7737, %v7737
      %v7754 = vpack.c.bf16 %v7750, %v7750
      %s7755 = scalar_lea.vmem %s7, 2048
      %v7756 = vld [vmem:[%s7755] sm:$0xff]
      %v7757 = vld [vmem:[%s7755 + $0x8] sm:$0xff]
      %v7758 = vld [vmem:[%s7755 + $0x10] sm:$0xff]
      %v7759 = vld [vmem:[%s7755 + $0x18] sm:$0xff]
      %v7760 = vld [vmem:[%s7755 + $0x20] sm:$0xff]
      %v7761 = vld [vmem:[%s7755 + $0x28] sm:$0xff]
      %v7762 = vld [vmem:[%s7755 + $0x30] sm:$0xff]
      %v7763 = vld [vmem:[%s7755 + $0x38] sm:$0xff]
      %v7764 = vld [vmem:[%s7755 + $0x40] sm:$0xff]
      %v7765 = vld [vmem:[%s7755 + $0x48] sm:$0xff]
      %v7766 = vld [vmem:[%s7755 + $0x50] sm:$0xff]
      %v7767 = vld [vmem:[%s7755 + $0x58] sm:$0xff]
      %v7768 = vld [vmem:[%s7755 + $0x60] sm:$0xff]
      %v7769 = vld [vmem:[%s7755 + $0x68] sm:$0xff]
      %v7770 = vld [vmem:[%s7755 + $0x70] sm:$0xff]
      %v7771 = vld [vmem:[%s7755 + $0x78] sm:$0xff]
      %v7772 = vld [vmem:[%s7755 + $0x80] sm:$0xff]
      %v7773 = vld [vmem:[%s7755 + $0x88] sm:$0xff]
      %v7774 = vld [vmem:[%s7755 + $0x90] sm:$0xff]
      %v7775 = vld [vmem:[%s7755 + $0x98] sm:$0xff]
      %v7776 = vld [vmem:[%s7755 + $0xa0] sm:$0xff]
      %v7777 = vld [vmem:[%s7755 + $0xa8] sm:$0xff]
      %v7778 = vld [vmem:[%s7755 + $0xb0] sm:$0xff]
      %v7779 = vld [vmem:[%s7755 + $0xb8] sm:$0xff]
      %v7780 = vld [vmem:[%s7755 + $0xc0] sm:$0xff]
      %v7781 = vld [vmem:[%s7755 + $0xc8] sm:$0xff]
      %v7782 = vld [vmem:[%s7755 + $0xd0] sm:$0xff]
      %v7783 = vld [vmem:[%s7755 + $0xd8] sm:$0xff]
      %v7784 = vld [vmem:[%s7755 + $0xe0] sm:$0xff]
      %v7785 = vld [vmem:[%s7755 + $0xe8] sm:$0xff]
      %v7786 = vld [vmem:[%s7755 + $0xf0] sm:$0xff]
      %v7787 = vld [vmem:[%s7755 + $0xf8] sm:$0xff]
      %v7820 = vunpack.c.l.b16 %v7756
      %v7821 = vunpack.c.h.b16 %v7756
      %v7822 = vunpack.c.l.b16 %v7757
      %v7823 = vunpack.c.h.b16 %v7757
      %v7824 = vunpack.c.l.b16 %v7758
      %v7825 = vunpack.c.h.b16 %v7758
      %v7826 = vunpack.c.l.b16 %v7759
      %v7827 = vunpack.c.h.b16 %v7759
      %v7828 = vunpack.c.l.b16 %v7760
      %v7829 = vunpack.c.h.b16 %v7760
      %v7830 = vunpack.c.l.b16 %v7761
      %v7831 = vunpack.c.h.b16 %v7761
      %v7832 = vunpack.c.l.b16 %v7762
      %v7833 = vunpack.c.h.b16 %v7762
      %v7834 = vunpack.c.l.b16 %v7763
      %v7835 = vunpack.c.h.b16 %v7763
      %v7836 = vunpack.c.l.b16 %v7764
      %v7837 = vunpack.c.h.b16 %v7764
      %v7838 = vunpack.c.l.b16 %v7765
      %v7839 = vunpack.c.h.b16 %v7765
      %v7840 = vunpack.c.l.b16 %v7766
      %v7841 = vunpack.c.h.b16 %v7766
      %v7842 = vunpack.c.l.b16 %v7767
      %v7843 = vunpack.c.h.b16 %v7767
      %v7844 = vunpack.c.l.b16 %v7768
      %v7845 = vunpack.c.h.b16 %v7768
      %v7846 = vunpack.c.l.b16 %v7769
      %v7847 = vunpack.c.h.b16 %v7769
      %v7848 = vunpack.c.l.b16 %v7770
      %v7849 = vunpack.c.h.b16 %v7770
      %v7850 = vunpack.c.l.b16 %v7771
      %v7851 = vunpack.c.h.b16 %v7771
      %v7852 = vunpack.c.l.b16 %v7772
      %v7853 = vunpack.c.h.b16 %v7772
      %v7854 = vunpack.c.l.b16 %v7773
      %v7855 = vunpack.c.h.b16 %v7773
      %v7856 = vunpack.c.l.b16 %v7774
      %v7857 = vunpack.c.h.b16 %v7774
      %v7858 = vunpack.c.l.b16 %v7775
      %v7859 = vunpack.c.h.b16 %v7775
      %v7860 = vunpack.c.l.b16 %v7776
      %v7861 = vunpack.c.h.b16 %v7776
      %v7862 = vunpack.c.l.b16 %v7777
      %v7863 = vunpack.c.h.b16 %v7777
      %v7864 = vunpack.c.l.b16 %v7778
      %v7865 = vunpack.c.h.b16 %v7778
      %v7866 = vunpack.c.l.b16 %v7779
      %v7867 = vunpack.c.h.b16 %v7779
      %v7868 = vunpack.c.l.b16 %v7780
      %v7869 = vunpack.c.h.b16 %v7780
      %v7870 = vunpack.c.l.b16 %v7781
      %v7871 = vunpack.c.h.b16 %v7781
      %v7872 = vunpack.c.l.b16 %v7782
      %v7873 = vunpack.c.h.b16 %v7782
      %v7874 = vunpack.c.l.b16 %v7783
      %v7875 = vunpack.c.h.b16 %v7783
      %v7876 = vunpack.c.l.b16 %v7784
      %v7877 = vunpack.c.h.b16 %v7784
      %v7878 = vunpack.c.l.b16 %v7785
      %v7879 = vunpack.c.h.b16 %v7785
      %v7880 = vunpack.c.l.b16 %v7786
      %v7881 = vunpack.c.h.b16 %v7786
      %v7882 = vunpack.c.l.b16 %v7787
      %v7883 = vunpack.c.h.b16 %v7787
      %v7884 = vpack.c.b16 %v7822, %v7820
      %v7885 = vpack.c.b16 %v7823, %v7821
      %v7886 = vpack.c.b16 %v7826, %v7824
      %v7887 = vpack.c.b16 %v7827, %v7825
      %v7888 = vpack.c.b16 %v7830, %v7828
      %v7889 = vpack.c.b16 %v7831, %v7829
      %v7890 = vpack.c.b16 %v7834, %v7832
      %v7891 = vpack.c.b16 %v7835, %v7833
      %v7892 = vpack.c.b16 %v7838, %v7836
      %v7893 = vpack.c.b16 %v7839, %v7837
      %v7894 = vpack.c.b16 %v7842, %v7840
      %v7895 = vpack.c.b16 %v7843, %v7841
      %v7896 = vpack.c.b16 %v7846, %v7844
      %v7897 = vpack.c.b16 %v7847, %v7845
      %v7898 = vpack.c.b16 %v7850, %v7848
      %v7899 = vpack.c.b16 %v7851, %v7849
      %v7900 = vpack.c.b16 %v7854, %v7852
      %v7901 = vpack.c.b16 %v7855, %v7853
      %v7902 = vpack.c.b16 %v7858, %v7856
      %v7903 = vpack.c.b16 %v7859, %v7857
      %v7904 = vpack.c.b16 %v7862, %v7860
      %v7905 = vpack.c.b16 %v7863, %v7861
      %v7906 = vpack.c.b16 %v7866, %v7864
      %v7907 = vpack.c.b16 %v7867, %v7865
      %v7908 = vpack.c.b16 %v7870, %v7868
      %v7909 = vpack.c.b16 %v7871, %v7869
      %v7910 = vpack.c.b16 %v7874, %v7872
      %v7911 = vpack.c.b16 %v7875, %v7873
      %v7912 = vpack.c.b16 %v7878, %v7876
      %v7913 = vpack.c.b16 %v7879, %v7877
      %v7914 = vpack.c.b16 %v7882, %v7880
      %v7915 = vpack.c.b16 %v7883, %v7881
      %7948 = vmatpush.bf16.msra.mxu0 %v7898
      %7949 = vmatpush.bf16.msra.mxu0 %v7896
      %7950 = vmatpush.bf16.msra.mxu0 %v7894
      %7951 = vmatpush.bf16.msra.mxu0 %v7892
      %7952 = vmatpush.bf16.msra.mxu0 %v7890
      %7953 = vmatpush.bf16.msra.mxu0 %v7888
      %7954 = vmatpush.bf16.msra.mxu0 %v7886
      %7955 = vmatpush.bf16.msra.mxu0 %v7884
      %7956 = vmatmul.bf16.gmra.mxu0 %v7753
      %v7957 = vpop.f32.mrf.mxu0
      %v7958 = vadd.f32 0.0, %v7957
      %v7959 = vpop.f32.mrf.mxu0
      %7960 = vdwg.mxu0
      %7961 = vmatpush.bf16.msra.mxu0 %v7914
      %7962 = vmatpush.bf16.msra.mxu0 %v7912
      %7963 = vmatpush.bf16.msra.mxu0 %v7910
      %7964 = vmatpush.bf16.msra.mxu0 %v7908
      %7965 = vmatpush.bf16.msra.mxu0 %v7906
      %7966 = vmatpush.bf16.msra.mxu0 %v7904
      %7967 = vmatpush.bf16.msra.mxu0 %v7902
      %7968 = vmatpush.bf16.msra.mxu0 %v7900
      %7969 = vmatmul.bf16.gmra.mxu0 %v7754
      %v7970 = vpop.f32.mrf.mxu0
      %v7971 = vadd.f32 %v7958, %v7970
      %v7972 = vpop.f32.mrf.mxu0
      %7973 = vdwg.mxu0
      %7974 = vmatpush.bf16.msra.mxu0 %v7899
      %7975 = vmatpush.bf16.msra.mxu0 %v7897
      %7976 = vmatpush.bf16.msra.mxu0 %v7895
      %7977 = vmatpush.bf16.msra.mxu0 %v7893
      %7978 = vmatpush.bf16.msra.mxu0 %v7891
      %7979 = vmatpush.bf16.msra.mxu0 %v7889
      %7980 = vmatpush.bf16.msra.mxu0 %v7887
      %7981 = vmatpush.bf16.msra.mxu0 %v7885
      %7982 = vmatmul.bf16.gmra.mxu0 %v7753
      %v7983 = vpop.f32.mrf.mxu0
      %v7984 = vadd.f32 0.0, %v7983
      %v7985 = vpop.f32.mrf.mxu0
      %7986 = vdwg.mxu0
      %7987 = vmatpush.bf16.msra.mxu0 %v7915
      %7988 = vmatpush.bf16.msra.mxu0 %v7913
      %7989 = vmatpush.bf16.msra.mxu0 %v7911
      %7990 = vmatpush.bf16.msra.mxu0 %v7909
      %7991 = vmatpush.bf16.msra.mxu0 %v7907
      %7992 = vmatpush.bf16.msra.mxu0 %v7905
      %7993 = vmatpush.bf16.msra.mxu0 %v7903
      %7994 = vmatpush.bf16.msra.mxu0 %v7901
      %7995 = vmatmul.bf16.gmra.mxu0 %v7754
      %v7996 = vpop.f32.mrf.mxu0
      %v7997 = vadd.f32 %v7984, %v7996
      %v7998 = vpop.f32.mrf.mxu0
      %7999 = vdwg.mxu0
      %v8000 = vadd.f32 %v7720, %v7971
      %v8001 = vadd.f32 %v7721, %v7997
      %v8002 = vrot.slane %v8000, 4
      %v8003 = vmax.f32 %v8000, %v8002
      %v8004 = vrot.slane %v8003, 2
      %v8005 = vmax.f32 %v8003, %v8004
      %v8006 = vrot.slane %v8005, 1
      %v8007 = vmax.f32 %v8005, %v8006
      %v8008 = vrot.slane %v8001, 4
      %v8009 = vmax.f32 %v8001, %v8008
      %v8010 = vrot.slane %v8009, 2
      %v8011 = vmax.f32 %v8009, %v8010
      %v8012 = vrot.slane %v8011, 1
      %v8013 = vmax.f32 %v8011, %v8012
      %v8014 = vld [vmem:[%s8] sm:$0x3]
      %v8016 = vperm.slane %v8014, 0
      %v8017 = vperm.slane %v8014, 1
      %v8020 = vadd.f32 %v8007, %v8016
      %v8021 = vadd.f32 %v8013, %v8017
      %v8022 = vmax.f32 %v8020, 0.0
      %v8023 = vmax.f32 %v8021, 0.0
      %v8024 = vpack.c.bf16 %v8022, %v8022
      %v8025 = vpack.c.bf16 %v8023, %v8023
      %v8026 = vld [vmem:[%s9] sm:$0xf]
      %v8027 = vld [vmem:[%s9 + $0x4] sm:$0xf]
      %v8028 = vld [vmem:[%s9 + $0x8] sm:$0xf]
      %v8029 = vld [vmem:[%s9 + $0xc] sm:$0xf]
      %v8030 = vld [vmem:[%s9 + $0x10] sm:$0xf]
      %v8031 = vld [vmem:[%s9 + $0x14] sm:$0xf]
      %v8032 = vld [vmem:[%s9 + $0x18] sm:$0xf]
      %v8033 = vld [vmem:[%s9 + $0x1c] sm:$0xf]
      %v8034 = vld [vmem:[%s9 + $0x20] sm:$0xf]
      %v8035 = vld [vmem:[%s9 + $0x24] sm:$0xf]
      %v8036 = vld [vmem:[%s9 + $0x28] sm:$0xf]
      %v8037 = vld [vmem:[%s9 + $0x2c] sm:$0xf]
      %v8038 = vld [vmem:[%s9 + $0x30] sm:$0xf]
      %v8039 = vld [vmem:[%s9 + $0x34] sm:$0xf]
      %v8040 = vld [vmem:[%s9 + $0x38] sm:$0xf]
      %v8041 = vld [vmem:[%s9 + $0x3c] sm:$0xf]
      %v8042 = vld [vmem:[%s9 + $0x40] sm:$0xf]
      %v8043 = vld [vmem:[%s9 + $0x44] sm:$0xf]
      %v8044 = vld [vmem:[%s9 + $0x48] sm:$0xf]
      %v8045 = vld [vmem:[%s9 + $0x4c] sm:$0xf]
      %v8046 = vld [vmem:[%s9 + $0x50] sm:$0xf]
      %v8047 = vld [vmem:[%s9 + $0x54] sm:$0xf]
      %v8048 = vld [vmem:[%s9 + $0x58] sm:$0xf]
      %v8049 = vld [vmem:[%s9 + $0x5c] sm:$0xf]
      %v8050 = vld [vmem:[%s9 + $0x60] sm:$0xf]
      %v8051 = vld [vmem:[%s9 + $0x64] sm:$0xf]
      %v8052 = vld [vmem:[%s9 + $0x68] sm:$0xf]
      %v8053 = vld [vmem:[%s9 + $0x6c] sm:$0xf]
      %v8054 = vld [vmem:[%s9 + $0x70] sm:$0xf]
      %v8055 = vld [vmem:[%s9 + $0x74] sm:$0xf]
      %v8056 = vld [vmem:[%s9 + $0x78] sm:$0xf]
      %v8057 = vld [vmem:[%s9 + $0x7c] sm:$0xf]
      %v8058 = vld [vmem:[%s10] sm:$0x1]
      %v8091 = vunpack.c.l.b16 %v8026
      %v8092 = vunpack.c.l.b16 %v8027
      %v8093 = vunpack.c.l.b16 %v8028
      %v8094 = vunpack.c.l.b16 %v8029
      %v8095 = vunpack.c.l.b16 %v8030
      %v8096 = vunpack.c.l.b16 %v8031
      %v8097 = vunpack.c.l.b16 %v8032
      %v8098 = vunpack.c.l.b16 %v8033
      %v8099 = vunpack.c.l.b16 %v8034
      %v8100 = vunpack.c.l.b16 %v8035
      %v8101 = vunpack.c.l.b16 %v8036
      %v8102 = vunpack.c.l.b16 %v8037
      %v8103 = vunpack.c.l.b16 %v8038
      %v8104 = vunpack.c.l.b16 %v8039
      %v8105 = vunpack.c.l.b16 %v8040
      %v8106 = vunpack.c.l.b16 %v8041
      %v8107 = vunpack.c.l.b16 %v8042
      %v8108 = vunpack.c.l.b16 %v8043
      %v8109 = vunpack.c.l.b16 %v8044
      %v8110 = vunpack.c.l.b16 %v8045
      %v8111 = vunpack.c.l.b16 %v8046
      %v8112 = vunpack.c.l.b16 %v8047
      %v8113 = vunpack.c.l.b16 %v8048
      %v8114 = vunpack.c.l.b16 %v8049
      %v8115 = vunpack.c.l.b16 %v8050
      %v8116 = vunpack.c.l.b16 %v8051
      %v8117 = vunpack.c.l.b16 %v8052
      %v8118 = vunpack.c.l.b16 %v8053
      %v8119 = vunpack.c.l.b16 %v8054
      %v8120 = vunpack.c.l.b16 %v8055
      %v8121 = vunpack.c.l.b16 %v8056
      %v8122 = vunpack.c.l.b16 %v8057
      %v8123 = vpack.c.b16 %v8092, %v8091
      %v8124 = vpack.c.b16 %v8094, %v8093
      %v8125 = vpack.c.b16 %v8096, %v8095
      %v8126 = vpack.c.b16 %v8098, %v8097
      %v8127 = vpack.c.b16 %v8100, %v8099
      %v8128 = vpack.c.b16 %v8102, %v8101
      %v8129 = vpack.c.b16 %v8104, %v8103
      %v8130 = vpack.c.b16 %v8106, %v8105
      %v8131 = vpack.c.b16 %v8108, %v8107
      %v8132 = vpack.c.b16 %v8110, %v8109
      %v8133 = vpack.c.b16 %v8112, %v8111
      %v8134 = vpack.c.b16 %v8114, %v8113
      %v8135 = vpack.c.b16 %v8116, %v8115
      %v8136 = vpack.c.b16 %v8118, %v8117
      %v8137 = vpack.c.b16 %v8120, %v8119
      %v8138 = vpack.c.b16 %v8122, %v8121
      %8155 = vmatpush.bf16.msra.mxu0 %v8130
      %8156 = vmatpush.bf16.msra.mxu0 %v8129
      %8157 = vmatpush.bf16.msra.mxu0 %v8128
      %8158 = vmatpush.bf16.msra.mxu0 %v8127
      %8159 = vmatpush.bf16.msra.mxu0 %v8126
      %8160 = vmatpush.bf16.msra.mxu0 %v8125
      %8161 = vmatpush.bf16.msra.mxu0 %v8124
      %8162 = vmatpush.bf16.msra.mxu0 %v8123
      %8163 = vmatmul.bf16.gmra.mxu0 %v8024
      %v8164 = vpop.f32.mrf.mxu0
      %v8165 = vadd.f32 %v8058, %v8164
      %v8166 = vpop.f32.mrf.mxu0
      %8167 = vdwg.mxu0
      %8168 = vmatpush.bf16.msra.mxu0 %v8138
      %8169 = vmatpush.bf16.msra.mxu0 %v8137
      %8170 = vmatpush.bf16.msra.mxu0 %v8136
      %8171 = vmatpush.bf16.msra.mxu0 %v8135
      %8172 = vmatpush.bf16.msra.mxu0 %v8134
      %8173 = vmatpush.bf16.msra.mxu0 %v8133
      %8174 = vmatpush.bf16.msra.mxu0 %v8132
      %8175 = vmatpush.bf16.msra.mxu0 %v8131
      %8176 = vmatmul.bf16.gmra.mxu0 %v8025
      %v8177 = vpop.f32.mrf.mxu0
      %v8178 = vadd.f32 %v8165, %v8177
      %v8179 = vpop.f32.mrf.mxu0
      %8180 = vdwg.mxu0
      %8181 = vst [vmem:[%s382] sm:$0x1] %v8178
      %p8182 = scmp.lt.s32.totalorder %s22, 1
      %s8183 = scalar_select %p8182, %s22, 1
      %s8184 = scalar_lea.vmem %s11, %s8183
      // Predicated region
      $region65: #{fixednet_forward.1} parent=63 // pred_check
        %p8185 = pneg %p276
      $region66: #{fixednet_forward.1} parent=63 // pred_check_branch
        %8187 = sbr.rel (%p8185) target = $region68
      $region67: #{fixednet_forward.1} parent=63 // pred_region
        _
      $region68: #{fixednet_forward.1} parent=63 // pred_fallthru
        _
    $region64: #{fixednet_forward.1} parent=5 // pred_fallthru
      _
    %p8188 = scmp.le.s32.totalorder 2, %s17
    // Predicated region
    $region69: #{fixednet_forward.1} parent=5 // pred_check
      %p8189 = pneg %p8188
    $region70: #{fixednet_forward.1} parent=5 // pred_check_branch
      %8191 = sbr.rel (%p8189) target = $region72
    $region71: #{fixednet_forward.1} parent=5 // pred_region
      %s8192 = ssub.s32 %s17, 2
      // Predicated region
      $region73: #{fixednet_forward.1} parent=71 // pred_check
        %p8193 = pneg %p282
      $region74: #{fixednet_forward.1} parent=71 // pred_check_branch
        %8195 = sbr.rel (%p8193) target = $region76
      $region75: #{fixednet_forward.1} parent=71 // pred_region
        %p8196 = scmp.lt.s32.totalorder %s23, 1
        %s8197 = scalar_select %p8196, %s23, 1
        %s8198 = scalar_lea.vmem %s11, %s8197
      $region76: #{fixednet_forward.1} parent=71 // pred_fallthru
        _
    $region72: #{fixednet_forward.1} parent=5 // pred_fallthru
      _
  $region6: #{fixednet_forward.1} parent=0 // loop_footer
    %s21 = sadd.s32 1, %s17
  $region7: #{fixednet_forward.1} parent=0 // loop_footer_branch
    %16 = sbr.rel target = $region3
  $region8: #{fixednet_forward.1} parent=0 // loop_exit
    _

</llo_original>
